<compile_context>
chip_gen: v6e
topology: v6e:2x2x1
jax: 0.10.0
libtpu: 0.0.40
codegen_flags: <defaults>
</compile_context>

<pallas_src>
import functools

import jax
import jax.numpy as jnp
from jax import lax
from jax.experimental import pallas as pl
from jax.experimental.pallas import tpu as pltpu


# ----------------------------------------------------------------------------
# Fused kernel: Conv1d + tanh + MaxPool1d + ReLU -> LSTM (last h) -> MLP head
# ----------------------------------------------------------------------------
def fused_cnn_lstm_kernel(x_ref, cw_ref, cb_ref, wihx_ref, whh_ref, lb_ref,
                          w1_ref, b1_ref, w2_ref, b2_ref, w3_ref, b3_ref,
                          o_ref, *, K, conv_pad, pool):
    _, Bb, C_in, L = x_ref.shape
    C_out = cw_ref.shape[0]              # == LSTM sequence length T
    FourH = whh_ref.shape[1]
    H = FourH // 4
    L_out = L + 2 * conv_pad - K + 1
    T = C_out
    f32 = jnp.float32

    x = x_ref[0]                         # (Bb, C_in, L)

    # ---- Conv1d as one im2col GEMM (zero halo built in VMEM) ----------------
    if conv_pad > 0:
        zcol = jnp.zeros((Bb, C_in, conv_pad), f32)
        xpad = jnp.concatenate([zcol, x, zcol], axis=-1)        # (Bb,C_in,L+2p)
    else:
        xpad = x
    rows = []
    for k in range(K):                                          # static unroll
        win = xpad[:, :, k:k + L_out]                           # (Bb,C_in,L_out)
        rows.append(jnp.concatenate([win[b] for b in range(Bb)], axis=-1))
    rhs = jnp.concatenate(rows, axis=0)                         # (K*C_in, Bb*L_out)
    conv = jnp.dot(cw_ref[...], rhs, preferred_element_type=f32)
    act = jnp.tanh(conv + cb_ref[...])                          # (C_out, Bb*L_out)

    # ---- MaxPool1d via shifted maxima + ReLU --------------------------------
    # cmax[:, pool*m] = max over the pool window; the values at the other
    # (discarded) lane positions are multiplied by zero rows of wihx below,
    # so no explicit stride-`pool` down-select is needed in-kernel.
    cmax = act
    for s in range(1, pool):                                    # static unroll
        shifted = jnp.concatenate([act[:, s:], act[:, :s]], axis=-1)
        cmax = jnp.maximum(cmax, shifted)
    cmax = jnp.maximum(cmax, 0.0)                               # ReLU

    # ---- Hoisted LSTM input projection: one (Bb*T, L_out) @ (L_out, 4H) -----
    # Batch-major rows (b*T + t) from 128-aligned lane slices; wihx has the
    # pooled-position rows of W_ih and zeros elsewhere; combined bias folded in.
    seq = jnp.concatenate(
        [cmax[:, b * L_out:(b + 1) * L_out] for b in range(Bb)], axis=0)
    xproj = jnp.dot(seq, wihx_ref[...], preferred_element_type=f32) + lb_ref[...]

    # ---- LSTM recurrence (static T -> fully unrolled) ------------------------
    whh = whh_ref[...]                                          # (H, 4H)
    lane = lax.broadcasted_iota(jnp.int32, (Bb, FourH), 1)
    g_mask = (lane >= 2 * H) & (lane < 3 * H)                   # tanh-gate lanes
    h = jnp.zeros((Bb, H), f32)
    c = jnp.zeros((Bb, H), f32)
    for t in range(T):
        x_t = jnp.concatenate(
            [xproj[b * T + t:b * T + t + 1, :] for b in range(Bb)], axis=0)
        gates = x_t + jnp.dot(h, whh, preferred_element_type=f32)   # (Bb, 4H)
        # Full-vreg nonlinearities (EUP), gate select via lane mask (VPU).
        a = jnp.where(g_mask, jnp.tanh(gates), jax.nn.sigmoid(gates))
        i_g = a[:, 0:H]
        f_g = a[:, H:2 * H]
        g_g = a[:, 2 * H:3 * H]
        o_g = a[:, 3 * H:4 * H]
        c = f_g * c + i_g * g_g
        h = o_g * jnp.tanh(c)

    # ---- MLP head: fc1 -> tanh -> fc2 -> tanh -> fc3 (lane-padded) ----------
    z = jnp.tanh(jnp.dot(h, w1_ref[...], preferred_element_type=f32) + b1_ref[...])
    z = jnp.tanh(jnp.dot(z, w2_ref[...], preferred_element_type=f32) + b2_ref[...])
    o_ref[0] = jnp.dot(z, w3_ref[...], preferred_element_type=f32) + b3_ref[...]


# ----------------------------------------------------------------------------
# Wrapper
# ----------------------------------------------------------------------------
def cnn_lstm_forward(x, params, conv_padding, pool_size, *, batch_blocks=1):
    B, C_in, L = x.shape
    C_out, KC = params["conv_w"].shape
    K = KC // C_in
    F, FourH = params["lstm_wih"].shape
    NP = params["fc3_w"].shape[1]
    n_out = params["n_out"]

    L_out = L + 2 * conv_padding - K + 1
    assert L_out % pool_size == 0, "MaxPool1d window must tile the conv output"
    L_pool = L_out // pool_size
    assert L_pool == F, f"pooled length {L_pool} must equal LSTM input_size {F}"
    assert B % batch_blocks == 0
    G = batch_blocks
    Bb = B // G

    # W_ih with zero rows interleaved at the non-pooled conv positions:
    # folds the stride-`pool` down-select of the max-pool into the GEMM.
    wih_exp = jnp.zeros((L_out, FourH), jnp.float32)
    wih_exp = wih_exp.at[::pool_size, :].set(params["lstm_wih"])

    x4 = x.reshape(G, Bb, C_in, L)

    def whole(arr):
        zeros = (0,) * arr.ndim
        return pl.BlockSpec(arr.shape, lambda g: zeros)

    kernel = functools.partial(fused_cnn_lstm_kernel, K=K,
                               conv_pad=conv_padding, pool=pool_size)
    out = pl.pallas_call(
        kernel,
        grid=(G,),
        in_specs=[
            pl.BlockSpec((1, Bb, C_in, L), lambda g: (g, 0, 0, 0)),
            whole(params["conv_w"]), whole(params["conv_b"]),
            whole(wih_exp), whole(params["lstm_whh"]), whole(params["lstm_b"]),
            whole(params["fc1_w"]), whole(params["fc1_b"]),
            whole(params["fc2_w"]), whole(params["fc2_b"]),
            whole(params["fc3_w"]), whole(params["fc3_b"]),
        ],
        out_specs=pl.BlockSpec((1, Bb, NP), lambda g: (g, 0, 0)),
        out_shape=jax.ShapeDtypeStruct((G, Bb, NP), jnp.float32),
        compiler_params=pltpu.CompilerParams(
            dimension_semantics=("parallel",)),
    )(x4, params["conv_w"], params["conv_b"], wih_exp,
      params["lstm_whh"], params["lstm_b"], params["fc1_w"], params["fc1_b"],
      params["fc2_w"], params["fc2_b"], params["fc3_w"], params["fc3_b"])

    return out.reshape(B, NP)[:, :n_out]


# ----------------------------------------------------------------------------
# Deterministic parameter init (PyTorch shapes, stored in kernel layouts)
# ----------------------------------------------------------------------------
def init_params(key, n_features, out_conv_filters, conv_kernel,
                lstm_hidden_unit, lstm_input_size=256, n_out=5, out_pad=128):
    ks = jax.random.split(key, 12)
    H = lstm_hidden_unit
    H2 = H // 2

    def unif(k, shape, fan_in):
        bound = 1.0 / float(fan_in) ** 0.5
        return jax.random.uniform(k, shape, jnp.float32, -bound, bound)

    conv_w = unif(ks[0], (out_conv_filters, n_features, conv_kernel),
                  n_features * conv_kernel)                 # (C_out, C_in, K)
    conv_b = unif(ks[1], (out_conv_filters,), n_features * conv_kernel)
    wih = unif(ks[2], (4 * H, lstm_input_size), H)          # PyTorch (4H, input)
    whh = unif(ks[3], (4 * H, H), H)
    bih = unif(ks[4], (4 * H,), H)
    bhh = unif(ks[5], (4 * H,), H)
    fc1_w = unif(ks[6], (H2, H), H)
    fc1_b = unif(ks[7], (H2,), H)
    fc2_w = unif(ks[8], (H2, H2), H2)
    fc2_b = unif(ks[9], (H2,), H2)
    fc3_w = unif(ks[10], (n_out, H2), H2)
    fc3_b = unif(ks[11], (n_out,), H2)

    # fc3 zero-padded to a lane-dense (multiple of 128) width.
    fc3_w_p = jnp.zeros((H2, out_pad), jnp.float32).at[:, :n_out].set(fc3_w.T)
    fc3_b_p = jnp.zeros((1, out_pad), jnp.float32).at[:, :n_out].set(fc3_b)

    return {
        # im2col layout: [co, k*C_in + ci] = conv_w[co, ci, k]
        "conv_w": jnp.transpose(conv_w, (0, 2, 1)).reshape(out_conv_filters, -1),
        "conv_b": conv_b.reshape(out_conv_filters, 1),
        "lstm_wih": wih.T,                                  # (input, 4H)
        "lstm_whh": whh.T,                                  # (H, 4H)
        "lstm_b": (bih + bhh).reshape(1, 4 * H),
        "fc1_w": fc1_w.T, "fc1_b": fc1_b.reshape(1, -1),
        "fc2_w": fc2_w.T, "fc2_b": fc2_b.reshape(1, -1),
        "fc3_w": fc3_w_p, "fc3_b": fc3_b_p,
        "n_out": n_out,
    }


# ----------------------------------------------------------------------------
# Pure-JAX reference (same math, different structure) for a self-check
# ----------------------------------------------------------------------------
def reference_forward(x, p, conv_padding, pool_size):
    B, C_in, L = x.shape
    C_out, KC = p["conv_w"].shape
    K = KC // C_in
    H = p["lstm_whh"].shape[0]
    L_out = L + 2 * conv_padding - K + 1
    w = p["conv_w"].reshape(C_out, K, C_in)
    xp = jnp.pad(x, ((0, 0), (0, 0), (conv_padding, conv_padding)))
    y = sum(jnp.einsum("oc,bcl->bol", w[:, k, :], xp[:, :, k:k + L_out])
            for k in range(K))
    y = jnp.tanh(y + p["conv_b"].reshape(1, C_out, 1))
    y = jnp.max(y.reshape(B, C_out, L_out // pool_size, pool_size), axis=-1)
    y = jnp.maximum(y, 0.0)
    h = jnp.zeros((B, H), jnp.float32)
    c = jnp.zeros((B, H), jnp.float32)
    for t in range(C_out):
        g = y[:, t, :] @ p["lstm_wih"] + h @ p["lstm_whh"] + p["lstm_b"]
        i = jax.nn.sigmoid(g[:, :H])
        f = jax.nn.sigmoid(g[:, H:2 * H])
        gg = jnp.tanh(g[:, 2 * H:3 * H])
        o = jax.nn.sigmoid(g[:, 3 * H:])
        c = f * c + i * gg
        h = o * jnp.tanh(c)
    z = jnp.tanh(h @ p["fc1_w"] + p["fc1_b"])
    z = jnp.tanh(z @ p["fc2_w"] + p["fc2_b"])
    out = z @ p["fc3_w"] + p["fc3_b"]
    return out[:, :p["n_out"]]


if __name__ == "__main__":
    # nn.LSTM has input_size=256 hard-coded, so the pooled length must be 256:
    # with conv kernel=3 / padding=1 and pool=2 the raw sequence length is 512.
    B, n_features = 2, 4
    out_conv_filters = 8          # becomes the LSTM sequence length
    conv_kernel, conv_padding = 3, 1
    pool_size = 2                 # pool_padding of the original ctor is unused
    lstm_hidden_unit = 32
    L = 512                       # -> L_pool = 256 == LSTM input_size

    key = jax.random.PRNGKey(0)
    k_x, k_p = jax.random.split(key)
    x = jax.random.normal(k_x, (B, n_features, L), jnp.float32)
    params = init_params(k_p, n_features, out_conv_filters, conv_kernel,
                         lstm_hidden_unit)

    with jax.default_matmul_precision("float32"):
        ref = jax.block_until_ready(
            reference_forward(x, params, conv_padding, pool_size))

        # Default: one fully fused block (best for single-TC v5e/v6e).
        out = jax.block_until_ready(
            cnn_lstm_forward(x, params, conv_padding, pool_size))

        # v7x path: one batch element per grid step with a "parallel" batch
        # axis so each TensorCore takes one element.
        out2 = jax.block_until_ready(
            cnn_lstm_forward(x, params, conv_padding, pool_size,
                             batch_blocks=B))

    assert out.shape == (B, 5), out.shape
    assert jnp.allclose(out, ref, rtol=5e-3, atol=5e-3), (out, ref)
    assert jnp.allclose(out2, ref, rtol=5e-3, atol=5e-3), (out2, ref)

    print("KERNEL_OK")
</pallas_src>

<mosaic_0001>
module attributes {stable_mosaic.version = 11 : i64} {
  func.func @fused_cnn_lstm_kernel(%arg0: i32, %arg1: memref<1x2x4x512xf32, #tpu.memory_space<vmem>>, %arg2: memref<8x12xf32, #tpu.memory_space<vmem>>, %arg3: memref<8x1xf32, #tpu.memory_space<vmem>>, %arg4: memref<512x128xf32, #tpu.memory_space<vmem>>, %arg5: memref<32x128xf32, #tpu.memory_space<vmem>>, %arg6: memref<1x128xf32, #tpu.memory_space<vmem>>, %arg7: memref<32x16xf32, #tpu.memory_space<vmem>>, %arg8: memref<1x16xf32, #tpu.memory_space<vmem>>, %arg9: memref<16x16xf32, #tpu.memory_space<vmem>>, %arg10: memref<1x16xf32, #tpu.memory_space<vmem>>, %arg11: memref<16x128xf32, #tpu.memory_space<vmem>>, %arg12: memref<1x128xf32, #tpu.memory_space<vmem>>, %arg13: memref<1x2x128xf32, #tpu.memory_space<vmem>>) attributes {dimension_semantics = [#tpu.dimension_semantics<parallel>], iteration_bounds = array<i64: 1>, scalar_prefetch = 0 : i64, scratch_operands = 0 : i64, tpu.core_type = #tpu.core_type<tc>, window_params = [{transform_indices = @transform_0, window_bounds = array<i64: 1, 2, 4, 512>}, {pipeline_mode = #tpu.pipeline_mode<synchronous>, transform_indices = @transform_1, window_bounds = array<i64: 8, 12>}, {pipeline_mode = #tpu.pipeline_mode<synchronous>, transform_indices = @transform_2, window_bounds = array<i64: 8, 1>}, {pipeline_mode = #tpu.pipeline_mode<synchronous>, transform_indices = @transform_3, window_bounds = array<i64: 512, 128>}, {pipeline_mode = #tpu.pipeline_mode<synchronous>, transform_indices = @transform_4, window_bounds = array<i64: 32, 128>}, {pipeline_mode = #tpu.pipeline_mode<synchronous>, transform_indices = @transform_5, window_bounds = array<i64: 1, 128>}, {pipeline_mode = #tpu.pipeline_mode<synchronous>, transform_indices = @transform_6, window_bounds = array<i64: 32, 16>}, {pipeline_mode = #tpu.pipeline_mode<synchronous>, transform_indices = @transform_7, window_bounds = array<i64: 1, 16>}, {pipeline_mode = #tpu.pipeline_mode<synchronous>, transform_indices = @transform_8, window_bounds = array<i64: 16, 16>}, {pipeline_mode = #tpu.pipeline_mode<synchronous>, transform_indices = @transform_9, window_bounds = array<i64: 1, 16>}, {pipeline_mode = #tpu.pipeline_mode<synchronous>, transform_indices = @transform_10, window_bounds = array<i64: 16, 128>}, {pipeline_mode = #tpu.pipeline_mode<synchronous>, transform_indices = @transform_11, window_bounds = array<i64: 1, 128>}, {transform_indices = @transform_12, window_bounds = array<i64: 1, 2, 128>}]} {
    %c0 = arith.constant 0 : index
    %c0_0 = arith.constant 0 : index
    %c0_1 = arith.constant 0 : index
    %c0_2 = arith.constant 0 : index
    %0 = vector.load %arg1[%c0, %c0_0, %c0_1, %c0_2] : memref<1x2x4x512xf32, #tpu.memory_space<vmem>>, vector<1x2x4x512xf32>
    %1 = vector.shape_cast %0 : vector<1x2x4x512xf32> to vector<2x4x512xf32>
    %cst = arith.constant 0.000000e+00 : f32
    %2 = vector.broadcast %cst : f32 to vector<2x4x1xf32>
    %3 = tpu.concatenate %2, %1, %2 in 2 : vector<2x4x1xf32>, vector<2x4x512xf32>, vector<2x4x1xf32> -> vector<2x4x514xf32>
    %4 = vector.extract_strided_slice %3 {offsets = [0, 0, 0], sizes = [2, 4, 512], strides = [1, 1, 1]} : vector<2x4x514xf32> to vector<2x4x512xf32>
    %5 = vector.extract_strided_slice %4 {offsets = [0, 0, 0], sizes = [1, 4, 512], strides = [1, 1, 1]} : vector<2x4x512xf32> to vector<1x4x512xf32>
    %6 = vector.shape_cast %5 : vector<1x4x512xf32> to vector<4x512xf32>
    %7 = vector.extract_strided_slice %4 {offsets = [1, 0, 0], sizes = [1, 4, 512], strides = [1, 1, 1]} : vector<2x4x512xf32> to vector<1x4x512xf32>
    %8 = vector.shape_cast %7 : vector<1x4x512xf32> to vector<4x512xf32>
    %9 = tpu.concatenate %6, %8 in 1 : vector<4x512xf32>, vector<4x512xf32> -> vector<4x1024xf32>
    %10 = vector.extract_strided_slice %3 {offsets = [0, 0, 1], sizes = [2, 4, 512], strides = [1, 1, 1]} : vector<2x4x514xf32> to vector<2x4x512xf32>
    %11 = vector.extract_strided_slice %10 {offsets = [0, 0, 0], sizes = [1, 4, 512], strides = [1, 1, 1]} : vector<2x4x512xf32> to vector<1x4x512xf32>
    %12 = vector.shape_cast %11 : vector<1x4x512xf32> to vector<4x512xf32>
    %13 = vector.extract_strided_slice %10 {offsets = [1, 0, 0], sizes = [1, 4, 512], strides = [1, 1, 1]} : vector<2x4x512xf32> to vector<1x4x512xf32>
    %14 = vector.shape_cast %13 : vector<1x4x512xf32> to vector<4x512xf32>
    %15 = tpu.concatenate %12, %14 in 1 : vector<4x512xf32>, vector<4x512xf32> -> vector<4x1024xf32>
    %16 = vector.extract_strided_slice %3 {offsets = [0, 0, 2], sizes = [2, 4, 512], strides = [1, 1, 1]} : vector<2x4x514xf32> to vector<2x4x512xf32>
    %17 = vector.extract_strided_slice %16 {offsets = [0, 0, 0], sizes = [1, 4, 512], strides = [1, 1, 1]} : vector<2x4x512xf32> to vector<1x4x512xf32>
    %18 = vector.shape_cast %17 : vector<1x4x512xf32> to vector<4x512xf32>
    %19 = vector.extract_strided_slice %16 {offsets = [1, 0, 0], sizes = [1, 4, 512], strides = [1, 1, 1]} : vector<2x4x512xf32> to vector<1x4x512xf32>
    %20 = vector.shape_cast %19 : vector<1x4x512xf32> to vector<4x512xf32>
    %21 = tpu.concatenate %18, %20 in 1 : vector<4x512xf32>, vector<4x512xf32> -> vector<4x1024xf32>
    %22 = tpu.concatenate %9, %15, %21 in 0 : vector<4x1024xf32>, vector<4x1024xf32>, vector<4x1024xf32> -> vector<12x1024xf32>
    %c0_3 = arith.constant 0 : index
    %c0_4 = arith.constant 0 : index
    %23 = vector.load %arg2[%c0_3, %c0_4] : memref<8x12xf32, #tpu.memory_space<vmem>>, vector<8x12xf32>
    %cst_5 = arith.constant dense<0.000000e+00> : vector<8x1024xf32>
    %24 = tpu.matmul %23, %22, %cst_5 {dimension_numbers = #tpu.dot_dimension_numbers<[1], [0], [0], [1], [0, 0, 1, 1], [], []>, precision = #tpu.contract_precision<fp32>} : vector<8x12xf32>, vector<12x1024xf32>, vector<8x1024xf32> -> vector<8x1024xf32>
    %c0_6 = arith.constant 0 : index
    %c0_7 = arith.constant 0 : index
    %25 = vector.load %arg3[%c0_6, %c0_7] : memref<8x1xf32, #tpu.memory_space<vmem>>, vector<8x1xf32>
    %26 = vector.broadcast %25 : vector<8x1xf32> to vector<8x1024xf32>
    %27 = arith.addf %24, %26 : vector<8x1024xf32>
    %28 = math.tanh %27 : vector<8x1024xf32>
    %29 = vector.extract_strided_slice %28 {offsets = [0, 1], sizes = [8, 1023], strides = [1, 1]} : vector<8x1024xf32> to vector<8x1023xf32>
    %30 = vector.extract_strided_slice %28 {offsets = [0, 0], sizes = [8, 1], strides = [1, 1]} : vector<8x1024xf32> to vector<8x1xf32>
    %31 = tpu.concatenate %29, %30 in 1 : vector<8x1023xf32>, vector<8x1xf32> -> vector<8x1024xf32>
    %32 = arith.maximumf %28, %31 : vector<8x1024xf32>
    %cst_8 = arith.constant 0.000000e+00 : f32
    %33 = vector.broadcast %cst_8 : f32 to vector<8x1024xf32>
    %34 = arith.maximumf %32, %33 : vector<8x1024xf32>
    %35 = vector.extract_strided_slice %34 {offsets = [0, 0], sizes = [8, 512], strides = [1, 1]} : vector<8x1024xf32> to vector<8x512xf32>
    %36 = vector.extract_strided_slice %34 {offsets = [0, 512], sizes = [8, 512], strides = [1, 1]} : vector<8x1024xf32> to vector<8x512xf32>
    %37 = tpu.concatenate %35, %36 in 0 : vector<8x512xf32>, vector<8x512xf32> -> vector<16x512xf32>
    %c0_9 = arith.constant 0 : index
    %c0_10 = arith.constant 0 : index
    %38 = vector.load %arg4[%c0_9, %c0_10] : memref<512x128xf32, #tpu.memory_space<vmem>>, vector<512x128xf32>
    %cst_11 = arith.constant dense<0.000000e+00> : vector<16x128xf32>
    %39 = tpu.matmul %37, %38, %cst_11 {dimension_numbers = #tpu.dot_dimension_numbers<[1], [0], [0], [1], [0, 0, 1, 1], [], []>, precision = #tpu.contract_precision<fp32>} : vector<16x512xf32>, vector<512x128xf32>, vector<16x128xf32> -> vector<16x128xf32>
    %c0_12 = arith.constant 0 : index
    %c0_13 = arith.constant 0 : index
    %40 = vector.load %arg6[%c0_12, %c0_13] : memref<1x128xf32, #tpu.memory_space<vmem>>, vector<1x128xf32>
    %41 = vector.broadcast %40 : vector<1x128xf32> to vector<16x128xf32>
    %42 = arith.addf %39, %41 : vector<16x128xf32>
    %c0_14 = arith.constant 0 : index
    %c0_15 = arith.constant 0 : index
    %43 = vector.load %arg5[%c0_14, %c0_15] : memref<32x128xf32, #tpu.memory_space<vmem>>, vector<32x128xf32>
    %44 = tpu.iota {dimensions = array<i32: 1>} : vector<2x128xi32>
    %c64_i32 = arith.constant 64 : i32
    %45 = vector.broadcast %c64_i32 : i32 to vector<2x128xi32>
    %46 = arith.cmpi sge, %44, %45 : vector<2x128xi32>
    %c96_i32 = arith.constant 96 : i32
    %47 = vector.broadcast %c96_i32 : i32 to vector<2x128xi32>
    %48 = arith.cmpi slt, %44, %47 : vector<2x128xi32>
    %49 = arith.andi %46, %48 : vector<2x128xi1>
    %cst_16 = arith.constant 0.000000e+00 : f32
    %50 = vector.broadcast %cst_16 : f32 to vector<2x32xf32>
    %cst_17 = arith.constant 0.000000e+00 : f32
    %51 = vector.broadcast %cst_17 : f32 to vector<2x32xf32>
    %52 = vector.extract_strided_slice %42 {offsets = [0, 0], sizes = [1, 128], strides = [1, 1]} : vector<16x128xf32> to vector<1x128xf32>
    %53 = vector.extract_strided_slice %42 {offsets = [8, 0], sizes = [1, 128], strides = [1, 1]} : vector<16x128xf32> to vector<1x128xf32>
    %54 = tpu.concatenate %52, %53 in 0 : vector<1x128xf32>, vector<1x128xf32> -> vector<2x128xf32>
    %cst_18 = arith.constant dense<0.000000e+00> : vector<2x128xf32>
    %55 = tpu.matmul %50, %43, %cst_18 {dimension_numbers = #tpu.dot_dimension_numbers<[1], [0], [0], [1], [0, 0, 1, 1], [], []>, precision = #tpu.contract_precision<fp32>} : vector<2x32xf32>, vector<32x128xf32>, vector<2x128xf32> -> vector<2x128xf32>
    %56 = arith.addf %54, %55 : vector<2x128xf32>
    %57 = math.tanh %56 : vector<2x128xf32>
    %58 = arith.negf %56 : vector<2x128xf32>
    %59 = math.exp %58 : vector<2x128xf32>
    %cst_19 = arith.constant 1.000000e+00 : f32
    %60 = vector.broadcast %cst_19 : f32 to vector<2x128xf32>
    %61 = arith.addf %60, %59 : vector<2x128xf32>
    %62 = arith.divf %60, %61 : vector<2x128xf32>
    %63 = arith.select %49, %57, %62 : vector<2x128xi1>, vector<2x128xf32>
    %64 = vector.extract_strided_slice %63 {offsets = [0, 0], sizes = [2, 32], strides = [1, 1]} : vector<2x128xf32> to vector<2x32xf32>
    %65 = vector.extract_strided_slice %63 {offsets = [0, 32], sizes = [2, 32], strides = [1, 1]} : vector<2x128xf32> to vector<2x32xf32>
    %66 = vector.extract_strided_slice %63 {offsets = [0, 64], sizes = [2, 32], strides = [1, 1]} : vector<2x128xf32> to vector<2x32xf32>
    %67 = vector.extract_strided_slice %63 {offsets = [0, 96], sizes = [2, 32], strides = [1, 1]} : vector<2x128xf32> to vector<2x32xf32>
    %68 = arith.mulf %65, %51 : vector<2x32xf32>
    %69 = arith.mulf %64, %66 : vector<2x32xf32>
    %70 = arith.addf %68, %69 : vector<2x32xf32>
    %71 = math.tanh %70 : vector<2x32xf32>
    %72 = arith.mulf %67, %71 : vector<2x32xf32>
    %73 = vector.extract_strided_slice %42 {offsets = [1, 0], sizes = [1, 128], strides = [1, 1]} : vector<16x128xf32> to vector<1x128xf32>
    %74 = vector.extract_strided_slice %42 {offsets = [9, 0], sizes = [1, 128], strides = [1, 1]} : vector<16x128xf32> to vector<1x128xf32>
    %75 = tpu.concatenate %73, %74 in 0 : vector<1x128xf32>, vector<1x128xf32> -> vector<2x128xf32>
    %cst_20 = arith.constant dense<0.000000e+00> : vector<2x128xf32>
    %76 = tpu.matmul %72, %43, %cst_20 {dimension_numbers = #tpu.dot_dimension_numbers<[1], [0], [0], [1], [0, 0, 1, 1], [], []>, precision = #tpu.contract_precision<fp32>} : vector<2x32xf32>, vector<32x128xf32>, vector<2x128xf32> -> vector<2x128xf32>
    %77 = arith.addf %75, %76 : vector<2x128xf32>
    %78 = math.tanh %77 : vector<2x128xf32>
    %79 = arith.negf %77 : vector<2x128xf32>
    %80 = math.exp %79 : vector<2x128xf32>
    %cst_21 = arith.constant 1.000000e+00 : f32
    %81 = vector.broadcast %cst_21 : f32 to vector<2x128xf32>
    %82 = arith.addf %81, %80 : vector<2x128xf32>
    %83 = arith.divf %81, %82 : vector<2x128xf32>
    %84 = arith.select %49, %78, %83 : vector<2x128xi1>, vector<2x128xf32>
    %85 = vector.extract_strided_slice %84 {offsets = [0, 0], sizes = [2, 32], strides = [1, 1]} : vector<2x128xf32> to vector<2x32xf32>
    %86 = vector.extract_strided_slice %84 {offsets = [0, 32], sizes = [2, 32], strides = [1, 1]} : vector<2x128xf32> to vector<2x32xf32>
    %87 = vector.extract_strided_slice %84 {offsets = [0, 64], sizes = [2, 32], strides = [1, 1]} : vector<2x128xf32> to vector<2x32xf32>
    %88 = vector.extract_strided_slice %84 {offsets = [0, 96], sizes = [2, 32], strides = [1, 1]} : vector<2x128xf32> to vector<2x32xf32>
    %89 = arith.mulf %86, %70 : vector<2x32xf32>
    %90 = arith.mulf %85, %87 : vector<2x32xf32>
    %91 = arith.addf %89, %90 : vector<2x32xf32>
    %92 = math.tanh %91 : vector<2x32xf32>
    %93 = arith.mulf %88, %92 : vector<2x32xf32>
    %94 = vector.extract_strided_slice %42 {offsets = [2, 0], sizes = [1, 128], strides = [1, 1]} : vector<16x128xf32> to vector<1x128xf32>
    %95 = vector.extract_strided_slice %42 {offsets = [10, 0], sizes = [1, 128], strides = [1, 1]} : vector<16x128xf32> to vector<1x128xf32>
    %96 = tpu.concatenate %94, %95 in 0 : vector<1x128xf32>, vector<1x128xf32> -> vector<2x128xf32>
    %cst_22 = arith.constant dense<0.000000e+00> : vector<2x128xf32>
    %97 = tpu.matmul %93, %43, %cst_22 {dimension_numbers = #tpu.dot_dimension_numbers<[1], [0], [0], [1], [0, 0, 1, 1], [], []>, precision = #tpu.contract_precision<fp32>} : vector<2x32xf32>, vector<32x128xf32>, vector<2x128xf32> -> vector<2x128xf32>
    %98 = arith.addf %96, %97 : vector<2x128xf32>
    %99 = math.tanh %98 : vector<2x128xf32>
    %100 = arith.negf %98 : vector<2x128xf32>
    %101 = math.exp %100 : vector<2x128xf32>
    %cst_23 = arith.constant 1.000000e+00 : f32
    %102 = vector.broadcast %cst_23 : f32 to vector<2x128xf32>
    %103 = arith.addf %102, %101 : vector<2x128xf32>
    %104 = arith.divf %102, %103 : vector<2x128xf32>
    %105 = arith.select %49, %99, %104 : vector<2x128xi1>, vector<2x128xf32>
    %106 = vector.extract_strided_slice %105 {offsets = [0, 0], sizes = [2, 32], strides = [1, 1]} : vector<2x128xf32> to vector<2x32xf32>
    %107 = vector.extract_strided_slice %105 {offsets = [0, 32], sizes = [2, 32], strides = [1, 1]} : vector<2x128xf32> to vector<2x32xf32>
    %108 = vector.extract_strided_slice %105 {offsets = [0, 64], sizes = [2, 32], strides = [1, 1]} : vector<2x128xf32> to vector<2x32xf32>
    %109 = vector.extract_strided_slice %105 {offsets = [0, 96], sizes = [2, 32], strides = [1, 1]} : vector<2x128xf32> to vector<2x32xf32>
    %110 = arith.mulf %107, %91 : vector<2x32xf32>
    %111 = arith.mulf %106, %108 : vector<2x32xf32>
    %112 = arith.addf %110, %111 : vector<2x32xf32>
    %113 = math.tanh %112 : vector<2x32xf32>
    %114 = arith.mulf %109, %113 : vector<2x32xf32>
    %115 = vector.extract_strided_slice %42 {offsets = [3, 0], sizes = [1, 128], strides = [1, 1]} : vector<16x128xf32> to vector<1x128xf32>
    %116 = vector.extract_strided_slice %42 {offsets = [11, 0], sizes = [1, 128], strides = [1, 1]} : vector<16x128xf32> to vector<1x128xf32>
    %117 = tpu.concatenate %115, %116 in 0 : vector<1x128xf32>, vector<1x128xf32> -> vector<2x128xf32>
    %cst_24 = arith.constant dense<0.000000e+00> : vector<2x128xf32>
    %118 = tpu.matmul %114, %43, %cst_24 {dimension_numbers = #tpu.dot_dimension_numbers<[1], [0], [0], [1], [0, 0, 1, 1], [], []>, precision = #tpu.contract_precision<fp32>} : vector<2x32xf32>, vector<32x128xf32>, vector<2x128xf32> -> vector<2x128xf32>
    %119 = arith.addf %117, %118 : vector<2x128xf32>
    %120 = math.tanh %119 : vector<2x128xf32>
    %121 = arith.negf %119 : vector<2x128xf32>
    %122 = math.exp %121 : vector<2x128xf32>
    %cst_25 = arith.constant 1.000000e+00 : f32
    %123 = vector.broadcast %cst_25 : f32 to vector<2x128xf32>
    %124 = arith.addf %123, %122 : vector<2x128xf32>
    %125 = arith.divf %123, %124 : vector<2x128xf32>
    %126 = arith.select %49, %120, %125 : vector<2x128xi1>, vector<2x128xf32>
    %127 = vector.extract_strided_slice %126 {offsets = [0, 0], sizes = [2, 32], strides = [1, 1]} : vector<2x128xf32> to vector<2x32xf32>
    %128 = vector.extract_strided_slice %126 {offsets = [0, 32], sizes = [2, 32], strides = [1, 1]} : vector<2x128xf32> to vector<2x32xf32>
    %129 = vector.extract_strided_slice %126 {offsets = [0, 64], sizes = [2, 32], strides = [1, 1]} : vector<2x128xf32> to vector<2x32xf32>
    %130 = vector.extract_strided_slice %126 {offsets = [0, 96], sizes = [2, 32], strides = [1, 1]} : vector<2x128xf32> to vector<2x32xf32>
    %131 = arith.mulf %128, %112 : vector<2x32xf32>
    %132 = arith.mulf %127, %129 : vector<2x32xf32>
    %133 = arith.addf %131, %132 : vector<2x32xf32>
    %134 = math.tanh %133 : vector<2x32xf32>
    %135 = arith.mulf %130, %134 : vector<2x32xf32>
    %136 = vector.extract_strided_slice %42 {offsets = [4, 0], sizes = [1, 128], strides = [1, 1]} : vector<16x128xf32> to vector<1x128xf32>
    %137 = vector.extract_strided_slice %42 {offsets = [12, 0], sizes = [1, 128], strides = [1, 1]} : vector<16x128xf32> to vector<1x128xf32>
    %138 = tpu.concatenate %136, %137 in 0 : vector<1x128xf32>, vector<1x128xf32> -> vector<2x128xf32>
    %cst_26 = arith.constant dense<0.000000e+00> : vector<2x128xf32>
    %139 = tpu.matmul %135, %43, %cst_26 {dimension_numbers = #tpu.dot_dimension_numbers<[1], [0], [0], [1], [0, 0, 1, 1], [], []>, precision = #tpu.contract_precision<fp32>} : vector<2x32xf32>, vector<32x128xf32>, vector<2x128xf32> -> vector<2x128xf32>
    %140 = arith.addf %138, %139 : vector<2x128xf32>
    %141 = math.tanh %140 : vector<2x128xf32>
    %142 = arith.negf %140 : vector<2x128xf32>
    %143 = math.exp %142 : vector<2x128xf32>
    %cst_27 = arith.constant 1.000000e+00 : f32
    %144 = vector.broadcast %cst_27 : f32 to vector<2x128xf32>
    %145 = arith.addf %144, %143 : vector<2x128xf32>
    %146 = arith.divf %144, %145 : vector<2x128xf32>
    %147 = arith.select %49, %141, %146 : vector<2x128xi1>, vector<2x128xf32>
    %148 = vector.extract_strided_slice %147 {offsets = [0, 0], sizes = [2, 32], strides = [1, 1]} : vector<2x128xf32> to vector<2x32xf32>
    %149 = vector.extract_strided_slice %147 {offsets = [0, 32], sizes = [2, 32], strides = [1, 1]} : vector<2x128xf32> to vector<2x32xf32>
    %150 = vector.extract_strided_slice %147 {offsets = [0, 64], sizes = [2, 32], strides = [1, 1]} : vector<2x128xf32> to vector<2x32xf32>
    %151 = vector.extract_strided_slice %147 {offsets = [0, 96], sizes = [2, 32], strides = [1, 1]} : vector<2x128xf32> to vector<2x32xf32>
    %152 = arith.mulf %149, %133 : vector<2x32xf32>
    %153 = arith.mulf %148, %150 : vector<2x32xf32>
    %154 = arith.addf %152, %153 : vector<2x32xf32>
    %155 = math.tanh %154 : vector<2x32xf32>
    %156 = arith.mulf %151, %155 : vector<2x32xf32>
    %157 = vector.extract_strided_slice %42 {offsets = [5, 0], sizes = [1, 128], strides = [1, 1]} : vector<16x128xf32> to vector<1x128xf32>
    %158 = vector.extract_strided_slice %42 {offsets = [13, 0], sizes = [1, 128], strides = [1, 1]} : vector<16x128xf32> to vector<1x128xf32>
    %159 = tpu.concatenate %157, %158 in 0 : vector<1x128xf32>, vector<1x128xf32> -> vector<2x128xf32>
    %cst_28 = arith.constant dense<0.000000e+00> : vector<2x128xf32>
    %160 = tpu.matmul %156, %43, %cst_28 {dimension_numbers = #tpu.dot_dimension_numbers<[1], [0], [0], [1], [0, 0, 1, 1], [], []>, precision = #tpu.contract_precision<fp32>} : vector<2x32xf32>, vector<32x128xf32>, vector<2x128xf32> -> vector<2x128xf32>
    %161 = arith.addf %159, %160 : vector<2x128xf32>
    %162 = math.tanh %161 : vector<2x128xf32>
    %163 = arith.negf %161 : vector<2x128xf32>
    %164 = math.exp %163 : vector<2x128xf32>
    %cst_29 = arith.constant 1.000000e+00 : f32
    %165 = vector.broadcast %cst_29 : f32 to vector<2x128xf32>
    %166 = arith.addf %165, %164 : vector<2x128xf32>
    %167 = arith.divf %165, %166 : vector<2x128xf32>
    %168 = arith.select %49, %162, %167 : vector<2x128xi1>, vector<2x128xf32>
    %169 = vector.extract_strided_slice %168 {offsets = [0, 0], sizes = [2, 32], strides = [1, 1]} : vector<2x128xf32> to vector<2x32xf32>
    %170 = vector.extract_strided_slice %168 {offsets = [0, 32], sizes = [2, 32], strides = [1, 1]} : vector<2x128xf32> to vector<2x32xf32>
    %171 = vector.extract_strided_slice %168 {offsets = [0, 64], sizes = [2, 32], strides = [1, 1]} : vector<2x128xf32> to vector<2x32xf32>
    %172 = vector.extract_strided_slice %168 {offsets = [0, 96], sizes = [2, 32], strides = [1, 1]} : vector<2x128xf32> to vector<2x32xf32>
    %173 = arith.mulf %170, %154 : vector<2x32xf32>
    %174 = arith.mulf %169, %171 : vector<2x32xf32>
    %175 = arith.addf %173, %174 : vector<2x32xf32>
    %176 = math.tanh %175 : vector<2x32xf32>
    %177 = arith.mulf %172, %176 : vector<2x32xf32>
    %178 = vector.extract_strided_slice %42 {offsets = [6, 0], sizes = [1, 128], strides = [1, 1]} : vector<16x128xf32> to vector<1x128xf32>
    %179 = vector.extract_strided_slice %42 {offsets = [14, 0], sizes = [1, 128], strides = [1, 1]} : vector<16x128xf32> to vector<1x128xf32>
    %180 = tpu.concatenate %178, %179 in 0 : vector<1x128xf32>, vector<1x128xf32> -> vector<2x128xf32>
    %cst_30 = arith.constant dense<0.000000e+00> : vector<2x128xf32>
    %181 = tpu.matmul %177, %43, %cst_30 {dimension_numbers = #tpu.dot_dimension_numbers<[1], [0], [0], [1], [0, 0, 1, 1], [], []>, precision = #tpu.contract_precision<fp32>} : vector<2x32xf32>, vector<32x128xf32>, vector<2x128xf32> -> vector<2x128xf32>
    %182 = arith.addf %180, %181 : vector<2x128xf32>
    %183 = math.tanh %182 : vector<2x128xf32>
    %184 = arith.negf %182 : vector<2x128xf32>
    %185 = math.exp %184 : vector<2x128xf32>
    %cst_31 = arith.constant 1.000000e+00 : f32
    %186 = vector.broadcast %cst_31 : f32 to vector<2x128xf32>
    %187 = arith.addf %186, %185 : vector<2x128xf32>
    %188 = arith.divf %186, %187 : vector<2x128xf32>
    %189 = arith.select %49, %183, %188 : vector<2x128xi1>, vector<2x128xf32>
    %190 = vector.extract_strided_slice %189 {offsets = [0, 0], sizes = [2, 32], strides = [1, 1]} : vector<2x128xf32> to vector<2x32xf32>
    %191 = vector.extract_strided_slice %189 {offsets = [0, 32], sizes = [2, 32], strides = [1, 1]} : vector<2x128xf32> to vector<2x32xf32>
    %192 = vector.extract_strided_slice %189 {offsets = [0, 64], sizes = [2, 32], strides = [1, 1]} : vector<2x128xf32> to vector<2x32xf32>
    %193 = vector.extract_strided_slice %189 {offsets = [0, 96], sizes = [2, 32], strides = [1, 1]} : vector<2x128xf32> to vector<2x32xf32>
    %194 = arith.mulf %191, %175 : vector<2x32xf32>
    %195 = arith.mulf %190, %192 : vector<2x32xf32>
    %196 = arith.addf %194, %195 : vector<2x32xf32>
    %197 = math.tanh %196 : vector<2x32xf32>
    %198 = arith.mulf %193, %197 : vector<2x32xf32>
    %199 = vector.extract_strided_slice %42 {offsets = [7, 0], sizes = [1, 128], strides = [1, 1]} : vector<16x128xf32> to vector<1x128xf32>
    %200 = vector.extract_strided_slice %42 {offsets = [15, 0], sizes = [1, 128], strides = [1, 1]} : vector<16x128xf32> to vector<1x128xf32>
    %201 = tpu.concatenate %199, %200 in 0 : vector<1x128xf32>, vector<1x128xf32> -> vector<2x128xf32>
    %cst_32 = arith.constant dense<0.000000e+00> : vector<2x128xf32>
    %202 = tpu.matmul %198, %43, %cst_32 {dimension_numbers = #tpu.dot_dimension_numbers<[1], [0], [0], [1], [0, 0, 1, 1], [], []>, precision = #tpu.contract_precision<fp32>} : vector<2x32xf32>, vector<32x128xf32>, vector<2x128xf32> -> vector<2x128xf32>
    %203 = arith.addf %201, %202 : vector<2x128xf32>
    %204 = math.tanh %203 : vector<2x128xf32>
    %205 = arith.negf %203 : vector<2x128xf32>
    %206 = math.exp %205 : vector<2x128xf32>
    %cst_33 = arith.constant 1.000000e+00 : f32
    %207 = vector.broadcast %cst_33 : f32 to vector<2x128xf32>
    %208 = arith.addf %207, %206 : vector<2x128xf32>
    %209 = arith.divf %207, %208 : vector<2x128xf32>
    %210 = arith.select %49, %204, %209 : vector<2x128xi1>, vector<2x128xf32>
    %211 = vector.extract_strided_slice %210 {offsets = [0, 0], sizes = [2, 32], strides = [1, 1]} : vector<2x128xf32> to vector<2x32xf32>
    %212 = vector.extract_strided_slice %210 {offsets = [0, 32], sizes = [2, 32], strides = [1, 1]} : vector<2x128xf32> to vector<2x32xf32>
    %213 = vector.extract_strided_slice %210 {offsets = [0, 64], sizes = [2, 32], strides = [1, 1]} : vector<2x128xf32> to vector<2x32xf32>
    %214 = vector.extract_strided_slice %210 {offsets = [0, 96], sizes = [2, 32], strides = [1, 1]} : vector<2x128xf32> to vector<2x32xf32>
    %215 = arith.mulf %212, %196 : vector<2x32xf32>
    %216 = arith.mulf %211, %213 : vector<2x32xf32>
    %217 = arith.addf %215, %216 : vector<2x32xf32>
    %218 = math.tanh %217 : vector<2x32xf32>
    %219 = arith.mulf %214, %218 : vector<2x32xf32>
    %c0_34 = arith.constant 0 : index
    %c0_35 = arith.constant 0 : index
    %220 = vector.load %arg7[%c0_34, %c0_35] : memref<32x16xf32, #tpu.memory_space<vmem>>, vector<32x16xf32>
    %cst_36 = arith.constant dense<0.000000e+00> : vector<2x16xf32>
    %221 = tpu.matmul %219, %220, %cst_36 {dimension_numbers = #tpu.dot_dimension_numbers<[1], [0], [0], [1], [0, 0, 1, 1], [], []>, precision = #tpu.contract_precision<fp32>} : vector<2x32xf32>, vector<32x16xf32>, vector<2x16xf32> -> vector<2x16xf32>
    %c0_37 = arith.constant 0 : index
    %c0_38 = arith.constant 0 : index
    %222 = vector.load %arg8[%c0_37, %c0_38] : memref<1x16xf32, #tpu.memory_space<vmem>>, vector<1x16xf32>
    %223 = vector.broadcast %222 : vector<1x16xf32> to vector<2x16xf32>
    %224 = arith.addf %221, %223 : vector<2x16xf32>
    %225 = math.tanh %224 : vector<2x16xf32>
    %c0_39 = arith.constant 0 : index
    %c0_40 = arith.constant 0 : index
    %226 = vector.load %arg9[%c0_39, %c0_40] : memref<16x16xf32, #tpu.memory_space<vmem>>, vector<16x16xf32>
    %cst_41 = arith.constant dense<0.000000e+00> : vector<2x16xf32>
    %227 = tpu.matmul %225, %226, %cst_41 {dimension_numbers = #tpu.dot_dimension_numbers<[1], [0], [0], [1], [0, 0, 1, 1], [], []>, precision = #tpu.contract_precision<fp32>} : vector<2x16xf32>, vector<16x16xf32>, vector<2x16xf32> -> vector<2x16xf32>
    %c0_42 = arith.constant 0 : index
    %c0_43 = arith.constant 0 : index
    %228 = vector.load %arg10[%c0_42, %c0_43] : memref<1x16xf32, #tpu.memory_space<vmem>>, vector<1x16xf32>
    %229 = vector.broadcast %228 : vector<1x16xf32> to vector<2x16xf32>
    %230 = arith.addf %227, %229 : vector<2x16xf32>
    %231 = math.tanh %230 : vector<2x16xf32>
    %c0_44 = arith.constant 0 : index
    %c0_45 = arith.constant 0 : index
    %232 = vector.load %arg11[%c0_44, %c0_45] : memref<16x128xf32, #tpu.memory_space<vmem>>, vector<16x128xf32>
    %cst_46 = arith.constant dense<0.000000e+00> : vector<2x128xf32>
    %233 = tpu.matmul %231, %232, %cst_46 {dimension_numbers = #tpu.dot_dimension_numbers<[1], [0], [0], [1], [0, 0, 1, 1], [], []>, precision = #tpu.contract_precision<fp32>} : vector<2x16xf32>, vector<16x128xf32>, vector<2x128xf32> -> vector<2x128xf32>
    %c0_47 = arith.constant 0 : index
    %c0_48 = arith.constant 0 : index
    %234 = vector.load %arg12[%c0_47, %c0_48] : memref<1x128xf32, #tpu.memory_space<vmem>>, vector<1x128xf32>
    %235 = vector.broadcast %234 : vector<1x128xf32> to vector<2x128xf32>
    %236 = arith.addf %233, %235 : vector<2x128xf32>
    %c0_49 = arith.constant 0 : index
    %c0_50 = arith.constant 0 : index
    %c0_51 = arith.constant 0 : index
    %237 = vector.load %arg13[%c0_49, %c0_50, %c0_51] : memref<1x2x128xf32, #tpu.memory_space<vmem>>, vector<1x2x128xf32>
    %238 = vector.shape_cast %237 : vector<1x2x128xf32> to vector<2x128xf32>
    %239 = vector.shape_cast %236 : vector<2x128xf32> to vector<1x2x128xf32>
    tpu.vector_store %arg13[%c0_49, %c0_50, %c0_51], %239 {strides = array<i32>} : memref<1x2x128xf32, #tpu.memory_space<vmem>>, vector<1x2x128xf32>,
    return
  }
  func.func @transform_0(%arg0: i32) -> (i32, i32, i32, i32) {
    %c0_i32 = arith.constant 0 : i32
    %c0_i32_0 = arith.constant 0 : i32
    %c0_i32_1 = arith.constant 0 : i32
    %c0_i32_2 = arith.constant 0 : i32
    return %arg0, %c0_i32, %c0_i32_0, %c0_i32_1 : i32, i32, i32, i32
  }
  func.func @transform_1(%arg0: i32) -> (i32, i32) {
    %c0_i32 = arith.constant 0 : i32
    %c0_i32_0 = arith.constant 0 : i32
    %c0_i32_1 = arith.constant 0 : i32
    return %c0_i32, %c0_i32_0 : i32, i32
  }
  func.func @transform_2(%arg0: i32) -> (i32, i32) {
    %c0_i32 = arith.constant 0 : i32
    %c0_i32_0 = arith.constant 0 : i32
    %c0_i32_1 = arith.constant 0 : i32
    return %c0_i32, %c0_i32_0 : i32, i32
  }
  func.func @transform_3(%arg0: i32) -> (i32, i32) {
    %c0_i32 = arith.constant 0 : i32
    %c0_i32_0 = arith.constant 0 : i32
    %c0_i32_1 = arith.constant 0 : i32
    return %c0_i32, %c0_i32_0 : i32, i32
  }
  func.func @transform_4(%arg0: i32) -> (i32, i32) {
    %c0_i32 = arith.constant 0 : i32
    %c0_i32_0 = arith.constant 0 : i32
    %c0_i32_1 = arith.constant 0 : i32
    return %c0_i32, %c0_i32_0 : i32, i32
  }
  func.func @transform_5(%arg0: i32) -> (i32, i32) {
    %c0_i32 = arith.constant 0 : i32
    %c0_i32_0 = arith.constant 0 : i32
    %c0_i32_1 = arith.constant 0 : i32
    return %c0_i32, %c0_i32_0 : i32, i32
  }
  func.func @transform_6(%arg0: i32) -> (i32, i32) {
    %c0_i32 = arith.constant 0 : i32
    %c0_i32_0 = arith.constant 0 : i32
    %c0_i32_1 = arith.constant 0 : i32
    return %c0_i32, %c0_i32_0 : i32, i32
  }
  func.func @transform_7(%arg0: i32) -> (i32, i32) {
    %c0_i32 = arith.constant 0 : i32
    %c0_i32_0 = arith.constant 0 : i32
    %c0_i32_1 = arith.constant 0 : i32
    return %c0_i32, %c0_i32_0 : i32, i32
  }
  func.func @transform_8(%arg0: i32) -> (i32, i32) {
    %c0_i32 = arith.constant 0 : i32
    %c0_i32_0 = arith.constant 0 : i32
    %c0_i32_1 = arith.constant 0 : i32
    return %c0_i32, %c0_i32_0 : i32, i32
  }
  func.func @transform_9(%arg0: i32) -> (i32, i32) {
    %c0_i32 = arith.constant 0 : i32
    %c0_i32_0 = arith.constant 0 : i32
    %c0_i32_1 = arith.constant 0 : i32
    return %c0_i32, %c0_i32_0 : i32, i32
  }
  func.func @transform_10(%arg0: i32) -> (i32, i32) {
    %c0_i32 = arith.constant 0 : i32
    %c0_i32_0 = arith.constant 0 : i32
    %c0_i32_1 = arith.constant 0 : i32
    return %c0_i32, %c0_i32_0 : i32, i32
  }
  func.func @transform_11(%arg0: i32) -> (i32, i32) {
    %c0_i32 = arith.constant 0 : i32
    %c0_i32_0 = arith.constant 0 : i32
    %c0_i32_1 = arith.constant 0 : i32
    return %c0_i32, %c0_i32_0 : i32, i32
  }
  func.func @transform_12(%arg0: i32) -> (i32, i32, i32) {
    %c0_i32 = arith.constant 0 : i32
    %c0_i32_0 = arith.constant 0 : i32
    %c0_i32_1 = arith.constant 0 : i32
    return %arg0, %c0_i32, %c0_i32_0 : i32, i32, i32
  }
}

</mosaic_0001>

<llo_original>
// kernel: tpu_custom_call.1
$region0: #{tpu_custom_call.1}
  #allocation0 [shape = 'u32[]', space=smem, size = 0x4, offset = 0x4, fixed_abs, tag = 'smem constant byte address 0x4 - core index']
  #allocation1 [shape = 'u32[144,128]{1,0:T(1,128)}', space=vmem, size = 0x12000, scoped, tag = 'internal scratch']
  %s0 = inlined_call_operand.vmem [shape: f32[1,2,4,512], index: 0, kind: input, shape index: {}]
  %s1 = inlined_call_operand.hbm [shape: f32[8,12], index: 1, kind: input, shape index: {}]
  %s2 = inlined_call_operand.vmem [shape: f32[8,1], index: 2, kind: input, shape index: {}]
  %s3 = inlined_call_operand.hbm [shape: f32[512,128], index: 3, kind: input, shape index: {}]
  %s4 = inlined_call_operand.vmem [shape: f32[32,128], index: 4, kind: input, shape index: {}]
  %s5 = inlined_call_operand.vmem [shape: f32[1,128], index: 5, kind: input, shape index: {}]
  %s6 = inlined_call_operand.vmem [shape: f32[32,16], index: 6, kind: input, shape index: {}]
  %s7 = inlined_call_operand.vmem [shape: f32[1,16], index: 7, kind: input, shape index: {}]
  %s8 = inlined_call_operand.hbm [shape: f32[16,16], index: 8, kind: input, shape index: {}]
  %s9 = inlined_call_operand.vmem [shape: f32[1,16], index: 9, kind: input, shape index: {}]
  %s10 = inlined_call_operand.hbm [shape: f32[16,128], index: 10, kind: input, shape index: {}]
  %s11 = inlined_call_operand.vmem [shape: f32[1,128], index: 11, kind: input, shape index: {}]
  %s12 = inlined_call_operand.hbm [shape: f32[1,2,128], index: 12, kind: output, shape index: {}]
  %s13 = sld [smem:[#allocation0]]
  $region74: #{tpu_custom_call.1} parent=0
    _
  %s15 = ssub.s32 1, %s13
  %s16 = scalar_select 0, %s15, %s13
  $region1: #{tpu_custom_call.1} parent=0
    #allocation2 [shape = 'u8[4096]{0}', space=vmem, size = 0x1000, scoped, tag = 'input window, operand 1, single buffered']
    #allocation3 [shape = 's32[1]{0}', space=sflag, size = 0x4, scoped, tag = 'scoped memory for tpu_custom_call.1']
    #allocation4 [shape = 's32[1]{0}', space=sflag, size = 0x4, scoped, tag = 'scoped memory for tpu_custom_call.1']
    #allocation5 [shape = 'u8[262144]{0}', space=vmem, size = 0x40000, scoped, tag = 'input window, operand 3, single buffered']
    #allocation6 [shape = 's32[1]{0}', space=sflag, size = 0x4, scoped, tag = 'scoped memory for tpu_custom_call.1']
    #allocation7 [shape = 'u8[8192]{0}', space=vmem, size = 0x2000, scoped, tag = 'input window, operand 8, single buffered']
    #allocation8 [shape = 'u8[8192]{0}', space=vmem, size = 0x2000, scoped, tag = 'input window, operand 10, single buffered']
    #allocation9 [shape = 's32[1]{0}', space=sflag, size = 0x4, scoped, tag = 'scoped memory for tpu_custom_call.1']
    #allocation10 [shape = 'u8[1024]{0}', space=vmem, size = 0x400, scoped, tag = 'output window, operand 0, single buffered']
    %17 = vsyncpa [#allocation3], 0
    %18 = vsyncpa [#allocation6], 0
    %19 = vsyncpa [#allocation9], 0
    %20 = vsyncpa [#allocation4], 0
    // Predicated region
    $region2: #{tpu_custom_call.1} parent=1 // pred_check
      _
    $region3: #{tpu_custom_call.1} parent=1 // pred_check_branch
      %22 = sbr.rel (0) target = $region5
    $region4: #{tpu_custom_call.1} parent=1 // pred_region
      _
    $region5: #{tpu_custom_call.1} parent=1 // pred_fallthru
      _
    // Predicated region
    $region6: #{tpu_custom_call.1} parent=1 // pred_check
      _
    $region7: #{tpu_custom_call.1} parent=1 // pred_check_branch
      %24 = sbr.rel (0) target = $region9
    $region8: #{tpu_custom_call.1} parent=1 // pred_region
      %s26 = ssub.s32 128, 128
      %27 = vsyncadd [#allocation3], %s26
      %s29 = sshll.u32 [#allocation2], 4
      %s30 = int_to_ptr.vmem [resolvable:$true] %s29
      %32 = dma.hbm_to_vmem [thread:$0]  %s1, 128, %s30, [#allocation3]
    $region9: #{tpu_custom_call.1} parent=1 // pred_fallthru
      _
    // Predicated region
    $region10: #{tpu_custom_call.1} parent=1 // pred_check
      _
    $region11: #{tpu_custom_call.1} parent=1 // pred_check_branch
      %34 = sbr.rel (0) target = $region13
    $region12: #{tpu_custom_call.1} parent=1 // pred_region
      _
    $region13: #{tpu_custom_call.1} parent=1 // pred_fallthru
      _
    // Predicated region
    $region14: #{tpu_custom_call.1} parent=1 // pred_check
      _
    $region15: #{tpu_custom_call.1} parent=1 // pred_check_branch
      %36 = sbr.rel (0) target = $region17
    $region16: #{tpu_custom_call.1} parent=1 // pred_region
      %s38 = ssub.s32 8192, 8192
      %39 = vsyncadd [#allocation6], %s38
      %s40 = sshll.u32 [#allocation5], 4
      %s41 = int_to_ptr.vmem [resolvable:$true] %s40
      %46 = dma.hbm_to_vmem [thread:$0]  %s3, 8192, %s41, [#allocation6], 128, 128, 8
    $region17: #{tpu_custom_call.1} parent=1 // pred_fallthru
      _
    // Predicated region
    $region18: #{tpu_custom_call.1} parent=1 // pred_check
      _
    $region19: #{tpu_custom_call.1} parent=1 // pred_check_branch
      %48 = sbr.rel (0) target = $region21
    $region20: #{tpu_custom_call.1} parent=1 // pred_region
      _
    $region21: #{tpu_custom_call.1} parent=1 // pred_fallthru
      _
    // Predicated region
    $region22: #{tpu_custom_call.1} parent=1 // pred_check
      _
    $region23: #{tpu_custom_call.1} parent=1 // pred_check_branch
      %50 = sbr.rel (0) target = $region25
    $region24: #{tpu_custom_call.1} parent=1 // pred_region
      _
    $region25: #{tpu_custom_call.1} parent=1 // pred_fallthru
      _
    // Predicated region
    $region26: #{tpu_custom_call.1} parent=1 // pred_check
      _
    $region27: #{tpu_custom_call.1} parent=1 // pred_check_branch
      %52 = sbr.rel (0) target = $region29
    $region28: #{tpu_custom_call.1} parent=1 // pred_region
      _
    $region29: #{tpu_custom_call.1} parent=1 // pred_fallthru
      _
    // Predicated region
    $region30: #{tpu_custom_call.1} parent=1 // pred_check
      _
    $region31: #{tpu_custom_call.1} parent=1 // pred_check_branch
      %54 = sbr.rel (0) target = $region33
    $region32: #{tpu_custom_call.1} parent=1 // pred_region
      _
    $region33: #{tpu_custom_call.1} parent=1 // pred_fallthru
      _
    // Predicated region
    $region34: #{tpu_custom_call.1} parent=1 // pred_check
      _
    $region35: #{tpu_custom_call.1} parent=1 // pred_check_branch
      %56 = sbr.rel (0) target = $region37
    $region36: #{tpu_custom_call.1} parent=1 // pred_region
      %s58 = ssub.s32 256, 256
      %59 = vsyncadd [#allocation6], %s58
      %s60 = sshll.u32 [#allocation7], 4
      %s61 = int_to_ptr.vmem [resolvable:$true] %s60
      %66 = dma.hbm_to_vmem [thread:$0]  %s8, 256, %s61, [#allocation6], 128, 128, 8
    $region37: #{tpu_custom_call.1} parent=1 // pred_fallthru
      _
    // Predicated region
    $region38: #{tpu_custom_call.1} parent=1 // pred_check
      _
    $region39: #{tpu_custom_call.1} parent=1 // pred_check_branch
      %68 = sbr.rel (0) target = $region41
    $region40: #{tpu_custom_call.1} parent=1 // pred_region
      _
    $region41: #{tpu_custom_call.1} parent=1 // pred_fallthru
      _
    // Predicated region
    $region42: #{tpu_custom_call.1} parent=1 // pred_check
      _
    $region43: #{tpu_custom_call.1} parent=1 // pred_check_branch
      %70 = sbr.rel (0) target = $region45
    $region44: #{tpu_custom_call.1} parent=1 // pred_region
      %s72 = ssub.s32 256, 256
      %73 = vsyncadd [#allocation9], %s72
      %s74 = sshll.u32 [#allocation8], 4
      %s75 = int_to_ptr.vmem [resolvable:$true] %s74
      %80 = dma.hbm_to_vmem [thread:$0]  %s10, 256, %s75, [#allocation9], 128, 128, 8
    $region45: #{tpu_custom_call.1} parent=1 // pred_fallthru
      _
    // Predicated region
    $region46: #{tpu_custom_call.1} parent=1 // pred_check
      _
    $region47: #{tpu_custom_call.1} parent=1 // pred_check_branch
      %82 = sbr.rel (0) target = $region49
    $region48: #{tpu_custom_call.1} parent=1 // pred_region
      _
    $region49: #{tpu_custom_call.1} parent=1 // pred_fallthru
      _
    // Predicated region
    $region50: #{tpu_custom_call.1} parent=1 // pred_check
      _
    $region51: #{tpu_custom_call.1} parent=1 // pred_check_branch
      %84 = sbr.rel (0) target = $region53
    $region52: #{tpu_custom_call.1} parent=1 // pred_region
      %85 = dma.done [#allocation3], 128
    $region53: #{tpu_custom_call.1} parent=1 // pred_fallthru
      _
    // Predicated region
    $region54: #{tpu_custom_call.1} parent=1 // pred_check
      _
    $region55: #{tpu_custom_call.1} parent=1 // pred_check_branch
      %87 = sbr.rel (0) target = $region57
    $region56: #{tpu_custom_call.1} parent=1 // pred_region
      %88 = dma.done [#allocation6], 8192
    $region57: #{tpu_custom_call.1} parent=1 // pred_fallthru
      _
    // Predicated region
    $region58: #{tpu_custom_call.1} parent=1 // pred_check
      _
    $region59: #{tpu_custom_call.1} parent=1 // pred_check_branch
      %90 = sbr.rel (0) target = $region61
    $region60: #{tpu_custom_call.1} parent=1 // pred_region
      %91 = dma.done [#allocation6], 256
    $region61: #{tpu_custom_call.1} parent=1 // pred_fallthru
      _
    // Predicated region
    $region62: #{tpu_custom_call.1} parent=1 // pred_check
      _
    $region63: #{tpu_custom_call.1} parent=1 // pred_check_branch
      %93 = sbr.rel (0) target = $region65
    $region64: #{tpu_custom_call.1} parent=1 // pred_region
      %94 = dma.done [#allocation9], 256
    $region65: #{tpu_custom_call.1} parent=1 // pred_fallthru
      _
    %v95 = vld [vmem:[%s0] sm:$0xff]
    %v96 = vld [vmem:[%s0 + $0x8] sm:$0xff]
    %v97 = vld [vmem:[%s0 + $0x10] sm:$0xff]
    %v98 = vld [vmem:[%s0 + $0x18] sm:$0xff]
    %v103 = vcombine.high %v95, %v95
    %v104 = vcombine.high %v96, %v96
    %v105 = vcombine.high %v97, %v97
    %v106 = vcombine.high %v98, %v98
    %107 = vrot.lane.b32.xlu0 %v95, 1
    %v108 = vpop.permute.xlu0 %107
    %109 = vrot.lane.b32.xlu0 %v103, 1
    %v110 = vpop.permute.xlu0 %109
    %111 = vrot.lane.b32.xlu0 %v96, 1
    %v112 = vpop.permute.xlu0 %111
    %113 = vrot.lane.b32.xlu0 %v104, 1
    %v114 = vpop.permute.xlu0 %113
    %115 = vrot.lane.b32.xlu0 %v97, 1
    %v116 = vpop.permute.xlu0 %115
    %117 = vrot.lane.b32.xlu0 %v105, 1
    %v118 = vpop.permute.xlu0 %117
    %119 = vrot.lane.b32.xlu0 %v98, 1
    %v120 = vpop.permute.xlu0 %119
    %121 = vrot.lane.b32.xlu0 %v106, 1
    %v122 = vpop.permute.xlu0 %121
    %vm123 = vcmask 7168
    %v124 = vsel %vm123, %v108, %v110
    %v125 = vsel %vm123, %v110, %v112
    %v126 = vsel %vm123, %v112, %v114
    %v127 = vsel %vm123, %v116, %v118
    %v128 = vsel %vm123, %v118, %v120
    %v129 = vsel %vm123, %v120, %v122
    %v140 = vsel %vm123, 0.0, %v108
    %v141 = vsel %vm123, 0.0, %v116
    %v142 = vsel %vm123, %v114, 0.0
    %v143 = vsel %vm123, %v122, 0.0
    %146 = vrot.lane.b32.xlu0 %v140, 127
    %v147 = vpop.permute.xlu0 %146
    %148 = vrot.lane.b32.xlu0 %v124, 127
    %v149 = vpop.permute.xlu0 %148
    %150 = vrot.lane.b32.xlu0 %v125, 127
    %v151 = vpop.permute.xlu0 %150
    %152 = vrot.lane.b32.xlu0 %v126, 127
    %v153 = vpop.permute.xlu0 %152
    %154 = vrot.lane.b32.xlu0 %v142, 127
    %v155 = vpop.permute.xlu0 %154
    %vm156 = vcmask 1039360
    %v157 = vsel %vm156, %v147, %v149
    %v158 = vsel %vm156, %v149, %v151
    %v159 = vsel %vm156, %v151, %v153
    %v160 = vsel %vm156, %v153, %v155
    %163 = vrot.lane.b32.xlu0 %v141, 127
    %v164 = vpop.permute.xlu0 %163
    %165 = vrot.lane.b32.xlu0 %v127, 127
    %v166 = vpop.permute.xlu0 %165
    %167 = vrot.lane.b32.xlu0 %v128, 127
    %v168 = vpop.permute.xlu0 %167
    %169 = vrot.lane.b32.xlu0 %v129, 127
    %v170 = vpop.permute.xlu0 %169
    %171 = vrot.lane.b32.xlu0 %v143, 127
    %v172 = vpop.permute.xlu0 %171
    %v173 = vsel %vm156, %v164, %v166
    %v174 = vsel %vm156, %v166, %v168
    %v175 = vsel %vm156, %v168, %v170
    %v176 = vsel %vm156, %v170, %v172
    %177 = vrot.lane.b32.xlu0 %v140, 126
    %v178 = vpop.permute.xlu0 %177
    %179 = vrot.lane.b32.xlu0 %v124, 126
    %v180 = vpop.permute.xlu0 %179
    %181 = vrot.lane.b32.xlu0 %v125, 126
    %v182 = vpop.permute.xlu0 %181
    %183 = vrot.lane.b32.xlu0 %v126, 126
    %v184 = vpop.permute.xlu0 %183
    %185 = vrot.lane.b32.xlu0 %v142, 126
    %v186 = vpop.permute.xlu0 %185
    %vm187 = vcmask 1031168
    %v188 = vsel %vm187, %v178, %v180
    %v189 = vsel %vm187, %v180, %v182
    %v190 = vsel %vm187, %v182, %v184
    %v191 = vsel %vm187, %v184, %v186
    %192 = vrot.lane.b32.xlu0 %v141, 126
    %v193 = vpop.permute.xlu0 %192
    %194 = vrot.lane.b32.xlu0 %v127, 126
    %v195 = vpop.permute.xlu0 %194
    %196 = vrot.lane.b32.xlu0 %v128, 126
    %v197 = vpop.permute.xlu0 %196
    %198 = vrot.lane.b32.xlu0 %v129, 126
    %v199 = vpop.permute.xlu0 %198
    %200 = vrot.lane.b32.xlu0 %v143, 126
    %v201 = vpop.permute.xlu0 %200
    %v202 = vsel %vm187, %v193, %v195
    %v203 = vsel %vm187, %v195, %v197
    %v204 = vsel %vm187, %v197, %v199
    %v205 = vsel %vm187, %v199, %v201
    %v206 = vrot.slane %v157, 4
    %v207 = vrot.slane %v158, 4
    %v208 = vrot.slane %v159, 4
    %v209 = vrot.slane %v160, 4
    %v210 = vrot.slane %v173, 4
    %v211 = vrot.slane %v174, 4
    %v212 = vrot.slane %v175, 4
    %v213 = vrot.slane %v176, 4
    %vm222 = vcmask 1043456
    %v223 = vsel %vm222, %v140, %v206
    %v224 = vsel %vm222, %v124, %v207
    %v225 = vsel %vm222, %v125, %v208
    %v226 = vsel %vm222, %v126, %v209
    %v227 = vsel %vm222, %v141, %v210
    %v228 = vsel %vm222, %v127, %v211
    %v229 = vsel %vm222, %v128, %v212
    %v230 = vsel %vm222, %v129, %v213
    %v231 = vld [vmem:[#allocation2] sm:$0xff]
    %v232 = vld [vmem:[%s2] sm:$0xff]
    %234 = vset.pattern.permute.xlu0 0
    %235 = vperm.xlu0 %234, %v232
    %v236 = vpop.permute.xlu0 %235
    %vm238 = vcmask 97280
    %v240 = vsel %vm238, %v231, 0
    %v242 = vsel %vm222, %v188, 0
    %v244 = vsel %vm222, %v189, 0
    %v246 = vsel %vm222, %v190, 0
    %v248 = vsel %vm222, %v191, 0
    %v250 = vsel %vm222, %v202, 0
    %v252 = vsel %vm222, %v203, 0
    %v254 = vsel %vm222, %v204, 0
    %v256 = vsel %vm222, %v205, 0
    %258 = vmatprep.subr.mxu0 0.0
    %259 = vmatpush1.msra.mxu0 0.0
    %260 = vmatprep.subr.mxu0 0.0
    %261 = vmatpush1.msra.mxu0 0.0
    %262 = vmatprep.subr.mxu0 0.0
    %263 = vmatpush1.msra.mxu0 0.0
    %264 = vmatprep.subr.mxu0 0.0
    %265 = vmatpush1.msra.mxu0 0.0
    %266 = vmatprep.subr.mxu0 0.0
    %267 = vmatpush1.msra.mxu0 0.0
    %268 = vmatprep.subr.mxu0 0.0
    %269 = vmatpush1.msra.mxu0 0.0
    %270 = vmatprep.subr.mxu0 0.0
    %271 = vmatpush1.msra.mxu0 0.0
    %272 = vmatprep.subr.mxu0 0.0
    %273 = vmatpush1.msra.mxu0 0.0
    %274 = vmatprep.subr.mxu0 0.0
    %275 = vmatpush1.msra.mxu0 0.0
    %276 = vmatprep.subr.mxu0 0.0
    %277 = vmatpush1.msra.mxu0 0.0
    %278 = vmatprep.subr.mxu0 0.0
    %279 = vmatpush1.msra.mxu0 0.0
    %280 = vmatprep.subr.mxu0 0.0
    %281 = vmatpush1.msra.mxu0 0.0
    %282 = vmatprep.subr.mxu0 0.0
    %283 = vmatpush1.msra.mxu0 0.0
    %284 = vmatprep.subr.mxu0 0.0
    %285 = vmatpush1.msra.mxu0 0.0
    %v286 = vand.u32 %v244, 4294901760
    %287 = vmatprep.subr.mxu0 %v286
    %v288 = vand.u32 %v242, 4294901760
    %289 = vmatpush1.msra.mxu0 %v288
    %v290 = vand.u32 %v224, 4294901760
    %291 = vmatprep.subr.mxu0 %v290
    %v292 = vand.u32 %v223, 4294901760
    %293 = vmatpush1.msra.mxu0 %v292
    %294 = vmatprep.subr.mxu0 0.0
    %295 = vmatpush2.msra.mxu0 0.0
    %296 = vmatprep.subr.mxu0 0.0
    %297 = vmatpush2.msra.mxu0 0.0
    %298 = vmatprep.subr.mxu0 0.0
    %299 = vmatpush2.msra.mxu0 0.0
    %300 = vmatprep.subr.mxu0 0.0
    %301 = vmatpush2.msra.mxu0 0.0
    %302 = vmatprep.subr.mxu0 0.0
    %303 = vmatpush2.msra.mxu0 0.0
    %304 = vmatprep.subr.mxu0 0.0
    %305 = vmatpush2.msra.mxu0 0.0
    %306 = vmatprep.subr.mxu0 0.0
    %307 = vmatpush2.msra.mxu0 0.0
    %308 = vmatprep.subr.mxu0 0.0
    %309 = vmatpush2.msra.mxu0 0.0
    %310 = vmatprep.subr.mxu0 0.0
    %311 = vmatpush2.msra.mxu0 0.0
    %312 = vmatprep.subr.mxu0 0.0
    %313 = vmatpush2.msra.mxu0 0.0
    %314 = vmatprep.subr.mxu0 0.0
    %315 = vmatpush2.msra.mxu0 0.0
    %316 = vmatprep.subr.mxu0 0.0
    %317 = vmatpush2.msra.mxu0 0.0
    %318 = vmatprep.subr.mxu0 0.0
    %319 = vmatpush2.msra.mxu0 0.0
    %320 = vmatprep.subr.mxu0 0.0
    %321 = vmatpush2.msra.mxu0 0.0
    %322 = vmatprep.subr.mxu0 0.0
    %323 = vmatpush2.msra.mxu0 0.0
    %324 = vmatprep.subr.mxu0 0.0
    %325 = vmatpush2.msra.mxu0 0.0
    %326 = vmatprep.mubr.f32.mxu0 0.0
    %v327 = vand.u32 %v240, 4294901760
    %v328 = vsub.f32 %v240, %v327
    %v329 = vand.u32 %v328, 4294901760
    %v330 = vsub.f32 %v328, %v329
    %v331 = vand.u32 %v330, 4294901760
    %332 = vmatmul.mubr.f32.gmra.mxu0 %v331
    %v333 = vpop.f32.mrf.mxu0
    %v334 = vadd.f32 %v236, %v333
    %v335 = vpop.f32.mrf.mxu0
    %v336 = vadd.f32 %v236, %v335
    %337 = vdwg.mxu0
    %338 = vmatprep.subr.mxu0 0.0
    %339 = vmatpush1.msra.mxu0 0.0
    %340 = vmatprep.subr.mxu0 0.0
    %341 = vmatpush1.msra.mxu0 0.0
    %342 = vmatprep.subr.mxu0 0.0
    %343 = vmatpush1.msra.mxu0 0.0
    %344 = vmatprep.subr.mxu0 0.0
    %345 = vmatpush1.msra.mxu0 0.0
    %346 = vmatprep.subr.mxu0 0.0
    %347 = vmatpush1.msra.mxu0 0.0
    %348 = vmatprep.subr.mxu0 0.0
    %349 = vmatpush1.msra.mxu0 0.0
    %350 = vmatprep.subr.mxu0 0.0
    %351 = vmatpush1.msra.mxu0 0.0
    %352 = vmatprep.subr.mxu0 0.0
    %353 = vmatpush1.msra.mxu0 0.0
    %354 = vmatprep.subr.mxu0 0.0
    %355 = vmatpush1.msra.mxu0 0.0
    %356 = vmatprep.subr.mxu0 0.0
    %357 = vmatpush1.msra.mxu0 0.0
    %358 = vmatprep.subr.mxu0 0.0
    %359 = vmatpush1.msra.mxu0 0.0
    %360 = vmatprep.subr.mxu0 0.0
    %361 = vmatpush1.msra.mxu0 0.0
    %362 = vmatprep.subr.mxu0 0.0
    %363 = vmatpush1.msra.mxu0 0.0
    %364 = vmatprep.subr.mxu0 0.0
    %365 = vmatpush1.msra.mxu0 0.0
    %v366 = vand.u32 %v244, 4294901760
    %v367 = vsub.f32 %v244, %v366
    %v368 = vand.u32 %v367, 4294901760
    %v369 = vsub.f32 %v367, %v368
    %v370 = vand.u32 %v369, 4294901760
    %371 = vmatprep.subr.mxu0 %v370
    %v372 = vand.u32 %v242, 4294901760
    %v373 = vsub.f32 %v242, %v372
    %v374 = vand.u32 %v373, 4294901760
    %v375 = vsub.f32 %v373, %v374
    %v376 = vand.u32 %v375, 4294901760
    %377 = vmatpush1.msra.mxu0 %v376
    %v378 = vand.u32 %v224, 4294901760
    %v379 = vsub.f32 %v224, %v378
    %v380 = vand.u32 %v379, 4294901760
    %v381 = vsub.f32 %v379, %v380
    %v382 = vand.u32 %v381, 4294901760
    %383 = vmatprep.subr.mxu0 %v382
    %v384 = vand.u32 %v223, 4294901760
    %v385 = vsub.f32 %v223, %v384
    %v386 = vand.u32 %v385, 4294901760
    %v387 = vsub.f32 %v385, %v386
    %v388 = vand.u32 %v387, 4294901760
    %389 = vmatpush1.msra.mxu0 %v388
    %390 = vmatprep.subr.mxu0 0.0
    %391 = vmatpush2.msra.mxu0 0.0
    %392 = vmatprep.subr.mxu0 0.0
    %393 = vmatpush2.msra.mxu0 0.0
    %394 = vmatprep.subr.mxu0 0.0
    %395 = vmatpush2.msra.mxu0 0.0
    %396 = vmatprep.subr.mxu0 0.0
    %397 = vmatpush2.msra.mxu0 0.0
    %398 = vmatprep.subr.mxu0 0.0
    %399 = vmatpush2.msra.mxu0 0.0
    %400 = vmatprep.subr.mxu0 0.0
    %401 = vmatpush2.msra.mxu0 0.0
    %402 = vmatprep.subr.mxu0 0.0
    %403 = vmatpush2.msra.mxu0 0.0
    %404 = vmatprep.subr.mxu0 0.0
    %405 = vmatpush2.msra.mxu0 0.0
    %406 = vmatprep.subr.mxu0 0.0
    %407 = vmatpush2.msra.mxu0 0.0
    %408 = vmatprep.subr.mxu0 0.0
    %409 = vmatpush2.msra.mxu0 0.0
    %410 = vmatprep.subr.mxu0 0.0
    %411 = vmatpush2.msra.mxu0 0.0
    %412 = vmatprep.subr.mxu0 0.0
    %413 = vmatpush2.msra.mxu0 0.0
    %414 = vmatprep.subr.mxu0 0.0
    %415 = vmatpush2.msra.mxu0 0.0
    %416 = vmatprep.subr.mxu0 0.0
    %417 = vmatpush2.msra.mxu0 0.0
    %418 = vmatprep.subr.mxu0 0.0
    %419 = vmatpush2.msra.mxu0 0.0
    %420 = vmatprep.subr.mxu0 0.0
    %421 = vmatpush2.msra.mxu0 0.0
    %422 = vmatprep.mubr.f32.mxu0 0.0
    %v423 = vand.u32 %v240, 4294901760
    %424 = vmatmul.mubr.f32.gmra.mxu0 %v423
    %v425 = vpop.f32.mrf.mxu0
    %v426 = vadd.f32 %v334, %v425
    %v427 = vpop.f32.mrf.mxu0
    %v428 = vadd.f32 %v336, %v427
    %429 = vdwg.mxu0
    %430 = vmatprep.subr.mxu0 0.0
    %431 = vmatpush1.msra.mxu0 0.0
    %432 = vmatprep.subr.mxu0 0.0
    %433 = vmatpush1.msra.mxu0 0.0
    %434 = vmatprep.subr.mxu0 0.0
    %435 = vmatpush1.msra.mxu0 0.0
    %436 = vmatprep.subr.mxu0 0.0
    %437 = vmatpush1.msra.mxu0 0.0
    %438 = vmatprep.subr.mxu0 0.0
    %439 = vmatpush1.msra.mxu0 0.0
    %440 = vmatprep.subr.mxu0 0.0
    %441 = vmatpush1.msra.mxu0 0.0
    %442 = vmatprep.subr.mxu0 0.0
    %443 = vmatpush1.msra.mxu0 0.0
    %444 = vmatprep.subr.mxu0 0.0
    %445 = vmatpush1.msra.mxu0 0.0
    %446 = vmatprep.subr.mxu0 0.0
    %447 = vmatpush1.msra.mxu0 0.0
    %448 = vmatprep.subr.mxu0 0.0
    %449 = vmatpush1.msra.mxu0 0.0
    %450 = vmatprep.subr.mxu0 0.0
    %451 = vmatpush1.msra.mxu0 0.0
    %452 = vmatprep.subr.mxu0 0.0
    %453 = vmatpush1.msra.mxu0 0.0
    %454 = vmatprep.subr.mxu0 0.0
    %455 = vmatpush1.msra.mxu0 0.0
    %456 = vmatprep.subr.mxu0 0.0
    %457 = vmatpush1.msra.mxu0 0.0
    %v458 = vand.u32 %v244, 4294901760
    %v459 = vsub.f32 %v244, %v458
    %460 = vmatprep.subr.mxu0 %v459
    %v461 = vand.u32 %v242, 4294901760
    %v462 = vsub.f32 %v242, %v461
    %463 = vmatpush1.msra.mxu0 %v462
    %v464 = vand.u32 %v224, 4294901760
    %v465 = vsub.f32 %v224, %v464
    %466 = vmatprep.subr.mxu0 %v465
    %v467 = vand.u32 %v223, 4294901760
    %v468 = vsub.f32 %v223, %v467
    %469 = vmatpush1.msra.mxu0 %v468
    %470 = vmatprep.subr.mxu0 0.0
    %471 = vmatpush2.msra.mxu0 0.0
    %472 = vmatprep.subr.mxu0 0.0
    %473 = vmatpush2.msra.mxu0 0.0
    %474 = vmatprep.subr.mxu0 0.0
    %475 = vmatpush2.msra.mxu0 0.0
    %476 = vmatprep.subr.mxu0 0.0
    %477 = vmatpush2.msra.mxu0 0.0
    %478 = vmatprep.subr.mxu0 0.0
    %479 = vmatpush2.msra.mxu0 0.0
    %480 = vmatprep.subr.mxu0 0.0
    %481 = vmatpush2.msra.mxu0 0.0
    %482 = vmatprep.subr.mxu0 0.0
    %483 = vmatpush2.msra.mxu0 0.0
    %484 = vmatprep.subr.mxu0 0.0
    %485 = vmatpush2.msra.mxu0 0.0
    %486 = vmatprep.subr.mxu0 0.0
    %487 = vmatpush2.msra.mxu0 0.0
    %488 = vmatprep.subr.mxu0 0.0
    %489 = vmatpush2.msra.mxu0 0.0
    %490 = vmatprep.subr.mxu0 0.0
    %491 = vmatpush2.msra.mxu0 0.0
    %492 = vmatprep.subr.mxu0 0.0
    %493 = vmatpush2.msra.mxu0 0.0
    %494 = vmatprep.subr.mxu0 0.0
    %495 = vmatpush2.msra.mxu0 0.0
    %496 = vmatprep.subr.mxu0 0.0
    %497 = vmatpush2.msra.mxu0 0.0
    %498 = vmatprep.subr.mxu0 0.0
    %499 = vmatpush2.msra.mxu0 0.0
    %500 = vmatprep.subr.mxu0 0.0
    %501 = vmatpush2.msra.mxu0 0.0
    %502 = vmatprep.mubr.f32.mxu0 0.0
    %v503 = vand.u32 %v240, 4294901760
    %v504 = vsub.f32 %v240, %v503
    %505 = vmatmul.mubr.f32.gmra.mxu0 %v504
    %v506 = vpop.f32.mrf.mxu0
    %v507 = vadd.f32 %v426, %v506
    %v508 = vpop.f32.mrf.mxu0
    %v509 = vadd.f32 %v428, %v508
    %510 = vdwg.mxu0
    %511 = vmatprep.subr.mxu0 0.0
    %512 = vmatpush1.msra.mxu0 0.0
    %513 = vmatprep.subr.mxu0 0.0
    %514 = vmatpush1.msra.mxu0 0.0
    %515 = vmatprep.subr.mxu0 0.0
    %516 = vmatpush1.msra.mxu0 0.0
    %517 = vmatprep.subr.mxu0 0.0
    %518 = vmatpush1.msra.mxu0 0.0
    %519 = vmatprep.subr.mxu0 0.0
    %520 = vmatpush1.msra.mxu0 0.0
    %521 = vmatprep.subr.mxu0 0.0
    %522 = vmatpush1.msra.mxu0 0.0
    %523 = vmatprep.subr.mxu0 0.0
    %524 = vmatpush1.msra.mxu0 0.0
    %525 = vmatprep.subr.mxu0 0.0
    %526 = vmatpush1.msra.mxu0 0.0
    %527 = vmatprep.subr.mxu0 0.0
    %528 = vmatpush1.msra.mxu0 0.0
    %529 = vmatprep.subr.mxu0 0.0
    %530 = vmatpush1.msra.mxu0 0.0
    %531 = vmatprep.subr.mxu0 0.0
    %532 = vmatpush1.msra.mxu0 0.0
    %533 = vmatprep.subr.mxu0 0.0
    %534 = vmatpush1.msra.mxu0 0.0
    %535 = vmatprep.subr.mxu0 0.0
    %536 = vmatpush1.msra.mxu0 0.0
    %537 = vmatprep.subr.mxu0 0.0
    %538 = vmatpush1.msra.mxu0 0.0
    %v539 = vand.u32 %v244, 4294901760
    %540 = vmatprep.subr.mxu0 %v539
    %v541 = vand.u32 %v242, 4294901760
    %542 = vmatpush1.msra.mxu0 %v541
    %v543 = vand.u32 %v224, 4294901760
    %544 = vmatprep.subr.mxu0 %v543
    %v545 = vand.u32 %v223, 4294901760
    %546 = vmatpush1.msra.mxu0 %v545
    %547 = vmatprep.subr.mxu0 0.0
    %548 = vmatpush2.msra.mxu0 0.0
    %549 = vmatprep.subr.mxu0 0.0
    %550 = vmatpush2.msra.mxu0 0.0
    %551 = vmatprep.subr.mxu0 0.0
    %552 = vmatpush2.msra.mxu0 0.0
    %553 = vmatprep.subr.mxu0 0.0
    %554 = vmatpush2.msra.mxu0 0.0
    %555 = vmatprep.subr.mxu0 0.0
    %556 = vmatpush2.msra.mxu0 0.0
    %557 = vmatprep.subr.mxu0 0.0
    %558 = vmatpush2.msra.mxu0 0.0
    %559 = vmatprep.subr.mxu0 0.0
    %560 = vmatpush2.msra.mxu0 0.0
    %561 = vmatprep.subr.mxu0 0.0
    %562 = vmatpush2.msra.mxu0 0.0
    %563 = vmatprep.subr.mxu0 0.0
    %564 = vmatpush2.msra.mxu0 0.0
    %565 = vmatprep.subr.mxu0 0.0
    %566 = vmatpush2.msra.mxu0 0.0
    %567 = vmatprep.subr.mxu0 0.0
    %568 = vmatpush2.msra.mxu0 0.0
    %569 = vmatprep.subr.mxu0 0.0
    %570 = vmatpush2.msra.mxu0 0.0
    %571 = vmatprep.subr.mxu0 0.0
    %572 = vmatpush2.msra.mxu0 0.0
    %573 = vmatprep.subr.mxu0 0.0
    %574 = vmatpush2.msra.mxu0 0.0
    %575 = vmatprep.subr.mxu0 0.0
    %576 = vmatpush2.msra.mxu0 0.0
    %577 = vmatprep.subr.mxu0 0.0
    %578 = vmatpush2.msra.mxu0 0.0
    %579 = vmatprep.mubr.f32.mxu0 0.0
    %v580 = vand.u32 %v240, 4294901760
    %v581 = vsub.f32 %v240, %v580
    %v582 = vand.u32 %v581, 4294901760
    %583 = vmatmul.mubr.f32.gmra.mxu0 %v582
    %v584 = vpop.f32.mrf.mxu0
    %v585 = vadd.f32 %v507, %v584
    %v586 = vpop.f32.mrf.mxu0
    %v587 = vadd.f32 %v509, %v586
    %588 = vdwg.mxu0
    %589 = vmatprep.subr.mxu0 0.0
    %590 = vmatpush1.msra.mxu0 0.0
    %591 = vmatprep.subr.mxu0 0.0
    %592 = vmatpush1.msra.mxu0 0.0
    %593 = vmatprep.subr.mxu0 0.0
    %594 = vmatpush1.msra.mxu0 0.0
    %595 = vmatprep.subr.mxu0 0.0
    %596 = vmatpush1.msra.mxu0 0.0
    %597 = vmatprep.subr.mxu0 0.0
    %598 = vmatpush1.msra.mxu0 0.0
    %599 = vmatprep.subr.mxu0 0.0
    %600 = vmatpush1.msra.mxu0 0.0
    %601 = vmatprep.subr.mxu0 0.0
    %602 = vmatpush1.msra.mxu0 0.0
    %603 = vmatprep.subr.mxu0 0.0
    %604 = vmatpush1.msra.mxu0 0.0
    %605 = vmatprep.subr.mxu0 0.0
    %606 = vmatpush1.msra.mxu0 0.0
    %607 = vmatprep.subr.mxu0 0.0
    %608 = vmatpush1.msra.mxu0 0.0
    %609 = vmatprep.subr.mxu0 0.0
    %610 = vmatpush1.msra.mxu0 0.0
    %611 = vmatprep.subr.mxu0 0.0
    %612 = vmatpush1.msra.mxu0 0.0
    %613 = vmatprep.subr.mxu0 0.0
    %614 = vmatpush1.msra.mxu0 0.0
    %615 = vmatprep.subr.mxu0 0.0
    %616 = vmatpush1.msra.mxu0 0.0
    %v617 = vand.u32 %v244, 4294901760
    %v618 = vsub.f32 %v244, %v617
    %v619 = vand.u32 %v618, 4294901760
    %620 = vmatprep.subr.mxu0 %v619
    %v621 = vand.u32 %v242, 4294901760
    %v622 = vsub.f32 %v242, %v621
    %v623 = vand.u32 %v622, 4294901760
    %624 = vmatpush1.msra.mxu0 %v623
    %v625 = vand.u32 %v224, 4294901760
    %v626 = vsub.f32 %v224, %v625
    %v627 = vand.u32 %v626, 4294901760
    %628 = vmatprep.subr.mxu0 %v627
    %v629 = vand.u32 %v223, 4294901760
    %v630 = vsub.f32 %v223, %v629
    %v631 = vand.u32 %v630, 4294901760
    %632 = vmatpush1.msra.mxu0 %v631
    %633 = vmatprep.subr.mxu0 0.0
    %634 = vmatpush2.msra.mxu0 0.0
    %635 = vmatprep.subr.mxu0 0.0
    %636 = vmatpush2.msra.mxu0 0.0
    %637 = vmatprep.subr.mxu0 0.0
    %638 = vmatpush2.msra.mxu0 0.0
    %639 = vmatprep.subr.mxu0 0.0
    %640 = vmatpush2.msra.mxu0 0.0
    %641 = vmatprep.subr.mxu0 0.0
    %642 = vmatpush2.msra.mxu0 0.0
    %643 = vmatprep.subr.mxu0 0.0
    %644 = vmatpush2.msra.mxu0 0.0
    %645 = vmatprep.subr.mxu0 0.0
    %646 = vmatpush2.msra.mxu0 0.0
    %647 = vmatprep.subr.mxu0 0.0
    %648 = vmatpush2.msra.mxu0 0.0
    %649 = vmatprep.subr.mxu0 0.0
    %650 = vmatpush2.msra.mxu0 0.0
    %651 = vmatprep.subr.mxu0 0.0
    %652 = vmatpush2.msra.mxu0 0.0
    %653 = vmatprep.subr.mxu0 0.0
    %654 = vmatpush2.msra.mxu0 0.0
    %655 = vmatprep.subr.mxu0 0.0
    %656 = vmatpush2.msra.mxu0 0.0
    %657 = vmatprep.subr.mxu0 0.0
    %658 = vmatpush2.msra.mxu0 0.0
    %659 = vmatprep.subr.mxu0 0.0
    %660 = vmatpush2.msra.mxu0 0.0
    %661 = vmatprep.subr.mxu0 0.0
    %662 = vmatpush2.msra.mxu0 0.0
    %663 = vmatprep.subr.mxu0 0.0
    %664 = vmatpush2.msra.mxu0 0.0
    %665 = vmatprep.mubr.f32.mxu0 0.0
    %v666 = vand.u32 %v240, 4294901760
    %667 = vmatmul.mubr.f32.gmra.mxu0 %v666
    %v668 = vpop.f32.mrf.mxu0
    %v669 = vadd.f32 %v585, %v668
    %v670 = vpop.f32.mrf.mxu0
    %v671 = vadd.f32 %v587, %v670
    %672 = vdwg.mxu0
    %673 = vmatprep.subr.mxu0 0.0
    %674 = vmatpush1.msra.mxu0 0.0
    %675 = vmatprep.subr.mxu0 0.0
    %676 = vmatpush1.msra.mxu0 0.0
    %677 = vmatprep.subr.mxu0 0.0
    %678 = vmatpush1.msra.mxu0 0.0
    %679 = vmatprep.subr.mxu0 0.0
    %680 = vmatpush1.msra.mxu0 0.0
    %681 = vmatprep.subr.mxu0 0.0
    %682 = vmatpush1.msra.mxu0 0.0
    %683 = vmatprep.subr.mxu0 0.0
    %684 = vmatpush1.msra.mxu0 0.0
    %685 = vmatprep.subr.mxu0 0.0
    %686 = vmatpush1.msra.mxu0 0.0
    %687 = vmatprep.subr.mxu0 0.0
    %688 = vmatpush1.msra.mxu0 0.0
    %689 = vmatprep.subr.mxu0 0.0
    %690 = vmatpush1.msra.mxu0 0.0
    %691 = vmatprep.subr.mxu0 0.0
    %692 = vmatpush1.msra.mxu0 0.0
    %693 = vmatprep.subr.mxu0 0.0
    %694 = vmatpush1.msra.mxu0 0.0
    %695 = vmatprep.subr.mxu0 0.0
    %696 = vmatpush1.msra.mxu0 0.0
    %697 = vmatprep.subr.mxu0 0.0
    %698 = vmatpush1.msra.mxu0 0.0
    %699 = vmatprep.subr.mxu0 0.0
    %700 = vmatpush1.msra.mxu0 0.0
    %v701 = vand.u32 %v244, 4294901760
    %702 = vmatprep.subr.mxu0 %v701
    %v703 = vand.u32 %v242, 4294901760
    %704 = vmatpush1.msra.mxu0 %v703
    %v705 = vand.u32 %v224, 4294901760
    %706 = vmatprep.subr.mxu0 %v705
    %v707 = vand.u32 %v223, 4294901760
    %708 = vmatpush1.msra.mxu0 %v707
    %709 = vmatprep.subr.mxu0 0.0
    %710 = vmatpush2.msra.mxu0 0.0
    %711 = vmatprep.subr.mxu0 0.0
    %712 = vmatpush2.msra.mxu0 0.0
    %713 = vmatprep.subr.mxu0 0.0
    %714 = vmatpush2.msra.mxu0 0.0
    %715 = vmatprep.subr.mxu0 0.0
    %716 = vmatpush2.msra.mxu0 0.0
    %717 = vmatprep.subr.mxu0 0.0
    %718 = vmatpush2.msra.mxu0 0.0
    %719 = vmatprep.subr.mxu0 0.0
    %720 = vmatpush2.msra.mxu0 0.0
    %721 = vmatprep.subr.mxu0 0.0
    %722 = vmatpush2.msra.mxu0 0.0
    %723 = vmatprep.subr.mxu0 0.0
    %724 = vmatpush2.msra.mxu0 0.0
    %725 = vmatprep.subr.mxu0 0.0
    %726 = vmatpush2.msra.mxu0 0.0
    %727 = vmatprep.subr.mxu0 0.0
    %728 = vmatpush2.msra.mxu0 0.0
    %729 = vmatprep.subr.mxu0 0.0
    %730 = vmatpush2.msra.mxu0 0.0
    %731 = vmatprep.subr.mxu0 0.0
    %732 = vmatpush2.msra.mxu0 0.0
    %733 = vmatprep.subr.mxu0 0.0
    %734 = vmatpush2.msra.mxu0 0.0
    %735 = vmatprep.subr.mxu0 0.0
    %736 = vmatpush2.msra.mxu0 0.0
    %737 = vmatprep.subr.mxu0 0.0
    %738 = vmatpush2.msra.mxu0 0.0
    %739 = vmatprep.subr.mxu0 0.0
    %740 = vmatpush2.msra.mxu0 0.0
    %741 = vmatprep.mubr.f32.mxu0 0.0
    %v742 = vand.u32 %v240, 4294901760
    %743 = vmatmul.mubr.f32.gmra.mxu0 %v742
    %v744 = vpop.f32.mrf.mxu0
    %v745 = vadd.f32 %v669, %v744
    %v746 = vpop.f32.mrf.mxu0
    %v747 = vadd.f32 %v671, %v746
    %748 = vdwg.mxu0
    %749 = vmatprep.subr.mxu0 0.0
    %750 = vmatpush1.msra.mxu0 0.0
    %751 = vmatprep.subr.mxu0 0.0
    %752 = vmatpush1.msra.mxu0 0.0
    %753 = vmatprep.subr.mxu0 0.0
    %754 = vmatpush1.msra.mxu0 0.0
    %755 = vmatprep.subr.mxu0 0.0
    %756 = vmatpush1.msra.mxu0 0.0
    %757 = vmatprep.subr.mxu0 0.0
    %758 = vmatpush1.msra.mxu0 0.0
    %759 = vmatprep.subr.mxu0 0.0
    %760 = vmatpush1.msra.mxu0 0.0
    %761 = vmatprep.subr.mxu0 0.0
    %762 = vmatpush1.msra.mxu0 0.0
    %763 = vmatprep.subr.mxu0 0.0
    %764 = vmatpush1.msra.mxu0 0.0
    %765 = vmatprep.subr.mxu0 0.0
    %766 = vmatpush1.msra.mxu0 0.0
    %767 = vmatprep.subr.mxu0 0.0
    %768 = vmatpush1.msra.mxu0 0.0
    %769 = vmatprep.subr.mxu0 0.0
    %770 = vmatpush1.msra.mxu0 0.0
    %771 = vmatprep.subr.mxu0 0.0
    %772 = vmatpush1.msra.mxu0 0.0
    %773 = vmatprep.subr.mxu0 0.0
    %774 = vmatpush1.msra.mxu0 0.0
    %775 = vmatprep.subr.mxu0 0.0
    %776 = vmatpush1.msra.mxu0 0.0
    %v777 = vand.u32 %v248, 4294901760
    %778 = vmatprep.subr.mxu0 %v777
    %v779 = vand.u32 %v246, 4294901760
    %780 = vmatpush1.msra.mxu0 %v779
    %v781 = vand.u32 %v226, 4294901760
    %782 = vmatprep.subr.mxu0 %v781
    %v783 = vand.u32 %v225, 4294901760
    %784 = vmatpush1.msra.mxu0 %v783
    %785 = vmatprep.subr.mxu0 0.0
    %786 = vmatpush2.msra.mxu0 0.0
    %787 = vmatprep.subr.mxu0 0.0
    %788 = vmatpush2.msra.mxu0 0.0
    %789 = vmatprep.subr.mxu0 0.0
    %790 = vmatpush2.msra.mxu0 0.0
    %791 = vmatprep.subr.mxu0 0.0
    %792 = vmatpush2.msra.mxu0 0.0
    %793 = vmatprep.subr.mxu0 0.0
    %794 = vmatpush2.msra.mxu0 0.0
    %795 = vmatprep.subr.mxu0 0.0
    %796 = vmatpush2.msra.mxu0 0.0
    %797 = vmatprep.subr.mxu0 0.0
    %798 = vmatpush2.msra.mxu0 0.0
    %799 = vmatprep.subr.mxu0 0.0
    %800 = vmatpush2.msra.mxu0 0.0
    %801 = vmatprep.subr.mxu0 0.0
    %802 = vmatpush2.msra.mxu0 0.0
    %803 = vmatprep.subr.mxu0 0.0
    %804 = vmatpush2.msra.mxu0 0.0
    %805 = vmatprep.subr.mxu0 0.0
    %806 = vmatpush2.msra.mxu0 0.0
    %807 = vmatprep.subr.mxu0 0.0
    %808 = vmatpush2.msra.mxu0 0.0
    %809 = vmatprep.subr.mxu0 0.0
    %810 = vmatpush2.msra.mxu0 0.0
    %811 = vmatprep.subr.mxu0 0.0
    %812 = vmatpush2.msra.mxu0 0.0
    %813 = vmatprep.subr.mxu0 0.0
    %814 = vmatpush2.msra.mxu0 0.0
    %815 = vmatprep.subr.mxu0 0.0
    %816 = vmatpush2.msra.mxu0 0.0
    %817 = vmatprep.mubr.f32.mxu0 0.0
    %v818 = vand.u32 %v240, 4294901760
    %v819 = vsub.f32 %v240, %v818
    %v820 = vand.u32 %v819, 4294901760
    %v821 = vsub.f32 %v819, %v820
    %v822 = vand.u32 %v821, 4294901760
    %823 = vmatmul.mubr.f32.gmra.mxu0 %v822
    %v824 = vpop.f32.mrf.mxu0
    %v825 = vadd.f32 %v236, %v824
    %v826 = vpop.f32.mrf.mxu0
    %v827 = vadd.f32 %v236, %v826
    %828 = vdwg.mxu0
    %829 = vmatprep.subr.mxu0 0.0
    %830 = vmatpush1.msra.mxu0 0.0
    %831 = vmatprep.subr.mxu0 0.0
    %832 = vmatpush1.msra.mxu0 0.0
    %833 = vmatprep.subr.mxu0 0.0
    %834 = vmatpush1.msra.mxu0 0.0
    %835 = vmatprep.subr.mxu0 0.0
    %836 = vmatpush1.msra.mxu0 0.0
    %837 = vmatprep.subr.mxu0 0.0
    %838 = vmatpush1.msra.mxu0 0.0
    %839 = vmatprep.subr.mxu0 0.0
    %840 = vmatpush1.msra.mxu0 0.0
    %841 = vmatprep.subr.mxu0 0.0
    %842 = vmatpush1.msra.mxu0 0.0
    %843 = vmatprep.subr.mxu0 0.0
    %844 = vmatpush1.msra.mxu0 0.0
    %845 = vmatprep.subr.mxu0 0.0
    %846 = vmatpush1.msra.mxu0 0.0
    %847 = vmatprep.subr.mxu0 0.0
    %848 = vmatpush1.msra.mxu0 0.0
    %849 = vmatprep.subr.mxu0 0.0
    %850 = vmatpush1.msra.mxu0 0.0
    %851 = vmatprep.subr.mxu0 0.0
    %852 = vmatpush1.msra.mxu0 0.0
    %853 = vmatprep.subr.mxu0 0.0
    %854 = vmatpush1.msra.mxu0 0.0
    %855 = vmatprep.subr.mxu0 0.0
    %856 = vmatpush1.msra.mxu0 0.0
    %v857 = vand.u32 %v248, 4294901760
    %v858 = vsub.f32 %v248, %v857
    %v859 = vand.u32 %v858, 4294901760
    %v860 = vsub.f32 %v858, %v859
    %v861 = vand.u32 %v860, 4294901760
    %862 = vmatprep.subr.mxu0 %v861
    %v863 = vand.u32 %v246, 4294901760
    %v864 = vsub.f32 %v246, %v863
    %v865 = vand.u32 %v864, 4294901760
    %v866 = vsub.f32 %v864, %v865
    %v867 = vand.u32 %v866, 4294901760
    %868 = vmatpush1.msra.mxu0 %v867
    %v869 = vand.u32 %v226, 4294901760
    %v870 = vsub.f32 %v226, %v869
    %v871 = vand.u32 %v870, 4294901760
    %v872 = vsub.f32 %v870, %v871
    %v873 = vand.u32 %v872, 4294901760
    %874 = vmatprep.subr.mxu0 %v873
    %v875 = vand.u32 %v225, 4294901760
    %v876 = vsub.f32 %v225, %v875
    %v877 = vand.u32 %v876, 4294901760
    %v878 = vsub.f32 %v876, %v877
    %v879 = vand.u32 %v878, 4294901760
    %880 = vmatpush1.msra.mxu0 %v879
    %881 = vmatprep.subr.mxu0 0.0
    %882 = vmatpush2.msra.mxu0 0.0
    %883 = vmatprep.subr.mxu0 0.0
    %884 = vmatpush2.msra.mxu0 0.0
    %885 = vmatprep.subr.mxu0 0.0
    %886 = vmatpush2.msra.mxu0 0.0
    %887 = vmatprep.subr.mxu0 0.0
    %888 = vmatpush2.msra.mxu0 0.0
    %889 = vmatprep.subr.mxu0 0.0
    %890 = vmatpush2.msra.mxu0 0.0
    %891 = vmatprep.subr.mxu0 0.0
    %892 = vmatpush2.msra.mxu0 0.0
    %893 = vmatprep.subr.mxu0 0.0
    %894 = vmatpush2.msra.mxu0 0.0
    %895 = vmatprep.subr.mxu0 0.0
    %896 = vmatpush2.msra.mxu0 0.0
    %897 = vmatprep.subr.mxu0 0.0
    %898 = vmatpush2.msra.mxu0 0.0
    %899 = vmatprep.subr.mxu0 0.0
    %900 = vmatpush2.msra.mxu0 0.0
    %901 = vmatprep.subr.mxu0 0.0
    %902 = vmatpush2.msra.mxu0 0.0
    %903 = vmatprep.subr.mxu0 0.0
    %904 = vmatpush2.msra.mxu0 0.0
    %905 = vmatprep.subr.mxu0 0.0
    %906 = vmatpush2.msra.mxu0 0.0
    %907 = vmatprep.subr.mxu0 0.0
    %908 = vmatpush2.msra.mxu0 0.0
    %909 = vmatprep.subr.mxu0 0.0
    %910 = vmatpush2.msra.mxu0 0.0
    %911 = vmatprep.subr.mxu0 0.0
    %912 = vmatpush2.msra.mxu0 0.0
    %913 = vmatprep.mubr.f32.mxu0 0.0
    %v914 = vand.u32 %v240, 4294901760
    %915 = vmatmul.mubr.f32.gmra.mxu0 %v914
    %v916 = vpop.f32.mrf.mxu0
    %v917 = vadd.f32 %v825, %v916
    %v918 = vpop.f32.mrf.mxu0
    %v919 = vadd.f32 %v827, %v918
    %920 = vdwg.mxu0
    %921 = vmatprep.subr.mxu0 0.0
    %922 = vmatpush1.msra.mxu0 0.0
    %923 = vmatprep.subr.mxu0 0.0
    %924 = vmatpush1.msra.mxu0 0.0
    %925 = vmatprep.subr.mxu0 0.0
    %926 = vmatpush1.msra.mxu0 0.0
    %927 = vmatprep.subr.mxu0 0.0
    %928 = vmatpush1.msra.mxu0 0.0
    %929 = vmatprep.subr.mxu0 0.0
    %930 = vmatpush1.msra.mxu0 0.0
    %931 = vmatprep.subr.mxu0 0.0
    %932 = vmatpush1.msra.mxu0 0.0
    %933 = vmatprep.subr.mxu0 0.0
    %934 = vmatpush1.msra.mxu0 0.0
    %935 = vmatprep.subr.mxu0 0.0
    %936 = vmatpush1.msra.mxu0 0.0
    %937 = vmatprep.subr.mxu0 0.0
    %938 = vmatpush1.msra.mxu0 0.0
    %939 = vmatprep.subr.mxu0 0.0
    %940 = vmatpush1.msra.mxu0 0.0
    %941 = vmatprep.subr.mxu0 0.0
    %942 = vmatpush1.msra.mxu0 0.0
    %943 = vmatprep.subr.mxu0 0.0
    %944 = vmatpush1.msra.mxu0 0.0
    %945 = vmatprep.subr.mxu0 0.0
    %946 = vmatpush1.msra.mxu0 0.0
    %947 = vmatprep.subr.mxu0 0.0
    %948 = vmatpush1.msra.mxu0 0.0
    %v949 = vand.u32 %v248, 4294901760
    %v950 = vsub.f32 %v248, %v949
    %951 = vmatprep.subr.mxu0 %v950
    %v952 = vand.u32 %v246, 4294901760
    %v953 = vsub.f32 %v246, %v952
    %954 = vmatpush1.msra.mxu0 %v953
    %v955 = vand.u32 %v226, 4294901760
    %v956 = vsub.f32 %v226, %v955
    %957 = vmatprep.subr.mxu0 %v956
    %v958 = vand.u32 %v225, 4294901760
    %v959 = vsub.f32 %v225, %v958
    %960 = vmatpush1.msra.mxu0 %v959
    %961 = vmatprep.subr.mxu0 0.0
    %962 = vmatpush2.msra.mxu0 0.0
    %963 = vmatprep.subr.mxu0 0.0
    %964 = vmatpush2.msra.mxu0 0.0
    %965 = vmatprep.subr.mxu0 0.0
    %966 = vmatpush2.msra.mxu0 0.0
    %967 = vmatprep.subr.mxu0 0.0
    %968 = vmatpush2.msra.mxu0 0.0
    %969 = vmatprep.subr.mxu0 0.0
    %970 = vmatpush2.msra.mxu0 0.0
    %971 = vmatprep.subr.mxu0 0.0
    %972 = vmatpush2.msra.mxu0 0.0
    %973 = vmatprep.subr.mxu0 0.0
    %974 = vmatpush2.msra.mxu0 0.0
    %975 = vmatprep.subr.mxu0 0.0
    %976 = vmatpush2.msra.mxu0 0.0
    %977 = vmatprep.subr.mxu0 0.0
    %978 = vmatpush2.msra.mxu0 0.0
    %979 = vmatprep.subr.mxu0 0.0
    %980 = vmatpush2.msra.mxu0 0.0
    %981 = vmatprep.subr.mxu0 0.0
    %982 = vmatpush2.msra.mxu0 0.0
    %983 = vmatprep.subr.mxu0 0.0
    %984 = vmatpush2.msra.mxu0 0.0
    %985 = vmatprep.subr.mxu0 0.0
    %986 = vmatpush2.msra.mxu0 0.0
    %987 = vmatprep.subr.mxu0 0.0
    %988 = vmatpush2.msra.mxu0 0.0
    %989 = vmatprep.subr.mxu0 0.0
    %990 = vmatpush2.msra.mxu0 0.0
    %991 = vmatprep.subr.mxu0 0.0
    %992 = vmatpush2.msra.mxu0 0.0
    %993 = vmatprep.mubr.f32.mxu0 0.0
    %v994 = vand.u32 %v240, 4294901760
    %v995 = vsub.f32 %v240, %v994
    %996 = vmatmul.mubr.f32.gmra.mxu0 %v995
    %v997 = vpop.f32.mrf.mxu0
    %v998 = vadd.f32 %v917, %v997
    %v999 = vpop.f32.mrf.mxu0
    %v1000 = vadd.f32 %v919, %v999
    %1001 = vdwg.mxu0
    %1002 = vmatprep.subr.mxu0 0.0
    %1003 = vmatpush1.msra.mxu0 0.0
    %1004 = vmatprep.subr.mxu0 0.0
    %1005 = vmatpush1.msra.mxu0 0.0
    %1006 = vmatprep.subr.mxu0 0.0
    %1007 = vmatpush1.msra.mxu0 0.0
    %1008 = vmatprep.subr.mxu0 0.0
    %1009 = vmatpush1.msra.mxu0 0.0
    %1010 = vmatprep.subr.mxu0 0.0
    %1011 = vmatpush1.msra.mxu0 0.0
    %1012 = vmatprep.subr.mxu0 0.0
    %1013 = vmatpush1.msra.mxu0 0.0
    %1014 = vmatprep.subr.mxu0 0.0
    %1015 = vmatpush1.msra.mxu0 0.0
    %1016 = vmatprep.subr.mxu0 0.0
    %1017 = vmatpush1.msra.mxu0 0.0
    %1018 = vmatprep.subr.mxu0 0.0
    %1019 = vmatpush1.msra.mxu0 0.0
    %1020 = vmatprep.subr.mxu0 0.0
    %1021 = vmatpush1.msra.mxu0 0.0
    %1022 = vmatprep.subr.mxu0 0.0
    %1023 = vmatpush1.msra.mxu0 0.0
    %1024 = vmatprep.subr.mxu0 0.0
    %1025 = vmatpush1.msra.mxu0 0.0
    %1026 = vmatprep.subr.mxu0 0.0
    %1027 = vmatpush1.msra.mxu0 0.0
    %1028 = vmatprep.subr.mxu0 0.0
    %1029 = vmatpush1.msra.mxu0 0.0
    %v1030 = vand.u32 %v248, 4294901760
    %1031 = vmatprep.subr.mxu0 %v1030
    %v1032 = vand.u32 %v246, 4294901760
    %1033 = vmatpush1.msra.mxu0 %v1032
    %v1034 = vand.u32 %v226, 4294901760
    %1035 = vmatprep.subr.mxu0 %v1034
    %v1036 = vand.u32 %v225, 4294901760
    %1037 = vmatpush1.msra.mxu0 %v1036
    %1038 = vmatprep.subr.mxu0 0.0
    %1039 = vmatpush2.msra.mxu0 0.0
    %1040 = vmatprep.subr.mxu0 0.0
    %1041 = vmatpush2.msra.mxu0 0.0
    %1042 = vmatprep.subr.mxu0 0.0
    %1043 = vmatpush2.msra.mxu0 0.0
    %1044 = vmatprep.subr.mxu0 0.0
    %1045 = vmatpush2.msra.mxu0 0.0
    %1046 = vmatprep.subr.mxu0 0.0
    %1047 = vmatpush2.msra.mxu0 0.0
    %1048 = vmatprep.subr.mxu0 0.0
    %1049 = vmatpush2.msra.mxu0 0.0
    %1050 = vmatprep.subr.mxu0 0.0
    %1051 = vmatpush2.msra.mxu0 0.0
    %1052 = vmatprep.subr.mxu0 0.0
    %1053 = vmatpush2.msra.mxu0 0.0
    %1054 = vmatprep.subr.mxu0 0.0
    %1055 = vmatpush2.msra.mxu0 0.0
    %1056 = vmatprep.subr.mxu0 0.0
    %1057 = vmatpush2.msra.mxu0 0.0
    %1058 = vmatprep.subr.mxu0 0.0
    %1059 = vmatpush2.msra.mxu0 0.0
    %1060 = vmatprep.subr.mxu0 0.0
    %1061 = vmatpush2.msra.mxu0 0.0
    %1062 = vmatprep.subr.mxu0 0.0
    %1063 = vmatpush2.msra.mxu0 0.0
    %1064 = vmatprep.subr.mxu0 0.0
    %1065 = vmatpush2.msra.mxu0 0.0
    %1066 = vmatprep.subr.mxu0 0.0
    %1067 = vmatpush2.msra.mxu0 0.0
    %1068 = vmatprep.subr.mxu0 0.0
    %1069 = vmatpush2.msra.mxu0 0.0
    %1070 = vmatprep.mubr.f32.mxu0 0.0
    %v1071 = vand.u32 %v240, 4294901760
    %v1072 = vsub.f32 %v240, %v1071
    %v1073 = vand.u32 %v1072, 4294901760
    %1074 = vmatmul.mubr.f32.gmra.mxu0 %v1073
    %v1075 = vpop.f32.mrf.mxu0
    %v1076 = vadd.f32 %v998, %v1075
    %v1077 = vpop.f32.mrf.mxu0
    %v1078 = vadd.f32 %v1000, %v1077
    %1079 = vdwg.mxu0
    %1080 = vmatprep.subr.mxu0 0.0
    %1081 = vmatpush1.msra.mxu0 0.0
    %1082 = vmatprep.subr.mxu0 0.0
    %1083 = vmatpush1.msra.mxu0 0.0
    %1084 = vmatprep.subr.mxu0 0.0
    %1085 = vmatpush1.msra.mxu0 0.0
    %1086 = vmatprep.subr.mxu0 0.0
    %1087 = vmatpush1.msra.mxu0 0.0
    %1088 = vmatprep.subr.mxu0 0.0
    %1089 = vmatpush1.msra.mxu0 0.0
    %1090 = vmatprep.subr.mxu0 0.0
    %1091 = vmatpush1.msra.mxu0 0.0
    %1092 = vmatprep.subr.mxu0 0.0
    %1093 = vmatpush1.msra.mxu0 0.0
    %1094 = vmatprep.subr.mxu0 0.0
    %1095 = vmatpush1.msra.mxu0 0.0
    %1096 = vmatprep.subr.mxu0 0.0
    %1097 = vmatpush1.msra.mxu0 0.0
    %1098 = vmatprep.subr.mxu0 0.0
    %1099 = vmatpush1.msra.mxu0 0.0
    %1100 = vmatprep.subr.mxu0 0.0
    %1101 = vmatpush1.msra.mxu0 0.0
    %1102 = vmatprep.subr.mxu0 0.0
    %1103 = vmatpush1.msra.mxu0 0.0
    %1104 = vmatprep.subr.mxu0 0.0
    %1105 = vmatpush1.msra.mxu0 0.0
    %1106 = vmatprep.subr.mxu0 0.0
    %1107 = vmatpush1.msra.mxu0 0.0
    %v1108 = vand.u32 %v248, 4294901760
    %v1109 = vsub.f32 %v248, %v1108
    %v1110 = vand.u32 %v1109, 4294901760
    %1111 = vmatprep.subr.mxu0 %v1110
    %v1112 = vand.u32 %v246, 4294901760
    %v1113 = vsub.f32 %v246, %v1112
    %v1114 = vand.u32 %v1113, 4294901760
    %1115 = vmatpush1.msra.mxu0 %v1114
    %v1116 = vand.u32 %v226, 4294901760
    %v1117 = vsub.f32 %v226, %v1116
    %v1118 = vand.u32 %v1117, 4294901760
    %1119 = vmatprep.subr.mxu0 %v1118
    %v1120 = vand.u32 %v225, 4294901760
    %v1121 = vsub.f32 %v225, %v1120
    %v1122 = vand.u32 %v1121, 4294901760
    %1123 = vmatpush1.msra.mxu0 %v1122
    %1124 = vmatprep.subr.mxu0 0.0
    %1125 = vmatpush2.msra.mxu0 0.0
    %1126 = vmatprep.subr.mxu0 0.0
    %1127 = vmatpush2.msra.mxu0 0.0
    %1128 = vmatprep.subr.mxu0 0.0
    %1129 = vmatpush2.msra.mxu0 0.0
    %1130 = vmatprep.subr.mxu0 0.0
    %1131 = vmatpush2.msra.mxu0 0.0
    %1132 = vmatprep.subr.mxu0 0.0
    %1133 = vmatpush2.msra.mxu0 0.0
    %1134 = vmatprep.subr.mxu0 0.0
    %1135 = vmatpush2.msra.mxu0 0.0
    %1136 = vmatprep.subr.mxu0 0.0
    %1137 = vmatpush2.msra.mxu0 0.0
    %1138 = vmatprep.subr.mxu0 0.0
    %1139 = vmatpush2.msra.mxu0 0.0
    %1140 = vmatprep.subr.mxu0 0.0
    %1141 = vmatpush2.msra.mxu0 0.0
    %1142 = vmatprep.subr.mxu0 0.0
    %1143 = vmatpush2.msra.mxu0 0.0
    %1144 = vmatprep.subr.mxu0 0.0
    %1145 = vmatpush2.msra.mxu0 0.0
    %1146 = vmatprep.subr.mxu0 0.0
    %1147 = vmatpush2.msra.mxu0 0.0
    %1148 = vmatprep.subr.mxu0 0.0
    %1149 = vmatpush2.msra.mxu0 0.0
    %1150 = vmatprep.subr.mxu0 0.0
    %1151 = vmatpush2.msra.mxu0 0.0
    %1152 = vmatprep.subr.mxu0 0.0
    %1153 = vmatpush2.msra.mxu0 0.0
    %1154 = vmatprep.subr.mxu0 0.0
    %1155 = vmatpush2.msra.mxu0 0.0
    %1156 = vmatprep.mubr.f32.mxu0 0.0
    %v1157 = vand.u32 %v240, 4294901760
    %1158 = vmatmul.mubr.f32.gmra.mxu0 %v1157
    %v1159 = vpop.f32.mrf.mxu0
    %v1160 = vadd.f32 %v1076, %v1159
    %v1161 = vpop.f32.mrf.mxu0
    %v1162 = vadd.f32 %v1078, %v1161
    %1163 = vdwg.mxu0
    %1164 = vmatprep.subr.mxu0 0.0
    %1165 = vmatpush1.msra.mxu0 0.0
    %1166 = vmatprep.subr.mxu0 0.0
    %1167 = vmatpush1.msra.mxu0 0.0
    %1168 = vmatprep.subr.mxu0 0.0
    %1169 = vmatpush1.msra.mxu0 0.0
    %1170 = vmatprep.subr.mxu0 0.0
    %1171 = vmatpush1.msra.mxu0 0.0
    %1172 = vmatprep.subr.mxu0 0.0
    %1173 = vmatpush1.msra.mxu0 0.0
    %1174 = vmatprep.subr.mxu0 0.0
    %1175 = vmatpush1.msra.mxu0 0.0
    %1176 = vmatprep.subr.mxu0 0.0
    %1177 = vmatpush1.msra.mxu0 0.0
    %1178 = vmatprep.subr.mxu0 0.0
    %1179 = vmatpush1.msra.mxu0 0.0
    %1180 = vmatprep.subr.mxu0 0.0
    %1181 = vmatpush1.msra.mxu0 0.0
    %1182 = vmatprep.subr.mxu0 0.0
    %1183 = vmatpush1.msra.mxu0 0.0
    %1184 = vmatprep.subr.mxu0 0.0
    %1185 = vmatpush1.msra.mxu0 0.0
    %1186 = vmatprep.subr.mxu0 0.0
    %1187 = vmatpush1.msra.mxu0 0.0
    %1188 = vmatprep.subr.mxu0 0.0
    %1189 = vmatpush1.msra.mxu0 0.0
    %1190 = vmatprep.subr.mxu0 0.0
    %1191 = vmatpush1.msra.mxu0 0.0
    %v1192 = vand.u32 %v248, 4294901760
    %1193 = vmatprep.subr.mxu0 %v1192
    %v1194 = vand.u32 %v246, 4294901760
    %1195 = vmatpush1.msra.mxu0 %v1194
    %v1196 = vand.u32 %v226, 4294901760
    %1197 = vmatprep.subr.mxu0 %v1196
    %v1198 = vand.u32 %v225, 4294901760
    %1199 = vmatpush1.msra.mxu0 %v1198
    %1200 = vmatprep.subr.mxu0 0.0
    %1201 = vmatpush2.msra.mxu0 0.0
    %1202 = vmatprep.subr.mxu0 0.0
    %1203 = vmatpush2.msra.mxu0 0.0
    %1204 = vmatprep.subr.mxu0 0.0
    %1205 = vmatpush2.msra.mxu0 0.0
    %1206 = vmatprep.subr.mxu0 0.0
    %1207 = vmatpush2.msra.mxu0 0.0
    %1208 = vmatprep.subr.mxu0 0.0
    %1209 = vmatpush2.msra.mxu0 0.0
    %1210 = vmatprep.subr.mxu0 0.0
    %1211 = vmatpush2.msra.mxu0 0.0
    %1212 = vmatprep.subr.mxu0 0.0
    %1213 = vmatpush2.msra.mxu0 0.0
    %1214 = vmatprep.subr.mxu0 0.0
    %1215 = vmatpush2.msra.mxu0 0.0
    %1216 = vmatprep.subr.mxu0 0.0
    %1217 = vmatpush2.msra.mxu0 0.0
    %1218 = vmatprep.subr.mxu0 0.0
    %1219 = vmatpush2.msra.mxu0 0.0
    %1220 = vmatprep.subr.mxu0 0.0
    %1221 = vmatpush2.msra.mxu0 0.0
    %1222 = vmatprep.subr.mxu0 0.0
    %1223 = vmatpush2.msra.mxu0 0.0
    %1224 = vmatprep.subr.mxu0 0.0
    %1225 = vmatpush2.msra.mxu0 0.0
    %1226 = vmatprep.subr.mxu0 0.0
    %1227 = vmatpush2.msra.mxu0 0.0
    %1228 = vmatprep.subr.mxu0 0.0
    %1229 = vmatpush2.msra.mxu0 0.0
    %1230 = vmatprep.subr.mxu0 0.0
    %1231 = vmatpush2.msra.mxu0 0.0
    %1232 = vmatprep.mubr.f32.mxu0 0.0
    %v1233 = vand.u32 %v240, 4294901760
    %1234 = vmatmul.mubr.f32.gmra.mxu0 %v1233
    %v1235 = vpop.f32.mrf.mxu0
    %v1236 = vadd.f32 %v1160, %v1235
    %v1237 = vpop.f32.mrf.mxu0
    %v1238 = vadd.f32 %v1162, %v1237
    %1239 = vdwg.mxu0
    %1240 = vmatprep.subr.mxu0 0.0
    %1241 = vmatpush1.msra.mxu0 0.0
    %1242 = vmatprep.subr.mxu0 0.0
    %1243 = vmatpush1.msra.mxu0 0.0
    %1244 = vmatprep.subr.mxu0 0.0
    %1245 = vmatpush1.msra.mxu0 0.0
    %1246 = vmatprep.subr.mxu0 0.0
    %1247 = vmatpush1.msra.mxu0 0.0
    %1248 = vmatprep.subr.mxu0 0.0
    %1249 = vmatpush1.msra.mxu0 0.0
    %1250 = vmatprep.subr.mxu0 0.0
    %1251 = vmatpush1.msra.mxu0 0.0
    %1252 = vmatprep.subr.mxu0 0.0
    %1253 = vmatpush1.msra.mxu0 0.0
    %1254 = vmatprep.subr.mxu0 0.0
    %1255 = vmatpush1.msra.mxu0 0.0
    %1256 = vmatprep.subr.mxu0 0.0
    %1257 = vmatpush1.msra.mxu0 0.0
    %1258 = vmatprep.subr.mxu0 0.0
    %1259 = vmatpush1.msra.mxu0 0.0
    %1260 = vmatprep.subr.mxu0 0.0
    %1261 = vmatpush1.msra.mxu0 0.0
    %1262 = vmatprep.subr.mxu0 0.0
    %1263 = vmatpush1.msra.mxu0 0.0
    %1264 = vmatprep.subr.mxu0 0.0
    %1265 = vmatpush1.msra.mxu0 0.0
    %1266 = vmatprep.subr.mxu0 0.0
    %1267 = vmatpush1.msra.mxu0 0.0
    %v1268 = vand.u32 %v252, 4294901760
    %1269 = vmatprep.subr.mxu0 %v1268
    %v1270 = vand.u32 %v250, 4294901760
    %1271 = vmatpush1.msra.mxu0 %v1270
    %v1272 = vand.u32 %v228, 4294901760
    %1273 = vmatprep.subr.mxu0 %v1272
    %v1274 = vand.u32 %v227, 4294901760
    %1275 = vmatpush1.msra.mxu0 %v1274
    %1276 = vmatprep.subr.mxu0 0.0
    %1277 = vmatpush2.msra.mxu0 0.0
    %1278 = vmatprep.subr.mxu0 0.0
    %1279 = vmatpush2.msra.mxu0 0.0
    %1280 = vmatprep.subr.mxu0 0.0
    %1281 = vmatpush2.msra.mxu0 0.0
    %1282 = vmatprep.subr.mxu0 0.0
    %1283 = vmatpush2.msra.mxu0 0.0
    %1284 = vmatprep.subr.mxu0 0.0
    %1285 = vmatpush2.msra.mxu0 0.0
    %1286 = vmatprep.subr.mxu0 0.0
    %1287 = vmatpush2.msra.mxu0 0.0
    %1288 = vmatprep.subr.mxu0 0.0
    %1289 = vmatpush2.msra.mxu0 0.0
    %1290 = vmatprep.subr.mxu0 0.0
    %1291 = vmatpush2.msra.mxu0 0.0
    %1292 = vmatprep.subr.mxu0 0.0
    %1293 = vmatpush2.msra.mxu0 0.0
    %1294 = vmatprep.subr.mxu0 0.0
    %1295 = vmatpush2.msra.mxu0 0.0
    %1296 = vmatprep.subr.mxu0 0.0
    %1297 = vmatpush2.msra.mxu0 0.0
    %1298 = vmatprep.subr.mxu0 0.0
    %1299 = vmatpush2.msra.mxu0 0.0
    %1300 = vmatprep.subr.mxu0 0.0
    %1301 = vmatpush2.msra.mxu0 0.0
    %1302 = vmatprep.subr.mxu0 0.0
    %1303 = vmatpush2.msra.mxu0 0.0
    %1304 = vmatprep.subr.mxu0 0.0
    %1305 = vmatpush2.msra.mxu0 0.0
    %1306 = vmatprep.subr.mxu0 0.0
    %1307 = vmatpush2.msra.mxu0 0.0
    %1308 = vmatprep.mubr.f32.mxu0 0.0
    %v1309 = vand.u32 %v240, 4294901760
    %v1310 = vsub.f32 %v240, %v1309
    %v1311 = vand.u32 %v1310, 4294901760
    %v1312 = vsub.f32 %v1310, %v1311
    %v1313 = vand.u32 %v1312, 4294901760
    %1314 = vmatmul.mubr.f32.gmra.mxu0 %v1313
    %v1315 = vpop.f32.mrf.mxu0
    %v1316 = vadd.f32 %v236, %v1315
    %v1317 = vpop.f32.mrf.mxu0
    %v1318 = vadd.f32 %v236, %v1317
    %1319 = vdwg.mxu0
    %1320 = vmatprep.subr.mxu0 0.0
    %1321 = vmatpush1.msra.mxu0 0.0
    %1322 = vmatprep.subr.mxu0 0.0
    %1323 = vmatpush1.msra.mxu0 0.0
    %1324 = vmatprep.subr.mxu0 0.0
    %1325 = vmatpush1.msra.mxu0 0.0
    %1326 = vmatprep.subr.mxu0 0.0
    %1327 = vmatpush1.msra.mxu0 0.0
    %1328 = vmatprep.subr.mxu0 0.0
    %1329 = vmatpush1.msra.mxu0 0.0
    %1330 = vmatprep.subr.mxu0 0.0
    %1331 = vmatpush1.msra.mxu0 0.0
    %1332 = vmatprep.subr.mxu0 0.0
    %1333 = vmatpush1.msra.mxu0 0.0
    %1334 = vmatprep.subr.mxu0 0.0
    %1335 = vmatpush1.msra.mxu0 0.0
    %1336 = vmatprep.subr.mxu0 0.0
    %1337 = vmatpush1.msra.mxu0 0.0
    %1338 = vmatprep.subr.mxu0 0.0
    %1339 = vmatpush1.msra.mxu0 0.0
    %1340 = vmatprep.subr.mxu0 0.0
    %1341 = vmatpush1.msra.mxu0 0.0
    %1342 = vmatprep.subr.mxu0 0.0
    %1343 = vmatpush1.msra.mxu0 0.0
    %1344 = vmatprep.subr.mxu0 0.0
    %1345 = vmatpush1.msra.mxu0 0.0
    %1346 = vmatprep.subr.mxu0 0.0
    %1347 = vmatpush1.msra.mxu0 0.0
    %v1348 = vand.u32 %v252, 4294901760
    %v1349 = vsub.f32 %v252, %v1348
    %v1350 = vand.u32 %v1349, 4294901760
    %v1351 = vsub.f32 %v1349, %v1350
    %v1352 = vand.u32 %v1351, 4294901760
    %1353 = vmatprep.subr.mxu0 %v1352
    %v1354 = vand.u32 %v250, 4294901760
    %v1355 = vsub.f32 %v250, %v1354
    %v1356 = vand.u32 %v1355, 4294901760
    %v1357 = vsub.f32 %v1355, %v1356
    %v1358 = vand.u32 %v1357, 4294901760
    %1359 = vmatpush1.msra.mxu0 %v1358
    %v1360 = vand.u32 %v228, 4294901760
    %v1361 = vsub.f32 %v228, %v1360
    %v1362 = vand.u32 %v1361, 4294901760
    %v1363 = vsub.f32 %v1361, %v1362
    %v1364 = vand.u32 %v1363, 4294901760
    %1365 = vmatprep.subr.mxu0 %v1364
    %v1366 = vand.u32 %v227, 4294901760
    %v1367 = vsub.f32 %v227, %v1366
    %v1368 = vand.u32 %v1367, 4294901760
    %v1369 = vsub.f32 %v1367, %v1368
    %v1370 = vand.u32 %v1369, 4294901760
    %1371 = vmatpush1.msra.mxu0 %v1370
    %1372 = vmatprep.subr.mxu0 0.0
    %1373 = vmatpush2.msra.mxu0 0.0
    %1374 = vmatprep.subr.mxu0 0.0
    %1375 = vmatpush2.msra.mxu0 0.0
    %1376 = vmatprep.subr.mxu0 0.0
    %1377 = vmatpush2.msra.mxu0 0.0
    %1378 = vmatprep.subr.mxu0 0.0
    %1379 = vmatpush2.msra.mxu0 0.0
    %1380 = vmatprep.subr.mxu0 0.0
    %1381 = vmatpush2.msra.mxu0 0.0
    %1382 = vmatprep.subr.mxu0 0.0
    %1383 = vmatpush2.msra.mxu0 0.0
    %1384 = vmatprep.subr.mxu0 0.0
    %1385 = vmatpush2.msra.mxu0 0.0
    %1386 = vmatprep.subr.mxu0 0.0
    %1387 = vmatpush2.msra.mxu0 0.0
    %1388 = vmatprep.subr.mxu0 0.0
    %1389 = vmatpush2.msra.mxu0 0.0
    %1390 = vmatprep.subr.mxu0 0.0
    %1391 = vmatpush2.msra.mxu0 0.0
    %1392 = vmatprep.subr.mxu0 0.0
    %1393 = vmatpush2.msra.mxu0 0.0
    %1394 = vmatprep.subr.mxu0 0.0
    %1395 = vmatpush2.msra.mxu0 0.0
    %1396 = vmatprep.subr.mxu0 0.0
    %1397 = vmatpush2.msra.mxu0 0.0
    %1398 = vmatprep.subr.mxu0 0.0
    %1399 = vmatpush2.msra.mxu0 0.0
    %1400 = vmatprep.subr.mxu0 0.0
    %1401 = vmatpush2.msra.mxu0 0.0
    %1402 = vmatprep.subr.mxu0 0.0
    %1403 = vmatpush2.msra.mxu0 0.0
    %1404 = vmatprep.mubr.f32.mxu0 0.0
    %v1405 = vand.u32 %v240, 4294901760
    %1406 = vmatmul.mubr.f32.gmra.mxu0 %v1405
    %v1407 = vpop.f32.mrf.mxu0
    %v1408 = vadd.f32 %v1316, %v1407
    %v1409 = vpop.f32.mrf.mxu0
    %v1410 = vadd.f32 %v1318, %v1409
    %1411 = vdwg.mxu0
    %1412 = vmatprep.subr.mxu0 0.0
    %1413 = vmatpush1.msra.mxu0 0.0
    %1414 = vmatprep.subr.mxu0 0.0
    %1415 = vmatpush1.msra.mxu0 0.0
    %1416 = vmatprep.subr.mxu0 0.0
    %1417 = vmatpush1.msra.mxu0 0.0
    %1418 = vmatprep.subr.mxu0 0.0
    %1419 = vmatpush1.msra.mxu0 0.0
    %1420 = vmatprep.subr.mxu0 0.0
    %1421 = vmatpush1.msra.mxu0 0.0
    %1422 = vmatprep.subr.mxu0 0.0
    %1423 = vmatpush1.msra.mxu0 0.0
    %1424 = vmatprep.subr.mxu0 0.0
    %1425 = vmatpush1.msra.mxu0 0.0
    %1426 = vmatprep.subr.mxu0 0.0
    %1427 = vmatpush1.msra.mxu0 0.0
    %1428 = vmatprep.subr.mxu0 0.0
    %1429 = vmatpush1.msra.mxu0 0.0
    %1430 = vmatprep.subr.mxu0 0.0
    %1431 = vmatpush1.msra.mxu0 0.0
    %1432 = vmatprep.subr.mxu0 0.0
    %1433 = vmatpush1.msra.mxu0 0.0
    %1434 = vmatprep.subr.mxu0 0.0
    %1435 = vmatpush1.msra.mxu0 0.0
    %1436 = vmatprep.subr.mxu0 0.0
    %1437 = vmatpush1.msra.mxu0 0.0
    %1438 = vmatprep.subr.mxu0 0.0
    %1439 = vmatpush1.msra.mxu0 0.0
    %v1440 = vand.u32 %v252, 4294901760
    %v1441 = vsub.f32 %v252, %v1440
    %1442 = vmatprep.subr.mxu0 %v1441
    %v1443 = vand.u32 %v250, 4294901760
    %v1444 = vsub.f32 %v250, %v1443
    %1445 = vmatpush1.msra.mxu0 %v1444
    %v1446 = vand.u32 %v228, 4294901760
    %v1447 = vsub.f32 %v228, %v1446
    %1448 = vmatprep.subr.mxu0 %v1447
    %v1449 = vand.u32 %v227, 4294901760
    %v1450 = vsub.f32 %v227, %v1449
    %1451 = vmatpush1.msra.mxu0 %v1450
    %1452 = vmatprep.subr.mxu0 0.0
    %1453 = vmatpush2.msra.mxu0 0.0
    %1454 = vmatprep.subr.mxu0 0.0
    %1455 = vmatpush2.msra.mxu0 0.0
    %1456 = vmatprep.subr.mxu0 0.0
    %1457 = vmatpush2.msra.mxu0 0.0
    %1458 = vmatprep.subr.mxu0 0.0
    %1459 = vmatpush2.msra.mxu0 0.0
    %1460 = vmatprep.subr.mxu0 0.0
    %1461 = vmatpush2.msra.mxu0 0.0
    %1462 = vmatprep.subr.mxu0 0.0
    %1463 = vmatpush2.msra.mxu0 0.0
    %1464 = vmatprep.subr.mxu0 0.0
    %1465 = vmatpush2.msra.mxu0 0.0
    %1466 = vmatprep.subr.mxu0 0.0
    %1467 = vmatpush2.msra.mxu0 0.0
    %1468 = vmatprep.subr.mxu0 0.0
    %1469 = vmatpush2.msra.mxu0 0.0
    %1470 = vmatprep.subr.mxu0 0.0
    %1471 = vmatpush2.msra.mxu0 0.0
    %1472 = vmatprep.subr.mxu0 0.0
    %1473 = vmatpush2.msra.mxu0 0.0
    %1474 = vmatprep.subr.mxu0 0.0
    %1475 = vmatpush2.msra.mxu0 0.0
    %1476 = vmatprep.subr.mxu0 0.0
    %1477 = vmatpush2.msra.mxu0 0.0
    %1478 = vmatprep.subr.mxu0 0.0
    %1479 = vmatpush2.msra.mxu0 0.0
    %1480 = vmatprep.subr.mxu0 0.0
    %1481 = vmatpush2.msra.mxu0 0.0
    %1482 = vmatprep.subr.mxu0 0.0
    %1483 = vmatpush2.msra.mxu0 0.0
    %1484 = vmatprep.mubr.f32.mxu0 0.0
    %v1485 = vand.u32 %v240, 4294901760
    %v1486 = vsub.f32 %v240, %v1485
    %1487 = vmatmul.mubr.f32.gmra.mxu0 %v1486
    %v1488 = vpop.f32.mrf.mxu0
    %v1489 = vadd.f32 %v1408, %v1488
    %v1490 = vpop.f32.mrf.mxu0
    %v1491 = vadd.f32 %v1410, %v1490
    %1492 = vdwg.mxu0
    %1493 = vmatprep.subr.mxu0 0.0
    %1494 = vmatpush1.msra.mxu0 0.0
    %1495 = vmatprep.subr.mxu0 0.0
    %1496 = vmatpush1.msra.mxu0 0.0
    %1497 = vmatprep.subr.mxu0 0.0
    %1498 = vmatpush1.msra.mxu0 0.0
    %1499 = vmatprep.subr.mxu0 0.0
    %1500 = vmatpush1.msra.mxu0 0.0
    %1501 = vmatprep.subr.mxu0 0.0
    %1502 = vmatpush1.msra.mxu0 0.0
    %1503 = vmatprep.subr.mxu0 0.0
    %1504 = vmatpush1.msra.mxu0 0.0
    %1505 = vmatprep.subr.mxu0 0.0
    %1506 = vmatpush1.msra.mxu0 0.0
    %1507 = vmatprep.subr.mxu0 0.0
    %1508 = vmatpush1.msra.mxu0 0.0
    %1509 = vmatprep.subr.mxu0 0.0
    %1510 = vmatpush1.msra.mxu0 0.0
    %1511 = vmatprep.subr.mxu0 0.0
    %1512 = vmatpush1.msra.mxu0 0.0
    %1513 = vmatprep.subr.mxu0 0.0
    %1514 = vmatpush1.msra.mxu0 0.0
    %1515 = vmatprep.subr.mxu0 0.0
    %1516 = vmatpush1.msra.mxu0 0.0
    %1517 = vmatprep.subr.mxu0 0.0
    %1518 = vmatpush1.msra.mxu0 0.0
    %1519 = vmatprep.subr.mxu0 0.0
    %1520 = vmatpush1.msra.mxu0 0.0
    %v1521 = vand.u32 %v252, 4294901760
    %1522 = vmatprep.subr.mxu0 %v1521
    %v1523 = vand.u32 %v250, 4294901760
    %1524 = vmatpush1.msra.mxu0 %v1523
    %v1525 = vand.u32 %v228, 4294901760
    %1526 = vmatprep.subr.mxu0 %v1525
    %v1527 = vand.u32 %v227, 4294901760
    %1528 = vmatpush1.msra.mxu0 %v1527
    %1529 = vmatprep.subr.mxu0 0.0
    %1530 = vmatpush2.msra.mxu0 0.0
    %1531 = vmatprep.subr.mxu0 0.0
    %1532 = vmatpush2.msra.mxu0 0.0
    %1533 = vmatprep.subr.mxu0 0.0
    %1534 = vmatpush2.msra.mxu0 0.0
    %1535 = vmatprep.subr.mxu0 0.0
    %1536 = vmatpush2.msra.mxu0 0.0
    %1537 = vmatprep.subr.mxu0 0.0
    %1538 = vmatpush2.msra.mxu0 0.0
    %1539 = vmatprep.subr.mxu0 0.0
    %1540 = vmatpush2.msra.mxu0 0.0
    %1541 = vmatprep.subr.mxu0 0.0
    %1542 = vmatpush2.msra.mxu0 0.0
    %1543 = vmatprep.subr.mxu0 0.0
    %1544 = vmatpush2.msra.mxu0 0.0
    %1545 = vmatprep.subr.mxu0 0.0
    %1546 = vmatpush2.msra.mxu0 0.0
    %1547 = vmatprep.subr.mxu0 0.0
    %1548 = vmatpush2.msra.mxu0 0.0
    %1549 = vmatprep.subr.mxu0 0.0
    %1550 = vmatpush2.msra.mxu0 0.0
    %1551 = vmatprep.subr.mxu0 0.0
    %1552 = vmatpush2.msra.mxu0 0.0
    %1553 = vmatprep.subr.mxu0 0.0
    %1554 = vmatpush2.msra.mxu0 0.0
    %1555 = vmatprep.subr.mxu0 0.0
    %1556 = vmatpush2.msra.mxu0 0.0
    %1557 = vmatprep.subr.mxu0 0.0
    %1558 = vmatpush2.msra.mxu0 0.0
    %1559 = vmatprep.subr.mxu0 0.0
    %1560 = vmatpush2.msra.mxu0 0.0
    %1561 = vmatprep.mubr.f32.mxu0 0.0
    %v1562 = vand.u32 %v240, 4294901760
    %v1563 = vsub.f32 %v240, %v1562
    %v1564 = vand.u32 %v1563, 4294901760
    %1565 = vmatmul.mubr.f32.gmra.mxu0 %v1564
    %v1566 = vpop.f32.mrf.mxu0
    %v1567 = vadd.f32 %v1489, %v1566
    %v1568 = vpop.f32.mrf.mxu0
    %v1569 = vadd.f32 %v1491, %v1568
    %1570 = vdwg.mxu0
    %1571 = vmatprep.subr.mxu0 0.0
    %1572 = vmatpush1.msra.mxu0 0.0
    %1573 = vmatprep.subr.mxu0 0.0
    %1574 = vmatpush1.msra.mxu0 0.0
    %1575 = vmatprep.subr.mxu0 0.0
    %1576 = vmatpush1.msra.mxu0 0.0
    %1577 = vmatprep.subr.mxu0 0.0
    %1578 = vmatpush1.msra.mxu0 0.0
    %1579 = vmatprep.subr.mxu0 0.0
    %1580 = vmatpush1.msra.mxu0 0.0
    %1581 = vmatprep.subr.mxu0 0.0
    %1582 = vmatpush1.msra.mxu0 0.0
    %1583 = vmatprep.subr.mxu0 0.0
    %1584 = vmatpush1.msra.mxu0 0.0
    %1585 = vmatprep.subr.mxu0 0.0
    %1586 = vmatpush1.msra.mxu0 0.0
    %1587 = vmatprep.subr.mxu0 0.0
    %1588 = vmatpush1.msra.mxu0 0.0
    %1589 = vmatprep.subr.mxu0 0.0
    %1590 = vmatpush1.msra.mxu0 0.0
    %1591 = vmatprep.subr.mxu0 0.0
    %1592 = vmatpush1.msra.mxu0 0.0
    %1593 = vmatprep.subr.mxu0 0.0
    %1594 = vmatpush1.msra.mxu0 0.0
    %1595 = vmatprep.subr.mxu0 0.0
    %1596 = vmatpush1.msra.mxu0 0.0
    %1597 = vmatprep.subr.mxu0 0.0
    %1598 = vmatpush1.msra.mxu0 0.0
    %v1599 = vand.u32 %v252, 4294901760
    %v1600 = vsub.f32 %v252, %v1599
    %v1601 = vand.u32 %v1600, 4294901760
    %1602 = vmatprep.subr.mxu0 %v1601
    %v1603 = vand.u32 %v250, 4294901760
    %v1604 = vsub.f32 %v250, %v1603
    %v1605 = vand.u32 %v1604, 4294901760
    %1606 = vmatpush1.msra.mxu0 %v1605
    %v1607 = vand.u32 %v228, 4294901760
    %v1608 = vsub.f32 %v228, %v1607
    %v1609 = vand.u32 %v1608, 4294901760
    %1610 = vmatprep.subr.mxu0 %v1609
    %v1611 = vand.u32 %v227, 4294901760
    %v1612 = vsub.f32 %v227, %v1611
    %v1613 = vand.u32 %v1612, 4294901760
    %1614 = vmatpush1.msra.mxu0 %v1613
    %1615 = vmatprep.subr.mxu0 0.0
    %1616 = vmatpush2.msra.mxu0 0.0
    %1617 = vmatprep.subr.mxu0 0.0
    %1618 = vmatpush2.msra.mxu0 0.0
    %1619 = vmatprep.subr.mxu0 0.0
    %1620 = vmatpush2.msra.mxu0 0.0
    %1621 = vmatprep.subr.mxu0 0.0
    %1622 = vmatpush2.msra.mxu0 0.0
    %1623 = vmatprep.subr.mxu0 0.0
    %1624 = vmatpush2.msra.mxu0 0.0
    %1625 = vmatprep.subr.mxu0 0.0
    %1626 = vmatpush2.msra.mxu0 0.0
    %1627 = vmatprep.subr.mxu0 0.0
    %1628 = vmatpush2.msra.mxu0 0.0
    %1629 = vmatprep.subr.mxu0 0.0
    %1630 = vmatpush2.msra.mxu0 0.0
    %1631 = vmatprep.subr.mxu0 0.0
    %1632 = vmatpush2.msra.mxu0 0.0
    %1633 = vmatprep.subr.mxu0 0.0
    %1634 = vmatpush2.msra.mxu0 0.0
    %1635 = vmatprep.subr.mxu0 0.0
    %1636 = vmatpush2.msra.mxu0 0.0
    %1637 = vmatprep.subr.mxu0 0.0
    %1638 = vmatpush2.msra.mxu0 0.0
    %1639 = vmatprep.subr.mxu0 0.0
    %1640 = vmatpush2.msra.mxu0 0.0
    %1641 = vmatprep.subr.mxu0 0.0
    %1642 = vmatpush2.msra.mxu0 0.0
    %1643 = vmatprep.subr.mxu0 0.0
    %1644 = vmatpush2.msra.mxu0 0.0
    %1645 = vmatprep.subr.mxu0 0.0
    %1646 = vmatpush2.msra.mxu0 0.0
    %1647 = vmatprep.mubr.f32.mxu0 0.0
    %v1648 = vand.u32 %v240, 4294901760
    %1649 = vmatmul.mubr.f32.gmra.mxu0 %v1648
    %v1650 = vpop.f32.mrf.mxu0
    %v1651 = vadd.f32 %v1567, %v1650
    %v1652 = vpop.f32.mrf.mxu0
    %v1653 = vadd.f32 %v1569, %v1652
    %1654 = vdwg.mxu0
    %1655 = vmatprep.subr.mxu0 0.0
    %1656 = vmatpush1.msra.mxu0 0.0
    %1657 = vmatprep.subr.mxu0 0.0
    %1658 = vmatpush1.msra.mxu0 0.0
    %1659 = vmatprep.subr.mxu0 0.0
    %1660 = vmatpush1.msra.mxu0 0.0
    %1661 = vmatprep.subr.mxu0 0.0
    %1662 = vmatpush1.msra.mxu0 0.0
    %1663 = vmatprep.subr.mxu0 0.0
    %1664 = vmatpush1.msra.mxu0 0.0
    %1665 = vmatprep.subr.mxu0 0.0
    %1666 = vmatpush1.msra.mxu0 0.0
    %1667 = vmatprep.subr.mxu0 0.0
    %1668 = vmatpush1.msra.mxu0 0.0
    %1669 = vmatprep.subr.mxu0 0.0
    %1670 = vmatpush1.msra.mxu0 0.0
    %1671 = vmatprep.subr.mxu0 0.0
    %1672 = vmatpush1.msra.mxu0 0.0
    %1673 = vmatprep.subr.mxu0 0.0
    %1674 = vmatpush1.msra.mxu0 0.0
    %1675 = vmatprep.subr.mxu0 0.0
    %1676 = vmatpush1.msra.mxu0 0.0
    %1677 = vmatprep.subr.mxu0 0.0
    %1678 = vmatpush1.msra.mxu0 0.0
    %1679 = vmatprep.subr.mxu0 0.0
    %1680 = vmatpush1.msra.mxu0 0.0
    %1681 = vmatprep.subr.mxu0 0.0
    %1682 = vmatpush1.msra.mxu0 0.0
    %v1683 = vand.u32 %v252, 4294901760
    %1684 = vmatprep.subr.mxu0 %v1683
    %v1685 = vand.u32 %v250, 4294901760
    %1686 = vmatpush1.msra.mxu0 %v1685
    %v1687 = vand.u32 %v228, 4294901760
    %1688 = vmatprep.subr.mxu0 %v1687
    %v1689 = vand.u32 %v227, 4294901760
    %1690 = vmatpush1.msra.mxu0 %v1689
    %1691 = vmatprep.subr.mxu0 0.0
    %1692 = vmatpush2.msra.mxu0 0.0
    %1693 = vmatprep.subr.mxu0 0.0
    %1694 = vmatpush2.msra.mxu0 0.0
    %1695 = vmatprep.subr.mxu0 0.0
    %1696 = vmatpush2.msra.mxu0 0.0
    %1697 = vmatprep.subr.mxu0 0.0
    %1698 = vmatpush2.msra.mxu0 0.0
    %1699 = vmatprep.subr.mxu0 0.0
    %1700 = vmatpush2.msra.mxu0 0.0
    %1701 = vmatprep.subr.mxu0 0.0
    %1702 = vmatpush2.msra.mxu0 0.0
    %1703 = vmatprep.subr.mxu0 0.0
    %1704 = vmatpush2.msra.mxu0 0.0
    %1705 = vmatprep.subr.mxu0 0.0
    %1706 = vmatpush2.msra.mxu0 0.0
    %1707 = vmatprep.subr.mxu0 0.0
    %1708 = vmatpush2.msra.mxu0 0.0
    %1709 = vmatprep.subr.mxu0 0.0
    %1710 = vmatpush2.msra.mxu0 0.0
    %1711 = vmatprep.subr.mxu0 0.0
    %1712 = vmatpush2.msra.mxu0 0.0
    %1713 = vmatprep.subr.mxu0 0.0
    %1714 = vmatpush2.msra.mxu0 0.0
    %1715 = vmatprep.subr.mxu0 0.0
    %1716 = vmatpush2.msra.mxu0 0.0
    %1717 = vmatprep.subr.mxu0 0.0
    %1718 = vmatpush2.msra.mxu0 0.0
    %1719 = vmatprep.subr.mxu0 0.0
    %1720 = vmatpush2.msra.mxu0 0.0
    %1721 = vmatprep.subr.mxu0 0.0
    %1722 = vmatpush2.msra.mxu0 0.0
    %1723 = vmatprep.mubr.f32.mxu0 0.0
    %v1724 = vand.u32 %v240, 4294901760
    %1725 = vmatmul.mubr.f32.gmra.mxu0 %v1724
    %v1726 = vpop.f32.mrf.mxu0
    %v1727 = vadd.f32 %v1651, %v1726
    %v1728 = vpop.f32.mrf.mxu0
    %v1729 = vadd.f32 %v1653, %v1728
    %1730 = vdwg.mxu0
    %1731 = vmatprep.subr.mxu0 0.0
    %1732 = vmatpush1.msra.mxu0 0.0
    %1733 = vmatprep.subr.mxu0 0.0
    %1734 = vmatpush1.msra.mxu0 0.0
    %1735 = vmatprep.subr.mxu0 0.0
    %1736 = vmatpush1.msra.mxu0 0.0
    %1737 = vmatprep.subr.mxu0 0.0
    %1738 = vmatpush1.msra.mxu0 0.0
    %1739 = vmatprep.subr.mxu0 0.0
    %1740 = vmatpush1.msra.mxu0 0.0
    %1741 = vmatprep.subr.mxu0 0.0
    %1742 = vmatpush1.msra.mxu0 0.0
    %1743 = vmatprep.subr.mxu0 0.0
    %1744 = vmatpush1.msra.mxu0 0.0
    %1745 = vmatprep.subr.mxu0 0.0
    %1746 = vmatpush1.msra.mxu0 0.0
    %1747 = vmatprep.subr.mxu0 0.0
    %1748 = vmatpush1.msra.mxu0 0.0
    %1749 = vmatprep.subr.mxu0 0.0
    %1750 = vmatpush1.msra.mxu0 0.0
    %1751 = vmatprep.subr.mxu0 0.0
    %1752 = vmatpush1.msra.mxu0 0.0
    %1753 = vmatprep.subr.mxu0 0.0
    %1754 = vmatpush1.msra.mxu0 0.0
    %1755 = vmatprep.subr.mxu0 0.0
    %1756 = vmatpush1.msra.mxu0 0.0
    %1757 = vmatprep.subr.mxu0 0.0
    %1758 = vmatpush1.msra.mxu0 0.0
    %v1759 = vand.u32 %v256, 4294901760
    %1760 = vmatprep.subr.mxu0 %v1759
    %v1761 = vand.u32 %v254, 4294901760
    %1762 = vmatpush1.msra.mxu0 %v1761
    %v1763 = vand.u32 %v230, 4294901760
    %1764 = vmatprep.subr.mxu0 %v1763
    %v1765 = vand.u32 %v229, 4294901760
    %1766 = vmatpush1.msra.mxu0 %v1765
    %1767 = vmatprep.subr.mxu0 0.0
    %1768 = vmatpush2.msra.mxu0 0.0
    %1769 = vmatprep.subr.mxu0 0.0
    %1770 = vmatpush2.msra.mxu0 0.0
    %1771 = vmatprep.subr.mxu0 0.0
    %1772 = vmatpush2.msra.mxu0 0.0
    %1773 = vmatprep.subr.mxu0 0.0
    %1774 = vmatpush2.msra.mxu0 0.0
    %1775 = vmatprep.subr.mxu0 0.0
    %1776 = vmatpush2.msra.mxu0 0.0
    %1777 = vmatprep.subr.mxu0 0.0
    %1778 = vmatpush2.msra.mxu0 0.0
    %1779 = vmatprep.subr.mxu0 0.0
    %1780 = vmatpush2.msra.mxu0 0.0
    %1781 = vmatprep.subr.mxu0 0.0
    %1782 = vmatpush2.msra.mxu0 0.0
    %1783 = vmatprep.subr.mxu0 0.0
    %1784 = vmatpush2.msra.mxu0 0.0
    %1785 = vmatprep.subr.mxu0 0.0
    %1786 = vmatpush2.msra.mxu0 0.0
    %1787 = vmatprep.subr.mxu0 0.0
    %1788 = vmatpush2.msra.mxu0 0.0
    %1789 = vmatprep.subr.mxu0 0.0
    %1790 = vmatpush2.msra.mxu0 0.0
    %1791 = vmatprep.subr.mxu0 0.0
    %1792 = vmatpush2.msra.mxu0 0.0
    %1793 = vmatprep.subr.mxu0 0.0
    %1794 = vmatpush2.msra.mxu0 0.0
    %1795 = vmatprep.subr.mxu0 0.0
    %1796 = vmatpush2.msra.mxu0 0.0
    %1797 = vmatprep.subr.mxu0 0.0
    %1798 = vmatpush2.msra.mxu0 0.0
    %1799 = vmatprep.mubr.f32.mxu0 0.0
    %v1800 = vand.u32 %v240, 4294901760
    %v1801 = vsub.f32 %v240, %v1800
    %v1802 = vand.u32 %v1801, 4294901760
    %v1803 = vsub.f32 %v1801, %v1802
    %v1804 = vand.u32 %v1803, 4294901760
    %1805 = vmatmul.mubr.f32.gmra.mxu0 %v1804
    %v1806 = vpop.f32.mrf.mxu0
    %v1807 = vadd.f32 %v236, %v1806
    %v1808 = vpop.f32.mrf.mxu0
    %v1809 = vadd.f32 %v236, %v1808
    %1810 = vdwg.mxu0
    %1811 = vmatprep.subr.mxu0 0.0
    %1812 = vmatpush1.msra.mxu0 0.0
    %1813 = vmatprep.subr.mxu0 0.0
    %1814 = vmatpush1.msra.mxu0 0.0
    %1815 = vmatprep.subr.mxu0 0.0
    %1816 = vmatpush1.msra.mxu0 0.0
    %1817 = vmatprep.subr.mxu0 0.0
    %1818 = vmatpush1.msra.mxu0 0.0
    %1819 = vmatprep.subr.mxu0 0.0
    %1820 = vmatpush1.msra.mxu0 0.0
    %1821 = vmatprep.subr.mxu0 0.0
    %1822 = vmatpush1.msra.mxu0 0.0
    %1823 = vmatprep.subr.mxu0 0.0
    %1824 = vmatpush1.msra.mxu0 0.0
    %1825 = vmatprep.subr.mxu0 0.0
    %1826 = vmatpush1.msra.mxu0 0.0
    %1827 = vmatprep.subr.mxu0 0.0
    %1828 = vmatpush1.msra.mxu0 0.0
    %1829 = vmatprep.subr.mxu0 0.0
    %1830 = vmatpush1.msra.mxu0 0.0
    %1831 = vmatprep.subr.mxu0 0.0
    %1832 = vmatpush1.msra.mxu0 0.0
    %1833 = vmatprep.subr.mxu0 0.0
    %1834 = vmatpush1.msra.mxu0 0.0
    %1835 = vmatprep.subr.mxu0 0.0
    %1836 = vmatpush1.msra.mxu0 0.0
    %1837 = vmatprep.subr.mxu0 0.0
    %1838 = vmatpush1.msra.mxu0 0.0
    %v1839 = vand.u32 %v256, 4294901760
    %v1840 = vsub.f32 %v256, %v1839
    %v1841 = vand.u32 %v1840, 4294901760
    %v1842 = vsub.f32 %v1840, %v1841
    %v1843 = vand.u32 %v1842, 4294901760
    %1844 = vmatprep.subr.mxu0 %v1843
    %v1845 = vand.u32 %v254, 4294901760
    %v1846 = vsub.f32 %v254, %v1845
    %v1847 = vand.u32 %v1846, 4294901760
    %v1848 = vsub.f32 %v1846, %v1847
    %v1849 = vand.u32 %v1848, 4294901760
    %1850 = vmatpush1.msra.mxu0 %v1849
    %v1851 = vand.u32 %v230, 4294901760
    %v1852 = vsub.f32 %v230, %v1851
    %v1853 = vand.u32 %v1852, 4294901760
    %v1854 = vsub.f32 %v1852, %v1853
    %v1855 = vand.u32 %v1854, 4294901760
    %1856 = vmatprep.subr.mxu0 %v1855
    %v1857 = vand.u32 %v229, 4294901760
    %v1858 = vsub.f32 %v229, %v1857
    %v1859 = vand.u32 %v1858, 4294901760
    %v1860 = vsub.f32 %v1858, %v1859
    %v1861 = vand.u32 %v1860, 4294901760
    %1862 = vmatpush1.msra.mxu0 %v1861
    %1863 = vmatprep.subr.mxu0 0.0
    %1864 = vmatpush2.msra.mxu0 0.0
    %1865 = vmatprep.subr.mxu0 0.0
    %1866 = vmatpush2.msra.mxu0 0.0
    %1867 = vmatprep.subr.mxu0 0.0
    %1868 = vmatpush2.msra.mxu0 0.0
    %1869 = vmatprep.subr.mxu0 0.0
    %1870 = vmatpush2.msra.mxu0 0.0
    %1871 = vmatprep.subr.mxu0 0.0
    %1872 = vmatpush2.msra.mxu0 0.0
    %1873 = vmatprep.subr.mxu0 0.0
    %1874 = vmatpush2.msra.mxu0 0.0
    %1875 = vmatprep.subr.mxu0 0.0
    %1876 = vmatpush2.msra.mxu0 0.0
    %1877 = vmatprep.subr.mxu0 0.0
    %1878 = vmatpush2.msra.mxu0 0.0
    %1879 = vmatprep.subr.mxu0 0.0
    %1880 = vmatpush2.msra.mxu0 0.0
    %1881 = vmatprep.subr.mxu0 0.0
    %1882 = vmatpush2.msra.mxu0 0.0
    %1883 = vmatprep.subr.mxu0 0.0
    %1884 = vmatpush2.msra.mxu0 0.0
    %1885 = vmatprep.subr.mxu0 0.0
    %1886 = vmatpush2.msra.mxu0 0.0
    %1887 = vmatprep.subr.mxu0 0.0
    %1888 = vmatpush2.msra.mxu0 0.0
    %1889 = vmatprep.subr.mxu0 0.0
    %1890 = vmatpush2.msra.mxu0 0.0
    %1891 = vmatprep.subr.mxu0 0.0
    %1892 = vmatpush2.msra.mxu0 0.0
    %1893 = vmatprep.subr.mxu0 0.0
    %1894 = vmatpush2.msra.mxu0 0.0
    %1895 = vmatprep.mubr.f32.mxu0 0.0
    %v1896 = vand.u32 %v240, 4294901760
    %1897 = vmatmul.mubr.f32.gmra.mxu0 %v1896
    %v1898 = vpop.f32.mrf.mxu0
    %v1899 = vadd.f32 %v1807, %v1898
    %v1900 = vpop.f32.mrf.mxu0
    %v1901 = vadd.f32 %v1809, %v1900
    %1902 = vdwg.mxu0
    %1903 = vmatprep.subr.mxu0 0.0
    %1904 = vmatpush1.msra.mxu0 0.0
    %1905 = vmatprep.subr.mxu0 0.0
    %1906 = vmatpush1.msra.mxu0 0.0
    %1907 = vmatprep.subr.mxu0 0.0
    %1908 = vmatpush1.msra.mxu0 0.0
    %1909 = vmatprep.subr.mxu0 0.0
    %1910 = vmatpush1.msra.mxu0 0.0
    %1911 = vmatprep.subr.mxu0 0.0
    %1912 = vmatpush1.msra.mxu0 0.0
    %1913 = vmatprep.subr.mxu0 0.0
    %1914 = vmatpush1.msra.mxu0 0.0
    %1915 = vmatprep.subr.mxu0 0.0
    %1916 = vmatpush1.msra.mxu0 0.0
    %1917 = vmatprep.subr.mxu0 0.0
    %1918 = vmatpush1.msra.mxu0 0.0
    %1919 = vmatprep.subr.mxu0 0.0
    %1920 = vmatpush1.msra.mxu0 0.0
    %1921 = vmatprep.subr.mxu0 0.0
    %1922 = vmatpush1.msra.mxu0 0.0
    %1923 = vmatprep.subr.mxu0 0.0
    %1924 = vmatpush1.msra.mxu0 0.0
    %1925 = vmatprep.subr.mxu0 0.0
    %1926 = vmatpush1.msra.mxu0 0.0
    %1927 = vmatprep.subr.mxu0 0.0
    %1928 = vmatpush1.msra.mxu0 0.0
    %1929 = vmatprep.subr.mxu0 0.0
    %1930 = vmatpush1.msra.mxu0 0.0
    %v1931 = vand.u32 %v256, 4294901760
    %v1932 = vsub.f32 %v256, %v1931
    %1933 = vmatprep.subr.mxu0 %v1932
    %v1934 = vand.u32 %v254, 4294901760
    %v1935 = vsub.f32 %v254, %v1934
    %1936 = vmatpush1.msra.mxu0 %v1935
    %v1937 = vand.u32 %v230, 4294901760
    %v1938 = vsub.f32 %v230, %v1937
    %1939 = vmatprep.subr.mxu0 %v1938
    %v1940 = vand.u32 %v229, 4294901760
    %v1941 = vsub.f32 %v229, %v1940
    %1942 = vmatpush1.msra.mxu0 %v1941
    %1943 = vmatprep.subr.mxu0 0.0
    %1944 = vmatpush2.msra.mxu0 0.0
    %1945 = vmatprep.subr.mxu0 0.0
    %1946 = vmatpush2.msra.mxu0 0.0
    %1947 = vmatprep.subr.mxu0 0.0
    %1948 = vmatpush2.msra.mxu0 0.0
    %1949 = vmatprep.subr.mxu0 0.0
    %1950 = vmatpush2.msra.mxu0 0.0
    %1951 = vmatprep.subr.mxu0 0.0
    %1952 = vmatpush2.msra.mxu0 0.0
    %1953 = vmatprep.subr.mxu0 0.0
    %1954 = vmatpush2.msra.mxu0 0.0
    %1955 = vmatprep.subr.mxu0 0.0
    %1956 = vmatpush2.msra.mxu0 0.0
    %1957 = vmatprep.subr.mxu0 0.0
    %1958 = vmatpush2.msra.mxu0 0.0
    %1959 = vmatprep.subr.mxu0 0.0
    %1960 = vmatpush2.msra.mxu0 0.0
    %1961 = vmatprep.subr.mxu0 0.0
    %1962 = vmatpush2.msra.mxu0 0.0
    %1963 = vmatprep.subr.mxu0 0.0
    %1964 = vmatpush2.msra.mxu0 0.0
    %1965 = vmatprep.subr.mxu0 0.0
    %1966 = vmatpush2.msra.mxu0 0.0
    %1967 = vmatprep.subr.mxu0 0.0
    %1968 = vmatpush2.msra.mxu0 0.0
    %1969 = vmatprep.subr.mxu0 0.0
    %1970 = vmatpush2.msra.mxu0 0.0
    %1971 = vmatprep.subr.mxu0 0.0
    %1972 = vmatpush2.msra.mxu0 0.0
    %1973 = vmatprep.subr.mxu0 0.0
    %1974 = vmatpush2.msra.mxu0 0.0
    %1975 = vmatprep.mubr.f32.mxu0 0.0
    %v1976 = vand.u32 %v240, 4294901760
    %v1977 = vsub.f32 %v240, %v1976
    %1978 = vmatmul.mubr.f32.gmra.mxu0 %v1977
    %v1979 = vpop.f32.mrf.mxu0
    %v1980 = vadd.f32 %v1899, %v1979
    %v1981 = vpop.f32.mrf.mxu0
    %v1982 = vadd.f32 %v1901, %v1981
    %1983 = vdwg.mxu0
    %1984 = vmatprep.subr.mxu0 0.0
    %1985 = vmatpush1.msra.mxu0 0.0
    %1986 = vmatprep.subr.mxu0 0.0
    %1987 = vmatpush1.msra.mxu0 0.0
    %1988 = vmatprep.subr.mxu0 0.0
    %1989 = vmatpush1.msra.mxu0 0.0
    %1990 = vmatprep.subr.mxu0 0.0
    %1991 = vmatpush1.msra.mxu0 0.0
    %1992 = vmatprep.subr.mxu0 0.0
    %1993 = vmatpush1.msra.mxu0 0.0
    %1994 = vmatprep.subr.mxu0 0.0
    %1995 = vmatpush1.msra.mxu0 0.0
    %1996 = vmatprep.subr.mxu0 0.0
    %1997 = vmatpush1.msra.mxu0 0.0
    %1998 = vmatprep.subr.mxu0 0.0
    %1999 = vmatpush1.msra.mxu0 0.0
    %2000 = vmatprep.subr.mxu0 0.0
    %2001 = vmatpush1.msra.mxu0 0.0
    %2002 = vmatprep.subr.mxu0 0.0
    %2003 = vmatpush1.msra.mxu0 0.0
    %2004 = vmatprep.subr.mxu0 0.0
    %2005 = vmatpush1.msra.mxu0 0.0
    %2006 = vmatprep.subr.mxu0 0.0
    %2007 = vmatpush1.msra.mxu0 0.0
    %2008 = vmatprep.subr.mxu0 0.0
    %2009 = vmatpush1.msra.mxu0 0.0
    %2010 = vmatprep.subr.mxu0 0.0
    %2011 = vmatpush1.msra.mxu0 0.0
    %v2012 = vand.u32 %v256, 4294901760
    %2013 = vmatprep.subr.mxu0 %v2012
    %v2014 = vand.u32 %v254, 4294901760
    %2015 = vmatpush1.msra.mxu0 %v2014
    %v2016 = vand.u32 %v230, 4294901760
    %2017 = vmatprep.subr.mxu0 %v2016
    %v2018 = vand.u32 %v229, 4294901760
    %2019 = vmatpush1.msra.mxu0 %v2018
    %2020 = vmatprep.subr.mxu0 0.0
    %2021 = vmatpush2.msra.mxu0 0.0
    %2022 = vmatprep.subr.mxu0 0.0
    %2023 = vmatpush2.msra.mxu0 0.0
    %2024 = vmatprep.subr.mxu0 0.0
    %2025 = vmatpush2.msra.mxu0 0.0
    %2026 = vmatprep.subr.mxu0 0.0
    %2027 = vmatpush2.msra.mxu0 0.0
    %2028 = vmatprep.subr.mxu0 0.0
    %2029 = vmatpush2.msra.mxu0 0.0
    %2030 = vmatprep.subr.mxu0 0.0
    %2031 = vmatpush2.msra.mxu0 0.0
    %2032 = vmatprep.subr.mxu0 0.0
    %2033 = vmatpush2.msra.mxu0 0.0
    %2034 = vmatprep.subr.mxu0 0.0
    %2035 = vmatpush2.msra.mxu0 0.0
    %2036 = vmatprep.subr.mxu0 0.0
    %2037 = vmatpush2.msra.mxu0 0.0
    %2038 = vmatprep.subr.mxu0 0.0
    %2039 = vmatpush2.msra.mxu0 0.0
    %2040 = vmatprep.subr.mxu0 0.0
    %2041 = vmatpush2.msra.mxu0 0.0
    %2042 = vmatprep.subr.mxu0 0.0
    %2043 = vmatpush2.msra.mxu0 0.0
    %2044 = vmatprep.subr.mxu0 0.0
    %2045 = vmatpush2.msra.mxu0 0.0
    %2046 = vmatprep.subr.mxu0 0.0
    %2047 = vmatpush2.msra.mxu0 0.0
    %2048 = vmatprep.subr.mxu0 0.0
    %2049 = vmatpush2.msra.mxu0 0.0
    %2050 = vmatprep.subr.mxu0 0.0
    %2051 = vmatpush2.msra.mxu0 0.0
    %2052 = vmatprep.mubr.f32.mxu0 0.0
    %v2053 = vand.u32 %v240, 4294901760
    %v2054 = vsub.f32 %v240, %v2053
    %v2055 = vand.u32 %v2054, 4294901760
    %2056 = vmatmul.mubr.f32.gmra.mxu0 %v2055
    %v2057 = vpop.f32.mrf.mxu0
    %v2058 = vadd.f32 %v1980, %v2057
    %v2059 = vpop.f32.mrf.mxu0
    %v2060 = vadd.f32 %v1982, %v2059
    %2061 = vdwg.mxu0
    %2062 = vmatprep.subr.mxu0 0.0
    %2063 = vmatpush1.msra.mxu0 0.0
    %2064 = vmatprep.subr.mxu0 0.0
    %2065 = vmatpush1.msra.mxu0 0.0
    %2066 = vmatprep.subr.mxu0 0.0
    %2067 = vmatpush1.msra.mxu0 0.0
    %2068 = vmatprep.subr.mxu0 0.0
    %2069 = vmatpush1.msra.mxu0 0.0
    %2070 = vmatprep.subr.mxu0 0.0
    %2071 = vmatpush1.msra.mxu0 0.0
    %2072 = vmatprep.subr.mxu0 0.0
    %2073 = vmatpush1.msra.mxu0 0.0
    %2074 = vmatprep.subr.mxu0 0.0
    %2075 = vmatpush1.msra.mxu0 0.0
    %2076 = vmatprep.subr.mxu0 0.0
    %2077 = vmatpush1.msra.mxu0 0.0
    %2078 = vmatprep.subr.mxu0 0.0
    %2079 = vmatpush1.msra.mxu0 0.0
    %2080 = vmatprep.subr.mxu0 0.0
    %2081 = vmatpush1.msra.mxu0 0.0
    %2082 = vmatprep.subr.mxu0 0.0
    %2083 = vmatpush1.msra.mxu0 0.0
    %2084 = vmatprep.subr.mxu0 0.0
    %2085 = vmatpush1.msra.mxu0 0.0
    %2086 = vmatprep.subr.mxu0 0.0
    %2087 = vmatpush1.msra.mxu0 0.0
    %2088 = vmatprep.subr.mxu0 0.0
    %2089 = vmatpush1.msra.mxu0 0.0
    %v2090 = vand.u32 %v256, 4294901760
    %v2091 = vsub.f32 %v256, %v2090
    %v2092 = vand.u32 %v2091, 4294901760
    %2093 = vmatprep.subr.mxu0 %v2092
    %v2094 = vand.u32 %v254, 4294901760
    %v2095 = vsub.f32 %v254, %v2094
    %v2096 = vand.u32 %v2095, 4294901760
    %2097 = vmatpush1.msra.mxu0 %v2096
    %v2098 = vand.u32 %v230, 4294901760
    %v2099 = vsub.f32 %v230, %v2098
    %v2100 = vand.u32 %v2099, 4294901760
    %2101 = vmatprep.subr.mxu0 %v2100
    %v2102 = vand.u32 %v229, 4294901760
    %v2103 = vsub.f32 %v229, %v2102
    %v2104 = vand.u32 %v2103, 4294901760
    %2105 = vmatpush1.msra.mxu0 %v2104
    %2106 = vmatprep.subr.mxu0 0.0
    %2107 = vmatpush2.msra.mxu0 0.0
    %2108 = vmatprep.subr.mxu0 0.0
    %2109 = vmatpush2.msra.mxu0 0.0
    %2110 = vmatprep.subr.mxu0 0.0
    %2111 = vmatpush2.msra.mxu0 0.0
    %2112 = vmatprep.subr.mxu0 0.0
    %2113 = vmatpush2.msra.mxu0 0.0
    %2114 = vmatprep.subr.mxu0 0.0
    %2115 = vmatpush2.msra.mxu0 0.0
    %2116 = vmatprep.subr.mxu0 0.0
    %2117 = vmatpush2.msra.mxu0 0.0
    %2118 = vmatprep.subr.mxu0 0.0
    %2119 = vmatpush2.msra.mxu0 0.0
    %2120 = vmatprep.subr.mxu0 0.0
    %2121 = vmatpush2.msra.mxu0 0.0
    %2122 = vmatprep.subr.mxu0 0.0
    %2123 = vmatpush2.msra.mxu0 0.0
    %2124 = vmatprep.subr.mxu0 0.0
    %2125 = vmatpush2.msra.mxu0 0.0
    %2126 = vmatprep.subr.mxu0 0.0
    %2127 = vmatpush2.msra.mxu0 0.0
    %2128 = vmatprep.subr.mxu0 0.0
    %2129 = vmatpush2.msra.mxu0 0.0
    %2130 = vmatprep.subr.mxu0 0.0
    %2131 = vmatpush2.msra.mxu0 0.0
    %2132 = vmatprep.subr.mxu0 0.0
    %2133 = vmatpush2.msra.mxu0 0.0
    %2134 = vmatprep.subr.mxu0 0.0
    %2135 = vmatpush2.msra.mxu0 0.0
    %2136 = vmatprep.subr.mxu0 0.0
    %2137 = vmatpush2.msra.mxu0 0.0
    %2138 = vmatprep.mubr.f32.mxu0 0.0
    %v2139 = vand.u32 %v240, 4294901760
    %2140 = vmatmul.mubr.f32.gmra.mxu0 %v2139
    %v2141 = vpop.f32.mrf.mxu0
    %v2142 = vadd.f32 %v2058, %v2141
    %v2143 = vpop.f32.mrf.mxu0
    %v2144 = vadd.f32 %v2060, %v2143
    %2145 = vdwg.mxu0
    %2146 = vmatprep.subr.mxu0 0.0
    %2147 = vmatpush1.msra.mxu0 0.0
    %2148 = vmatprep.subr.mxu0 0.0
    %2149 = vmatpush1.msra.mxu0 0.0
    %2150 = vmatprep.subr.mxu0 0.0
    %2151 = vmatpush1.msra.mxu0 0.0
    %2152 = vmatprep.subr.mxu0 0.0
    %2153 = vmatpush1.msra.mxu0 0.0
    %2154 = vmatprep.subr.mxu0 0.0
    %2155 = vmatpush1.msra.mxu0 0.0
    %2156 = vmatprep.subr.mxu0 0.0
    %2157 = vmatpush1.msra.mxu0 0.0
    %2158 = vmatprep.subr.mxu0 0.0
    %2159 = vmatpush1.msra.mxu0 0.0
    %2160 = vmatprep.subr.mxu0 0.0
    %2161 = vmatpush1.msra.mxu0 0.0
    %2162 = vmatprep.subr.mxu0 0.0
    %2163 = vmatpush1.msra.mxu0 0.0
    %2164 = vmatprep.subr.mxu0 0.0
    %2165 = vmatpush1.msra.mxu0 0.0
    %2166 = vmatprep.subr.mxu0 0.0
    %2167 = vmatpush1.msra.mxu0 0.0
    %2168 = vmatprep.subr.mxu0 0.0
    %2169 = vmatpush1.msra.mxu0 0.0
    %2170 = vmatprep.subr.mxu0 0.0
    %2171 = vmatpush1.msra.mxu0 0.0
    %2172 = vmatprep.subr.mxu0 0.0
    %2173 = vmatpush1.msra.mxu0 0.0
    %v2174 = vand.u32 %v256, 4294901760
    %2175 = vmatprep.subr.mxu0 %v2174
    %v2176 = vand.u32 %v254, 4294901760
    %2177 = vmatpush1.msra.mxu0 %v2176
    %v2178 = vand.u32 %v230, 4294901760
    %2179 = vmatprep.subr.mxu0 %v2178
    %v2180 = vand.u32 %v229, 4294901760
    %2181 = vmatpush1.msra.mxu0 %v2180
    %2182 = vmatprep.subr.mxu0 0.0
    %2183 = vmatpush2.msra.mxu0 0.0
    %2184 = vmatprep.subr.mxu0 0.0
    %2185 = vmatpush2.msra.mxu0 0.0
    %2186 = vmatprep.subr.mxu0 0.0
    %2187 = vmatpush2.msra.mxu0 0.0
    %2188 = vmatprep.subr.mxu0 0.0
    %2189 = vmatpush2.msra.mxu0 0.0
    %2190 = vmatprep.subr.mxu0 0.0
    %2191 = vmatpush2.msra.mxu0 0.0
    %2192 = vmatprep.subr.mxu0 0.0
    %2193 = vmatpush2.msra.mxu0 0.0
    %2194 = vmatprep.subr.mxu0 0.0
    %2195 = vmatpush2.msra.mxu0 0.0
    %2196 = vmatprep.subr.mxu0 0.0
    %2197 = vmatpush2.msra.mxu0 0.0
    %2198 = vmatprep.subr.mxu0 0.0
    %2199 = vmatpush2.msra.mxu0 0.0
    %2200 = vmatprep.subr.mxu0 0.0
    %2201 = vmatpush2.msra.mxu0 0.0
    %2202 = vmatprep.subr.mxu0 0.0
    %2203 = vmatpush2.msra.mxu0 0.0
    %2204 = vmatprep.subr.mxu0 0.0
    %2205 = vmatpush2.msra.mxu0 0.0
    %2206 = vmatprep.subr.mxu0 0.0
    %2207 = vmatpush2.msra.mxu0 0.0
    %2208 = vmatprep.subr.mxu0 0.0
    %2209 = vmatpush2.msra.mxu0 0.0
    %2210 = vmatprep.subr.mxu0 0.0
    %2211 = vmatpush2.msra.mxu0 0.0
    %2212 = vmatprep.subr.mxu0 0.0
    %2213 = vmatpush2.msra.mxu0 0.0
    %2214 = vmatprep.mubr.f32.mxu0 0.0
    %v2215 = vand.u32 %v240, 4294901760
    %2216 = vmatmul.mubr.f32.gmra.mxu0 %v2215
    %v2217 = vpop.f32.mrf.mxu0
    %v2218 = vadd.f32 %v2142, %v2217
    %v2219 = vpop.f32.mrf.mxu0
    %v2220 = vadd.f32 %v2144, %v2219
    %2221 = vdwg.mxu0
    %v2222 = vtanh.pop %v745
    %v2223 = vtanh.pop %v747
    %v2224 = vtanh.pop %v1236
    %v2225 = vtanh.pop %v1238
    %v2226 = vtanh.pop %v1727
    %v2227 = vtanh.pop %v1729
    %v2228 = vtanh.pop %v2218
    %v2229 = vtanh.pop %v2220
    %2238 = vrot.lane.b32.xlu0 %v2222, 127
    %v2239 = vpop.permute.xlu0 %2238
    %2240 = vrot.lane.b32.xlu0 %v2223, 127
    %v2241 = vpop.permute.xlu0 %2240
    %2242 = vrot.lane.b32.xlu0 %v2224, 127
    %v2243 = vpop.permute.xlu0 %2242
    %2244 = vrot.lane.b32.xlu0 %v2225, 127
    %v2245 = vpop.permute.xlu0 %2244
    %2246 = vrot.lane.b32.xlu0 %v2226, 127
    %v2247 = vpop.permute.xlu0 %2246
    %2248 = vrot.lane.b32.xlu0 %v2227, 127
    %v2249 = vpop.permute.xlu0 %2248
    %2250 = vrot.lane.b32.xlu0 %v2228, 127
    %v2251 = vpop.permute.xlu0 %2250
    %2252 = vrot.lane.b32.xlu0 %v2229, 127
    %v2253 = vpop.permute.xlu0 %2252
    %v2254 = vsel %vm156, %v2239, %v2241
    %v2255 = vsel %vm156, %v2241, %v2243
    %v2256 = vsel %vm156, %v2243, %v2245
    %v2257 = vsel %vm156, %v2245, %v2247
    %v2258 = vsel %vm156, %v2247, %v2249
    %v2259 = vsel %vm156, %v2249, %v2251
    %v2260 = vsel %vm156, %v2251, %v2253
    %v2270 = vsel %vm156, %v2253, %v2239
    %v2271 = vmax.f32 %v2222, %v2254
    %v2272 = vmax.f32 %v2223, %v2255
    %v2273 = vmax.f32 %v2224, %v2256
    %v2274 = vmax.f32 %v2225, %v2257
    %v2275 = vmax.f32 %v2226, %v2258
    %v2276 = vmax.f32 %v2227, %v2259
    %v2277 = vmax.f32 %v2228, %v2260
    %v2278 = vmax.f32 %v2229, %v2270
    %v2279 = vmax.f32 %v2271, 0.0
    %v2280 = vmax.f32 %v2272, 0.0
    %v2281 = vmax.f32 %v2273, 0.0
    %v2282 = vmax.f32 %v2274, 0.0
    %v2283 = vmax.f32 %v2275, 0.0
    %v2284 = vmax.f32 %v2276, 0.0
    %v2285 = vmax.f32 %v2277, 0.0
    %v2286 = vmax.f32 %v2278, 0.0
    %v2287 = vld [vmem:[#allocation5] sm:$0xff]
    %v2288 = vld [vmem:[#allocation5 + $0x8] sm:$0xff]
    %v2289 = vld [vmem:[#allocation5 + $0x10] sm:$0xff]
    %v2290 = vld [vmem:[#allocation5 + $0x18] sm:$0xff]
    %v2291 = vld [vmem:[#allocation5 + $0x20] sm:$0xff]
    %v2292 = vld [vmem:[#allocation5 + $0x28] sm:$0xff]
    %v2293 = vld [vmem:[#allocation5 + $0x30] sm:$0xff]
    %v2294 = vld [vmem:[#allocation5 + $0x38] sm:$0xff]
    %v2295 = vld [vmem:[#allocation5 + $0x40] sm:$0xff]
    %v2296 = vld [vmem:[#allocation5 + $0x48] sm:$0xff]
    %v2297 = vld [vmem:[#allocation5 + $0x50] sm:$0xff]
    %v2298 = vld [vmem:[#allocation5 + $0x58] sm:$0xff]
    %v2299 = vld [vmem:[#allocation5 + $0x60] sm:$0xff]
    %v2300 = vld [vmem:[#allocation5 + $0x68] sm:$0xff]
    %v2301 = vld [vmem:[#allocation5 + $0x70] sm:$0xff]
    %v2302 = vld [vmem:[#allocation5 + $0x78] sm:$0xff]
    %v2303 = vld [vmem:[#allocation5 + $0x80] sm:$0xff]
    %v2304 = vld [vmem:[#allocation5 + $0x88] sm:$0xff]
    %v2305 = vld [vmem:[#allocation5 + $0x90] sm:$0xff]
    %v2306 = vld [vmem:[#allocation5 + $0x98] sm:$0xff]
    %v2307 = vld [vmem:[#allocation5 + $0xa0] sm:$0xff]
    %v2308 = vld [vmem:[#allocation5 + $0xa8] sm:$0xff]
    %v2309 = vld [vmem:[#allocation5 + $0xb0] sm:$0xff]
    %v2310 = vld [vmem:[#allocation5 + $0xb8] sm:$0xff]
    %v2311 = vld [vmem:[#allocation5 + $0xc0] sm:$0xff]
    %v2312 = vld [vmem:[#allocation5 + $0xc8] sm:$0xff]
    %v2313 = vld [vmem:[#allocation5 + $0xd0] sm:$0xff]
    %v2314 = vld [vmem:[#allocation5 + $0xd8] sm:$0xff]
    %v2315 = vld [vmem:[#allocation5 + $0xe0] sm:$0xff]
    %v2316 = vld [vmem:[#allocation5 + $0xe8] sm:$0xff]
    %v2317 = vld [vmem:[#allocation5 + $0xf0] sm:$0xff]
    %v2318 = vld [vmem:[#allocation5 + $0xf8] sm:$0xff]
    %v2319 = vld [vmem:[#allocation5 + $0x100] sm:$0xff]
    %v2320 = vld [vmem:[#allocation5 + $0x108] sm:$0xff]
    %v2321 = vld [vmem:[#allocation5 + $0x110] sm:$0xff]
    %v2322 = vld [vmem:[#allocation5 + $0x118] sm:$0xff]
    %v2323 = vld [vmem:[#allocation5 + $0x120] sm:$0xff]
    %v2324 = vld [vmem:[#allocation5 + $0x128] sm:$0xff]
    %v2325 = vld [vmem:[#allocation5 + $0x130] sm:$0xff]
    %v2326 = vld [vmem:[#allocation5 + $0x138] sm:$0xff]
    %v2327 = vld [vmem:[#allocation5 + $0x140] sm:$0xff]
    %v2328 = vld [vmem:[#allocation5 + $0x148] sm:$0xff]
    %v2329 = vld [vmem:[#allocation5 + $0x150] sm:$0xff]
    %v2330 = vld [vmem:[#allocation5 + $0x158] sm:$0xff]
    %v2331 = vld [vmem:[#allocation5 + $0x160] sm:$0xff]
    %v2332 = vld [vmem:[#allocation5 + $0x168] sm:$0xff]
    %v2333 = vld [vmem:[#allocation5 + $0x170] sm:$0xff]
    %v2334 = vld [vmem:[#allocation5 + $0x178] sm:$0xff]
    %v2335 = vld [vmem:[#allocation5 + $0x180] sm:$0xff]
    %v2336 = vld [vmem:[#allocation5 + $0x188] sm:$0xff]
    %v2337 = vld [vmem:[#allocation5 + $0x190] sm:$0xff]
    %v2338 = vld [vmem:[#allocation5 + $0x198] sm:$0xff]
    %v2339 = vld [vmem:[#allocation5 + $0x1a0] sm:$0xff]
    %v2340 = vld [vmem:[#allocation5 + $0x1a8] sm:$0xff]
    %v2341 = vld [vmem:[#allocation5 + $0x1b0] sm:$0xff]
    %v2342 = vld [vmem:[#allocation5 + $0x1b8] sm:$0xff]
    %v2343 = vld [vmem:[#allocation5 + $0x1c0] sm:$0xff]
    %v2344 = vld [vmem:[#allocation5 + $0x1c8] sm:$0xff]
    %v2345 = vld [vmem:[#allocation5 + $0x1d0] sm:$0xff]
    %v2346 = vld [vmem:[#allocation5 + $0x1d8] sm:$0xff]
    %v2347 = vld [vmem:[#allocation5 + $0x1e0] sm:$0xff]
    %v2348 = vld [vmem:[#allocation5 + $0x1e8] sm:$0xff]
    %v2349 = vld [vmem:[#allocation5 + $0x1f0] sm:$0xff]
    %v2350 = vld [vmem:[#allocation5 + $0x1f8] sm:$0xff]
    %v2351 = vld [vmem:[%s5] sm:$0x1]
    %v2353 = vlaneseq
    %v2354 = vshrl.u32 %v2353, 7
    %v2355 = vsub.s32 0, %v2354
    %v2356 = vrot.slane %v2351, %v2355
    %2358 = vmatprep.subr.mxu0 0.0
    %v2359 = vand.u32 %v2302, 4294901760
    %2360 = vmatpush1.msra.mxu0 %v2359
    %2361 = vmatprep.subr.mxu0 0.0
    %v2362 = vand.u32 %v2301, 4294901760
    %2363 = vmatpush1.msra.mxu0 %v2362
    %2364 = vmatprep.subr.mxu0 0.0
    %v2365 = vand.u32 %v2300, 4294901760
    %2366 = vmatpush1.msra.mxu0 %v2365
    %2367 = vmatprep.subr.mxu0 0.0
    %v2368 = vand.u32 %v2299, 4294901760
    %2369 = vmatpush1.msra.mxu0 %v2368
    %2370 = vmatprep.subr.mxu0 0.0
    %v2371 = vand.u32 %v2298, 4294901760
    %2372 = vmatpush1.msra.mxu0 %v2371
    %2373 = vmatprep.subr.mxu0 0.0
    %v2374 = vand.u32 %v2297, 4294901760
    %2375 = vmatpush1.msra.mxu0 %v2374
    %2376 = vmatprep.subr.mxu0 0.0
    %v2377 = vand.u32 %v2296, 4294901760
    %2378 = vmatpush1.msra.mxu0 %v2377
    %2379 = vmatprep.subr.mxu0 0.0
    %v2380 = vand.u32 %v2295, 4294901760
    %2381 = vmatpush1.msra.mxu0 %v2380
    %2382 = vmatprep.subr.mxu0 0.0
    %v2383 = vand.u32 %v2294, 4294901760
    %2384 = vmatpush1.msra.mxu0 %v2383
    %2385 = vmatprep.subr.mxu0 0.0
    %v2386 = vand.u32 %v2293, 4294901760
    %2387 = vmatpush1.msra.mxu0 %v2386
    %2388 = vmatprep.subr.mxu0 0.0
    %v2389 = vand.u32 %v2292, 4294901760
    %2390 = vmatpush1.msra.mxu0 %v2389
    %2391 = vmatprep.subr.mxu0 0.0
    %v2392 = vand.u32 %v2291, 4294901760
    %2393 = vmatpush1.msra.mxu0 %v2392
    %2394 = vmatprep.subr.mxu0 0.0
    %v2395 = vand.u32 %v2290, 4294901760
    %2396 = vmatpush1.msra.mxu0 %v2395
    %2397 = vmatprep.subr.mxu0 0.0
    %v2398 = vand.u32 %v2289, 4294901760
    %2399 = vmatpush1.msra.mxu0 %v2398
    %2400 = vmatprep.subr.mxu0 0.0
    %v2401 = vand.u32 %v2288, 4294901760
    %2402 = vmatpush1.msra.mxu0 %v2401
    %2403 = vmatprep.subr.mxu0 0.0
    %v2404 = vand.u32 %v2287, 4294901760
    %2405 = vmatpush1.msra.mxu0 %v2404
    %2406 = vmatprep.subr.mxu0 0.0
    %v2407 = vand.u32 %v2318, 4294901760
    %2408 = vmatpush2.msra.mxu0 %v2407
    %2409 = vmatprep.subr.mxu0 0.0
    %v2410 = vand.u32 %v2317, 4294901760
    %2411 = vmatpush2.msra.mxu0 %v2410
    %2412 = vmatprep.subr.mxu0 0.0
    %v2413 = vand.u32 %v2316, 4294901760
    %2414 = vmatpush2.msra.mxu0 %v2413
    %2415 = vmatprep.subr.mxu0 0.0
    %v2416 = vand.u32 %v2315, 4294901760
    %2417 = vmatpush2.msra.mxu0 %v2416
    %2418 = vmatprep.subr.mxu0 0.0
    %v2419 = vand.u32 %v2314, 4294901760
    %2420 = vmatpush2.msra.mxu0 %v2419
    %2421 = vmatprep.subr.mxu0 0.0
    %v2422 = vand.u32 %v2313, 4294901760
    %2423 = vmatpush2.msra.mxu0 %v2422
    %2424 = vmatprep.subr.mxu0 0.0
    %v2425 = vand.u32 %v2312, 4294901760
    %2426 = vmatpush2.msra.mxu0 %v2425
    %2427 = vmatprep.subr.mxu0 0.0
    %v2428 = vand.u32 %v2311, 4294901760
    %2429 = vmatpush2.msra.mxu0 %v2428
    %2430 = vmatprep.subr.mxu0 0.0
    %v2431 = vand.u32 %v2310, 4294901760
    %2432 = vmatpush2.msra.mxu0 %v2431
    %2433 = vmatprep.subr.mxu0 0.0
    %v2434 = vand.u32 %v2309, 4294901760
    %2435 = vmatpush2.msra.mxu0 %v2434
    %2436 = vmatprep.subr.mxu0 0.0
    %v2437 = vand.u32 %v2308, 4294901760
    %2438 = vmatpush2.msra.mxu0 %v2437
    %2439 = vmatprep.subr.mxu0 0.0
    %v2440 = vand.u32 %v2307, 4294901760
    %2441 = vmatpush2.msra.mxu0 %v2440
    %2442 = vmatprep.subr.mxu0 0.0
    %v2443 = vand.u32 %v2306, 4294901760
    %2444 = vmatpush2.msra.mxu0 %v2443
    %2445 = vmatprep.subr.mxu0 0.0
    %v2446 = vand.u32 %v2305, 4294901760
    %2447 = vmatpush2.msra.mxu0 %v2446
    %2448 = vmatprep.subr.mxu0 0.0
    %v2449 = vand.u32 %v2304, 4294901760
    %2450 = vmatpush2.msra.mxu0 %v2449
    %2451 = vmatprep.subr.mxu0 0.0
    %v2452 = vand.u32 %v2303, 4294901760
    %2453 = vmatpush2.msra.mxu0 %v2452
    %v2454 = vand.u32 %v2280, 4294901760
    %v2455 = vsub.f32 %v2280, %v2454
    %v2456 = vand.u32 %v2455, 4294901760
    %v2457 = vsub.f32 %v2455, %v2456
    %v2458 = vand.u32 %v2457, 4294901760
    %2459 = vmatprep.mubr.f32.mxu0 %v2458
    %v2460 = vand.u32 %v2279, 4294901760
    %v2461 = vsub.f32 %v2279, %v2460
    %v2462 = vand.u32 %v2461, 4294901760
    %v2463 = vsub.f32 %v2461, %v2462
    %v2464 = vand.u32 %v2463, 4294901760
    %2465 = vmatmul.mubr.f32.gmra.mxu0 %v2464
    %v2466 = vpop.f32.mrf.mxu0
    %v2467 = vadd.f32 %v2356, %v2466
    %v2468 = vpop.f32.mrf.mxu0
    %v2469 = vand.u32 %v2284, 4294901760
    %v2470 = vsub.f32 %v2284, %v2469
    %v2471 = vand.u32 %v2470, 4294901760
    %v2472 = vsub.f32 %v2470, %v2471
    %v2473 = vand.u32 %v2472, 4294901760
    %2474 = vmatprep.mubr.f32.mxu0 %v2473
    %v2475 = vand.u32 %v2283, 4294901760
    %v2476 = vsub.f32 %v2283, %v2475
    %v2477 = vand.u32 %v2476, 4294901760
    %v2478 = vsub.f32 %v2476, %v2477
    %v2479 = vand.u32 %v2478, 4294901760
    %2480 = vmatmul.mubr.f32.gmra.mxu0 %v2479
    %v2481 = vpop.f32.mrf.mxu0
    %v2482 = vadd.f32 %v2356, %v2481
    %v2483 = vpop.f32.mrf.mxu0
    %2484 = vdwg.mxu0
    %2485 = vmatprep.subr.mxu0 0.0
    %v2486 = vand.u32 %v2302, 4294901760
    %v2487 = vsub.f32 %v2302, %v2486
    %v2488 = vand.u32 %v2487, 4294901760
    %v2489 = vsub.f32 %v2487, %v2488
    %v2490 = vand.u32 %v2489, 4294901760
    %2491 = vmatpush1.msra.mxu0 %v2490
    %2492 = vmatprep.subr.mxu0 0.0
    %v2493 = vand.u32 %v2301, 4294901760
    %v2494 = vsub.f32 %v2301, %v2493
    %v2495 = vand.u32 %v2494, 4294901760
    %v2496 = vsub.f32 %v2494, %v2495
    %v2497 = vand.u32 %v2496, 4294901760
    %2498 = vmatpush1.msra.mxu0 %v2497
    %2499 = vmatprep.subr.mxu0 0.0
    %v2500 = vand.u32 %v2300, 4294901760
    %v2501 = vsub.f32 %v2300, %v2500
    %v2502 = vand.u32 %v2501, 4294901760
    %v2503 = vsub.f32 %v2501, %v2502
    %v2504 = vand.u32 %v2503, 4294901760
    %2505 = vmatpush1.msra.mxu0 %v2504
    %2506 = vmatprep.subr.mxu0 0.0
    %v2507 = vand.u32 %v2299, 4294901760
    %v2508 = vsub.f32 %v2299, %v2507
    %v2509 = vand.u32 %v2508, 4294901760
    %v2510 = vsub.f32 %v2508, %v2509
    %v2511 = vand.u32 %v2510, 4294901760
    %2512 = vmatpush1.msra.mxu0 %v2511
    %2513 = vmatprep.subr.mxu0 0.0
    %v2514 = vand.u32 %v2298, 4294901760
    %v2515 = vsub.f32 %v2298, %v2514
    %v2516 = vand.u32 %v2515, 4294901760
    %v2517 = vsub.f32 %v2515, %v2516
    %v2518 = vand.u32 %v2517, 4294901760
    %2519 = vmatpush1.msra.mxu0 %v2518
    %2520 = vmatprep.subr.mxu0 0.0
    %v2521 = vand.u32 %v2297, 4294901760
    %v2522 = vsub.f32 %v2297, %v2521
    %v2523 = vand.u32 %v2522, 4294901760
    %v2524 = vsub.f32 %v2522, %v2523
    %v2525 = vand.u32 %v2524, 4294901760
    %2526 = vmatpush1.msra.mxu0 %v2525
    %2527 = vmatprep.subr.mxu0 0.0
    %v2528 = vand.u32 %v2296, 4294901760
    %v2529 = vsub.f32 %v2296, %v2528
    %v2530 = vand.u32 %v2529, 4294901760
    %v2531 = vsub.f32 %v2529, %v2530
    %v2532 = vand.u32 %v2531, 4294901760
    %2533 = vmatpush1.msra.mxu0 %v2532
    %2534 = vmatprep.subr.mxu0 0.0
    %v2535 = vand.u32 %v2295, 4294901760
    %v2536 = vsub.f32 %v2295, %v2535
    %v2537 = vand.u32 %v2536, 4294901760
    %v2538 = vsub.f32 %v2536, %v2537
    %v2539 = vand.u32 %v2538, 4294901760
    %2540 = vmatpush1.msra.mxu0 %v2539
    %2541 = vmatprep.subr.mxu0 0.0
    %v2542 = vand.u32 %v2294, 4294901760
    %v2543 = vsub.f32 %v2294, %v2542
    %v2544 = vand.u32 %v2543, 4294901760
    %v2545 = vsub.f32 %v2543, %v2544
    %v2546 = vand.u32 %v2545, 4294901760
    %2547 = vmatpush1.msra.mxu0 %v2546
    %2548 = vmatprep.subr.mxu0 0.0
    %v2549 = vand.u32 %v2293, 4294901760
    %v2550 = vsub.f32 %v2293, %v2549
    %v2551 = vand.u32 %v2550, 4294901760
    %v2552 = vsub.f32 %v2550, %v2551
    %v2553 = vand.u32 %v2552, 4294901760
    %2554 = vmatpush1.msra.mxu0 %v2553
    %2555 = vmatprep.subr.mxu0 0.0
    %v2556 = vand.u32 %v2292, 4294901760
    %v2557 = vsub.f32 %v2292, %v2556
    %v2558 = vand.u32 %v2557, 4294901760
    %v2559 = vsub.f32 %v2557, %v2558
    %v2560 = vand.u32 %v2559, 4294901760
    %2561 = vmatpush1.msra.mxu0 %v2560
    %2562 = vmatprep.subr.mxu0 0.0
    %v2563 = vand.u32 %v2291, 4294901760
    %v2564 = vsub.f32 %v2291, %v2563
    %v2565 = vand.u32 %v2564, 4294901760
    %v2566 = vsub.f32 %v2564, %v2565
    %v2567 = vand.u32 %v2566, 4294901760
    %2568 = vmatpush1.msra.mxu0 %v2567
    %2569 = vmatprep.subr.mxu0 0.0
    %v2570 = vand.u32 %v2290, 4294901760
    %v2571 = vsub.f32 %v2290, %v2570
    %v2572 = vand.u32 %v2571, 4294901760
    %v2573 = vsub.f32 %v2571, %v2572
    %v2574 = vand.u32 %v2573, 4294901760
    %2575 = vmatpush1.msra.mxu0 %v2574
    %2576 = vmatprep.subr.mxu0 0.0
    %v2577 = vand.u32 %v2289, 4294901760
    %v2578 = vsub.f32 %v2289, %v2577
    %v2579 = vand.u32 %v2578, 4294901760
    %v2580 = vsub.f32 %v2578, %v2579
    %v2581 = vand.u32 %v2580, 4294901760
    %2582 = vmatpush1.msra.mxu0 %v2581
    %2583 = vmatprep.subr.mxu0 0.0
    %v2584 = vand.u32 %v2288, 4294901760
    %v2585 = vsub.f32 %v2288, %v2584
    %v2586 = vand.u32 %v2585, 4294901760
    %v2587 = vsub.f32 %v2585, %v2586
    %v2588 = vand.u32 %v2587, 4294901760
    %2589 = vmatpush1.msra.mxu0 %v2588
    %2590 = vmatprep.subr.mxu0 0.0
    %v2591 = vand.u32 %v2287, 4294901760
    %v2592 = vsub.f32 %v2287, %v2591
    %v2593 = vand.u32 %v2592, 4294901760
    %v2594 = vsub.f32 %v2592, %v2593
    %v2595 = vand.u32 %v2594, 4294901760
    %2596 = vmatpush1.msra.mxu0 %v2595
    %2597 = vmatprep.subr.mxu0 0.0
    %v2598 = vand.u32 %v2318, 4294901760
    %v2599 = vsub.f32 %v2318, %v2598
    %v2600 = vand.u32 %v2599, 4294901760
    %v2601 = vsub.f32 %v2599, %v2600
    %v2602 = vand.u32 %v2601, 4294901760
    %2603 = vmatpush2.msra.mxu0 %v2602
    %2604 = vmatprep.subr.mxu0 0.0
    %v2605 = vand.u32 %v2317, 4294901760
    %v2606 = vsub.f32 %v2317, %v2605
    %v2607 = vand.u32 %v2606, 4294901760
    %v2608 = vsub.f32 %v2606, %v2607
    %v2609 = vand.u32 %v2608, 4294901760
    %2610 = vmatpush2.msra.mxu0 %v2609
    %2611 = vmatprep.subr.mxu0 0.0
    %v2612 = vand.u32 %v2316, 4294901760
    %v2613 = vsub.f32 %v2316, %v2612
    %v2614 = vand.u32 %v2613, 4294901760
    %v2615 = vsub.f32 %v2613, %v2614
    %v2616 = vand.u32 %v2615, 4294901760
    %2617 = vmatpush2.msra.mxu0 %v2616
    %2618 = vmatprep.subr.mxu0 0.0
    %v2619 = vand.u32 %v2315, 4294901760
    %v2620 = vsub.f32 %v2315, %v2619
    %v2621 = vand.u32 %v2620, 4294901760
    %v2622 = vsub.f32 %v2620, %v2621
    %v2623 = vand.u32 %v2622, 4294901760
    %2624 = vmatpush2.msra.mxu0 %v2623
    %2625 = vmatprep.subr.mxu0 0.0
    %v2626 = vand.u32 %v2314, 4294901760
    %v2627 = vsub.f32 %v2314, %v2626
    %v2628 = vand.u32 %v2627, 4294901760
    %v2629 = vsub.f32 %v2627, %v2628
    %v2630 = vand.u32 %v2629, 4294901760
    %2631 = vmatpush2.msra.mxu0 %v2630
    %2632 = vmatprep.subr.mxu0 0.0
    %v2633 = vand.u32 %v2313, 4294901760
    %v2634 = vsub.f32 %v2313, %v2633
    %v2635 = vand.u32 %v2634, 4294901760
    %v2636 = vsub.f32 %v2634, %v2635
    %v2637 = vand.u32 %v2636, 4294901760
    %2638 = vmatpush2.msra.mxu0 %v2637
    %2639 = vmatprep.subr.mxu0 0.0
    %v2640 = vand.u32 %v2312, 4294901760
    %v2641 = vsub.f32 %v2312, %v2640
    %v2642 = vand.u32 %v2641, 4294901760
    %v2643 = vsub.f32 %v2641, %v2642
    %v2644 = vand.u32 %v2643, 4294901760
    %2645 = vmatpush2.msra.mxu0 %v2644
    %2646 = vmatprep.subr.mxu0 0.0
    %v2647 = vand.u32 %v2311, 4294901760
    %v2648 = vsub.f32 %v2311, %v2647
    %v2649 = vand.u32 %v2648, 4294901760
    %v2650 = vsub.f32 %v2648, %v2649
    %v2651 = vand.u32 %v2650, 4294901760
    %2652 = vmatpush2.msra.mxu0 %v2651
    %2653 = vmatprep.subr.mxu0 0.0
    %v2654 = vand.u32 %v2310, 4294901760
    %v2655 = vsub.f32 %v2310, %v2654
    %v2656 = vand.u32 %v2655, 4294901760
    %v2657 = vsub.f32 %v2655, %v2656
    %v2658 = vand.u32 %v2657, 4294901760
    %2659 = vmatpush2.msra.mxu0 %v2658
    %2660 = vmatprep.subr.mxu0 0.0
    %v2661 = vand.u32 %v2309, 4294901760
    %v2662 = vsub.f32 %v2309, %v2661
    %v2663 = vand.u32 %v2662, 4294901760
    %v2664 = vsub.f32 %v2662, %v2663
    %v2665 = vand.u32 %v2664, 4294901760
    %2666 = vmatpush2.msra.mxu0 %v2665
    %2667 = vmatprep.subr.mxu0 0.0
    %v2668 = vand.u32 %v2308, 4294901760
    %v2669 = vsub.f32 %v2308, %v2668
    %v2670 = vand.u32 %v2669, 4294901760
    %v2671 = vsub.f32 %v2669, %v2670
    %v2672 = vand.u32 %v2671, 4294901760
    %2673 = vmatpush2.msra.mxu0 %v2672
    %2674 = vmatprep.subr.mxu0 0.0
    %v2675 = vand.u32 %v2307, 4294901760
    %v2676 = vsub.f32 %v2307, %v2675
    %v2677 = vand.u32 %v2676, 4294901760
    %v2678 = vsub.f32 %v2676, %v2677
    %v2679 = vand.u32 %v2678, 4294901760
    %2680 = vmatpush2.msra.mxu0 %v2679
    %2681 = vmatprep.subr.mxu0 0.0
    %v2682 = vand.u32 %v2306, 4294901760
    %v2683 = vsub.f32 %v2306, %v2682
    %v2684 = vand.u32 %v2683, 4294901760
    %v2685 = vsub.f32 %v2683, %v2684
    %v2686 = vand.u32 %v2685, 4294901760
    %2687 = vmatpush2.msra.mxu0 %v2686
    %2688 = vmatprep.subr.mxu0 0.0
    %v2689 = vand.u32 %v2305, 4294901760
    %v2690 = vsub.f32 %v2305, %v2689
    %v2691 = vand.u32 %v2690, 4294901760
    %v2692 = vsub.f32 %v2690, %v2691
    %v2693 = vand.u32 %v2692, 4294901760
    %2694 = vmatpush2.msra.mxu0 %v2693
    %2695 = vmatprep.subr.mxu0 0.0
    %v2696 = vand.u32 %v2304, 4294901760
    %v2697 = vsub.f32 %v2304, %v2696
    %v2698 = vand.u32 %v2697, 4294901760
    %v2699 = vsub.f32 %v2697, %v2698
    %v2700 = vand.u32 %v2699, 4294901760
    %2701 = vmatpush2.msra.mxu0 %v2700
    %2702 = vmatprep.subr.mxu0 0.0
    %v2703 = vand.u32 %v2303, 4294901760
    %v2704 = vsub.f32 %v2303, %v2703
    %v2705 = vand.u32 %v2704, 4294901760
    %v2706 = vsub.f32 %v2704, %v2705
    %v2707 = vand.u32 %v2706, 4294901760
    %2708 = vmatpush2.msra.mxu0 %v2707
    %v2709 = vand.u32 %v2280, 4294901760
    %2710 = vmatprep.mubr.f32.mxu0 %v2709
    %v2711 = vand.u32 %v2279, 4294901760
    %2712 = vmatmul.mubr.f32.gmra.mxu0 %v2711
    %v2713 = vpop.f32.mrf.mxu0
    %v2714 = vadd.f32 %v2467, %v2713
    %v2715 = vpop.f32.mrf.mxu0
    %v2716 = vand.u32 %v2284, 4294901760
    %2717 = vmatprep.mubr.f32.mxu0 %v2716
    %v2718 = vand.u32 %v2283, 4294901760
    %2719 = vmatmul.mubr.f32.gmra.mxu0 %v2718
    %v2720 = vpop.f32.mrf.mxu0
    %v2721 = vadd.f32 %v2482, %v2720
    %v2722 = vpop.f32.mrf.mxu0
    %2723 = vdwg.mxu0
    %2724 = vmatprep.subr.mxu0 0.0
    %v2725 = vand.u32 %v2302, 4294901760
    %v2726 = vsub.f32 %v2302, %v2725
    %2727 = vmatpush1.msra.mxu0 %v2726
    %2728 = vmatprep.subr.mxu0 0.0
    %v2729 = vand.u32 %v2301, 4294901760
    %v2730 = vsub.f32 %v2301, %v2729
    %2731 = vmatpush1.msra.mxu0 %v2730
    %2732 = vmatprep.subr.mxu0 0.0
    %v2733 = vand.u32 %v2300, 4294901760
    %v2734 = vsub.f32 %v2300, %v2733
    %2735 = vmatpush1.msra.mxu0 %v2734
    %2736 = vmatprep.subr.mxu0 0.0
    %v2737 = vand.u32 %v2299, 4294901760
    %v2738 = vsub.f32 %v2299, %v2737
    %2739 = vmatpush1.msra.mxu0 %v2738
    %2740 = vmatprep.subr.mxu0 0.0
    %v2741 = vand.u32 %v2298, 4294901760
    %v2742 = vsub.f32 %v2298, %v2741
    %2743 = vmatpush1.msra.mxu0 %v2742
    %2744 = vmatprep.subr.mxu0 0.0
    %v2745 = vand.u32 %v2297, 4294901760
    %v2746 = vsub.f32 %v2297, %v2745
    %2747 = vmatpush1.msra.mxu0 %v2746
    %2748 = vmatprep.subr.mxu0 0.0
    %v2749 = vand.u32 %v2296, 4294901760
    %v2750 = vsub.f32 %v2296, %v2749
    %2751 = vmatpush1.msra.mxu0 %v2750
    %2752 = vmatprep.subr.mxu0 0.0
    %v2753 = vand.u32 %v2295, 4294901760
    %v2754 = vsub.f32 %v2295, %v2753
    %2755 = vmatpush1.msra.mxu0 %v2754
    %2756 = vmatprep.subr.mxu0 0.0
    %v2757 = vand.u32 %v2294, 4294901760
    %v2758 = vsub.f32 %v2294, %v2757
    %2759 = vmatpush1.msra.mxu0 %v2758
    %2760 = vmatprep.subr.mxu0 0.0
    %v2761 = vand.u32 %v2293, 4294901760
    %v2762 = vsub.f32 %v2293, %v2761
    %2763 = vmatpush1.msra.mxu0 %v2762
    %2764 = vmatprep.subr.mxu0 0.0
    %v2765 = vand.u32 %v2292, 4294901760
    %v2766 = vsub.f32 %v2292, %v2765
    %2767 = vmatpush1.msra.mxu0 %v2766
    %2768 = vmatprep.subr.mxu0 0.0
    %v2769 = vand.u32 %v2291, 4294901760
    %v2770 = vsub.f32 %v2291, %v2769
    %2771 = vmatpush1.msra.mxu0 %v2770
    %2772 = vmatprep.subr.mxu0 0.0
    %v2773 = vand.u32 %v2290, 4294901760
    %v2774 = vsub.f32 %v2290, %v2773
    %2775 = vmatpush1.msra.mxu0 %v2774
    %2776 = vmatprep.subr.mxu0 0.0
    %v2777 = vand.u32 %v2289, 4294901760
    %v2778 = vsub.f32 %v2289, %v2777
    %2779 = vmatpush1.msra.mxu0 %v2778
    %2780 = vmatprep.subr.mxu0 0.0
    %v2781 = vand.u32 %v2288, 4294901760
    %v2782 = vsub.f32 %v2288, %v2781
    %2783 = vmatpush1.msra.mxu0 %v2782
    %2784 = vmatprep.subr.mxu0 0.0
    %v2785 = vand.u32 %v2287, 4294901760
    %v2786 = vsub.f32 %v2287, %v2785
    %2787 = vmatpush1.msra.mxu0 %v2786
    %2788 = vmatprep.subr.mxu0 0.0
    %v2789 = vand.u32 %v2318, 4294901760
    %v2790 = vsub.f32 %v2318, %v2789
    %2791 = vmatpush2.msra.mxu0 %v2790
    %2792 = vmatprep.subr.mxu0 0.0
    %v2793 = vand.u32 %v2317, 4294901760
    %v2794 = vsub.f32 %v2317, %v2793
    %2795 = vmatpush2.msra.mxu0 %v2794
    %2796 = vmatprep.subr.mxu0 0.0
    %v2797 = vand.u32 %v2316, 4294901760
    %v2798 = vsub.f32 %v2316, %v2797
    %2799 = vmatpush2.msra.mxu0 %v2798
    %2800 = vmatprep.subr.mxu0 0.0
    %v2801 = vand.u32 %v2315, 4294901760
    %v2802 = vsub.f32 %v2315, %v2801
    %2803 = vmatpush2.msra.mxu0 %v2802
    %2804 = vmatprep.subr.mxu0 0.0
    %v2805 = vand.u32 %v2314, 4294901760
    %v2806 = vsub.f32 %v2314, %v2805
    %2807 = vmatpush2.msra.mxu0 %v2806
    %2808 = vmatprep.subr.mxu0 0.0
    %v2809 = vand.u32 %v2313, 4294901760
    %v2810 = vsub.f32 %v2313, %v2809
    %2811 = vmatpush2.msra.mxu0 %v2810
    %2812 = vmatprep.subr.mxu0 0.0
    %v2813 = vand.u32 %v2312, 4294901760
    %v2814 = vsub.f32 %v2312, %v2813
    %2815 = vmatpush2.msra.mxu0 %v2814
    %2816 = vmatprep.subr.mxu0 0.0
    %v2817 = vand.u32 %v2311, 4294901760
    %v2818 = vsub.f32 %v2311, %v2817
    %2819 = vmatpush2.msra.mxu0 %v2818
    %2820 = vmatprep.subr.mxu0 0.0
    %v2821 = vand.u32 %v2310, 4294901760
    %v2822 = vsub.f32 %v2310, %v2821
    %2823 = vmatpush2.msra.mxu0 %v2822
    %2824 = vmatprep.subr.mxu0 0.0
    %v2825 = vand.u32 %v2309, 4294901760
    %v2826 = vsub.f32 %v2309, %v2825
    %2827 = vmatpush2.msra.mxu0 %v2826
    %2828 = vmatprep.subr.mxu0 0.0
    %v2829 = vand.u32 %v2308, 4294901760
    %v2830 = vsub.f32 %v2308, %v2829
    %2831 = vmatpush2.msra.mxu0 %v2830
    %2832 = vmatprep.subr.mxu0 0.0
    %v2833 = vand.u32 %v2307, 4294901760
    %v2834 = vsub.f32 %v2307, %v2833
    %2835 = vmatpush2.msra.mxu0 %v2834
    %2836 = vmatprep.subr.mxu0 0.0
    %v2837 = vand.u32 %v2306, 4294901760
    %v2838 = vsub.f32 %v2306, %v2837
    %2839 = vmatpush2.msra.mxu0 %v2838
    %2840 = vmatprep.subr.mxu0 0.0
    %v2841 = vand.u32 %v2305, 4294901760
    %v2842 = vsub.f32 %v2305, %v2841
    %2843 = vmatpush2.msra.mxu0 %v2842
    %2844 = vmatprep.subr.mxu0 0.0
    %v2845 = vand.u32 %v2304, 4294901760
    %v2846 = vsub.f32 %v2304, %v2845
    %2847 = vmatpush2.msra.mxu0 %v2846
    %2848 = vmatprep.subr.mxu0 0.0
    %v2849 = vand.u32 %v2303, 4294901760
    %v2850 = vsub.f32 %v2303, %v2849
    %2851 = vmatpush2.msra.mxu0 %v2850
    %v2852 = vand.u32 %v2280, 4294901760
    %v2853 = vsub.f32 %v2280, %v2852
    %2854 = vmatprep.mubr.f32.mxu0 %v2853
    %v2855 = vand.u32 %v2279, 4294901760
    %v2856 = vsub.f32 %v2279, %v2855
    %2857 = vmatmul.mubr.f32.gmra.mxu0 %v2856
    %v2858 = vpop.f32.mrf.mxu0
    %v2859 = vadd.f32 %v2714, %v2858
    %v2860 = vpop.f32.mrf.mxu0
    %v2861 = vand.u32 %v2284, 4294901760
    %v2862 = vsub.f32 %v2284, %v2861
    %2863 = vmatprep.mubr.f32.mxu0 %v2862
    %v2864 = vand.u32 %v2283, 4294901760
    %v2865 = vsub.f32 %v2283, %v2864
    %2866 = vmatmul.mubr.f32.gmra.mxu0 %v2865
    %v2867 = vpop.f32.mrf.mxu0
    %v2868 = vadd.f32 %v2721, %v2867
    %v2869 = vpop.f32.mrf.mxu0
    %2870 = vdwg.mxu0
    %2871 = vmatprep.subr.mxu0 0.0
    %v2872 = vand.u32 %v2302, 4294901760
    %2873 = vmatpush1.msra.mxu0 %v2872
    %2874 = vmatprep.subr.mxu0 0.0
    %v2875 = vand.u32 %v2301, 4294901760
    %2876 = vmatpush1.msra.mxu0 %v2875
    %2877 = vmatprep.subr.mxu0 0.0
    %v2878 = vand.u32 %v2300, 4294901760
    %2879 = vmatpush1.msra.mxu0 %v2878
    %2880 = vmatprep.subr.mxu0 0.0
    %v2881 = vand.u32 %v2299, 4294901760
    %2882 = vmatpush1.msra.mxu0 %v2881
    %2883 = vmatprep.subr.mxu0 0.0
    %v2884 = vand.u32 %v2298, 4294901760
    %2885 = vmatpush1.msra.mxu0 %v2884
    %2886 = vmatprep.subr.mxu0 0.0
    %v2887 = vand.u32 %v2297, 4294901760
    %2888 = vmatpush1.msra.mxu0 %v2887
    %2889 = vmatprep.subr.mxu0 0.0
    %v2890 = vand.u32 %v2296, 4294901760
    %2891 = vmatpush1.msra.mxu0 %v2890
    %2892 = vmatprep.subr.mxu0 0.0
    %v2893 = vand.u32 %v2295, 4294901760
    %2894 = vmatpush1.msra.mxu0 %v2893
    %2895 = vmatprep.subr.mxu0 0.0
    %v2896 = vand.u32 %v2294, 4294901760
    %2897 = vmatpush1.msra.mxu0 %v2896
    %2898 = vmatprep.subr.mxu0 0.0
    %v2899 = vand.u32 %v2293, 4294901760
    %2900 = vmatpush1.msra.mxu0 %v2899
    %2901 = vmatprep.subr.mxu0 0.0
    %v2902 = vand.u32 %v2292, 4294901760
    %2903 = vmatpush1.msra.mxu0 %v2902
    %2904 = vmatprep.subr.mxu0 0.0
    %v2905 = vand.u32 %v2291, 4294901760
    %2906 = vmatpush1.msra.mxu0 %v2905
    %2907 = vmatprep.subr.mxu0 0.0
    %v2908 = vand.u32 %v2290, 4294901760
    %2909 = vmatpush1.msra.mxu0 %v2908
    %2910 = vmatprep.subr.mxu0 0.0
    %v2911 = vand.u32 %v2289, 4294901760
    %2912 = vmatpush1.msra.mxu0 %v2911
    %2913 = vmatprep.subr.mxu0 0.0
    %v2914 = vand.u32 %v2288, 4294901760
    %2915 = vmatpush1.msra.mxu0 %v2914
    %2916 = vmatprep.subr.mxu0 0.0
    %v2917 = vand.u32 %v2287, 4294901760
    %2918 = vmatpush1.msra.mxu0 %v2917
    %2919 = vmatprep.subr.mxu0 0.0
    %v2920 = vand.u32 %v2318, 4294901760
    %2921 = vmatpush2.msra.mxu0 %v2920
    %2922 = vmatprep.subr.mxu0 0.0
    %v2923 = vand.u32 %v2317, 4294901760
    %2924 = vmatpush2.msra.mxu0 %v2923
    %2925 = vmatprep.subr.mxu0 0.0
    %v2926 = vand.u32 %v2316, 4294901760
    %2927 = vmatpush2.msra.mxu0 %v2926
    %2928 = vmatprep.subr.mxu0 0.0
    %v2929 = vand.u32 %v2315, 4294901760
    %2930 = vmatpush2.msra.mxu0 %v2929
    %2931 = vmatprep.subr.mxu0 0.0
    %v2932 = vand.u32 %v2314, 4294901760
    %2933 = vmatpush2.msra.mxu0 %v2932
    %2934 = vmatprep.subr.mxu0 0.0
    %v2935 = vand.u32 %v2313, 4294901760
    %2936 = vmatpush2.msra.mxu0 %v2935
    %2937 = vmatprep.subr.mxu0 0.0
    %v2938 = vand.u32 %v2312, 4294901760
    %2939 = vmatpush2.msra.mxu0 %v2938
    %2940 = vmatprep.subr.mxu0 0.0
    %v2941 = vand.u32 %v2311, 4294901760
    %2942 = vmatpush2.msra.mxu0 %v2941
    %2943 = vmatprep.subr.mxu0 0.0
    %v2944 = vand.u32 %v2310, 4294901760
    %2945 = vmatpush2.msra.mxu0 %v2944
    %2946 = vmatprep.subr.mxu0 0.0
    %v2947 = vand.u32 %v2309, 4294901760
    %2948 = vmatpush2.msra.mxu0 %v2947
    %2949 = vmatprep.subr.mxu0 0.0
    %v2950 = vand.u32 %v2308, 4294901760
    %2951 = vmatpush2.msra.mxu0 %v2950
    %2952 = vmatprep.subr.mxu0 0.0
    %v2953 = vand.u32 %v2307, 4294901760
    %2954 = vmatpush2.msra.mxu0 %v2953
    %2955 = vmatprep.subr.mxu0 0.0
    %v2956 = vand.u32 %v2306, 4294901760
    %2957 = vmatpush2.msra.mxu0 %v2956
    %2958 = vmatprep.subr.mxu0 0.0
    %v2959 = vand.u32 %v2305, 4294901760
    %2960 = vmatpush2.msra.mxu0 %v2959
    %2961 = vmatprep.subr.mxu0 0.0
    %v2962 = vand.u32 %v2304, 4294901760
    %2963 = vmatpush2.msra.mxu0 %v2962
    %2964 = vmatprep.subr.mxu0 0.0
    %v2965 = vand.u32 %v2303, 4294901760
    %2966 = vmatpush2.msra.mxu0 %v2965
    %v2967 = vand.u32 %v2280, 4294901760
    %v2968 = vsub.f32 %v2280, %v2967
    %v2969 = vand.u32 %v2968, 4294901760
    %2970 = vmatprep.mubr.f32.mxu0 %v2969
    %v2971 = vand.u32 %v2279, 4294901760
    %v2972 = vsub.f32 %v2279, %v2971
    %v2973 = vand.u32 %v2972, 4294901760
    %2974 = vmatmul.mubr.f32.gmra.mxu0 %v2973
    %v2975 = vpop.f32.mrf.mxu0
    %v2976 = vadd.f32 %v2859, %v2975
    %v2977 = vpop.f32.mrf.mxu0
    %v2978 = vand.u32 %v2284, 4294901760
    %v2979 = vsub.f32 %v2284, %v2978
    %v2980 = vand.u32 %v2979, 4294901760
    %2981 = vmatprep.mubr.f32.mxu0 %v2980
    %v2982 = vand.u32 %v2283, 4294901760
    %v2983 = vsub.f32 %v2283, %v2982
    %v2984 = vand.u32 %v2983, 4294901760
    %2985 = vmatmul.mubr.f32.gmra.mxu0 %v2984
    %v2986 = vpop.f32.mrf.mxu0
    %v2987 = vadd.f32 %v2868, %v2986
    %v2988 = vpop.f32.mrf.mxu0
    %2989 = vdwg.mxu0
    %2990 = vmatprep.subr.mxu0 0.0
    %v2991 = vand.u32 %v2302, 4294901760
    %v2992 = vsub.f32 %v2302, %v2991
    %v2993 = vand.u32 %v2992, 4294901760
    %2994 = vmatpush1.msra.mxu0 %v2993
    %2995 = vmatprep.subr.mxu0 0.0
    %v2996 = vand.u32 %v2301, 4294901760
    %v2997 = vsub.f32 %v2301, %v2996
    %v2998 = vand.u32 %v2997, 4294901760
    %2999 = vmatpush1.msra.mxu0 %v2998
    %3000 = vmatprep.subr.mxu0 0.0
    %v3001 = vand.u32 %v2300, 4294901760
    %v3002 = vsub.f32 %v2300, %v3001
    %v3003 = vand.u32 %v3002, 4294901760
    %3004 = vmatpush1.msra.mxu0 %v3003
    %3005 = vmatprep.subr.mxu0 0.0
    %v3006 = vand.u32 %v2299, 4294901760
    %v3007 = vsub.f32 %v2299, %v3006
    %v3008 = vand.u32 %v3007, 4294901760
    %3009 = vmatpush1.msra.mxu0 %v3008
    %3010 = vmatprep.subr.mxu0 0.0
    %v3011 = vand.u32 %v2298, 4294901760
    %v3012 = vsub.f32 %v2298, %v3011
    %v3013 = vand.u32 %v3012, 4294901760
    %3014 = vmatpush1.msra.mxu0 %v3013
    %3015 = vmatprep.subr.mxu0 0.0
    %v3016 = vand.u32 %v2297, 4294901760
    %v3017 = vsub.f32 %v2297, %v3016
    %v3018 = vand.u32 %v3017, 4294901760
    %3019 = vmatpush1.msra.mxu0 %v3018
    %3020 = vmatprep.subr.mxu0 0.0
    %v3021 = vand.u32 %v2296, 4294901760
    %v3022 = vsub.f32 %v2296, %v3021
    %v3023 = vand.u32 %v3022, 4294901760
    %3024 = vmatpush1.msra.mxu0 %v3023
    %3025 = vmatprep.subr.mxu0 0.0
    %v3026 = vand.u32 %v2295, 4294901760
    %v3027 = vsub.f32 %v2295, %v3026
    %v3028 = vand.u32 %v3027, 4294901760
    %3029 = vmatpush1.msra.mxu0 %v3028
    %3030 = vmatprep.subr.mxu0 0.0
    %v3031 = vand.u32 %v2294, 4294901760
    %v3032 = vsub.f32 %v2294, %v3031
    %v3033 = vand.u32 %v3032, 4294901760
    %3034 = vmatpush1.msra.mxu0 %v3033
    %3035 = vmatprep.subr.mxu0 0.0
    %v3036 = vand.u32 %v2293, 4294901760
    %v3037 = vsub.f32 %v2293, %v3036
    %v3038 = vand.u32 %v3037, 4294901760
    %3039 = vmatpush1.msra.mxu0 %v3038
    %3040 = vmatprep.subr.mxu0 0.0
    %v3041 = vand.u32 %v2292, 4294901760
    %v3042 = vsub.f32 %v2292, %v3041
    %v3043 = vand.u32 %v3042, 4294901760
    %3044 = vmatpush1.msra.mxu0 %v3043
    %3045 = vmatprep.subr.mxu0 0.0
    %v3046 = vand.u32 %v2291, 4294901760
    %v3047 = vsub.f32 %v2291, %v3046
    %v3048 = vand.u32 %v3047, 4294901760
    %3049 = vmatpush1.msra.mxu0 %v3048
    %3050 = vmatprep.subr.mxu0 0.0
    %v3051 = vand.u32 %v2290, 4294901760
    %v3052 = vsub.f32 %v2290, %v3051
    %v3053 = vand.u32 %v3052, 4294901760
    %3054 = vmatpush1.msra.mxu0 %v3053
    %3055 = vmatprep.subr.mxu0 0.0
    %v3056 = vand.u32 %v2289, 4294901760
    %v3057 = vsub.f32 %v2289, %v3056
    %v3058 = vand.u32 %v3057, 4294901760
    %3059 = vmatpush1.msra.mxu0 %v3058
    %3060 = vmatprep.subr.mxu0 0.0
    %v3061 = vand.u32 %v2288, 4294901760
    %v3062 = vsub.f32 %v2288, %v3061
    %v3063 = vand.u32 %v3062, 4294901760
    %3064 = vmatpush1.msra.mxu0 %v3063
    %3065 = vmatprep.subr.mxu0 0.0
    %v3066 = vand.u32 %v2287, 4294901760
    %v3067 = vsub.f32 %v2287, %v3066
    %v3068 = vand.u32 %v3067, 4294901760
    %3069 = vmatpush1.msra.mxu0 %v3068
    %3070 = vmatprep.subr.mxu0 0.0
    %v3071 = vand.u32 %v2318, 4294901760
    %v3072 = vsub.f32 %v2318, %v3071
    %v3073 = vand.u32 %v3072, 4294901760
    %3074 = vmatpush2.msra.mxu0 %v3073
    %3075 = vmatprep.subr.mxu0 0.0
    %v3076 = vand.u32 %v2317, 4294901760
    %v3077 = vsub.f32 %v2317, %v3076
    %v3078 = vand.u32 %v3077, 4294901760
    %3079 = vmatpush2.msra.mxu0 %v3078
    %3080 = vmatprep.subr.mxu0 0.0
    %v3081 = vand.u32 %v2316, 4294901760
    %v3082 = vsub.f32 %v2316, %v3081
    %v3083 = vand.u32 %v3082, 4294901760
    %3084 = vmatpush2.msra.mxu0 %v3083
    %3085 = vmatprep.subr.mxu0 0.0
    %v3086 = vand.u32 %v2315, 4294901760
    %v3087 = vsub.f32 %v2315, %v3086
    %v3088 = vand.u32 %v3087, 4294901760
    %3089 = vmatpush2.msra.mxu0 %v3088
    %3090 = vmatprep.subr.mxu0 0.0
    %v3091 = vand.u32 %v2314, 4294901760
    %v3092 = vsub.f32 %v2314, %v3091
    %v3093 = vand.u32 %v3092, 4294901760
    %3094 = vmatpush2.msra.mxu0 %v3093
    %3095 = vmatprep.subr.mxu0 0.0
    %v3096 = vand.u32 %v2313, 4294901760
    %v3097 = vsub.f32 %v2313, %v3096
    %v3098 = vand.u32 %v3097, 4294901760
    %3099 = vmatpush2.msra.mxu0 %v3098
    %3100 = vmatprep.subr.mxu0 0.0
    %v3101 = vand.u32 %v2312, 4294901760
    %v3102 = vsub.f32 %v2312, %v3101
    %v3103 = vand.u32 %v3102, 4294901760
    %3104 = vmatpush2.msra.mxu0 %v3103
    %3105 = vmatprep.subr.mxu0 0.0
    %v3106 = vand.u32 %v2311, 4294901760
    %v3107 = vsub.f32 %v2311, %v3106
    %v3108 = vand.u32 %v3107, 4294901760
    %3109 = vmatpush2.msra.mxu0 %v3108
    %3110 = vmatprep.subr.mxu0 0.0
    %v3111 = vand.u32 %v2310, 4294901760
    %v3112 = vsub.f32 %v2310, %v3111
    %v3113 = vand.u32 %v3112, 4294901760
    %3114 = vmatpush2.msra.mxu0 %v3113
    %3115 = vmatprep.subr.mxu0 0.0
    %v3116 = vand.u32 %v2309, 4294901760
    %v3117 = vsub.f32 %v2309, %v3116
    %v3118 = vand.u32 %v3117, 4294901760
    %3119 = vmatpush2.msra.mxu0 %v3118
    %3120 = vmatprep.subr.mxu0 0.0
    %v3121 = vand.u32 %v2308, 4294901760
    %v3122 = vsub.f32 %v2308, %v3121
    %v3123 = vand.u32 %v3122, 4294901760
    %3124 = vmatpush2.msra.mxu0 %v3123
    %3125 = vmatprep.subr.mxu0 0.0
    %v3126 = vand.u32 %v2307, 4294901760
    %v3127 = vsub.f32 %v2307, %v3126
    %v3128 = vand.u32 %v3127, 4294901760
    %3129 = vmatpush2.msra.mxu0 %v3128
    %3130 = vmatprep.subr.mxu0 0.0
    %v3131 = vand.u32 %v2306, 4294901760
    %v3132 = vsub.f32 %v2306, %v3131
    %v3133 = vand.u32 %v3132, 4294901760
    %3134 = vmatpush2.msra.mxu0 %v3133
    %3135 = vmatprep.subr.mxu0 0.0
    %v3136 = vand.u32 %v2305, 4294901760
    %v3137 = vsub.f32 %v2305, %v3136
    %v3138 = vand.u32 %v3137, 4294901760
    %3139 = vmatpush2.msra.mxu0 %v3138
    %3140 = vmatprep.subr.mxu0 0.0
    %v3141 = vand.u32 %v2304, 4294901760
    %v3142 = vsub.f32 %v2304, %v3141
    %v3143 = vand.u32 %v3142, 4294901760
    %3144 = vmatpush2.msra.mxu0 %v3143
    %3145 = vmatprep.subr.mxu0 0.0
    %v3146 = vand.u32 %v2303, 4294901760
    %v3147 = vsub.f32 %v2303, %v3146
    %v3148 = vand.u32 %v3147, 4294901760
    %3149 = vmatpush2.msra.mxu0 %v3148
    %v3150 = vand.u32 %v2280, 4294901760
    %3151 = vmatprep.mubr.f32.mxu0 %v3150
    %v3152 = vand.u32 %v2279, 4294901760
    %3153 = vmatmul.mubr.f32.gmra.mxu0 %v3152
    %v3154 = vpop.f32.mrf.mxu0
    %v3155 = vadd.f32 %v2976, %v3154
    %v3156 = vpop.f32.mrf.mxu0
    %v3157 = vand.u32 %v2284, 4294901760
    %3158 = vmatprep.mubr.f32.mxu0 %v3157
    %v3159 = vand.u32 %v2283, 4294901760
    %3160 = vmatmul.mubr.f32.gmra.mxu0 %v3159
    %v3161 = vpop.f32.mrf.mxu0
    %v3162 = vadd.f32 %v2987, %v3161
    %v3163 = vpop.f32.mrf.mxu0
    %3164 = vdwg.mxu0
    %3165 = vmatprep.subr.mxu0 0.0
    %v3166 = vand.u32 %v2302, 4294901760
    %3167 = vmatpush1.msra.mxu0 %v3166
    %3168 = vmatprep.subr.mxu0 0.0
    %v3169 = vand.u32 %v2301, 4294901760
    %3170 = vmatpush1.msra.mxu0 %v3169
    %3171 = vmatprep.subr.mxu0 0.0
    %v3172 = vand.u32 %v2300, 4294901760
    %3173 = vmatpush1.msra.mxu0 %v3172
    %3174 = vmatprep.subr.mxu0 0.0
    %v3175 = vand.u32 %v2299, 4294901760
    %3176 = vmatpush1.msra.mxu0 %v3175
    %3177 = vmatprep.subr.mxu0 0.0
    %v3178 = vand.u32 %v2298, 4294901760
    %3179 = vmatpush1.msra.mxu0 %v3178
    %3180 = vmatprep.subr.mxu0 0.0
    %v3181 = vand.u32 %v2297, 4294901760
    %3182 = vmatpush1.msra.mxu0 %v3181
    %3183 = vmatprep.subr.mxu0 0.0
    %v3184 = vand.u32 %v2296, 4294901760
    %3185 = vmatpush1.msra.mxu0 %v3184
    %3186 = vmatprep.subr.mxu0 0.0
    %v3187 = vand.u32 %v2295, 4294901760
    %3188 = vmatpush1.msra.mxu0 %v3187
    %3189 = vmatprep.subr.mxu0 0.0
    %v3190 = vand.u32 %v2294, 4294901760
    %3191 = vmatpush1.msra.mxu0 %v3190
    %3192 = vmatprep.subr.mxu0 0.0
    %v3193 = vand.u32 %v2293, 4294901760
    %3194 = vmatpush1.msra.mxu0 %v3193
    %3195 = vmatprep.subr.mxu0 0.0
    %v3196 = vand.u32 %v2292, 4294901760
    %3197 = vmatpush1.msra.mxu0 %v3196
    %3198 = vmatprep.subr.mxu0 0.0
    %v3199 = vand.u32 %v2291, 4294901760
    %3200 = vmatpush1.msra.mxu0 %v3199
    %3201 = vmatprep.subr.mxu0 0.0
    %v3202 = vand.u32 %v2290, 4294901760
    %3203 = vmatpush1.msra.mxu0 %v3202
    %3204 = vmatprep.subr.mxu0 0.0
    %v3205 = vand.u32 %v2289, 4294901760
    %3206 = vmatpush1.msra.mxu0 %v3205
    %3207 = vmatprep.subr.mxu0 0.0
    %v3208 = vand.u32 %v2288, 4294901760
    %3209 = vmatpush1.msra.mxu0 %v3208
    %3210 = vmatprep.subr.mxu0 0.0
    %v3211 = vand.u32 %v2287, 4294901760
    %3212 = vmatpush1.msra.mxu0 %v3211
    %3213 = vmatprep.subr.mxu0 0.0
    %v3214 = vand.u32 %v2318, 4294901760
    %3215 = vmatpush2.msra.mxu0 %v3214
    %3216 = vmatprep.subr.mxu0 0.0
    %v3217 = vand.u32 %v2317, 4294901760
    %3218 = vmatpush2.msra.mxu0 %v3217
    %3219 = vmatprep.subr.mxu0 0.0
    %v3220 = vand.u32 %v2316, 4294901760
    %3221 = vmatpush2.msra.mxu0 %v3220
    %3222 = vmatprep.subr.mxu0 0.0
    %v3223 = vand.u32 %v2315, 4294901760
    %3224 = vmatpush2.msra.mxu0 %v3223
    %3225 = vmatprep.subr.mxu0 0.0
    %v3226 = vand.u32 %v2314, 4294901760
    %3227 = vmatpush2.msra.mxu0 %v3226
    %3228 = vmatprep.subr.mxu0 0.0
    %v3229 = vand.u32 %v2313, 4294901760
    %3230 = vmatpush2.msra.mxu0 %v3229
    %3231 = vmatprep.subr.mxu0 0.0
    %v3232 = vand.u32 %v2312, 4294901760
    %3233 = vmatpush2.msra.mxu0 %v3232
    %3234 = vmatprep.subr.mxu0 0.0
    %v3235 = vand.u32 %v2311, 4294901760
    %3236 = vmatpush2.msra.mxu0 %v3235
    %3237 = vmatprep.subr.mxu0 0.0
    %v3238 = vand.u32 %v2310, 4294901760
    %3239 = vmatpush2.msra.mxu0 %v3238
    %3240 = vmatprep.subr.mxu0 0.0
    %v3241 = vand.u32 %v2309, 4294901760
    %3242 = vmatpush2.msra.mxu0 %v3241
    %3243 = vmatprep.subr.mxu0 0.0
    %v3244 = vand.u32 %v2308, 4294901760
    %3245 = vmatpush2.msra.mxu0 %v3244
    %3246 = vmatprep.subr.mxu0 0.0
    %v3247 = vand.u32 %v2307, 4294901760
    %3248 = vmatpush2.msra.mxu0 %v3247
    %3249 = vmatprep.subr.mxu0 0.0
    %v3250 = vand.u32 %v2306, 4294901760
    %3251 = vmatpush2.msra.mxu0 %v3250
    %3252 = vmatprep.subr.mxu0 0.0
    %v3253 = vand.u32 %v2305, 4294901760
    %3254 = vmatpush2.msra.mxu0 %v3253
    %3255 = vmatprep.subr.mxu0 0.0
    %v3256 = vand.u32 %v2304, 4294901760
    %3257 = vmatpush2.msra.mxu0 %v3256
    %3258 = vmatprep.subr.mxu0 0.0
    %v3259 = vand.u32 %v2303, 4294901760
    %3260 = vmatpush2.msra.mxu0 %v3259
    %v3261 = vand.u32 %v2280, 4294901760
    %3262 = vmatprep.mubr.f32.mxu0 %v3261
    %v3263 = vand.u32 %v2279, 4294901760
    %3264 = vmatmul.mubr.f32.gmra.mxu0 %v3263
    %v3265 = vpop.f32.mrf.mxu0
    %v3266 = vadd.f32 %v3155, %v3265
    %v3267 = vpop.f32.mrf.mxu0
    %v3268 = vand.u32 %v2284, 4294901760
    %3269 = vmatprep.mubr.f32.mxu0 %v3268
    %v3270 = vand.u32 %v2283, 4294901760
    %3271 = vmatmul.mubr.f32.gmra.mxu0 %v3270
    %v3272 = vpop.f32.mrf.mxu0
    %v3273 = vadd.f32 %v3162, %v3272
    %v3274 = vpop.f32.mrf.mxu0
    %3275 = vdwg.mxu0
    %3276 = vmatprep.subr.mxu0 0.0
    %v3277 = vand.u32 %v2334, 4294901760
    %3278 = vmatpush1.msra.mxu0 %v3277
    %3279 = vmatprep.subr.mxu0 0.0
    %v3280 = vand.u32 %v2333, 4294901760
    %3281 = vmatpush1.msra.mxu0 %v3280
    %3282 = vmatprep.subr.mxu0 0.0
    %v3283 = vand.u32 %v2332, 4294901760
    %3284 = vmatpush1.msra.mxu0 %v3283
    %3285 = vmatprep.subr.mxu0 0.0
    %v3286 = vand.u32 %v2331, 4294901760
    %3287 = vmatpush1.msra.mxu0 %v3286
    %3288 = vmatprep.subr.mxu0 0.0
    %v3289 = vand.u32 %v2330, 4294901760
    %3290 = vmatpush1.msra.mxu0 %v3289
    %3291 = vmatprep.subr.mxu0 0.0
    %v3292 = vand.u32 %v2329, 4294901760
    %3293 = vmatpush1.msra.mxu0 %v3292
    %3294 = vmatprep.subr.mxu0 0.0
    %v3295 = vand.u32 %v2328, 4294901760
    %3296 = vmatpush1.msra.mxu0 %v3295
    %3297 = vmatprep.subr.mxu0 0.0
    %v3298 = vand.u32 %v2327, 4294901760
    %3299 = vmatpush1.msra.mxu0 %v3298
    %3300 = vmatprep.subr.mxu0 0.0
    %v3301 = vand.u32 %v2326, 4294901760
    %3302 = vmatpush1.msra.mxu0 %v3301
    %3303 = vmatprep.subr.mxu0 0.0
    %v3304 = vand.u32 %v2325, 4294901760
    %3305 = vmatpush1.msra.mxu0 %v3304
    %3306 = vmatprep.subr.mxu0 0.0
    %v3307 = vand.u32 %v2324, 4294901760
    %3308 = vmatpush1.msra.mxu0 %v3307
    %3309 = vmatprep.subr.mxu0 0.0
    %v3310 = vand.u32 %v2323, 4294901760
    %3311 = vmatpush1.msra.mxu0 %v3310
    %3312 = vmatprep.subr.mxu0 0.0
    %v3313 = vand.u32 %v2322, 4294901760
    %3314 = vmatpush1.msra.mxu0 %v3313
    %3315 = vmatprep.subr.mxu0 0.0
    %v3316 = vand.u32 %v2321, 4294901760
    %3317 = vmatpush1.msra.mxu0 %v3316
    %3318 = vmatprep.subr.mxu0 0.0
    %v3319 = vand.u32 %v2320, 4294901760
    %3320 = vmatpush1.msra.mxu0 %v3319
    %3321 = vmatprep.subr.mxu0 0.0
    %v3322 = vand.u32 %v2319, 4294901760
    %3323 = vmatpush1.msra.mxu0 %v3322
    %3324 = vmatprep.subr.mxu0 0.0
    %v3325 = vand.u32 %v2350, 4294901760
    %3326 = vmatpush2.msra.mxu0 %v3325
    %3327 = vmatprep.subr.mxu0 0.0
    %v3328 = vand.u32 %v2349, 4294901760
    %3329 = vmatpush2.msra.mxu0 %v3328
    %3330 = vmatprep.subr.mxu0 0.0
    %v3331 = vand.u32 %v2348, 4294901760
    %3332 = vmatpush2.msra.mxu0 %v3331
    %3333 = vmatprep.subr.mxu0 0.0
    %v3334 = vand.u32 %v2347, 4294901760
    %3335 = vmatpush2.msra.mxu0 %v3334
    %3336 = vmatprep.subr.mxu0 0.0
    %v3337 = vand.u32 %v2346, 4294901760
    %3338 = vmatpush2.msra.mxu0 %v3337
    %3339 = vmatprep.subr.mxu0 0.0
    %v3340 = vand.u32 %v2345, 4294901760
    %3341 = vmatpush2.msra.mxu0 %v3340
    %3342 = vmatprep.subr.mxu0 0.0
    %v3343 = vand.u32 %v2344, 4294901760
    %3344 = vmatpush2.msra.mxu0 %v3343
    %3345 = vmatprep.subr.mxu0 0.0
    %v3346 = vand.u32 %v2343, 4294901760
    %3347 = vmatpush2.msra.mxu0 %v3346
    %3348 = vmatprep.subr.mxu0 0.0
    %v3349 = vand.u32 %v2342, 4294901760
    %3350 = vmatpush2.msra.mxu0 %v3349
    %3351 = vmatprep.subr.mxu0 0.0
    %v3352 = vand.u32 %v2341, 4294901760
    %3353 = vmatpush2.msra.mxu0 %v3352
    %3354 = vmatprep.subr.mxu0 0.0
    %v3355 = vand.u32 %v2340, 4294901760
    %3356 = vmatpush2.msra.mxu0 %v3355
    %3357 = vmatprep.subr.mxu0 0.0
    %v3358 = vand.u32 %v2339, 4294901760
    %3359 = vmatpush2.msra.mxu0 %v3358
    %3360 = vmatprep.subr.mxu0 0.0
    %v3361 = vand.u32 %v2338, 4294901760
    %3362 = vmatpush2.msra.mxu0 %v3361
    %3363 = vmatprep.subr.mxu0 0.0
    %v3364 = vand.u32 %v2337, 4294901760
    %3365 = vmatpush2.msra.mxu0 %v3364
    %3366 = vmatprep.subr.mxu0 0.0
    %v3367 = vand.u32 %v2336, 4294901760
    %3368 = vmatpush2.msra.mxu0 %v3367
    %3369 = vmatprep.subr.mxu0 0.0
    %v3370 = vand.u32 %v2335, 4294901760
    %3371 = vmatpush2.msra.mxu0 %v3370
    %v3372 = vand.u32 %v2282, 4294901760
    %v3373 = vsub.f32 %v2282, %v3372
    %v3374 = vand.u32 %v3373, 4294901760
    %v3375 = vsub.f32 %v3373, %v3374
    %v3376 = vand.u32 %v3375, 4294901760
    %3377 = vmatprep.mubr.f32.mxu0 %v3376
    %v3378 = vand.u32 %v2281, 4294901760
    %v3379 = vsub.f32 %v2281, %v3378
    %v3380 = vand.u32 %v3379, 4294901760
    %v3381 = vsub.f32 %v3379, %v3380
    %v3382 = vand.u32 %v3381, 4294901760
    %3383 = vmatmul.mubr.f32.gmra.mxu0 %v3382
    %v3384 = vpop.f32.mrf.mxu0
    %v3385 = vadd.f32 %v3266, %v3384
    %v3386 = vpop.f32.mrf.mxu0
    %v3387 = vand.u32 %v2286, 4294901760
    %v3388 = vsub.f32 %v2286, %v3387
    %v3389 = vand.u32 %v3388, 4294901760
    %v3390 = vsub.f32 %v3388, %v3389
    %v3391 = vand.u32 %v3390, 4294901760
    %3392 = vmatprep.mubr.f32.mxu0 %v3391
    %v3393 = vand.u32 %v2285, 4294901760
    %v3394 = vsub.f32 %v2285, %v3393
    %v3395 = vand.u32 %v3394, 4294901760
    %v3396 = vsub.f32 %v3394, %v3395
    %v3397 = vand.u32 %v3396, 4294901760
    %3398 = vmatmul.mubr.f32.gmra.mxu0 %v3397
    %v3399 = vpop.f32.mrf.mxu0
    %v3400 = vadd.f32 %v3273, %v3399
    %v3401 = vpop.f32.mrf.mxu0
    %3402 = vdwg.mxu0
    %3403 = vmatprep.subr.mxu0 0.0
    %v3404 = vand.u32 %v2334, 4294901760
    %v3405 = vsub.f32 %v2334, %v3404
    %v3406 = vand.u32 %v3405, 4294901760
    %v3407 = vsub.f32 %v3405, %v3406
    %v3408 = vand.u32 %v3407, 4294901760
    %3409 = vmatpush1.msra.mxu0 %v3408
    %3410 = vmatprep.subr.mxu0 0.0
    %v3411 = vand.u32 %v2333, 4294901760
    %v3412 = vsub.f32 %v2333, %v3411
    %v3413 = vand.u32 %v3412, 4294901760
    %v3414 = vsub.f32 %v3412, %v3413
    %v3415 = vand.u32 %v3414, 4294901760
    %3416 = vmatpush1.msra.mxu0 %v3415
    %3417 = vmatprep.subr.mxu0 0.0
    %v3418 = vand.u32 %v2332, 4294901760
    %v3419 = vsub.f32 %v2332, %v3418
    %v3420 = vand.u32 %v3419, 4294901760
    %v3421 = vsub.f32 %v3419, %v3420
    %v3422 = vand.u32 %v3421, 4294901760
    %3423 = vmatpush1.msra.mxu0 %v3422
    %3424 = vmatprep.subr.mxu0 0.0
    %v3425 = vand.u32 %v2331, 4294901760
    %v3426 = vsub.f32 %v2331, %v3425
    %v3427 = vand.u32 %v3426, 4294901760
    %v3428 = vsub.f32 %v3426, %v3427
    %v3429 = vand.u32 %v3428, 4294901760
    %3430 = vmatpush1.msra.mxu0 %v3429
    %3431 = vmatprep.subr.mxu0 0.0
    %v3432 = vand.u32 %v2330, 4294901760
    %v3433 = vsub.f32 %v2330, %v3432
    %v3434 = vand.u32 %v3433, 4294901760
    %v3435 = vsub.f32 %v3433, %v3434
    %v3436 = vand.u32 %v3435, 4294901760
    %3437 = vmatpush1.msra.mxu0 %v3436
    %3438 = vmatprep.subr.mxu0 0.0
    %v3439 = vand.u32 %v2329, 4294901760
    %v3440 = vsub.f32 %v2329, %v3439
    %v3441 = vand.u32 %v3440, 4294901760
    %v3442 = vsub.f32 %v3440, %v3441
    %v3443 = vand.u32 %v3442, 4294901760
    %3444 = vmatpush1.msra.mxu0 %v3443
    %3445 = vmatprep.subr.mxu0 0.0
    %v3446 = vand.u32 %v2328, 4294901760
    %v3447 = vsub.f32 %v2328, %v3446
    %v3448 = vand.u32 %v3447, 4294901760
    %v3449 = vsub.f32 %v3447, %v3448
    %v3450 = vand.u32 %v3449, 4294901760
    %3451 = vmatpush1.msra.mxu0 %v3450
    %3452 = vmatprep.subr.mxu0 0.0
    %v3453 = vand.u32 %v2327, 4294901760
    %v3454 = vsub.f32 %v2327, %v3453
    %v3455 = vand.u32 %v3454, 4294901760
    %v3456 = vsub.f32 %v3454, %v3455
    %v3457 = vand.u32 %v3456, 4294901760
    %3458 = vmatpush1.msra.mxu0 %v3457
    %3459 = vmatprep.subr.mxu0 0.0
    %v3460 = vand.u32 %v2326, 4294901760
    %v3461 = vsub.f32 %v2326, %v3460
    %v3462 = vand.u32 %v3461, 4294901760
    %v3463 = vsub.f32 %v3461, %v3462
    %v3464 = vand.u32 %v3463, 4294901760
    %3465 = vmatpush1.msra.mxu0 %v3464
    %3466 = vmatprep.subr.mxu0 0.0
    %v3467 = vand.u32 %v2325, 4294901760
    %v3468 = vsub.f32 %v2325, %v3467
    %v3469 = vand.u32 %v3468, 4294901760
    %v3470 = vsub.f32 %v3468, %v3469
    %v3471 = vand.u32 %v3470, 4294901760
    %3472 = vmatpush1.msra.mxu0 %v3471
    %3473 = vmatprep.subr.mxu0 0.0
    %v3474 = vand.u32 %v2324, 4294901760
    %v3475 = vsub.f32 %v2324, %v3474
    %v3476 = vand.u32 %v3475, 4294901760
    %v3477 = vsub.f32 %v3475, %v3476
    %v3478 = vand.u32 %v3477, 4294901760
    %3479 = vmatpush1.msra.mxu0 %v3478
    %3480 = vmatprep.subr.mxu0 0.0
    %v3481 = vand.u32 %v2323, 4294901760
    %v3482 = vsub.f32 %v2323, %v3481
    %v3483 = vand.u32 %v3482, 4294901760
    %v3484 = vsub.f32 %v3482, %v3483
    %v3485 = vand.u32 %v3484, 4294901760
    %3486 = vmatpush1.msra.mxu0 %v3485
    %3487 = vmatprep.subr.mxu0 0.0
    %v3488 = vand.u32 %v2322, 4294901760
    %v3489 = vsub.f32 %v2322, %v3488
    %v3490 = vand.u32 %v3489, 4294901760
    %v3491 = vsub.f32 %v3489, %v3490
    %v3492 = vand.u32 %v3491, 4294901760
    %3493 = vmatpush1.msra.mxu0 %v3492
    %3494 = vmatprep.subr.mxu0 0.0
    %v3495 = vand.u32 %v2321, 4294901760
    %v3496 = vsub.f32 %v2321, %v3495
    %v3497 = vand.u32 %v3496, 4294901760
    %v3498 = vsub.f32 %v3496, %v3497
    %v3499 = vand.u32 %v3498, 4294901760
    %3500 = vmatpush1.msra.mxu0 %v3499
    %3501 = vmatprep.subr.mxu0 0.0
    %v3502 = vand.u32 %v2320, 4294901760
    %v3503 = vsub.f32 %v2320, %v3502
    %v3504 = vand.u32 %v3503, 4294901760
    %v3505 = vsub.f32 %v3503, %v3504
    %v3506 = vand.u32 %v3505, 4294901760
    %3507 = vmatpush1.msra.mxu0 %v3506
    %3508 = vmatprep.subr.mxu0 0.0
    %v3509 = vand.u32 %v2319, 4294901760
    %v3510 = vsub.f32 %v2319, %v3509
    %v3511 = vand.u32 %v3510, 4294901760
    %v3512 = vsub.f32 %v3510, %v3511
    %v3513 = vand.u32 %v3512, 4294901760
    %3514 = vmatpush1.msra.mxu0 %v3513
    %3515 = vmatprep.subr.mxu0 0.0
    %v3516 = vand.u32 %v2350, 4294901760
    %v3517 = vsub.f32 %v2350, %v3516
    %v3518 = vand.u32 %v3517, 4294901760
    %v3519 = vsub.f32 %v3517, %v3518
    %v3520 = vand.u32 %v3519, 4294901760
    %3521 = vmatpush2.msra.mxu0 %v3520
    %3522 = vmatprep.subr.mxu0 0.0
    %v3523 = vand.u32 %v2349, 4294901760
    %v3524 = vsub.f32 %v2349, %v3523
    %v3525 = vand.u32 %v3524, 4294901760
    %v3526 = vsub.f32 %v3524, %v3525
    %v3527 = vand.u32 %v3526, 4294901760
    %3528 = vmatpush2.msra.mxu0 %v3527
    %3529 = vmatprep.subr.mxu0 0.0
    %v3530 = vand.u32 %v2348, 4294901760
    %v3531 = vsub.f32 %v2348, %v3530
    %v3532 = vand.u32 %v3531, 4294901760
    %v3533 = vsub.f32 %v3531, %v3532
    %v3534 = vand.u32 %v3533, 4294901760
    %3535 = vmatpush2.msra.mxu0 %v3534
    %3536 = vmatprep.subr.mxu0 0.0
    %v3537 = vand.u32 %v2347, 4294901760
    %v3538 = vsub.f32 %v2347, %v3537
    %v3539 = vand.u32 %v3538, 4294901760
    %v3540 = vsub.f32 %v3538, %v3539
    %v3541 = vand.u32 %v3540, 4294901760
    %3542 = vmatpush2.msra.mxu0 %v3541
    %3543 = vmatprep.subr.mxu0 0.0
    %v3544 = vand.u32 %v2346, 4294901760
    %v3545 = vsub.f32 %v2346, %v3544
    %v3546 = vand.u32 %v3545, 4294901760
    %v3547 = vsub.f32 %v3545, %v3546
    %v3548 = vand.u32 %v3547, 4294901760
    %3549 = vmatpush2.msra.mxu0 %v3548
    %3550 = vmatprep.subr.mxu0 0.0
    %v3551 = vand.u32 %v2345, 4294901760
    %v3552 = vsub.f32 %v2345, %v3551
    %v3553 = vand.u32 %v3552, 4294901760
    %v3554 = vsub.f32 %v3552, %v3553
    %v3555 = vand.u32 %v3554, 4294901760
    %3556 = vmatpush2.msra.mxu0 %v3555
    %3557 = vmatprep.subr.mxu0 0.0
    %v3558 = vand.u32 %v2344, 4294901760
    %v3559 = vsub.f32 %v2344, %v3558
    %v3560 = vand.u32 %v3559, 4294901760
    %v3561 = vsub.f32 %v3559, %v3560
    %v3562 = vand.u32 %v3561, 4294901760
    %3563 = vmatpush2.msra.mxu0 %v3562
    %3564 = vmatprep.subr.mxu0 0.0
    %v3565 = vand.u32 %v2343, 4294901760
    %v3566 = vsub.f32 %v2343, %v3565
    %v3567 = vand.u32 %v3566, 4294901760
    %v3568 = vsub.f32 %v3566, %v3567
    %v3569 = vand.u32 %v3568, 4294901760
    %3570 = vmatpush2.msra.mxu0 %v3569
    %3571 = vmatprep.subr.mxu0 0.0
    %v3572 = vand.u32 %v2342, 4294901760
    %v3573 = vsub.f32 %v2342, %v3572
    %v3574 = vand.u32 %v3573, 4294901760
    %v3575 = vsub.f32 %v3573, %v3574
    %v3576 = vand.u32 %v3575, 4294901760
    %3577 = vmatpush2.msra.mxu0 %v3576
    %3578 = vmatprep.subr.mxu0 0.0
    %v3579 = vand.u32 %v2341, 4294901760
    %v3580 = vsub.f32 %v2341, %v3579
    %v3581 = vand.u32 %v3580, 4294901760
    %v3582 = vsub.f32 %v3580, %v3581
    %v3583 = vand.u32 %v3582, 4294901760
    %3584 = vmatpush2.msra.mxu0 %v3583
    %3585 = vmatprep.subr.mxu0 0.0
    %v3586 = vand.u32 %v2340, 4294901760
    %v3587 = vsub.f32 %v2340, %v3586
    %v3588 = vand.u32 %v3587, 4294901760
    %v3589 = vsub.f32 %v3587, %v3588
    %v3590 = vand.u32 %v3589, 4294901760
    %3591 = vmatpush2.msra.mxu0 %v3590
    %3592 = vmatprep.subr.mxu0 0.0
    %v3593 = vand.u32 %v2339, 4294901760
    %v3594 = vsub.f32 %v2339, %v3593
    %v3595 = vand.u32 %v3594, 4294901760
    %v3596 = vsub.f32 %v3594, %v3595
    %v3597 = vand.u32 %v3596, 4294901760
    %3598 = vmatpush2.msra.mxu0 %v3597
    %3599 = vmatprep.subr.mxu0 0.0
    %v3600 = vand.u32 %v2338, 4294901760
    %v3601 = vsub.f32 %v2338, %v3600
    %v3602 = vand.u32 %v3601, 4294901760
    %v3603 = vsub.f32 %v3601, %v3602
    %v3604 = vand.u32 %v3603, 4294901760
    %3605 = vmatpush2.msra.mxu0 %v3604
    %3606 = vmatprep.subr.mxu0 0.0
    %v3607 = vand.u32 %v2337, 4294901760
    %v3608 = vsub.f32 %v2337, %v3607
    %v3609 = vand.u32 %v3608, 4294901760
    %v3610 = vsub.f32 %v3608, %v3609
    %v3611 = vand.u32 %v3610, 4294901760
    %3612 = vmatpush2.msra.mxu0 %v3611
    %3613 = vmatprep.subr.mxu0 0.0
    %v3614 = vand.u32 %v2336, 4294901760
    %v3615 = vsub.f32 %v2336, %v3614
    %v3616 = vand.u32 %v3615, 4294901760
    %v3617 = vsub.f32 %v3615, %v3616
    %v3618 = vand.u32 %v3617, 4294901760
    %3619 = vmatpush2.msra.mxu0 %v3618
    %3620 = vmatprep.subr.mxu0 0.0
    %v3621 = vand.u32 %v2335, 4294901760
    %v3622 = vsub.f32 %v2335, %v3621
    %v3623 = vand.u32 %v3622, 4294901760
    %v3624 = vsub.f32 %v3622, %v3623
    %v3625 = vand.u32 %v3624, 4294901760
    %3626 = vmatpush2.msra.mxu0 %v3625
    %v3627 = vand.u32 %v2282, 4294901760
    %3628 = vmatprep.mubr.f32.mxu0 %v3627
    %v3629 = vand.u32 %v2281, 4294901760
    %3630 = vmatmul.mubr.f32.gmra.mxu0 %v3629
    %v3631 = vpop.f32.mrf.mxu0
    %v3632 = vadd.f32 %v3385, %v3631
    %v3633 = vpop.f32.mrf.mxu0
    %v3634 = vand.u32 %v2286, 4294901760
    %3635 = vmatprep.mubr.f32.mxu0 %v3634
    %v3636 = vand.u32 %v2285, 4294901760
    %3637 = vmatmul.mubr.f32.gmra.mxu0 %v3636
    %v3638 = vpop.f32.mrf.mxu0
    %v3639 = vadd.f32 %v3400, %v3638
    %v3640 = vpop.f32.mrf.mxu0
    %3641 = vdwg.mxu0
    %3642 = vmatprep.subr.mxu0 0.0
    %v3643 = vand.u32 %v2334, 4294901760
    %v3644 = vsub.f32 %v2334, %v3643
    %3645 = vmatpush1.msra.mxu0 %v3644
    %3646 = vmatprep.subr.mxu0 0.0
    %v3647 = vand.u32 %v2333, 4294901760
    %v3648 = vsub.f32 %v2333, %v3647
    %3649 = vmatpush1.msra.mxu0 %v3648
    %3650 = vmatprep.subr.mxu0 0.0
    %v3651 = vand.u32 %v2332, 4294901760
    %v3652 = vsub.f32 %v2332, %v3651
    %3653 = vmatpush1.msra.mxu0 %v3652
    %3654 = vmatprep.subr.mxu0 0.0
    %v3655 = vand.u32 %v2331, 4294901760
    %v3656 = vsub.f32 %v2331, %v3655
    %3657 = vmatpush1.msra.mxu0 %v3656
    %3658 = vmatprep.subr.mxu0 0.0
    %v3659 = vand.u32 %v2330, 4294901760
    %v3660 = vsub.f32 %v2330, %v3659
    %3661 = vmatpush1.msra.mxu0 %v3660
    %3662 = vmatprep.subr.mxu0 0.0
    %v3663 = vand.u32 %v2329, 4294901760
    %v3664 = vsub.f32 %v2329, %v3663
    %3665 = vmatpush1.msra.mxu0 %v3664
    %3666 = vmatprep.subr.mxu0 0.0
    %v3667 = vand.u32 %v2328, 4294901760
    %v3668 = vsub.f32 %v2328, %v3667
    %3669 = vmatpush1.msra.mxu0 %v3668
    %3670 = vmatprep.subr.mxu0 0.0
    %v3671 = vand.u32 %v2327, 4294901760
    %v3672 = vsub.f32 %v2327, %v3671
    %3673 = vmatpush1.msra.mxu0 %v3672
    %3674 = vmatprep.subr.mxu0 0.0
    %v3675 = vand.u32 %v2326, 4294901760
    %v3676 = vsub.f32 %v2326, %v3675
    %3677 = vmatpush1.msra.mxu0 %v3676
    %3678 = vmatprep.subr.mxu0 0.0
    %v3679 = vand.u32 %v2325, 4294901760
    %v3680 = vsub.f32 %v2325, %v3679
    %3681 = vmatpush1.msra.mxu0 %v3680
    %3682 = vmatprep.subr.mxu0 0.0
    %v3683 = vand.u32 %v2324, 4294901760
    %v3684 = vsub.f32 %v2324, %v3683
    %3685 = vmatpush1.msra.mxu0 %v3684
    %3686 = vmatprep.subr.mxu0 0.0
    %v3687 = vand.u32 %v2323, 4294901760
    %v3688 = vsub.f32 %v2323, %v3687
    %3689 = vmatpush1.msra.mxu0 %v3688
    %3690 = vmatprep.subr.mxu0 0.0
    %v3691 = vand.u32 %v2322, 4294901760
    %v3692 = vsub.f32 %v2322, %v3691
    %3693 = vmatpush1.msra.mxu0 %v3692
    %3694 = vmatprep.subr.mxu0 0.0
    %v3695 = vand.u32 %v2321, 4294901760
    %v3696 = vsub.f32 %v2321, %v3695
    %3697 = vmatpush1.msra.mxu0 %v3696
    %3698 = vmatprep.subr.mxu0 0.0
    %v3699 = vand.u32 %v2320, 4294901760
    %v3700 = vsub.f32 %v2320, %v3699
    %3701 = vmatpush1.msra.mxu0 %v3700
    %3702 = vmatprep.subr.mxu0 0.0
    %v3703 = vand.u32 %v2319, 4294901760
    %v3704 = vsub.f32 %v2319, %v3703
    %3705 = vmatpush1.msra.mxu0 %v3704
    %3706 = vmatprep.subr.mxu0 0.0
    %v3707 = vand.u32 %v2350, 4294901760
    %v3708 = vsub.f32 %v2350, %v3707
    %3709 = vmatpush2.msra.mxu0 %v3708
    %3710 = vmatprep.subr.mxu0 0.0
    %v3711 = vand.u32 %v2349, 4294901760
    %v3712 = vsub.f32 %v2349, %v3711
    %3713 = vmatpush2.msra.mxu0 %v3712
    %3714 = vmatprep.subr.mxu0 0.0
    %v3715 = vand.u32 %v2348, 4294901760
    %v3716 = vsub.f32 %v2348, %v3715
    %3717 = vmatpush2.msra.mxu0 %v3716
    %3718 = vmatprep.subr.mxu0 0.0
    %v3719 = vand.u32 %v2347, 4294901760
    %v3720 = vsub.f32 %v2347, %v3719
    %3721 = vmatpush2.msra.mxu0 %v3720
    %3722 = vmatprep.subr.mxu0 0.0
    %v3723 = vand.u32 %v2346, 4294901760
    %v3724 = vsub.f32 %v2346, %v3723
    %3725 = vmatpush2.msra.mxu0 %v3724
    %3726 = vmatprep.subr.mxu0 0.0
    %v3727 = vand.u32 %v2345, 4294901760
    %v3728 = vsub.f32 %v2345, %v3727
    %3729 = vmatpush2.msra.mxu0 %v3728
    %3730 = vmatprep.subr.mxu0 0.0
    %v3731 = vand.u32 %v2344, 4294901760
    %v3732 = vsub.f32 %v2344, %v3731
    %3733 = vmatpush2.msra.mxu0 %v3732
    %3734 = vmatprep.subr.mxu0 0.0
    %v3735 = vand.u32 %v2343, 4294901760
    %v3736 = vsub.f32 %v2343, %v3735
    %3737 = vmatpush2.msra.mxu0 %v3736
    %3738 = vmatprep.subr.mxu0 0.0
    %v3739 = vand.u32 %v2342, 4294901760
    %v3740 = vsub.f32 %v2342, %v3739
    %3741 = vmatpush2.msra.mxu0 %v3740
    %3742 = vmatprep.subr.mxu0 0.0
    %v3743 = vand.u32 %v2341, 4294901760
    %v3744 = vsub.f32 %v2341, %v3743
    %3745 = vmatpush2.msra.mxu0 %v3744
    %3746 = vmatprep.subr.mxu0 0.0
    %v3747 = vand.u32 %v2340, 4294901760
    %v3748 = vsub.f32 %v2340, %v3747
    %3749 = vmatpush2.msra.mxu0 %v3748
    %3750 = vmatprep.subr.mxu0 0.0
    %v3751 = vand.u32 %v2339, 4294901760
    %v3752 = vsub.f32 %v2339, %v3751
    %3753 = vmatpush2.msra.mxu0 %v3752
    %3754 = vmatprep.subr.mxu0 0.0
    %v3755 = vand.u32 %v2338, 4294901760
    %v3756 = vsub.f32 %v2338, %v3755
    %3757 = vmatpush2.msra.mxu0 %v3756
    %3758 = vmatprep.subr.mxu0 0.0
    %v3759 = vand.u32 %v2337, 4294901760
    %v3760 = vsub.f32 %v2337, %v3759
    %3761 = vmatpush2.msra.mxu0 %v3760
    %3762 = vmatprep.subr.mxu0 0.0
    %v3763 = vand.u32 %v2336, 4294901760
    %v3764 = vsub.f32 %v2336, %v3763
    %3765 = vmatpush2.msra.mxu0 %v3764
    %3766 = vmatprep.subr.mxu0 0.0
    %v3767 = vand.u32 %v2335, 4294901760
    %v3768 = vsub.f32 %v2335, %v3767
    %3769 = vmatpush2.msra.mxu0 %v3768
    %v3770 = vand.u32 %v2282, 4294901760
    %v3771 = vsub.f32 %v2282, %v3770
    %3772 = vmatprep.mubr.f32.mxu0 %v3771
    %v3773 = vand.u32 %v2281, 4294901760
    %v3774 = vsub.f32 %v2281, %v3773
    %3775 = vmatmul.mubr.f32.gmra.mxu0 %v3774
    %v3776 = vpop.f32.mrf.mxu0
    %v3777 = vadd.f32 %v3632, %v3776
    %v3778 = vpop.f32.mrf.mxu0
    %v3779 = vand.u32 %v2286, 4294901760
    %v3780 = vsub.f32 %v2286, %v3779
    %3781 = vmatprep.mubr.f32.mxu0 %v3780
    %v3782 = vand.u32 %v2285, 4294901760
    %v3783 = vsub.f32 %v2285, %v3782
    %3784 = vmatmul.mubr.f32.gmra.mxu0 %v3783
    %v3785 = vpop.f32.mrf.mxu0
    %v3786 = vadd.f32 %v3639, %v3785
    %v3787 = vpop.f32.mrf.mxu0
    %3788 = vdwg.mxu0
    %3789 = vmatprep.subr.mxu0 0.0
    %v3790 = vand.u32 %v2334, 4294901760
    %3791 = vmatpush1.msra.mxu0 %v3790
    %3792 = vmatprep.subr.mxu0 0.0
    %v3793 = vand.u32 %v2333, 4294901760
    %3794 = vmatpush1.msra.mxu0 %v3793
    %3795 = vmatprep.subr.mxu0 0.0
    %v3796 = vand.u32 %v2332, 4294901760
    %3797 = vmatpush1.msra.mxu0 %v3796
    %3798 = vmatprep.subr.mxu0 0.0
    %v3799 = vand.u32 %v2331, 4294901760
    %3800 = vmatpush1.msra.mxu0 %v3799
    %3801 = vmatprep.subr.mxu0 0.0
    %v3802 = vand.u32 %v2330, 4294901760
    %3803 = vmatpush1.msra.mxu0 %v3802
    %3804 = vmatprep.subr.mxu0 0.0
    %v3805 = vand.u32 %v2329, 4294901760
    %3806 = vmatpush1.msra.mxu0 %v3805
    %3807 = vmatprep.subr.mxu0 0.0
    %v3808 = vand.u32 %v2328, 4294901760
    %3809 = vmatpush1.msra.mxu0 %v3808
    %3810 = vmatprep.subr.mxu0 0.0
    %v3811 = vand.u32 %v2327, 4294901760
    %3812 = vmatpush1.msra.mxu0 %v3811
    %3813 = vmatprep.subr.mxu0 0.0
    %v3814 = vand.u32 %v2326, 4294901760
    %3815 = vmatpush1.msra.mxu0 %v3814
    %3816 = vmatprep.subr.mxu0 0.0
    %v3817 = vand.u32 %v2325, 4294901760
    %3818 = vmatpush1.msra.mxu0 %v3817
    %3819 = vmatprep.subr.mxu0 0.0
    %v3820 = vand.u32 %v2324, 4294901760
    %3821 = vmatpush1.msra.mxu0 %v3820
    %3822 = vmatprep.subr.mxu0 0.0
    %v3823 = vand.u32 %v2323, 4294901760
    %3824 = vmatpush1.msra.mxu0 %v3823
    %3825 = vmatprep.subr.mxu0 0.0
    %v3826 = vand.u32 %v2322, 4294901760
    %3827 = vmatpush1.msra.mxu0 %v3826
    %3828 = vmatprep.subr.mxu0 0.0
    %v3829 = vand.u32 %v2321, 4294901760
    %3830 = vmatpush1.msra.mxu0 %v3829
    %3831 = vmatprep.subr.mxu0 0.0
    %v3832 = vand.u32 %v2320, 4294901760
    %3833 = vmatpush1.msra.mxu0 %v3832
    %3834 = vmatprep.subr.mxu0 0.0
    %v3835 = vand.u32 %v2319, 4294901760
    %3836 = vmatpush1.msra.mxu0 %v3835
    %3837 = vmatprep.subr.mxu0 0.0
    %v3838 = vand.u32 %v2350, 4294901760
    %3839 = vmatpush2.msra.mxu0 %v3838
    %3840 = vmatprep.subr.mxu0 0.0
    %v3841 = vand.u32 %v2349, 4294901760
    %3842 = vmatpush2.msra.mxu0 %v3841
    %3843 = vmatprep.subr.mxu0 0.0
    %v3844 = vand.u32 %v2348, 4294901760
    %3845 = vmatpush2.msra.mxu0 %v3844
    %3846 = vmatprep.subr.mxu0 0.0
    %v3847 = vand.u32 %v2347, 4294901760
    %3848 = vmatpush2.msra.mxu0 %v3847
    %3849 = vmatprep.subr.mxu0 0.0
    %v3850 = vand.u32 %v2346, 4294901760
    %3851 = vmatpush2.msra.mxu0 %v3850
    %3852 = vmatprep.subr.mxu0 0.0
    %v3853 = vand.u32 %v2345, 4294901760
    %3854 = vmatpush2.msra.mxu0 %v3853
    %3855 = vmatprep.subr.mxu0 0.0
    %v3856 = vand.u32 %v2344, 4294901760
    %3857 = vmatpush2.msra.mxu0 %v3856
    %3858 = vmatprep.subr.mxu0 0.0
    %v3859 = vand.u32 %v2343, 4294901760
    %3860 = vmatpush2.msra.mxu0 %v3859
    %3861 = vmatprep.subr.mxu0 0.0
    %v3862 = vand.u32 %v2342, 4294901760
    %3863 = vmatpush2.msra.mxu0 %v3862
    %3864 = vmatprep.subr.mxu0 0.0
    %v3865 = vand.u32 %v2341, 4294901760
    %3866 = vmatpush2.msra.mxu0 %v3865
    %3867 = vmatprep.subr.mxu0 0.0
    %v3868 = vand.u32 %v2340, 4294901760
    %3869 = vmatpush2.msra.mxu0 %v3868
    %3870 = vmatprep.subr.mxu0 0.0
    %v3871 = vand.u32 %v2339, 4294901760
    %3872 = vmatpush2.msra.mxu0 %v3871
    %3873 = vmatprep.subr.mxu0 0.0
    %v3874 = vand.u32 %v2338, 4294901760
    %3875 = vmatpush2.msra.mxu0 %v3874
    %3876 = vmatprep.subr.mxu0 0.0
    %v3877 = vand.u32 %v2337, 4294901760
    %3878 = vmatpush2.msra.mxu0 %v3877
    %3879 = vmatprep.subr.mxu0 0.0
    %v3880 = vand.u32 %v2336, 4294901760
    %3881 = vmatpush2.msra.mxu0 %v3880
    %3882 = vmatprep.subr.mxu0 0.0
    %v3883 = vand.u32 %v2335, 4294901760
    %3884 = vmatpush2.msra.mxu0 %v3883
    %v3885 = vand.u32 %v2282, 4294901760
    %v3886 = vsub.f32 %v2282, %v3885
    %v3887 = vand.u32 %v3886, 4294901760
    %3888 = vmatprep.mubr.f32.mxu0 %v3887
    %v3889 = vand.u32 %v2281, 4294901760
    %v3890 = vsub.f32 %v2281, %v3889
    %v3891 = vand.u32 %v3890, 4294901760
    %3892 = vmatmul.mubr.f32.gmra.mxu0 %v3891
    %v3893 = vpop.f32.mrf.mxu0
    %v3894 = vadd.f32 %v3777, %v3893
    %v3895 = vpop.f32.mrf.mxu0
    %v3896 = vand.u32 %v2286, 4294901760
    %v3897 = vsub.f32 %v2286, %v3896
    %v3898 = vand.u32 %v3897, 4294901760
    %3899 = vmatprep.mubr.f32.mxu0 %v3898
    %v3900 = vand.u32 %v2285, 4294901760
    %v3901 = vsub.f32 %v2285, %v3900
    %v3902 = vand.u32 %v3901, 4294901760
    %3903 = vmatmul.mubr.f32.gmra.mxu0 %v3902
    %v3904 = vpop.f32.mrf.mxu0
    %v3905 = vadd.f32 %v3786, %v3904
    %v3906 = vpop.f32.mrf.mxu0
    %3907 = vdwg.mxu0
    %3908 = vmatprep.subr.mxu0 0.0
    %v3909 = vand.u32 %v2334, 4294901760
    %v3910 = vsub.f32 %v2334, %v3909
    %v3911 = vand.u32 %v3910, 4294901760
    %3912 = vmatpush1.msra.mxu0 %v3911
    %3913 = vmatprep.subr.mxu0 0.0
    %v3914 = vand.u32 %v2333, 4294901760
    %v3915 = vsub.f32 %v2333, %v3914
    %v3916 = vand.u32 %v3915, 4294901760
    %3917 = vmatpush1.msra.mxu0 %v3916
    %3918 = vmatprep.subr.mxu0 0.0
    %v3919 = vand.u32 %v2332, 4294901760
    %v3920 = vsub.f32 %v2332, %v3919
    %v3921 = vand.u32 %v3920, 4294901760
    %3922 = vmatpush1.msra.mxu0 %v3921
    %3923 = vmatprep.subr.mxu0 0.0
    %v3924 = vand.u32 %v2331, 4294901760
    %v3925 = vsub.f32 %v2331, %v3924
    %v3926 = vand.u32 %v3925, 4294901760
    %3927 = vmatpush1.msra.mxu0 %v3926
    %3928 = vmatprep.subr.mxu0 0.0
    %v3929 = vand.u32 %v2330, 4294901760
    %v3930 = vsub.f32 %v2330, %v3929
    %v3931 = vand.u32 %v3930, 4294901760
    %3932 = vmatpush1.msra.mxu0 %v3931
    %3933 = vmatprep.subr.mxu0 0.0
    %v3934 = vand.u32 %v2329, 4294901760
    %v3935 = vsub.f32 %v2329, %v3934
    %v3936 = vand.u32 %v3935, 4294901760
    %3937 = vmatpush1.msra.mxu0 %v3936
    %3938 = vmatprep.subr.mxu0 0.0
    %v3939 = vand.u32 %v2328, 4294901760
    %v3940 = vsub.f32 %v2328, %v3939
    %v3941 = vand.u32 %v3940, 4294901760
    %3942 = vmatpush1.msra.mxu0 %v3941
    %3943 = vmatprep.subr.mxu0 0.0
    %v3944 = vand.u32 %v2327, 4294901760
    %v3945 = vsub.f32 %v2327, %v3944
    %v3946 = vand.u32 %v3945, 4294901760
    %3947 = vmatpush1.msra.mxu0 %v3946
    %3948 = vmatprep.subr.mxu0 0.0
    %v3949 = vand.u32 %v2326, 4294901760
    %v3950 = vsub.f32 %v2326, %v3949
    %v3951 = vand.u32 %v3950, 4294901760
    %3952 = vmatpush1.msra.mxu0 %v3951
    %3953 = vmatprep.subr.mxu0 0.0
    %v3954 = vand.u32 %v2325, 4294901760
    %v3955 = vsub.f32 %v2325, %v3954
    %v3956 = vand.u32 %v3955, 4294901760
    %3957 = vmatpush1.msra.mxu0 %v3956
    %3958 = vmatprep.subr.mxu0 0.0
    %v3959 = vand.u32 %v2324, 4294901760
    %v3960 = vsub.f32 %v2324, %v3959
    %v3961 = vand.u32 %v3960, 4294901760
    %3962 = vmatpush1.msra.mxu0 %v3961
    %3963 = vmatprep.subr.mxu0 0.0
    %v3964 = vand.u32 %v2323, 4294901760
    %v3965 = vsub.f32 %v2323, %v3964
    %v3966 = vand.u32 %v3965, 4294901760
    %3967 = vmatpush1.msra.mxu0 %v3966
    %3968 = vmatprep.subr.mxu0 0.0
    %v3969 = vand.u32 %v2322, 4294901760
    %v3970 = vsub.f32 %v2322, %v3969
    %v3971 = vand.u32 %v3970, 4294901760
    %3972 = vmatpush1.msra.mxu0 %v3971
    %3973 = vmatprep.subr.mxu0 0.0
    %v3974 = vand.u32 %v2321, 4294901760
    %v3975 = vsub.f32 %v2321, %v3974
    %v3976 = vand.u32 %v3975, 4294901760
    %3977 = vmatpush1.msra.mxu0 %v3976
    %3978 = vmatprep.subr.mxu0 0.0
    %v3979 = vand.u32 %v2320, 4294901760
    %v3980 = vsub.f32 %v2320, %v3979
    %v3981 = vand.u32 %v3980, 4294901760
    %3982 = vmatpush1.msra.mxu0 %v3981
    %3983 = vmatprep.subr.mxu0 0.0
    %v3984 = vand.u32 %v2319, 4294901760
    %v3985 = vsub.f32 %v2319, %v3984
    %v3986 = vand.u32 %v3985, 4294901760
    %3987 = vmatpush1.msra.mxu0 %v3986
    %3988 = vmatprep.subr.mxu0 0.0
    %v3989 = vand.u32 %v2350, 4294901760
    %v3990 = vsub.f32 %v2350, %v3989
    %v3991 = vand.u32 %v3990, 4294901760
    %3992 = vmatpush2.msra.mxu0 %v3991
    %3993 = vmatprep.subr.mxu0 0.0
    %v3994 = vand.u32 %v2349, 4294901760
    %v3995 = vsub.f32 %v2349, %v3994
    %v3996 = vand.u32 %v3995, 4294901760
    %3997 = vmatpush2.msra.mxu0 %v3996
    %3998 = vmatprep.subr.mxu0 0.0
    %v3999 = vand.u32 %v2348, 4294901760
    %v4000 = vsub.f32 %v2348, %v3999
    %v4001 = vand.u32 %v4000, 4294901760
    %4002 = vmatpush2.msra.mxu0 %v4001
    %4003 = vmatprep.subr.mxu0 0.0
    %v4004 = vand.u32 %v2347, 4294901760
    %v4005 = vsub.f32 %v2347, %v4004
    %v4006 = vand.u32 %v4005, 4294901760
    %4007 = vmatpush2.msra.mxu0 %v4006
    %4008 = vmatprep.subr.mxu0 0.0
    %v4009 = vand.u32 %v2346, 4294901760
    %v4010 = vsub.f32 %v2346, %v4009
    %v4011 = vand.u32 %v4010, 4294901760
    %4012 = vmatpush2.msra.mxu0 %v4011
    %4013 = vmatprep.subr.mxu0 0.0
    %v4014 = vand.u32 %v2345, 4294901760
    %v4015 = vsub.f32 %v2345, %v4014
    %v4016 = vand.u32 %v4015, 4294901760
    %4017 = vmatpush2.msra.mxu0 %v4016
    %4018 = vmatprep.subr.mxu0 0.0
    %v4019 = vand.u32 %v2344, 4294901760
    %v4020 = vsub.f32 %v2344, %v4019
    %v4021 = vand.u32 %v4020, 4294901760
    %4022 = vmatpush2.msra.mxu0 %v4021
    %4023 = vmatprep.subr.mxu0 0.0
    %v4024 = vand.u32 %v2343, 4294901760
    %v4025 = vsub.f32 %v2343, %v4024
    %v4026 = vand.u32 %v4025, 4294901760
    %4027 = vmatpush2.msra.mxu0 %v4026
    %4028 = vmatprep.subr.mxu0 0.0
    %v4029 = vand.u32 %v2342, 4294901760
    %v4030 = vsub.f32 %v2342, %v4029
    %v4031 = vand.u32 %v4030, 4294901760
    %4032 = vmatpush2.msra.mxu0 %v4031
    %4033 = vmatprep.subr.mxu0 0.0
    %v4034 = vand.u32 %v2341, 4294901760
    %v4035 = vsub.f32 %v2341, %v4034
    %v4036 = vand.u32 %v4035, 4294901760
    %4037 = vmatpush2.msra.mxu0 %v4036
    %4038 = vmatprep.subr.mxu0 0.0
    %v4039 = vand.u32 %v2340, 4294901760
    %v4040 = vsub.f32 %v2340, %v4039
    %v4041 = vand.u32 %v4040, 4294901760
    %4042 = vmatpush2.msra.mxu0 %v4041
    %4043 = vmatprep.subr.mxu0 0.0
    %v4044 = vand.u32 %v2339, 4294901760
    %v4045 = vsub.f32 %v2339, %v4044
    %v4046 = vand.u32 %v4045, 4294901760
    %4047 = vmatpush2.msra.mxu0 %v4046
    %4048 = vmatprep.subr.mxu0 0.0
    %v4049 = vand.u32 %v2338, 4294901760
    %v4050 = vsub.f32 %v2338, %v4049
    %v4051 = vand.u32 %v4050, 4294901760
    %4052 = vmatpush2.msra.mxu0 %v4051
    %4053 = vmatprep.subr.mxu0 0.0
    %v4054 = vand.u32 %v2337, 4294901760
    %v4055 = vsub.f32 %v2337, %v4054
    %v4056 = vand.u32 %v4055, 4294901760
    %4057 = vmatpush2.msra.mxu0 %v4056
    %4058 = vmatprep.subr.mxu0 0.0
    %v4059 = vand.u32 %v2336, 4294901760
    %v4060 = vsub.f32 %v2336, %v4059
    %v4061 = vand.u32 %v4060, 4294901760
    %4062 = vmatpush2.msra.mxu0 %v4061
    %4063 = vmatprep.subr.mxu0 0.0
    %v4064 = vand.u32 %v2335, 4294901760
    %v4065 = vsub.f32 %v2335, %v4064
    %v4066 = vand.u32 %v4065, 4294901760
    %4067 = vmatpush2.msra.mxu0 %v4066
    %v4068 = vand.u32 %v2282, 4294901760
    %4069 = vmatprep.mubr.f32.mxu0 %v4068
    %v4070 = vand.u32 %v2281, 4294901760
    %4071 = vmatmul.mubr.f32.gmra.mxu0 %v4070
    %v4072 = vpop.f32.mrf.mxu0
    %v4073 = vadd.f32 %v3894, %v4072
    %v4074 = vpop.f32.mrf.mxu0
    %v4075 = vand.u32 %v2286, 4294901760
    %4076 = vmatprep.mubr.f32.mxu0 %v4075
    %v4077 = vand.u32 %v2285, 4294901760
    %4078 = vmatmul.mubr.f32.gmra.mxu0 %v4077
    %v4079 = vpop.f32.mrf.mxu0
    %v4080 = vadd.f32 %v3905, %v4079
    %v4081 = vpop.f32.mrf.mxu0
    %4082 = vdwg.mxu0
    %4083 = vmatprep.subr.mxu0 0.0
    %v4084 = vand.u32 %v2334, 4294901760
    %4085 = vmatpush1.msra.mxu0 %v4084
    %4086 = vmatprep.subr.mxu0 0.0
    %v4087 = vand.u32 %v2333, 4294901760
    %4088 = vmatpush1.msra.mxu0 %v4087
    %4089 = vmatprep.subr.mxu0 0.0
    %v4090 = vand.u32 %v2332, 4294901760
    %4091 = vmatpush1.msra.mxu0 %v4090
    %4092 = vmatprep.subr.mxu0 0.0
    %v4093 = vand.u32 %v2331, 4294901760
    %4094 = vmatpush1.msra.mxu0 %v4093
    %4095 = vmatprep.subr.mxu0 0.0
    %v4096 = vand.u32 %v2330, 4294901760
    %4097 = vmatpush1.msra.mxu0 %v4096
    %4098 = vmatprep.subr.mxu0 0.0
    %v4099 = vand.u32 %v2329, 4294901760
    %4100 = vmatpush1.msra.mxu0 %v4099
    %4101 = vmatprep.subr.mxu0 0.0
    %v4102 = vand.u32 %v2328, 4294901760
    %4103 = vmatpush1.msra.mxu0 %v4102
    %4104 = vmatprep.subr.mxu0 0.0
    %v4105 = vand.u32 %v2327, 4294901760
    %4106 = vmatpush1.msra.mxu0 %v4105
    %4107 = vmatprep.subr.mxu0 0.0
    %v4108 = vand.u32 %v2326, 4294901760
    %4109 = vmatpush1.msra.mxu0 %v4108
    %4110 = vmatprep.subr.mxu0 0.0
    %v4111 = vand.u32 %v2325, 4294901760
    %4112 = vmatpush1.msra.mxu0 %v4111
    %4113 = vmatprep.subr.mxu0 0.0
    %v4114 = vand.u32 %v2324, 4294901760
    %4115 = vmatpush1.msra.mxu0 %v4114
    %4116 = vmatprep.subr.mxu0 0.0
    %v4117 = vand.u32 %v2323, 4294901760
    %4118 = vmatpush1.msra.mxu0 %v4117
    %4119 = vmatprep.subr.mxu0 0.0
    %v4120 = vand.u32 %v2322, 4294901760
    %4121 = vmatpush1.msra.mxu0 %v4120
    %4122 = vmatprep.subr.mxu0 0.0
    %v4123 = vand.u32 %v2321, 4294901760
    %4124 = vmatpush1.msra.mxu0 %v4123
    %4125 = vmatprep.subr.mxu0 0.0
    %v4126 = vand.u32 %v2320, 4294901760
    %4127 = vmatpush1.msra.mxu0 %v4126
    %4128 = vmatprep.subr.mxu0 0.0
    %v4129 = vand.u32 %v2319, 4294901760
    %4130 = vmatpush1.msra.mxu0 %v4129
    %4131 = vmatprep.subr.mxu0 0.0
    %v4132 = vand.u32 %v2350, 4294901760
    %4133 = vmatpush2.msra.mxu0 %v4132
    %4134 = vmatprep.subr.mxu0 0.0
    %v4135 = vand.u32 %v2349, 4294901760
    %4136 = vmatpush2.msra.mxu0 %v4135
    %4137 = vmatprep.subr.mxu0 0.0
    %v4138 = vand.u32 %v2348, 4294901760
    %4139 = vmatpush2.msra.mxu0 %v4138
    %4140 = vmatprep.subr.mxu0 0.0
    %v4141 = vand.u32 %v2347, 4294901760
    %4142 = vmatpush2.msra.mxu0 %v4141
    %4143 = vmatprep.subr.mxu0 0.0
    %v4144 = vand.u32 %v2346, 4294901760
    %4145 = vmatpush2.msra.mxu0 %v4144
    %4146 = vmatprep.subr.mxu0 0.0
    %v4147 = vand.u32 %v2345, 4294901760
    %4148 = vmatpush2.msra.mxu0 %v4147
    %4149 = vmatprep.subr.mxu0 0.0
    %v4150 = vand.u32 %v2344, 4294901760
    %4151 = vmatpush2.msra.mxu0 %v4150
    %4152 = vmatprep.subr.mxu0 0.0
    %v4153 = vand.u32 %v2343, 4294901760
    %4154 = vmatpush2.msra.mxu0 %v4153
    %4155 = vmatprep.subr.mxu0 0.0
    %v4156 = vand.u32 %v2342, 4294901760
    %4157 = vmatpush2.msra.mxu0 %v4156
    %4158 = vmatprep.subr.mxu0 0.0
    %v4159 = vand.u32 %v2341, 4294901760
    %4160 = vmatpush2.msra.mxu0 %v4159
    %4161 = vmatprep.subr.mxu0 0.0
    %v4162 = vand.u32 %v2340, 4294901760
    %4163 = vmatpush2.msra.mxu0 %v4162
    %4164 = vmatprep.subr.mxu0 0.0
    %v4165 = vand.u32 %v2339, 4294901760
    %4166 = vmatpush2.msra.mxu0 %v4165
    %4167 = vmatprep.subr.mxu0 0.0
    %v4168 = vand.u32 %v2338, 4294901760
    %4169 = vmatpush2.msra.mxu0 %v4168
    %4170 = vmatprep.subr.mxu0 0.0
    %v4171 = vand.u32 %v2337, 4294901760
    %4172 = vmatpush2.msra.mxu0 %v4171
    %4173 = vmatprep.subr.mxu0 0.0
    %v4174 = vand.u32 %v2336, 4294901760
    %4175 = vmatpush2.msra.mxu0 %v4174
    %4176 = vmatprep.subr.mxu0 0.0
    %v4177 = vand.u32 %v2335, 4294901760
    %4178 = vmatpush2.msra.mxu0 %v4177
    %v4179 = vand.u32 %v2282, 4294901760
    %4180 = vmatprep.mubr.f32.mxu0 %v4179
    %v4181 = vand.u32 %v2281, 4294901760
    %4182 = vmatmul.mubr.f32.gmra.mxu0 %v4181
    %v4183 = vpop.f32.mrf.mxu0
    %v4184 = vadd.f32 %v4073, %v4183
    %v4185 = vpop.f32.mrf.mxu0
    %v4186 = vand.u32 %v2286, 4294901760
    %4187 = vmatprep.mubr.f32.mxu0 %v4186
    %v4188 = vand.u32 %v2285, 4294901760
    %4189 = vmatmul.mubr.f32.gmra.mxu0 %v4188
    %v4190 = vpop.f32.mrf.mxu0
    %v4191 = vadd.f32 %v4080, %v4190
    %v4192 = vpop.f32.mrf.mxu0
    %4193 = vdwg.mxu0
    %v4194 = vld [vmem:[%s4] sm:$0xff]
    %v4195 = vld [vmem:[%s4 + $0x8] sm:$0xff]
    %v4196 = vld [vmem:[%s4 + $0x10] sm:$0xff]
    %v4197 = vld [vmem:[%s4 + $0x18] sm:$0xff]
    %v4198 = vlaneseq
    %v4199 = vand.u32 %v4198, 127
    %vm4200 = vcmp.ge.s32.totalorder %v4199, 64
    %vm4201 = vcmp.lt.s32.totalorder %v4199, 96
    %vm4202 = vmand %vm4200, %vm4201
    %v4204 = vrot.slane %v4191, 7
    %vm4206 = vcmask 1040384
    %v4207 = vsel %vm4206, %v4184, %v4204
    %vm4208 = vcmask 261120
    %v4210 = vsel %vm4208, 0.0, 0
    %4212 = vmatprep.subr.mxu0 0.0
    %4213 = vmatpush1.msra.mxu0 0.0
    %4214 = vmatprep.subr.mxu0 0.0
    %4215 = vmatpush1.msra.mxu0 0.0
    %4216 = vmatprep.subr.mxu0 0.0
    %4217 = vmatpush1.msra.mxu0 0.0
    %4218 = vmatprep.subr.mxu0 0.0
    %4219 = vmatpush1.msra.mxu0 0.0
    %4220 = vmatprep.subr.mxu0 0.0
    %4221 = vmatpush1.msra.mxu0 0.0
    %4222 = vmatprep.subr.mxu0 0.0
    %4223 = vmatpush1.msra.mxu0 0.0
    %4224 = vmatprep.subr.mxu0 0.0
    %4225 = vmatpush1.msra.mxu0 0.0
    %4226 = vmatprep.subr.mxu0 0.0
    %4227 = vmatpush1.msra.mxu0 0.0
    %4228 = vmatprep.subr.mxu0 0.0
    %4229 = vmatpush1.msra.mxu0 0.0
    %4230 = vmatprep.subr.mxu0 0.0
    %4231 = vmatpush1.msra.mxu0 0.0
    %4232 = vmatprep.subr.mxu0 0.0
    %4233 = vmatpush1.msra.mxu0 0.0
    %4234 = vmatprep.subr.mxu0 0.0
    %4235 = vmatpush1.msra.mxu0 0.0
    %4236 = vmatprep.subr.mxu0 0.0
    %v4237 = vand.u32 %v4197, 4294901760
    %4238 = vmatpush1.msra.mxu0 %v4237
    %4239 = vmatprep.subr.mxu0 0.0
    %v4240 = vand.u32 %v4196, 4294901760
    %4241 = vmatpush1.msra.mxu0 %v4240
    %4242 = vmatprep.subr.mxu0 0.0
    %v4243 = vand.u32 %v4195, 4294901760
    %4244 = vmatpush1.msra.mxu0 %v4243
    %4245 = vmatprep.subr.mxu0 0.0
    %v4246 = vand.u32 %v4194, 4294901760
    %4247 = vmatpush1.msra.mxu0 %v4246
    %4248 = vmatprep.subr.mxu0 0.0
    %4249 = vmatpush2.msra.mxu0 0.0
    %4250 = vmatprep.subr.mxu0 0.0
    %4251 = vmatpush2.msra.mxu0 0.0
    %4252 = vmatprep.subr.mxu0 0.0
    %4253 = vmatpush2.msra.mxu0 0.0
    %4254 = vmatprep.subr.mxu0 0.0
    %4255 = vmatpush2.msra.mxu0 0.0
    %4256 = vmatprep.subr.mxu0 0.0
    %4257 = vmatpush2.msra.mxu0 0.0
    %4258 = vmatprep.subr.mxu0 0.0
    %4259 = vmatpush2.msra.mxu0 0.0
    %4260 = vmatprep.subr.mxu0 0.0
    %4261 = vmatpush2.msra.mxu0 0.0
    %4262 = vmatprep.subr.mxu0 0.0
    %4263 = vmatpush2.msra.mxu0 0.0
    %4264 = vmatprep.subr.mxu0 0.0
    %4265 = vmatpush2.msra.mxu0 0.0
    %4266 = vmatprep.subr.mxu0 0.0
    %4267 = vmatpush2.msra.mxu0 0.0
    %4268 = vmatprep.subr.mxu0 0.0
    %4269 = vmatpush2.msra.mxu0 0.0
    %4270 = vmatprep.subr.mxu0 0.0
    %4271 = vmatpush2.msra.mxu0 0.0
    %4272 = vmatprep.subr.mxu0 0.0
    %4273 = vmatpush2.msra.mxu0 0.0
    %4274 = vmatprep.subr.mxu0 0.0
    %4275 = vmatpush2.msra.mxu0 0.0
    %4276 = vmatprep.subr.mxu0 0.0
    %4277 = vmatpush2.msra.mxu0 0.0
    %4278 = vmatprep.subr.mxu0 0.0
    %4279 = vmatpush2.msra.mxu0 0.0
    %4280 = vmatprep.mubr.f32.mxu0 0.0
    %v4281 = vand.u32 %v4210, 4294901760
    %v4282 = vsub.f32 %v4210, %v4281
    %v4283 = vand.u32 %v4282, 4294901760
    %v4284 = vsub.f32 %v4282, %v4283
    %v4285 = vand.u32 %v4284, 4294901760
    %4286 = vmatmul.mubr.f32.gmra.mxu0 %v4285
    %v4287 = vpop.f32.mrf.mxu0
    %v4288 = vadd.f32 0.0, %v4287
    %v4289 = vpop.f32.mrf.mxu0
    %4290 = vdwg.mxu0
    %4291 = vmatprep.subr.mxu0 0.0
    %4292 = vmatpush1.msra.mxu0 0.0
    %4293 = vmatprep.subr.mxu0 0.0
    %4294 = vmatpush1.msra.mxu0 0.0
    %4295 = vmatprep.subr.mxu0 0.0
    %4296 = vmatpush1.msra.mxu0 0.0
    %4297 = vmatprep.subr.mxu0 0.0
    %4298 = vmatpush1.msra.mxu0 0.0
    %4299 = vmatprep.subr.mxu0 0.0
    %4300 = vmatpush1.msra.mxu0 0.0
    %4301 = vmatprep.subr.mxu0 0.0
    %4302 = vmatpush1.msra.mxu0 0.0
    %4303 = vmatprep.subr.mxu0 0.0
    %4304 = vmatpush1.msra.mxu0 0.0
    %4305 = vmatprep.subr.mxu0 0.0
    %4306 = vmatpush1.msra.mxu0 0.0
    %4307 = vmatprep.subr.mxu0 0.0
    %4308 = vmatpush1.msra.mxu0 0.0
    %4309 = vmatprep.subr.mxu0 0.0
    %4310 = vmatpush1.msra.mxu0 0.0
    %4311 = vmatprep.subr.mxu0 0.0
    %4312 = vmatpush1.msra.mxu0 0.0
    %4313 = vmatprep.subr.mxu0 0.0
    %4314 = vmatpush1.msra.mxu0 0.0
    %4315 = vmatprep.subr.mxu0 0.0
    %v4316 = vand.u32 %v4197, 4294901760
    %v4317 = vsub.f32 %v4197, %v4316
    %v4318 = vand.u32 %v4317, 4294901760
    %v4319 = vsub.f32 %v4317, %v4318
    %v4320 = vand.u32 %v4319, 4294901760
    %4321 = vmatpush1.msra.mxu0 %v4320
    %4322 = vmatprep.subr.mxu0 0.0
    %v4323 = vand.u32 %v4196, 4294901760
    %v4324 = vsub.f32 %v4196, %v4323
    %v4325 = vand.u32 %v4324, 4294901760
    %v4326 = vsub.f32 %v4324, %v4325
    %v4327 = vand.u32 %v4326, 4294901760
    %4328 = vmatpush1.msra.mxu0 %v4327
    %4329 = vmatprep.subr.mxu0 0.0
    %v4330 = vand.u32 %v4195, 4294901760
    %v4331 = vsub.f32 %v4195, %v4330
    %v4332 = vand.u32 %v4331, 4294901760
    %v4333 = vsub.f32 %v4331, %v4332
    %v4334 = vand.u32 %v4333, 4294901760
    %4335 = vmatpush1.msra.mxu0 %v4334
    %4336 = vmatprep.subr.mxu0 0.0
    %v4337 = vand.u32 %v4194, 4294901760
    %v4338 = vsub.f32 %v4194, %v4337
    %v4339 = vand.u32 %v4338, 4294901760
    %v4340 = vsub.f32 %v4338, %v4339
    %v4341 = vand.u32 %v4340, 4294901760
    %4342 = vmatpush1.msra.mxu0 %v4341
    %4343 = vmatprep.subr.mxu0 0.0
    %4344 = vmatpush2.msra.mxu0 0.0
    %4345 = vmatprep.subr.mxu0 0.0
    %4346 = vmatpush2.msra.mxu0 0.0
    %4347 = vmatprep.subr.mxu0 0.0
    %4348 = vmatpush2.msra.mxu0 0.0
    %4349 = vmatprep.subr.mxu0 0.0
    %4350 = vmatpush2.msra.mxu0 0.0
    %4351 = vmatprep.subr.mxu0 0.0
    %4352 = vmatpush2.msra.mxu0 0.0
    %4353 = vmatprep.subr.mxu0 0.0
    %4354 = vmatpush2.msra.mxu0 0.0
    %4355 = vmatprep.subr.mxu0 0.0
    %4356 = vmatpush2.msra.mxu0 0.0
    %4357 = vmatprep.subr.mxu0 0.0
    %4358 = vmatpush2.msra.mxu0 0.0
    %4359 = vmatprep.subr.mxu0 0.0
    %4360 = vmatpush2.msra.mxu0 0.0
    %4361 = vmatprep.subr.mxu0 0.0
    %4362 = vmatpush2.msra.mxu0 0.0
    %4363 = vmatprep.subr.mxu0 0.0
    %4364 = vmatpush2.msra.mxu0 0.0
    %4365 = vmatprep.subr.mxu0 0.0
    %4366 = vmatpush2.msra.mxu0 0.0
    %4367 = vmatprep.subr.mxu0 0.0
    %4368 = vmatpush2.msra.mxu0 0.0
    %4369 = vmatprep.subr.mxu0 0.0
    %4370 = vmatpush2.msra.mxu0 0.0
    %4371 = vmatprep.subr.mxu0 0.0
    %4372 = vmatpush2.msra.mxu0 0.0
    %4373 = vmatprep.subr.mxu0 0.0
    %4374 = vmatpush2.msra.mxu0 0.0
    %4375 = vmatprep.mubr.f32.mxu0 0.0
    %v4376 = vand.u32 %v4210, 4294901760
    %4377 = vmatmul.mubr.f32.gmra.mxu0 %v4376
    %v4378 = vpop.f32.mrf.mxu0
    %v4379 = vadd.f32 %v4288, %v4378
    %v4380 = vpop.f32.mrf.mxu0
    %4381 = vdwg.mxu0
    %4382 = vmatprep.subr.mxu0 0.0
    %4383 = vmatpush1.msra.mxu0 0.0
    %4384 = vmatprep.subr.mxu0 0.0
    %4385 = vmatpush1.msra.mxu0 0.0
    %4386 = vmatprep.subr.mxu0 0.0
    %4387 = vmatpush1.msra.mxu0 0.0
    %4388 = vmatprep.subr.mxu0 0.0
    %4389 = vmatpush1.msra.mxu0 0.0
    %4390 = vmatprep.subr.mxu0 0.0
    %4391 = vmatpush1.msra.mxu0 0.0
    %4392 = vmatprep.subr.mxu0 0.0
    %4393 = vmatpush1.msra.mxu0 0.0
    %4394 = vmatprep.subr.mxu0 0.0
    %4395 = vmatpush1.msra.mxu0 0.0
    %4396 = vmatprep.subr.mxu0 0.0
    %4397 = vmatpush1.msra.mxu0 0.0
    %4398 = vmatprep.subr.mxu0 0.0
    %4399 = vmatpush1.msra.mxu0 0.0
    %4400 = vmatprep.subr.mxu0 0.0
    %4401 = vmatpush1.msra.mxu0 0.0
    %4402 = vmatprep.subr.mxu0 0.0
    %4403 = vmatpush1.msra.mxu0 0.0
    %4404 = vmatprep.subr.mxu0 0.0
    %4405 = vmatpush1.msra.mxu0 0.0
    %4406 = vmatprep.subr.mxu0 0.0
    %v4407 = vand.u32 %v4197, 4294901760
    %v4408 = vsub.f32 %v4197, %v4407
    %4409 = vmatpush1.msra.mxu0 %v4408
    %4410 = vmatprep.subr.mxu0 0.0
    %v4411 = vand.u32 %v4196, 4294901760
    %v4412 = vsub.f32 %v4196, %v4411
    %4413 = vmatpush1.msra.mxu0 %v4412
    %4414 = vmatprep.subr.mxu0 0.0
    %v4415 = vand.u32 %v4195, 4294901760
    %v4416 = vsub.f32 %v4195, %v4415
    %4417 = vmatpush1.msra.mxu0 %v4416
    %4418 = vmatprep.subr.mxu0 0.0
    %v4419 = vand.u32 %v4194, 4294901760
    %v4420 = vsub.f32 %v4194, %v4419
    %4421 = vmatpush1.msra.mxu0 %v4420
    %4422 = vmatprep.subr.mxu0 0.0
    %4423 = vmatpush2.msra.mxu0 0.0
    %4424 = vmatprep.subr.mxu0 0.0
    %4425 = vmatpush2.msra.mxu0 0.0
    %4426 = vmatprep.subr.mxu0 0.0
    %4427 = vmatpush2.msra.mxu0 0.0
    %4428 = vmatprep.subr.mxu0 0.0
    %4429 = vmatpush2.msra.mxu0 0.0
    %4430 = vmatprep.subr.mxu0 0.0
    %4431 = vmatpush2.msra.mxu0 0.0
    %4432 = vmatprep.subr.mxu0 0.0
    %4433 = vmatpush2.msra.mxu0 0.0
    %4434 = vmatprep.subr.mxu0 0.0
    %4435 = vmatpush2.msra.mxu0 0.0
    %4436 = vmatprep.subr.mxu0 0.0
    %4437 = vmatpush2.msra.mxu0 0.0
    %4438 = vmatprep.subr.mxu0 0.0
    %4439 = vmatpush2.msra.mxu0 0.0
    %4440 = vmatprep.subr.mxu0 0.0
    %4441 = vmatpush2.msra.mxu0 0.0
    %4442 = vmatprep.subr.mxu0 0.0
    %4443 = vmatpush2.msra.mxu0 0.0
    %4444 = vmatprep.subr.mxu0 0.0
    %4445 = vmatpush2.msra.mxu0 0.0
    %4446 = vmatprep.subr.mxu0 0.0
    %4447 = vmatpush2.msra.mxu0 0.0
    %4448 = vmatprep.subr.mxu0 0.0
    %4449 = vmatpush2.msra.mxu0 0.0
    %4450 = vmatprep.subr.mxu0 0.0
    %4451 = vmatpush2.msra.mxu0 0.0
    %4452 = vmatprep.subr.mxu0 0.0
    %4453 = vmatpush2.msra.mxu0 0.0
    %4454 = vmatprep.mubr.f32.mxu0 0.0
    %v4455 = vand.u32 %v4210, 4294901760
    %v4456 = vsub.f32 %v4210, %v4455
    %4457 = vmatmul.mubr.f32.gmra.mxu0 %v4456
    %v4458 = vpop.f32.mrf.mxu0
    %v4459 = vadd.f32 %v4379, %v4458
    %v4460 = vpop.f32.mrf.mxu0
    %4461 = vdwg.mxu0
    %4462 = vmatprep.subr.mxu0 0.0
    %4463 = vmatpush1.msra.mxu0 0.0
    %4464 = vmatprep.subr.mxu0 0.0
    %4465 = vmatpush1.msra.mxu0 0.0
    %4466 = vmatprep.subr.mxu0 0.0
    %4467 = vmatpush1.msra.mxu0 0.0
    %4468 = vmatprep.subr.mxu0 0.0
    %4469 = vmatpush1.msra.mxu0 0.0
    %4470 = vmatprep.subr.mxu0 0.0
    %4471 = vmatpush1.msra.mxu0 0.0
    %4472 = vmatprep.subr.mxu0 0.0
    %4473 = vmatpush1.msra.mxu0 0.0
    %4474 = vmatprep.subr.mxu0 0.0
    %4475 = vmatpush1.msra.mxu0 0.0
    %4476 = vmatprep.subr.mxu0 0.0
    %4477 = vmatpush1.msra.mxu0 0.0
    %4478 = vmatprep.subr.mxu0 0.0
    %4479 = vmatpush1.msra.mxu0 0.0
    %4480 = vmatprep.subr.mxu0 0.0
    %4481 = vmatpush1.msra.mxu0 0.0
    %4482 = vmatprep.subr.mxu0 0.0
    %4483 = vmatpush1.msra.mxu0 0.0
    %4484 = vmatprep.subr.mxu0 0.0
    %4485 = vmatpush1.msra.mxu0 0.0
    %4486 = vmatprep.subr.mxu0 0.0
    %v4487 = vand.u32 %v4197, 4294901760
    %4488 = vmatpush1.msra.mxu0 %v4487
    %4489 = vmatprep.subr.mxu0 0.0
    %v4490 = vand.u32 %v4196, 4294901760
    %4491 = vmatpush1.msra.mxu0 %v4490
    %4492 = vmatprep.subr.mxu0 0.0
    %v4493 = vand.u32 %v4195, 4294901760
    %4494 = vmatpush1.msra.mxu0 %v4493
    %4495 = vmatprep.subr.mxu0 0.0
    %v4496 = vand.u32 %v4194, 4294901760
    %4497 = vmatpush1.msra.mxu0 %v4496
    %4498 = vmatprep.subr.mxu0 0.0
    %4499 = vmatpush2.msra.mxu0 0.0
    %4500 = vmatprep.subr.mxu0 0.0
    %4501 = vmatpush2.msra.mxu0 0.0
    %4502 = vmatprep.subr.mxu0 0.0
    %4503 = vmatpush2.msra.mxu0 0.0
    %4504 = vmatprep.subr.mxu0 0.0
    %4505 = vmatpush2.msra.mxu0 0.0
    %4506 = vmatprep.subr.mxu0 0.0
    %4507 = vmatpush2.msra.mxu0 0.0
    %4508 = vmatprep.subr.mxu0 0.0
    %4509 = vmatpush2.msra.mxu0 0.0
    %4510 = vmatprep.subr.mxu0 0.0
    %4511 = vmatpush2.msra.mxu0 0.0
    %4512 = vmatprep.subr.mxu0 0.0
    %4513 = vmatpush2.msra.mxu0 0.0
    %4514 = vmatprep.subr.mxu0 0.0
    %4515 = vmatpush2.msra.mxu0 0.0
    %4516 = vmatprep.subr.mxu0 0.0
    %4517 = vmatpush2.msra.mxu0 0.0
    %4518 = vmatprep.subr.mxu0 0.0
    %4519 = vmatpush2.msra.mxu0 0.0
    %4520 = vmatprep.subr.mxu0 0.0
    %4521 = vmatpush2.msra.mxu0 0.0
    %4522 = vmatprep.subr.mxu0 0.0
    %4523 = vmatpush2.msra.mxu0 0.0
    %4524 = vmatprep.subr.mxu0 0.0
    %4525 = vmatpush2.msra.mxu0 0.0
    %4526 = vmatprep.subr.mxu0 0.0
    %4527 = vmatpush2.msra.mxu0 0.0
    %4528 = vmatprep.subr.mxu0 0.0
    %4529 = vmatpush2.msra.mxu0 0.0
    %4530 = vmatprep.mubr.f32.mxu0 0.0
    %v4531 = vand.u32 %v4210, 4294901760
    %v4532 = vsub.f32 %v4210, %v4531
    %v4533 = vand.u32 %v4532, 4294901760
    %4534 = vmatmul.mubr.f32.gmra.mxu0 %v4533
    %v4535 = vpop.f32.mrf.mxu0
    %v4536 = vadd.f32 %v4459, %v4535
    %v4537 = vpop.f32.mrf.mxu0
    %4538 = vdwg.mxu0
    %4539 = vmatprep.subr.mxu0 0.0
    %4540 = vmatpush1.msra.mxu0 0.0
    %4541 = vmatprep.subr.mxu0 0.0
    %4542 = vmatpush1.msra.mxu0 0.0
    %4543 = vmatprep.subr.mxu0 0.0
    %4544 = vmatpush1.msra.mxu0 0.0
    %4545 = vmatprep.subr.mxu0 0.0
    %4546 = vmatpush1.msra.mxu0 0.0
    %4547 = vmatprep.subr.mxu0 0.0
    %4548 = vmatpush1.msra.mxu0 0.0
    %4549 = vmatprep.subr.mxu0 0.0
    %4550 = vmatpush1.msra.mxu0 0.0
    %4551 = vmatprep.subr.mxu0 0.0
    %4552 = vmatpush1.msra.mxu0 0.0
    %4553 = vmatprep.subr.mxu0 0.0
    %4554 = vmatpush1.msra.mxu0 0.0
    %4555 = vmatprep.subr.mxu0 0.0
    %4556 = vmatpush1.msra.mxu0 0.0
    %4557 = vmatprep.subr.mxu0 0.0
    %4558 = vmatpush1.msra.mxu0 0.0
    %4559 = vmatprep.subr.mxu0 0.0
    %4560 = vmatpush1.msra.mxu0 0.0
    %4561 = vmatprep.subr.mxu0 0.0
    %4562 = vmatpush1.msra.mxu0 0.0
    %4563 = vmatprep.subr.mxu0 0.0
    %v4564 = vand.u32 %v4197, 4294901760
    %v4565 = vsub.f32 %v4197, %v4564
    %v4566 = vand.u32 %v4565, 4294901760
    %4567 = vmatpush1.msra.mxu0 %v4566
    %4568 = vmatprep.subr.mxu0 0.0
    %v4569 = vand.u32 %v4196, 4294901760
    %v4570 = vsub.f32 %v4196, %v4569
    %v4571 = vand.u32 %v4570, 4294901760
    %4572 = vmatpush1.msra.mxu0 %v4571
    %4573 = vmatprep.subr.mxu0 0.0
    %v4574 = vand.u32 %v4195, 4294901760
    %v4575 = vsub.f32 %v4195, %v4574
    %v4576 = vand.u32 %v4575, 4294901760
    %4577 = vmatpush1.msra.mxu0 %v4576
    %4578 = vmatprep.subr.mxu0 0.0
    %v4579 = vand.u32 %v4194, 4294901760
    %v4580 = vsub.f32 %v4194, %v4579
    %v4581 = vand.u32 %v4580, 4294901760
    %4582 = vmatpush1.msra.mxu0 %v4581
    %4583 = vmatprep.subr.mxu0 0.0
    %4584 = vmatpush2.msra.mxu0 0.0
    %4585 = vmatprep.subr.mxu0 0.0
    %4586 = vmatpush2.msra.mxu0 0.0
    %4587 = vmatprep.subr.mxu0 0.0
    %4588 = vmatpush2.msra.mxu0 0.0
    %4589 = vmatprep.subr.mxu0 0.0
    %4590 = vmatpush2.msra.mxu0 0.0
    %4591 = vmatprep.subr.mxu0 0.0
    %4592 = vmatpush2.msra.mxu0 0.0
    %4593 = vmatprep.subr.mxu0 0.0
    %4594 = vmatpush2.msra.mxu0 0.0
    %4595 = vmatprep.subr.mxu0 0.0
    %4596 = vmatpush2.msra.mxu0 0.0
    %4597 = vmatprep.subr.mxu0 0.0
    %4598 = vmatpush2.msra.mxu0 0.0
    %4599 = vmatprep.subr.mxu0 0.0
    %4600 = vmatpush2.msra.mxu0 0.0
    %4601 = vmatprep.subr.mxu0 0.0
    %4602 = vmatpush2.msra.mxu0 0.0
    %4603 = vmatprep.subr.mxu0 0.0
    %4604 = vmatpush2.msra.mxu0 0.0
    %4605 = vmatprep.subr.mxu0 0.0
    %4606 = vmatpush2.msra.mxu0 0.0
    %4607 = vmatprep.subr.mxu0 0.0
    %4608 = vmatpush2.msra.mxu0 0.0
    %4609 = vmatprep.subr.mxu0 0.0
    %4610 = vmatpush2.msra.mxu0 0.0
    %4611 = vmatprep.subr.mxu0 0.0
    %4612 = vmatpush2.msra.mxu0 0.0
    %4613 = vmatprep.subr.mxu0 0.0
    %4614 = vmatpush2.msra.mxu0 0.0
    %4615 = vmatprep.mubr.f32.mxu0 0.0
    %v4616 = vand.u32 %v4210, 4294901760
    %4617 = vmatmul.mubr.f32.gmra.mxu0 %v4616
    %v4618 = vpop.f32.mrf.mxu0
    %v4619 = vadd.f32 %v4536, %v4618
    %v4620 = vpop.f32.mrf.mxu0
    %4621 = vdwg.mxu0
    %4622 = vmatprep.subr.mxu0 0.0
    %4623 = vmatpush1.msra.mxu0 0.0
    %4624 = vmatprep.subr.mxu0 0.0
    %4625 = vmatpush1.msra.mxu0 0.0
    %4626 = vmatprep.subr.mxu0 0.0
    %4627 = vmatpush1.msra.mxu0 0.0
    %4628 = vmatprep.subr.mxu0 0.0
    %4629 = vmatpush1.msra.mxu0 0.0
    %4630 = vmatprep.subr.mxu0 0.0
    %4631 = vmatpush1.msra.mxu0 0.0
    %4632 = vmatprep.subr.mxu0 0.0
    %4633 = vmatpush1.msra.mxu0 0.0
    %4634 = vmatprep.subr.mxu0 0.0
    %4635 = vmatpush1.msra.mxu0 0.0
    %4636 = vmatprep.subr.mxu0 0.0
    %4637 = vmatpush1.msra.mxu0 0.0
    %4638 = vmatprep.subr.mxu0 0.0
    %4639 = vmatpush1.msra.mxu0 0.0
    %4640 = vmatprep.subr.mxu0 0.0
    %4641 = vmatpush1.msra.mxu0 0.0
    %4642 = vmatprep.subr.mxu0 0.0
    %4643 = vmatpush1.msra.mxu0 0.0
    %4644 = vmatprep.subr.mxu0 0.0
    %4645 = vmatpush1.msra.mxu0 0.0
    %4646 = vmatprep.subr.mxu0 0.0
    %v4647 = vand.u32 %v4197, 4294901760
    %4648 = vmatpush1.msra.mxu0 %v4647
    %4649 = vmatprep.subr.mxu0 0.0
    %v4650 = vand.u32 %v4196, 4294901760
    %4651 = vmatpush1.msra.mxu0 %v4650
    %4652 = vmatprep.subr.mxu0 0.0
    %v4653 = vand.u32 %v4195, 4294901760
    %4654 = vmatpush1.msra.mxu0 %v4653
    %4655 = vmatprep.subr.mxu0 0.0
    %v4656 = vand.u32 %v4194, 4294901760
    %4657 = vmatpush1.msra.mxu0 %v4656
    %4658 = vmatprep.subr.mxu0 0.0
    %4659 = vmatpush2.msra.mxu0 0.0
    %4660 = vmatprep.subr.mxu0 0.0
    %4661 = vmatpush2.msra.mxu0 0.0
    %4662 = vmatprep.subr.mxu0 0.0
    %4663 = vmatpush2.msra.mxu0 0.0
    %4664 = vmatprep.subr.mxu0 0.0
    %4665 = vmatpush2.msra.mxu0 0.0
    %4666 = vmatprep.subr.mxu0 0.0
    %4667 = vmatpush2.msra.mxu0 0.0
    %4668 = vmatprep.subr.mxu0 0.0
    %4669 = vmatpush2.msra.mxu0 0.0
    %4670 = vmatprep.subr.mxu0 0.0
    %4671 = vmatpush2.msra.mxu0 0.0
    %4672 = vmatprep.subr.mxu0 0.0
    %4673 = vmatpush2.msra.mxu0 0.0
    %4674 = vmatprep.subr.mxu0 0.0
    %4675 = vmatpush2.msra.mxu0 0.0
    %4676 = vmatprep.subr.mxu0 0.0
    %4677 = vmatpush2.msra.mxu0 0.0
    %4678 = vmatprep.subr.mxu0 0.0
    %4679 = vmatpush2.msra.mxu0 0.0
    %4680 = vmatprep.subr.mxu0 0.0
    %4681 = vmatpush2.msra.mxu0 0.0
    %4682 = vmatprep.subr.mxu0 0.0
    %4683 = vmatpush2.msra.mxu0 0.0
    %4684 = vmatprep.subr.mxu0 0.0
    %4685 = vmatpush2.msra.mxu0 0.0
    %4686 = vmatprep.subr.mxu0 0.0
    %4687 = vmatpush2.msra.mxu0 0.0
    %4688 = vmatprep.subr.mxu0 0.0
    %4689 = vmatpush2.msra.mxu0 0.0
    %4690 = vmatprep.mubr.f32.mxu0 0.0
    %v4691 = vand.u32 %v4210, 4294901760
    %4692 = vmatmul.mubr.f32.gmra.mxu0 %v4691
    %v4693 = vpop.f32.mrf.mxu0
    %v4694 = vadd.f32 %v4619, %v4693
    %v4695 = vpop.f32.mrf.mxu0
    %4696 = vdwg.mxu0
    %v4697 = vadd.f32 %v4207, %v4694
    %v4698 = vtanh.pop %v4697
    %v4699 = vxor.u32 %v4697, 2147483648
    %v4700 = vmul.f32 %v4699, 1.442695
    %v4701 = vpow.pop %v4700
    %v4702 = vadd.f32 %v4701, 1.0
    %v4703 = vrcp.pop %v4702
    %v4704 = vmul.f32 1.0, %v4703
    %v4705 = vsel %vm4202, %v4698, %v4704
    %v4706 = vmul.f32 %v4705, 0.0
    %4708 = vrot.lane.b32.xlu0 %v4705, 64
    %v4709 = vpop.permute.xlu0 %4708
    %v4711 = vmul.f32 %v4705, %v4709
    %4713 = vrot.lane.b32.xlu0 %v4711, 32
    %v4714 = vpop.permute.xlu0 %4713
    %v4716 = vadd.f32 %v4706, %v4714
    %v4717 = vtanh.pop %v4716
    %4719 = vrot.lane.b32.xlu0 %v4717, 64
    %v4720 = vpop.permute.xlu0 %4719
    %v4722 = vmul.f32 %v4705, %v4720
    %v4724 = vrot.slane %v4184, 1
    %v4726 = vsel %vm4206, %v4724, %v4191
    %4728 = vrot.lane.b32.xlu0 %v4722, 32
    %v4729 = vpop.permute.xlu0 %4728
    %v4730 = vsel %vm4208, %v4729, 0
    %4732 = vmatprep.subr.mxu0 0.0
    %4733 = vmatpush1.msra.mxu0 0.0
    %4734 = vmatprep.subr.mxu0 0.0
    %4735 = vmatpush1.msra.mxu0 0.0
    %4736 = vmatprep.subr.mxu0 0.0
    %4737 = vmatpush1.msra.mxu0 0.0
    %4738 = vmatprep.subr.mxu0 0.0
    %4739 = vmatpush1.msra.mxu0 0.0
    %4740 = vmatprep.subr.mxu0 0.0
    %4741 = vmatpush1.msra.mxu0 0.0
    %4742 = vmatprep.subr.mxu0 0.0
    %4743 = vmatpush1.msra.mxu0 0.0
    %4744 = vmatprep.subr.mxu0 0.0
    %4745 = vmatpush1.msra.mxu0 0.0
    %4746 = vmatprep.subr.mxu0 0.0
    %4747 = vmatpush1.msra.mxu0 0.0
    %4748 = vmatprep.subr.mxu0 0.0
    %4749 = vmatpush1.msra.mxu0 0.0
    %4750 = vmatprep.subr.mxu0 0.0
    %4751 = vmatpush1.msra.mxu0 0.0
    %4752 = vmatprep.subr.mxu0 0.0
    %4753 = vmatpush1.msra.mxu0 0.0
    %4754 = vmatprep.subr.mxu0 0.0
    %4755 = vmatpush1.msra.mxu0 0.0
    %4756 = vmatprep.subr.mxu0 0.0
    %v4757 = vand.u32 %v4197, 4294901760
    %4758 = vmatpush1.msra.mxu0 %v4757
    %4759 = vmatprep.subr.mxu0 0.0
    %v4760 = vand.u32 %v4196, 4294901760
    %4761 = vmatpush1.msra.mxu0 %v4760
    %4762 = vmatprep.subr.mxu0 0.0
    %v4763 = vand.u32 %v4195, 4294901760
    %4764 = vmatpush1.msra.mxu0 %v4763
    %4765 = vmatprep.subr.mxu0 0.0
    %v4766 = vand.u32 %v4194, 4294901760
    %4767 = vmatpush1.msra.mxu0 %v4766
    %4768 = vmatprep.subr.mxu0 0.0
    %4769 = vmatpush2.msra.mxu0 0.0
    %4770 = vmatprep.subr.mxu0 0.0
    %4771 = vmatpush2.msra.mxu0 0.0
    %4772 = vmatprep.subr.mxu0 0.0
    %4773 = vmatpush2.msra.mxu0 0.0
    %4774 = vmatprep.subr.mxu0 0.0
    %4775 = vmatpush2.msra.mxu0 0.0
    %4776 = vmatprep.subr.mxu0 0.0
    %4777 = vmatpush2.msra.mxu0 0.0
    %4778 = vmatprep.subr.mxu0 0.0
    %4779 = vmatpush2.msra.mxu0 0.0
    %4780 = vmatprep.subr.mxu0 0.0
    %4781 = vmatpush2.msra.mxu0 0.0
    %4782 = vmatprep.subr.mxu0 0.0
    %4783 = vmatpush2.msra.mxu0 0.0
    %4784 = vmatprep.subr.mxu0 0.0
    %4785 = vmatpush2.msra.mxu0 0.0
    %4786 = vmatprep.subr.mxu0 0.0
    %4787 = vmatpush2.msra.mxu0 0.0
    %4788 = vmatprep.subr.mxu0 0.0
    %4789 = vmatpush2.msra.mxu0 0.0
    %4790 = vmatprep.subr.mxu0 0.0
    %4791 = vmatpush2.msra.mxu0 0.0
    %4792 = vmatprep.subr.mxu0 0.0
    %4793 = vmatpush2.msra.mxu0 0.0
    %4794 = vmatprep.subr.mxu0 0.0
    %4795 = vmatpush2.msra.mxu0 0.0
    %4796 = vmatprep.subr.mxu0 0.0
    %4797 = vmatpush2.msra.mxu0 0.0
    %4798 = vmatprep.subr.mxu0 0.0
    %4799 = vmatpush2.msra.mxu0 0.0
    %4800 = vmatprep.mubr.f32.mxu0 0.0
    %v4801 = vand.u32 %v4730, 4294901760
    %v4802 = vsub.f32 %v4730, %v4801
    %v4803 = vand.u32 %v4802, 4294901760
    %v4804 = vsub.f32 %v4802, %v4803
    %v4805 = vand.u32 %v4804, 4294901760
    %4806 = vmatmul.mubr.f32.gmra.mxu0 %v4805
    %v4807 = vpop.f32.mrf.mxu0
    %v4808 = vadd.f32 0.0, %v4807
    %v4809 = vpop.f32.mrf.mxu0
    %4810 = vdwg.mxu0
    %4811 = vmatprep.subr.mxu0 0.0
    %4812 = vmatpush1.msra.mxu0 0.0
    %4813 = vmatprep.subr.mxu0 0.0
    %4814 = vmatpush1.msra.mxu0 0.0
    %4815 = vmatprep.subr.mxu0 0.0
    %4816 = vmatpush1.msra.mxu0 0.0
    %4817 = vmatprep.subr.mxu0 0.0
    %4818 = vmatpush1.msra.mxu0 0.0
    %4819 = vmatprep.subr.mxu0 0.0
    %4820 = vmatpush1.msra.mxu0 0.0
    %4821 = vmatprep.subr.mxu0 0.0
    %4822 = vmatpush1.msra.mxu0 0.0
    %4823 = vmatprep.subr.mxu0 0.0
    %4824 = vmatpush1.msra.mxu0 0.0
    %4825 = vmatprep.subr.mxu0 0.0
    %4826 = vmatpush1.msra.mxu0 0.0
    %4827 = vmatprep.subr.mxu0 0.0
    %4828 = vmatpush1.msra.mxu0 0.0
    %4829 = vmatprep.subr.mxu0 0.0
    %4830 = vmatpush1.msra.mxu0 0.0
    %4831 = vmatprep.subr.mxu0 0.0
    %4832 = vmatpush1.msra.mxu0 0.0
    %4833 = vmatprep.subr.mxu0 0.0
    %4834 = vmatpush1.msra.mxu0 0.0
    %4835 = vmatprep.subr.mxu0 0.0
    %v4836 = vand.u32 %v4197, 4294901760
    %v4837 = vsub.f32 %v4197, %v4836
    %v4838 = vand.u32 %v4837, 4294901760
    %v4839 = vsub.f32 %v4837, %v4838
    %v4840 = vand.u32 %v4839, 4294901760
    %4841 = vmatpush1.msra.mxu0 %v4840
    %4842 = vmatprep.subr.mxu0 0.0
    %v4843 = vand.u32 %v4196, 4294901760
    %v4844 = vsub.f32 %v4196, %v4843
    %v4845 = vand.u32 %v4844, 4294901760
    %v4846 = vsub.f32 %v4844, %v4845
    %v4847 = vand.u32 %v4846, 4294901760
    %4848 = vmatpush1.msra.mxu0 %v4847
    %4849 = vmatprep.subr.mxu0 0.0
    %v4850 = vand.u32 %v4195, 4294901760
    %v4851 = vsub.f32 %v4195, %v4850
    %v4852 = vand.u32 %v4851, 4294901760
    %v4853 = vsub.f32 %v4851, %v4852
    %v4854 = vand.u32 %v4853, 4294901760
    %4855 = vmatpush1.msra.mxu0 %v4854
    %4856 = vmatprep.subr.mxu0 0.0
    %v4857 = vand.u32 %v4194, 4294901760
    %v4858 = vsub.f32 %v4194, %v4857
    %v4859 = vand.u32 %v4858, 4294901760
    %v4860 = vsub.f32 %v4858, %v4859
    %v4861 = vand.u32 %v4860, 4294901760
    %4862 = vmatpush1.msra.mxu0 %v4861
    %4863 = vmatprep.subr.mxu0 0.0
    %4864 = vmatpush2.msra.mxu0 0.0
    %4865 = vmatprep.subr.mxu0 0.0
    %4866 = vmatpush2.msra.mxu0 0.0
    %4867 = vmatprep.subr.mxu0 0.0
    %4868 = vmatpush2.msra.mxu0 0.0
    %4869 = vmatprep.subr.mxu0 0.0
    %4870 = vmatpush2.msra.mxu0 0.0
    %4871 = vmatprep.subr.mxu0 0.0
    %4872 = vmatpush2.msra.mxu0 0.0
    %4873 = vmatprep.subr.mxu0 0.0
    %4874 = vmatpush2.msra.mxu0 0.0
    %4875 = vmatprep.subr.mxu0 0.0
    %4876 = vmatpush2.msra.mxu0 0.0
    %4877 = vmatprep.subr.mxu0 0.0
    %4878 = vmatpush2.msra.mxu0 0.0
    %4879 = vmatprep.subr.mxu0 0.0
    %4880 = vmatpush2.msra.mxu0 0.0
    %4881 = vmatprep.subr.mxu0 0.0
    %4882 = vmatpush2.msra.mxu0 0.0
    %4883 = vmatprep.subr.mxu0 0.0
    %4884 = vmatpush2.msra.mxu0 0.0
    %4885 = vmatprep.subr.mxu0 0.0
    %4886 = vmatpush2.msra.mxu0 0.0
    %4887 = vmatprep.subr.mxu0 0.0
    %4888 = vmatpush2.msra.mxu0 0.0
    %4889 = vmatprep.subr.mxu0 0.0
    %4890 = vmatpush2.msra.mxu0 0.0
    %4891 = vmatprep.subr.mxu0 0.0
    %4892 = vmatpush2.msra.mxu0 0.0
    %4893 = vmatprep.subr.mxu0 0.0
    %4894 = vmatpush2.msra.mxu0 0.0
    %4895 = vmatprep.mubr.f32.mxu0 0.0
    %v4896 = vand.u32 %v4730, 4294901760
    %4897 = vmatmul.mubr.f32.gmra.mxu0 %v4896
    %v4898 = vpop.f32.mrf.mxu0
    %v4899 = vadd.f32 %v4808, %v4898
    %v4900 = vpop.f32.mrf.mxu0
    %4901 = vdwg.mxu0
    %4902 = vmatprep.subr.mxu0 0.0
    %4903 = vmatpush1.msra.mxu0 0.0
    %4904 = vmatprep.subr.mxu0 0.0
    %4905 = vmatpush1.msra.mxu0 0.0
    %4906 = vmatprep.subr.mxu0 0.0
    %4907 = vmatpush1.msra.mxu0 0.0
    %4908 = vmatprep.subr.mxu0 0.0
    %4909 = vmatpush1.msra.mxu0 0.0
    %4910 = vmatprep.subr.mxu0 0.0
    %4911 = vmatpush1.msra.mxu0 0.0
    %4912 = vmatprep.subr.mxu0 0.0
    %4913 = vmatpush1.msra.mxu0 0.0
    %4914 = vmatprep.subr.mxu0 0.0
    %4915 = vmatpush1.msra.mxu0 0.0
    %4916 = vmatprep.subr.mxu0 0.0
    %4917 = vmatpush1.msra.mxu0 0.0
    %4918 = vmatprep.subr.mxu0 0.0
    %4919 = vmatpush1.msra.mxu0 0.0
    %4920 = vmatprep.subr.mxu0 0.0
    %4921 = vmatpush1.msra.mxu0 0.0
    %4922 = vmatprep.subr.mxu0 0.0
    %4923 = vmatpush1.msra.mxu0 0.0
    %4924 = vmatprep.subr.mxu0 0.0
    %4925 = vmatpush1.msra.mxu0 0.0
    %4926 = vmatprep.subr.mxu0 0.0
    %v4927 = vand.u32 %v4197, 4294901760
    %v4928 = vsub.f32 %v4197, %v4927
    %4929 = vmatpush1.msra.mxu0 %v4928
    %4930 = vmatprep.subr.mxu0 0.0
    %v4931 = vand.u32 %v4196, 4294901760
    %v4932 = vsub.f32 %v4196, %v4931
    %4933 = vmatpush1.msra.mxu0 %v4932
    %4934 = vmatprep.subr.mxu0 0.0
    %v4935 = vand.u32 %v4195, 4294901760
    %v4936 = vsub.f32 %v4195, %v4935
    %4937 = vmatpush1.msra.mxu0 %v4936
    %4938 = vmatprep.subr.mxu0 0.0
    %v4939 = vand.u32 %v4194, 4294901760
    %v4940 = vsub.f32 %v4194, %v4939
    %4941 = vmatpush1.msra.mxu0 %v4940
    %4942 = vmatprep.subr.mxu0 0.0
    %4943 = vmatpush2.msra.mxu0 0.0
    %4944 = vmatprep.subr.mxu0 0.0
    %4945 = vmatpush2.msra.mxu0 0.0
    %4946 = vmatprep.subr.mxu0 0.0
    %4947 = vmatpush2.msra.mxu0 0.0
    %4948 = vmatprep.subr.mxu0 0.0
    %4949 = vmatpush2.msra.mxu0 0.0
    %4950 = vmatprep.subr.mxu0 0.0
    %4951 = vmatpush2.msra.mxu0 0.0
    %4952 = vmatprep.subr.mxu0 0.0
    %4953 = vmatpush2.msra.mxu0 0.0
    %4954 = vmatprep.subr.mxu0 0.0
    %4955 = vmatpush2.msra.mxu0 0.0
    %4956 = vmatprep.subr.mxu0 0.0
    %4957 = vmatpush2.msra.mxu0 0.0
    %4958 = vmatprep.subr.mxu0 0.0
    %4959 = vmatpush2.msra.mxu0 0.0
    %4960 = vmatprep.subr.mxu0 0.0
    %4961 = vmatpush2.msra.mxu0 0.0
    %4962 = vmatprep.subr.mxu0 0.0
    %4963 = vmatpush2.msra.mxu0 0.0
    %4964 = vmatprep.subr.mxu0 0.0
    %4965 = vmatpush2.msra.mxu0 0.0
    %4966 = vmatprep.subr.mxu0 0.0
    %4967 = vmatpush2.msra.mxu0 0.0
    %4968 = vmatprep.subr.mxu0 0.0
    %4969 = vmatpush2.msra.mxu0 0.0
    %4970 = vmatprep.subr.mxu0 0.0
    %4971 = vmatpush2.msra.mxu0 0.0
    %4972 = vmatprep.subr.mxu0 0.0
    %4973 = vmatpush2.msra.mxu0 0.0
    %4974 = vmatprep.mubr.f32.mxu0 0.0
    %v4975 = vand.u32 %v4730, 4294901760
    %v4976 = vsub.f32 %v4730, %v4975
    %4977 = vmatmul.mubr.f32.gmra.mxu0 %v4976
    %v4978 = vpop.f32.mrf.mxu0
    %v4979 = vadd.f32 %v4899, %v4978
    %v4980 = vpop.f32.mrf.mxu0
    %4981 = vdwg.mxu0
    %4982 = vmatprep.subr.mxu0 0.0
    %4983 = vmatpush1.msra.mxu0 0.0
    %4984 = vmatprep.subr.mxu0 0.0
    %4985 = vmatpush1.msra.mxu0 0.0
    %4986 = vmatprep.subr.mxu0 0.0
    %4987 = vmatpush1.msra.mxu0 0.0
    %4988 = vmatprep.subr.mxu0 0.0
    %4989 = vmatpush1.msra.mxu0 0.0
    %4990 = vmatprep.subr.mxu0 0.0
    %4991 = vmatpush1.msra.mxu0 0.0
    %4992 = vmatprep.subr.mxu0 0.0
    %4993 = vmatpush1.msra.mxu0 0.0
    %4994 = vmatprep.subr.mxu0 0.0
    %4995 = vmatpush1.msra.mxu0 0.0
    %4996 = vmatprep.subr.mxu0 0.0
    %4997 = vmatpush1.msra.mxu0 0.0
    %4998 = vmatprep.subr.mxu0 0.0
    %4999 = vmatpush1.msra.mxu0 0.0
    %5000 = vmatprep.subr.mxu0 0.0
    %5001 = vmatpush1.msra.mxu0 0.0
    %5002 = vmatprep.subr.mxu0 0.0
    %5003 = vmatpush1.msra.mxu0 0.0
    %5004 = vmatprep.subr.mxu0 0.0
    %5005 = vmatpush1.msra.mxu0 0.0
    %5006 = vmatprep.subr.mxu0 0.0
    %v5007 = vand.u32 %v4197, 4294901760
    %5008 = vmatpush1.msra.mxu0 %v5007
    %5009 = vmatprep.subr.mxu0 0.0
    %v5010 = vand.u32 %v4196, 4294901760
    %5011 = vmatpush1.msra.mxu0 %v5010
    %5012 = vmatprep.subr.mxu0 0.0
    %v5013 = vand.u32 %v4195, 4294901760
    %5014 = vmatpush1.msra.mxu0 %v5013
    %5015 = vmatprep.subr.mxu0 0.0
    %v5016 = vand.u32 %v4194, 4294901760
    %5017 = vmatpush1.msra.mxu0 %v5016
    %5018 = vmatprep.subr.mxu0 0.0
    %5019 = vmatpush2.msra.mxu0 0.0
    %5020 = vmatprep.subr.mxu0 0.0
    %5021 = vmatpush2.msra.mxu0 0.0
    %5022 = vmatprep.subr.mxu0 0.0
    %5023 = vmatpush2.msra.mxu0 0.0
    %5024 = vmatprep.subr.mxu0 0.0
    %5025 = vmatpush2.msra.mxu0 0.0
    %5026 = vmatprep.subr.mxu0 0.0
    %5027 = vmatpush2.msra.mxu0 0.0
    %5028 = vmatprep.subr.mxu0 0.0
    %5029 = vmatpush2.msra.mxu0 0.0
    %5030 = vmatprep.subr.mxu0 0.0
    %5031 = vmatpush2.msra.mxu0 0.0
    %5032 = vmatprep.subr.mxu0 0.0
    %5033 = vmatpush2.msra.mxu0 0.0
    %5034 = vmatprep.subr.mxu0 0.0
    %5035 = vmatpush2.msra.mxu0 0.0
    %5036 = vmatprep.subr.mxu0 0.0
    %5037 = vmatpush2.msra.mxu0 0.0
    %5038 = vmatprep.subr.mxu0 0.0
    %5039 = vmatpush2.msra.mxu0 0.0
    %5040 = vmatprep.subr.mxu0 0.0
    %5041 = vmatpush2.msra.mxu0 0.0
    %5042 = vmatprep.subr.mxu0 0.0
    %5043 = vmatpush2.msra.mxu0 0.0
    %5044 = vmatprep.subr.mxu0 0.0
    %5045 = vmatpush2.msra.mxu0 0.0
    %5046 = vmatprep.subr.mxu0 0.0
    %5047 = vmatpush2.msra.mxu0 0.0
    %5048 = vmatprep.subr.mxu0 0.0
    %5049 = vmatpush2.msra.mxu0 0.0
    %5050 = vmatprep.mubr.f32.mxu0 0.0
    %v5051 = vand.u32 %v4730, 4294901760
    %v5052 = vsub.f32 %v4730, %v5051
    %v5053 = vand.u32 %v5052, 4294901760
    %5054 = vmatmul.mubr.f32.gmra.mxu0 %v5053
    %v5055 = vpop.f32.mrf.mxu0
    %v5056 = vadd.f32 %v4979, %v5055
    %v5057 = vpop.f32.mrf.mxu0
    %5058 = vdwg.mxu0
    %5059 = vmatprep.subr.mxu0 0.0
    %5060 = vmatpush1.msra.mxu0 0.0
    %5061 = vmatprep.subr.mxu0 0.0
    %5062 = vmatpush1.msra.mxu0 0.0
    %5063 = vmatprep.subr.mxu0 0.0
    %5064 = vmatpush1.msra.mxu0 0.0
    %5065 = vmatprep.subr.mxu0 0.0
    %5066 = vmatpush1.msra.mxu0 0.0
    %5067 = vmatprep.subr.mxu0 0.0
    %5068 = vmatpush1.msra.mxu0 0.0
    %5069 = vmatprep.subr.mxu0 0.0
    %5070 = vmatpush1.msra.mxu0 0.0
    %5071 = vmatprep.subr.mxu0 0.0
    %5072 = vmatpush1.msra.mxu0 0.0
    %5073 = vmatprep.subr.mxu0 0.0
    %5074 = vmatpush1.msra.mxu0 0.0
    %5075 = vmatprep.subr.mxu0 0.0
    %5076 = vmatpush1.msra.mxu0 0.0
    %5077 = vmatprep.subr.mxu0 0.0
    %5078 = vmatpush1.msra.mxu0 0.0
    %5079 = vmatprep.subr.mxu0 0.0
    %5080 = vmatpush1.msra.mxu0 0.0
    %5081 = vmatprep.subr.mxu0 0.0
    %5082 = vmatpush1.msra.mxu0 0.0
    %5083 = vmatprep.subr.mxu0 0.0
    %v5084 = vand.u32 %v4197, 4294901760
    %v5085 = vsub.f32 %v4197, %v5084
    %v5086 = vand.u32 %v5085, 4294901760
    %5087 = vmatpush1.msra.mxu0 %v5086
    %5088 = vmatprep.subr.mxu0 0.0
    %v5089 = vand.u32 %v4196, 4294901760
    %v5090 = vsub.f32 %v4196, %v5089
    %v5091 = vand.u32 %v5090, 4294901760
    %5092 = vmatpush1.msra.mxu0 %v5091
    %5093 = vmatprep.subr.mxu0 0.0
    %v5094 = vand.u32 %v4195, 4294901760
    %v5095 = vsub.f32 %v4195, %v5094
    %v5096 = vand.u32 %v5095, 4294901760
    %5097 = vmatpush1.msra.mxu0 %v5096
    %5098 = vmatprep.subr.mxu0 0.0
    %v5099 = vand.u32 %v4194, 4294901760
    %v5100 = vsub.f32 %v4194, %v5099
    %v5101 = vand.u32 %v5100, 4294901760
    %5102 = vmatpush1.msra.mxu0 %v5101
    %5103 = vmatprep.subr.mxu0 0.0
    %5104 = vmatpush2.msra.mxu0 0.0
    %5105 = vmatprep.subr.mxu0 0.0
    %5106 = vmatpush2.msra.mxu0 0.0
    %5107 = vmatprep.subr.mxu0 0.0
    %5108 = vmatpush2.msra.mxu0 0.0
    %5109 = vmatprep.subr.mxu0 0.0
    %5110 = vmatpush2.msra.mxu0 0.0
    %5111 = vmatprep.subr.mxu0 0.0
    %5112 = vmatpush2.msra.mxu0 0.0
    %5113 = vmatprep.subr.mxu0 0.0
    %5114 = vmatpush2.msra.mxu0 0.0
    %5115 = vmatprep.subr.mxu0 0.0
    %5116 = vmatpush2.msra.mxu0 0.0
    %5117 = vmatprep.subr.mxu0 0.0
    %5118 = vmatpush2.msra.mxu0 0.0
    %5119 = vmatprep.subr.mxu0 0.0
    %5120 = vmatpush2.msra.mxu0 0.0
    %5121 = vmatprep.subr.mxu0 0.0
    %5122 = vmatpush2.msra.mxu0 0.0
    %5123 = vmatprep.subr.mxu0 0.0
    %5124 = vmatpush2.msra.mxu0 0.0
    %5125 = vmatprep.subr.mxu0 0.0
    %5126 = vmatpush2.msra.mxu0 0.0
    %5127 = vmatprep.subr.mxu0 0.0
    %5128 = vmatpush2.msra.mxu0 0.0
    %5129 = vmatprep.subr.mxu0 0.0
    %5130 = vmatpush2.msra.mxu0 0.0
    %5131 = vmatprep.subr.mxu0 0.0
    %5132 = vmatpush2.msra.mxu0 0.0
    %5133 = vmatprep.subr.mxu0 0.0
    %5134 = vmatpush2.msra.mxu0 0.0
    %5135 = vmatprep.mubr.f32.mxu0 0.0
    %v5136 = vand.u32 %v4730, 4294901760
    %5137 = vmatmul.mubr.f32.gmra.mxu0 %v5136
    %v5138 = vpop.f32.mrf.mxu0
    %v5139 = vadd.f32 %v5056, %v5138
    %v5140 = vpop.f32.mrf.mxu0
    %5141 = vdwg.mxu0
    %5142 = vmatprep.subr.mxu0 0.0
    %5143 = vmatpush1.msra.mxu0 0.0
    %5144 = vmatprep.subr.mxu0 0.0
    %5145 = vmatpush1.msra.mxu0 0.0
    %5146 = vmatprep.subr.mxu0 0.0
    %5147 = vmatpush1.msra.mxu0 0.0
    %5148 = vmatprep.subr.mxu0 0.0
    %5149 = vmatpush1.msra.mxu0 0.0
    %5150 = vmatprep.subr.mxu0 0.0
    %5151 = vmatpush1.msra.mxu0 0.0
    %5152 = vmatprep.subr.mxu0 0.0
    %5153 = vmatpush1.msra.mxu0 0.0
    %5154 = vmatprep.subr.mxu0 0.0
    %5155 = vmatpush1.msra.mxu0 0.0
    %5156 = vmatprep.subr.mxu0 0.0
    %5157 = vmatpush1.msra.mxu0 0.0
    %5158 = vmatprep.subr.mxu0 0.0
    %5159 = vmatpush1.msra.mxu0 0.0
    %5160 = vmatprep.subr.mxu0 0.0
    %5161 = vmatpush1.msra.mxu0 0.0
    %5162 = vmatprep.subr.mxu0 0.0
    %5163 = vmatpush1.msra.mxu0 0.0
    %5164 = vmatprep.subr.mxu0 0.0
    %5165 = vmatpush1.msra.mxu0 0.0
    %5166 = vmatprep.subr.mxu0 0.0
    %v5167 = vand.u32 %v4197, 4294901760
    %5168 = vmatpush1.msra.mxu0 %v5167
    %5169 = vmatprep.subr.mxu0 0.0
    %v5170 = vand.u32 %v4196, 4294901760
    %5171 = vmatpush1.msra.mxu0 %v5170
    %5172 = vmatprep.subr.mxu0 0.0
    %v5173 = vand.u32 %v4195, 4294901760
    %5174 = vmatpush1.msra.mxu0 %v5173
    %5175 = vmatprep.subr.mxu0 0.0
    %v5176 = vand.u32 %v4194, 4294901760
    %5177 = vmatpush1.msra.mxu0 %v5176
    %5178 = vmatprep.subr.mxu0 0.0
    %5179 = vmatpush2.msra.mxu0 0.0
    %5180 = vmatprep.subr.mxu0 0.0
    %5181 = vmatpush2.msra.mxu0 0.0
    %5182 = vmatprep.subr.mxu0 0.0
    %5183 = vmatpush2.msra.mxu0 0.0
    %5184 = vmatprep.subr.mxu0 0.0
    %5185 = vmatpush2.msra.mxu0 0.0
    %5186 = vmatprep.subr.mxu0 0.0
    %5187 = vmatpush2.msra.mxu0 0.0
    %5188 = vmatprep.subr.mxu0 0.0
    %5189 = vmatpush2.msra.mxu0 0.0
    %5190 = vmatprep.subr.mxu0 0.0
    %5191 = vmatpush2.msra.mxu0 0.0
    %5192 = vmatprep.subr.mxu0 0.0
    %5193 = vmatpush2.msra.mxu0 0.0
    %5194 = vmatprep.subr.mxu0 0.0
    %5195 = vmatpush2.msra.mxu0 0.0
    %5196 = vmatprep.subr.mxu0 0.0
    %5197 = vmatpush2.msra.mxu0 0.0
    %5198 = vmatprep.subr.mxu0 0.0
    %5199 = vmatpush2.msra.mxu0 0.0
    %5200 = vmatprep.subr.mxu0 0.0
    %5201 = vmatpush2.msra.mxu0 0.0
    %5202 = vmatprep.subr.mxu0 0.0
    %5203 = vmatpush2.msra.mxu0 0.0
    %5204 = vmatprep.subr.mxu0 0.0
    %5205 = vmatpush2.msra.mxu0 0.0
    %5206 = vmatprep.subr.mxu0 0.0
    %5207 = vmatpush2.msra.mxu0 0.0
    %5208 = vmatprep.subr.mxu0 0.0
    %5209 = vmatpush2.msra.mxu0 0.0
    %5210 = vmatprep.mubr.f32.mxu0 0.0
    %v5211 = vand.u32 %v4730, 4294901760
    %5212 = vmatmul.mubr.f32.gmra.mxu0 %v5211
    %v5213 = vpop.f32.mrf.mxu0
    %v5214 = vadd.f32 %v5139, %v5213
    %v5215 = vpop.f32.mrf.mxu0
    %5216 = vdwg.mxu0
    %v5217 = vadd.f32 %v4726, %v5214
    %v5218 = vtanh.pop %v5217
    %v5219 = vxor.u32 %v5217, 2147483648
    %v5220 = vmul.f32 %v5219, 1.442695
    %v5221 = vpow.pop %v5220
    %v5222 = vadd.f32 %v5221, 1.0
    %v5223 = vrcp.pop %v5222
    %v5224 = vmul.f32 1.0, %v5223
    %v5225 = vsel %vm4202, %v5218, %v5224
    %v5226 = vmul.f32 %v5225, %v4716
    %5228 = vrot.lane.b32.xlu0 %v5225, 64
    %v5229 = vpop.permute.xlu0 %5228
    %v5231 = vmul.f32 %v5225, %v5229
    %5233 = vrot.lane.b32.xlu0 %v5231, 32
    %v5234 = vpop.permute.xlu0 %5233
    %v5236 = vadd.f32 %v5226, %v5234
    %v5237 = vtanh.pop %v5236
    %5239 = vrot.lane.b32.xlu0 %v5237, 64
    %v5240 = vpop.permute.xlu0 %5239
    %v5242 = vmul.f32 %v5225, %v5240
    %v5243 = vrot.slane %v4184, 2
    %v5245 = vrot.slane %v4191, 1
    %v5247 = vsel %vm4206, %v5243, %v5245
    %5249 = vrot.lane.b32.xlu0 %v5242, 32
    %v5250 = vpop.permute.xlu0 %5249
    %v5251 = vsel %vm4208, %v5250, 0
    %5253 = vmatprep.subr.mxu0 0.0
    %5254 = vmatpush1.msra.mxu0 0.0
    %5255 = vmatprep.subr.mxu0 0.0
    %5256 = vmatpush1.msra.mxu0 0.0
    %5257 = vmatprep.subr.mxu0 0.0
    %5258 = vmatpush1.msra.mxu0 0.0
    %5259 = vmatprep.subr.mxu0 0.0
    %5260 = vmatpush1.msra.mxu0 0.0
    %5261 = vmatprep.subr.mxu0 0.0
    %5262 = vmatpush1.msra.mxu0 0.0
    %5263 = vmatprep.subr.mxu0 0.0
    %5264 = vmatpush1.msra.mxu0 0.0
    %5265 = vmatprep.subr.mxu0 0.0
    %5266 = vmatpush1.msra.mxu0 0.0
    %5267 = vmatprep.subr.mxu0 0.0
    %5268 = vmatpush1.msra.mxu0 0.0
    %5269 = vmatprep.subr.mxu0 0.0
    %5270 = vmatpush1.msra.mxu0 0.0
    %5271 = vmatprep.subr.mxu0 0.0
    %5272 = vmatpush1.msra.mxu0 0.0
    %5273 = vmatprep.subr.mxu0 0.0
    %5274 = vmatpush1.msra.mxu0 0.0
    %5275 = vmatprep.subr.mxu0 0.0
    %5276 = vmatpush1.msra.mxu0 0.0
    %5277 = vmatprep.subr.mxu0 0.0
    %v5278 = vand.u32 %v4197, 4294901760
    %5279 = vmatpush1.msra.mxu0 %v5278
    %5280 = vmatprep.subr.mxu0 0.0
    %v5281 = vand.u32 %v4196, 4294901760
    %5282 = vmatpush1.msra.mxu0 %v5281
    %5283 = vmatprep.subr.mxu0 0.0
    %v5284 = vand.u32 %v4195, 4294901760
    %5285 = vmatpush1.msra.mxu0 %v5284
    %5286 = vmatprep.subr.mxu0 0.0
    %v5287 = vand.u32 %v4194, 4294901760
    %5288 = vmatpush1.msra.mxu0 %v5287
    %5289 = vmatprep.subr.mxu0 0.0
    %5290 = vmatpush2.msra.mxu0 0.0
    %5291 = vmatprep.subr.mxu0 0.0
    %5292 = vmatpush2.msra.mxu0 0.0
    %5293 = vmatprep.subr.mxu0 0.0
    %5294 = vmatpush2.msra.mxu0 0.0
    %5295 = vmatprep.subr.mxu0 0.0
    %5296 = vmatpush2.msra.mxu0 0.0
    %5297 = vmatprep.subr.mxu0 0.0
    %5298 = vmatpush2.msra.mxu0 0.0
    %5299 = vmatprep.subr.mxu0 0.0
    %5300 = vmatpush2.msra.mxu0 0.0
    %5301 = vmatprep.subr.mxu0 0.0
    %5302 = vmatpush2.msra.mxu0 0.0
    %5303 = vmatprep.subr.mxu0 0.0
    %5304 = vmatpush2.msra.mxu0 0.0
    %5305 = vmatprep.subr.mxu0 0.0
    %5306 = vmatpush2.msra.mxu0 0.0
    %5307 = vmatprep.subr.mxu0 0.0
    %5308 = vmatpush2.msra.mxu0 0.0
    %5309 = vmatprep.subr.mxu0 0.0
    %5310 = vmatpush2.msra.mxu0 0.0
    %5311 = vmatprep.subr.mxu0 0.0
    %5312 = vmatpush2.msra.mxu0 0.0
    %5313 = vmatprep.subr.mxu0 0.0
    %5314 = vmatpush2.msra.mxu0 0.0
    %5315 = vmatprep.subr.mxu0 0.0
    %5316 = vmatpush2.msra.mxu0 0.0
    %5317 = vmatprep.subr.mxu0 0.0
    %5318 = vmatpush2.msra.mxu0 0.0
    %5319 = vmatprep.subr.mxu0 0.0
    %5320 = vmatpush2.msra.mxu0 0.0
    %5321 = vmatprep.mubr.f32.mxu0 0.0
    %v5322 = vand.u32 %v5251, 4294901760
    %v5323 = vsub.f32 %v5251, %v5322
    %v5324 = vand.u32 %v5323, 4294901760
    %v5325 = vsub.f32 %v5323, %v5324
    %v5326 = vand.u32 %v5325, 4294901760
    %5327 = vmatmul.mubr.f32.gmra.mxu0 %v5326
    %v5328 = vpop.f32.mrf.mxu0
    %v5329 = vadd.f32 0.0, %v5328
    %v5330 = vpop.f32.mrf.mxu0
    %5331 = vdwg.mxu0
    %5332 = vmatprep.subr.mxu0 0.0
    %5333 = vmatpush1.msra.mxu0 0.0
    %5334 = vmatprep.subr.mxu0 0.0
    %5335 = vmatpush1.msra.mxu0 0.0
    %5336 = vmatprep.subr.mxu0 0.0
    %5337 = vmatpush1.msra.mxu0 0.0
    %5338 = vmatprep.subr.mxu0 0.0
    %5339 = vmatpush1.msra.mxu0 0.0
    %5340 = vmatprep.subr.mxu0 0.0
    %5341 = vmatpush1.msra.mxu0 0.0
    %5342 = vmatprep.subr.mxu0 0.0
    %5343 = vmatpush1.msra.mxu0 0.0
    %5344 = vmatprep.subr.mxu0 0.0
    %5345 = vmatpush1.msra.mxu0 0.0
    %5346 = vmatprep.subr.mxu0 0.0
    %5347 = vmatpush1.msra.mxu0 0.0
    %5348 = vmatprep.subr.mxu0 0.0
    %5349 = vmatpush1.msra.mxu0 0.0
    %5350 = vmatprep.subr.mxu0 0.0
    %5351 = vmatpush1.msra.mxu0 0.0
    %5352 = vmatprep.subr.mxu0 0.0
    %5353 = vmatpush1.msra.mxu0 0.0
    %5354 = vmatprep.subr.mxu0 0.0
    %5355 = vmatpush1.msra.mxu0 0.0
    %5356 = vmatprep.subr.mxu0 0.0
    %v5357 = vand.u32 %v4197, 4294901760
    %v5358 = vsub.f32 %v4197, %v5357
    %v5359 = vand.u32 %v5358, 4294901760
    %v5360 = vsub.f32 %v5358, %v5359
    %v5361 = vand.u32 %v5360, 4294901760
    %5362 = vmatpush1.msra.mxu0 %v5361
    %5363 = vmatprep.subr.mxu0 0.0
    %v5364 = vand.u32 %v4196, 4294901760
    %v5365 = vsub.f32 %v4196, %v5364
    %v5366 = vand.u32 %v5365, 4294901760
    %v5367 = vsub.f32 %v5365, %v5366
    %v5368 = vand.u32 %v5367, 4294901760
    %5369 = vmatpush1.msra.mxu0 %v5368
    %5370 = vmatprep.subr.mxu0 0.0
    %v5371 = vand.u32 %v4195, 4294901760
    %v5372 = vsub.f32 %v4195, %v5371
    %v5373 = vand.u32 %v5372, 4294901760
    %v5374 = vsub.f32 %v5372, %v5373
    %v5375 = vand.u32 %v5374, 4294901760
    %5376 = vmatpush1.msra.mxu0 %v5375
    %5377 = vmatprep.subr.mxu0 0.0
    %v5378 = vand.u32 %v4194, 4294901760
    %v5379 = vsub.f32 %v4194, %v5378
    %v5380 = vand.u32 %v5379, 4294901760
    %v5381 = vsub.f32 %v5379, %v5380
    %v5382 = vand.u32 %v5381, 4294901760
    %5383 = vmatpush1.msra.mxu0 %v5382
    %5384 = vmatprep.subr.mxu0 0.0
    %5385 = vmatpush2.msra.mxu0 0.0
    %5386 = vmatprep.subr.mxu0 0.0
    %5387 = vmatpush2.msra.mxu0 0.0
    %5388 = vmatprep.subr.mxu0 0.0
    %5389 = vmatpush2.msra.mxu0 0.0
    %5390 = vmatprep.subr.mxu0 0.0
    %5391 = vmatpush2.msra.mxu0 0.0
    %5392 = vmatprep.subr.mxu0 0.0
    %5393 = vmatpush2.msra.mxu0 0.0
    %5394 = vmatprep.subr.mxu0 0.0
    %5395 = vmatpush2.msra.mxu0 0.0
    %5396 = vmatprep.subr.mxu0 0.0
    %5397 = vmatpush2.msra.mxu0 0.0
    %5398 = vmatprep.subr.mxu0 0.0
    %5399 = vmatpush2.msra.mxu0 0.0
    %5400 = vmatprep.subr.mxu0 0.0
    %5401 = vmatpush2.msra.mxu0 0.0
    %5402 = vmatprep.subr.mxu0 0.0
    %5403 = vmatpush2.msra.mxu0 0.0
    %5404 = vmatprep.subr.mxu0 0.0
    %5405 = vmatpush2.msra.mxu0 0.0
    %5406 = vmatprep.subr.mxu0 0.0
    %5407 = vmatpush2.msra.mxu0 0.0
    %5408 = vmatprep.subr.mxu0 0.0
    %5409 = vmatpush2.msra.mxu0 0.0
    %5410 = vmatprep.subr.mxu0 0.0
    %5411 = vmatpush2.msra.mxu0 0.0
    %5412 = vmatprep.subr.mxu0 0.0
    %5413 = vmatpush2.msra.mxu0 0.0
    %5414 = vmatprep.subr.mxu0 0.0
    %5415 = vmatpush2.msra.mxu0 0.0
    %5416 = vmatprep.mubr.f32.mxu0 0.0
    %v5417 = vand.u32 %v5251, 4294901760
    %5418 = vmatmul.mubr.f32.gmra.mxu0 %v5417
    %v5419 = vpop.f32.mrf.mxu0
    %v5420 = vadd.f32 %v5329, %v5419
    %v5421 = vpop.f32.mrf.mxu0
    %5422 = vdwg.mxu0
    %5423 = vmatprep.subr.mxu0 0.0
    %5424 = vmatpush1.msra.mxu0 0.0
    %5425 = vmatprep.subr.mxu0 0.0
    %5426 = vmatpush1.msra.mxu0 0.0
    %5427 = vmatprep.subr.mxu0 0.0
    %5428 = vmatpush1.msra.mxu0 0.0
    %5429 = vmatprep.subr.mxu0 0.0
    %5430 = vmatpush1.msra.mxu0 0.0
    %5431 = vmatprep.subr.mxu0 0.0
    %5432 = vmatpush1.msra.mxu0 0.0
    %5433 = vmatprep.subr.mxu0 0.0
    %5434 = vmatpush1.msra.mxu0 0.0
    %5435 = vmatprep.subr.mxu0 0.0
    %5436 = vmatpush1.msra.mxu0 0.0
    %5437 = vmatprep.subr.mxu0 0.0
    %5438 = vmatpush1.msra.mxu0 0.0
    %5439 = vmatprep.subr.mxu0 0.0
    %5440 = vmatpush1.msra.mxu0 0.0
    %5441 = vmatprep.subr.mxu0 0.0
    %5442 = vmatpush1.msra.mxu0 0.0
    %5443 = vmatprep.subr.mxu0 0.0
    %5444 = vmatpush1.msra.mxu0 0.0
    %5445 = vmatprep.subr.mxu0 0.0
    %5446 = vmatpush1.msra.mxu0 0.0
    %5447 = vmatprep.subr.mxu0 0.0
    %v5448 = vand.u32 %v4197, 4294901760
    %v5449 = vsub.f32 %v4197, %v5448
    %5450 = vmatpush1.msra.mxu0 %v5449
    %5451 = vmatprep.subr.mxu0 0.0
    %v5452 = vand.u32 %v4196, 4294901760
    %v5453 = vsub.f32 %v4196, %v5452
    %5454 = vmatpush1.msra.mxu0 %v5453
    %5455 = vmatprep.subr.mxu0 0.0
    %v5456 = vand.u32 %v4195, 4294901760
    %v5457 = vsub.f32 %v4195, %v5456
    %5458 = vmatpush1.msra.mxu0 %v5457
    %5459 = vmatprep.subr.mxu0 0.0
    %v5460 = vand.u32 %v4194, 4294901760
    %v5461 = vsub.f32 %v4194, %v5460
    %5462 = vmatpush1.msra.mxu0 %v5461
    %5463 = vmatprep.subr.mxu0 0.0
    %5464 = vmatpush2.msra.mxu0 0.0
    %5465 = vmatprep.subr.mxu0 0.0
    %5466 = vmatpush2.msra.mxu0 0.0
    %5467 = vmatprep.subr.mxu0 0.0
    %5468 = vmatpush2.msra.mxu0 0.0
    %5469 = vmatprep.subr.mxu0 0.0
    %5470 = vmatpush2.msra.mxu0 0.0
    %5471 = vmatprep.subr.mxu0 0.0
    %5472 = vmatpush2.msra.mxu0 0.0
    %5473 = vmatprep.subr.mxu0 0.0
    %5474 = vmatpush2.msra.mxu0 0.0
    %5475 = vmatprep.subr.mxu0 0.0
    %5476 = vmatpush2.msra.mxu0 0.0
    %5477 = vmatprep.subr.mxu0 0.0
    %5478 = vmatpush2.msra.mxu0 0.0
    %5479 = vmatprep.subr.mxu0 0.0
    %5480 = vmatpush2.msra.mxu0 0.0
    %5481 = vmatprep.subr.mxu0 0.0
    %5482 = vmatpush2.msra.mxu0 0.0
    %5483 = vmatprep.subr.mxu0 0.0
    %5484 = vmatpush2.msra.mxu0 0.0
    %5485 = vmatprep.subr.mxu0 0.0
    %5486 = vmatpush2.msra.mxu0 0.0
    %5487 = vmatprep.subr.mxu0 0.0
    %5488 = vmatpush2.msra.mxu0 0.0
    %5489 = vmatprep.subr.mxu0 0.0
    %5490 = vmatpush2.msra.mxu0 0.0
    %5491 = vmatprep.subr.mxu0 0.0
    %5492 = vmatpush2.msra.mxu0 0.0
    %5493 = vmatprep.subr.mxu0 0.0
    %5494 = vmatpush2.msra.mxu0 0.0
    %5495 = vmatprep.mubr.f32.mxu0 0.0
    %v5496 = vand.u32 %v5251, 4294901760
    %v5497 = vsub.f32 %v5251, %v5496
    %5498 = vmatmul.mubr.f32.gmra.mxu0 %v5497
    %v5499 = vpop.f32.mrf.mxu0
    %v5500 = vadd.f32 %v5420, %v5499
    %v5501 = vpop.f32.mrf.mxu0
    %5502 = vdwg.mxu0
    %5503 = vmatprep.subr.mxu0 0.0
    %5504 = vmatpush1.msra.mxu0 0.0
    %5505 = vmatprep.subr.mxu0 0.0
    %5506 = vmatpush1.msra.mxu0 0.0
    %5507 = vmatprep.subr.mxu0 0.0
    %5508 = vmatpush1.msra.mxu0 0.0
    %5509 = vmatprep.subr.mxu0 0.0
    %5510 = vmatpush1.msra.mxu0 0.0
    %5511 = vmatprep.subr.mxu0 0.0
    %5512 = vmatpush1.msra.mxu0 0.0
    %5513 = vmatprep.subr.mxu0 0.0
    %5514 = vmatpush1.msra.mxu0 0.0
    %5515 = vmatprep.subr.mxu0 0.0
    %5516 = vmatpush1.msra.mxu0 0.0
    %5517 = vmatprep.subr.mxu0 0.0
    %5518 = vmatpush1.msra.mxu0 0.0
    %5519 = vmatprep.subr.mxu0 0.0
    %5520 = vmatpush1.msra.mxu0 0.0
    %5521 = vmatprep.subr.mxu0 0.0
    %5522 = vmatpush1.msra.mxu0 0.0
    %5523 = vmatprep.subr.mxu0 0.0
    %5524 = vmatpush1.msra.mxu0 0.0
    %5525 = vmatprep.subr.mxu0 0.0
    %5526 = vmatpush1.msra.mxu0 0.0
    %5527 = vmatprep.subr.mxu0 0.0
    %v5528 = vand.u32 %v4197, 4294901760
    %5529 = vmatpush1.msra.mxu0 %v5528
    %5530 = vmatprep.subr.mxu0 0.0
    %v5531 = vand.u32 %v4196, 4294901760
    %5532 = vmatpush1.msra.mxu0 %v5531
    %5533 = vmatprep.subr.mxu0 0.0
    %v5534 = vand.u32 %v4195, 4294901760
    %5535 = vmatpush1.msra.mxu0 %v5534
    %5536 = vmatprep.subr.mxu0 0.0
    %v5537 = vand.u32 %v4194, 4294901760
    %5538 = vmatpush1.msra.mxu0 %v5537
    %5539 = vmatprep.subr.mxu0 0.0
    %5540 = vmatpush2.msra.mxu0 0.0
    %5541 = vmatprep.subr.mxu0 0.0
    %5542 = vmatpush2.msra.mxu0 0.0
    %5543 = vmatprep.subr.mxu0 0.0
    %5544 = vmatpush2.msra.mxu0 0.0
    %5545 = vmatprep.subr.mxu0 0.0
    %5546 = vmatpush2.msra.mxu0 0.0
    %5547 = vmatprep.subr.mxu0 0.0
    %5548 = vmatpush2.msra.mxu0 0.0
    %5549 = vmatprep.subr.mxu0 0.0
    %5550 = vmatpush2.msra.mxu0 0.0
    %5551 = vmatprep.subr.mxu0 0.0
    %5552 = vmatpush2.msra.mxu0 0.0
    %5553 = vmatprep.subr.mxu0 0.0
    %5554 = vmatpush2.msra.mxu0 0.0
    %5555 = vmatprep.subr.mxu0 0.0
    %5556 = vmatpush2.msra.mxu0 0.0
    %5557 = vmatprep.subr.mxu0 0.0
    %5558 = vmatpush2.msra.mxu0 0.0
    %5559 = vmatprep.subr.mxu0 0.0
    %5560 = vmatpush2.msra.mxu0 0.0
    %5561 = vmatprep.subr.mxu0 0.0
    %5562 = vmatpush2.msra.mxu0 0.0
    %5563 = vmatprep.subr.mxu0 0.0
    %5564 = vmatpush2.msra.mxu0 0.0
    %5565 = vmatprep.subr.mxu0 0.0
    %5566 = vmatpush2.msra.mxu0 0.0
    %5567 = vmatprep.subr.mxu0 0.0
    %5568 = vmatpush2.msra.mxu0 0.0
    %5569 = vmatprep.subr.mxu0 0.0
    %5570 = vmatpush2.msra.mxu0 0.0
    %5571 = vmatprep.mubr.f32.mxu0 0.0
    %v5572 = vand.u32 %v5251, 4294901760
    %v5573 = vsub.f32 %v5251, %v5572
    %v5574 = vand.u32 %v5573, 4294901760
    %5575 = vmatmul.mubr.f32.gmra.mxu0 %v5574
    %v5576 = vpop.f32.mrf.mxu0
    %v5577 = vadd.f32 %v5500, %v5576
    %v5578 = vpop.f32.mrf.mxu0
    %5579 = vdwg.mxu0
    %5580 = vmatprep.subr.mxu0 0.0
    %5581 = vmatpush1.msra.mxu0 0.0
    %5582 = vmatprep.subr.mxu0 0.0
    %5583 = vmatpush1.msra.mxu0 0.0
    %5584 = vmatprep.subr.mxu0 0.0
    %5585 = vmatpush1.msra.mxu0 0.0
    %5586 = vmatprep.subr.mxu0 0.0
    %5587 = vmatpush1.msra.mxu0 0.0
    %5588 = vmatprep.subr.mxu0 0.0
    %5589 = vmatpush1.msra.mxu0 0.0
    %5590 = vmatprep.subr.mxu0 0.0
    %5591 = vmatpush1.msra.mxu0 0.0
    %5592 = vmatprep.subr.mxu0 0.0
    %5593 = vmatpush1.msra.mxu0 0.0
    %5594 = vmatprep.subr.mxu0 0.0
    %5595 = vmatpush1.msra.mxu0 0.0
    %5596 = vmatprep.subr.mxu0 0.0
    %5597 = vmatpush1.msra.mxu0 0.0
    %5598 = vmatprep.subr.mxu0 0.0
    %5599 = vmatpush1.msra.mxu0 0.0
    %5600 = vmatprep.subr.mxu0 0.0
    %5601 = vmatpush1.msra.mxu0 0.0
    %5602 = vmatprep.subr.mxu0 0.0
    %5603 = vmatpush1.msra.mxu0 0.0
    %5604 = vmatprep.subr.mxu0 0.0
    %v5605 = vand.u32 %v4197, 4294901760
    %v5606 = vsub.f32 %v4197, %v5605
    %v5607 = vand.u32 %v5606, 4294901760
    %5608 = vmatpush1.msra.mxu0 %v5607
    %5609 = vmatprep.subr.mxu0 0.0
    %v5610 = vand.u32 %v4196, 4294901760
    %v5611 = vsub.f32 %v4196, %v5610
    %v5612 = vand.u32 %v5611, 4294901760
    %5613 = vmatpush1.msra.mxu0 %v5612
    %5614 = vmatprep.subr.mxu0 0.0
    %v5615 = vand.u32 %v4195, 4294901760
    %v5616 = vsub.f32 %v4195, %v5615
    %v5617 = vand.u32 %v5616, 4294901760
    %5618 = vmatpush1.msra.mxu0 %v5617
    %5619 = vmatprep.subr.mxu0 0.0
    %v5620 = vand.u32 %v4194, 4294901760
    %v5621 = vsub.f32 %v4194, %v5620
    %v5622 = vand.u32 %v5621, 4294901760
    %5623 = vmatpush1.msra.mxu0 %v5622
    %5624 = vmatprep.subr.mxu0 0.0
    %5625 = vmatpush2.msra.mxu0 0.0
    %5626 = vmatprep.subr.mxu0 0.0
    %5627 = vmatpush2.msra.mxu0 0.0
    %5628 = vmatprep.subr.mxu0 0.0
    %5629 = vmatpush2.msra.mxu0 0.0
    %5630 = vmatprep.subr.mxu0 0.0
    %5631 = vmatpush2.msra.mxu0 0.0
    %5632 = vmatprep.subr.mxu0 0.0
    %5633 = vmatpush2.msra.mxu0 0.0
    %5634 = vmatprep.subr.mxu0 0.0
    %5635 = vmatpush2.msra.mxu0 0.0
    %5636 = vmatprep.subr.mxu0 0.0
    %5637 = vmatpush2.msra.mxu0 0.0
    %5638 = vmatprep.subr.mxu0 0.0
    %5639 = vmatpush2.msra.mxu0 0.0
    %5640 = vmatprep.subr.mxu0 0.0
    %5641 = vmatpush2.msra.mxu0 0.0
    %5642 = vmatprep.subr.mxu0 0.0
    %5643 = vmatpush2.msra.mxu0 0.0
    %5644 = vmatprep.subr.mxu0 0.0
    %5645 = vmatpush2.msra.mxu0 0.0
    %5646 = vmatprep.subr.mxu0 0.0
    %5647 = vmatpush2.msra.mxu0 0.0
    %5648 = vmatprep.subr.mxu0 0.0
    %5649 = vmatpush2.msra.mxu0 0.0
    %5650 = vmatprep.subr.mxu0 0.0
    %5651 = vmatpush2.msra.mxu0 0.0
    %5652 = vmatprep.subr.mxu0 0.0
    %5653 = vmatpush2.msra.mxu0 0.0
    %5654 = vmatprep.subr.mxu0 0.0
    %5655 = vmatpush2.msra.mxu0 0.0
    %5656 = vmatprep.mubr.f32.mxu0 0.0
    %v5657 = vand.u32 %v5251, 4294901760
    %5658 = vmatmul.mubr.f32.gmra.mxu0 %v5657
    %v5659 = vpop.f32.mrf.mxu0
    %v5660 = vadd.f32 %v5577, %v5659
    %v5661 = vpop.f32.mrf.mxu0
    %5662 = vdwg.mxu0
    %5663 = vmatprep.subr.mxu0 0.0
    %5664 = vmatpush1.msra.mxu0 0.0
    %5665 = vmatprep.subr.mxu0 0.0
    %5666 = vmatpush1.msra.mxu0 0.0
    %5667 = vmatprep.subr.mxu0 0.0
    %5668 = vmatpush1.msra.mxu0 0.0
    %5669 = vmatprep.subr.mxu0 0.0
    %5670 = vmatpush1.msra.mxu0 0.0
    %5671 = vmatprep.subr.mxu0 0.0
    %5672 = vmatpush1.msra.mxu0 0.0
    %5673 = vmatprep.subr.mxu0 0.0
    %5674 = vmatpush1.msra.mxu0 0.0
    %5675 = vmatprep.subr.mxu0 0.0
    %5676 = vmatpush1.msra.mxu0 0.0
    %5677 = vmatprep.subr.mxu0 0.0
    %5678 = vmatpush1.msra.mxu0 0.0
    %5679 = vmatprep.subr.mxu0 0.0
    %5680 = vmatpush1.msra.mxu0 0.0
    %5681 = vmatprep.subr.mxu0 0.0
    %5682 = vmatpush1.msra.mxu0 0.0
    %5683 = vmatprep.subr.mxu0 0.0
    %5684 = vmatpush1.msra.mxu0 0.0
    %5685 = vmatprep.subr.mxu0 0.0
    %5686 = vmatpush1.msra.mxu0 0.0
    %5687 = vmatprep.subr.mxu0 0.0
    %v5688 = vand.u32 %v4197, 4294901760
    %5689 = vmatpush1.msra.mxu0 %v5688
    %5690 = vmatprep.subr.mxu0 0.0
    %v5691 = vand.u32 %v4196, 4294901760
    %5692 = vmatpush1.msra.mxu0 %v5691
    %5693 = vmatprep.subr.mxu0 0.0
    %v5694 = vand.u32 %v4195, 4294901760
    %5695 = vmatpush1.msra.mxu0 %v5694
    %5696 = vmatprep.subr.mxu0 0.0
    %v5697 = vand.u32 %v4194, 4294901760
    %5698 = vmatpush1.msra.mxu0 %v5697
    %5699 = vmatprep.subr.mxu0 0.0
    %5700 = vmatpush2.msra.mxu0 0.0
    %5701 = vmatprep.subr.mxu0 0.0
    %5702 = vmatpush2.msra.mxu0 0.0
    %5703 = vmatprep.subr.mxu0 0.0
    %5704 = vmatpush2.msra.mxu0 0.0
    %5705 = vmatprep.subr.mxu0 0.0
    %5706 = vmatpush2.msra.mxu0 0.0
    %5707 = vmatprep.subr.mxu0 0.0
    %5708 = vmatpush2.msra.mxu0 0.0
    %5709 = vmatprep.subr.mxu0 0.0
    %5710 = vmatpush2.msra.mxu0 0.0
    %5711 = vmatprep.subr.mxu0 0.0
    %5712 = vmatpush2.msra.mxu0 0.0
    %5713 = vmatprep.subr.mxu0 0.0
    %5714 = vmatpush2.msra.mxu0 0.0
    %5715 = vmatprep.subr.mxu0 0.0
    %5716 = vmatpush2.msra.mxu0 0.0
    %5717 = vmatprep.subr.mxu0 0.0
    %5718 = vmatpush2.msra.mxu0 0.0
    %5719 = vmatprep.subr.mxu0 0.0
    %5720 = vmatpush2.msra.mxu0 0.0
    %5721 = vmatprep.subr.mxu0 0.0
    %5722 = vmatpush2.msra.mxu0 0.0
    %5723 = vmatprep.subr.mxu0 0.0
    %5724 = vmatpush2.msra.mxu0 0.0
    %5725 = vmatprep.subr.mxu0 0.0
    %5726 = vmatpush2.msra.mxu0 0.0
    %5727 = vmatprep.subr.mxu0 0.0
    %5728 = vmatpush2.msra.mxu0 0.0
    %5729 = vmatprep.subr.mxu0 0.0
    %5730 = vmatpush2.msra.mxu0 0.0
    %5731 = vmatprep.mubr.f32.mxu0 0.0
    %v5732 = vand.u32 %v5251, 4294901760
    %5733 = vmatmul.mubr.f32.gmra.mxu0 %v5732
    %v5734 = vpop.f32.mrf.mxu0
    %v5735 = vadd.f32 %v5660, %v5734
    %v5736 = vpop.f32.mrf.mxu0
    %5737 = vdwg.mxu0
    %v5738 = vadd.f32 %v5247, %v5735
    %v5739 = vtanh.pop %v5738
    %v5740 = vxor.u32 %v5738, 2147483648
    %v5741 = vmul.f32 %v5740, 1.442695
    %v5742 = vpow.pop %v5741
    %v5743 = vadd.f32 %v5742, 1.0
    %v5744 = vrcp.pop %v5743
    %v5745 = vmul.f32 1.0, %v5744
    %v5746 = vsel %vm4202, %v5739, %v5745
    %v5747 = vmul.f32 %v5746, %v5236
    %5749 = vrot.lane.b32.xlu0 %v5746, 64
    %v5750 = vpop.permute.xlu0 %5749
    %v5752 = vmul.f32 %v5746, %v5750
    %5754 = vrot.lane.b32.xlu0 %v5752, 32
    %v5755 = vpop.permute.xlu0 %5754
    %v5757 = vadd.f32 %v5747, %v5755
    %v5758 = vtanh.pop %v5757
    %5760 = vrot.lane.b32.xlu0 %v5758, 64
    %v5761 = vpop.permute.xlu0 %5760
    %v5763 = vmul.f32 %v5746, %v5761
    %v5764 = vrot.slane %v4184, 3
    %v5766 = vrot.slane %v4191, 2
    %v5768 = vsel %vm4206, %v5764, %v5766
    %5770 = vrot.lane.b32.xlu0 %v5763, 32
    %v5771 = vpop.permute.xlu0 %5770
    %v5772 = vsel %vm4208, %v5771, 0
    %5774 = vmatprep.subr.mxu0 0.0
    %5775 = vmatpush1.msra.mxu0 0.0
    %5776 = vmatprep.subr.mxu0 0.0
    %5777 = vmatpush1.msra.mxu0 0.0
    %5778 = vmatprep.subr.mxu0 0.0
    %5779 = vmatpush1.msra.mxu0 0.0
    %5780 = vmatprep.subr.mxu0 0.0
    %5781 = vmatpush1.msra.mxu0 0.0
    %5782 = vmatprep.subr.mxu0 0.0
    %5783 = vmatpush1.msra.mxu0 0.0
    %5784 = vmatprep.subr.mxu0 0.0
    %5785 = vmatpush1.msra.mxu0 0.0
    %5786 = vmatprep.subr.mxu0 0.0
    %5787 = vmatpush1.msra.mxu0 0.0
    %5788 = vmatprep.subr.mxu0 0.0
    %5789 = vmatpush1.msra.mxu0 0.0
    %5790 = vmatprep.subr.mxu0 0.0
    %5791 = vmatpush1.msra.mxu0 0.0
    %5792 = vmatprep.subr.mxu0 0.0
    %5793 = vmatpush1.msra.mxu0 0.0
    %5794 = vmatprep.subr.mxu0 0.0
    %5795 = vmatpush1.msra.mxu0 0.0
    %5796 = vmatprep.subr.mxu0 0.0
    %5797 = vmatpush1.msra.mxu0 0.0
    %5798 = vmatprep.subr.mxu0 0.0
    %v5799 = vand.u32 %v4197, 4294901760
    %5800 = vmatpush1.msra.mxu0 %v5799
    %5801 = vmatprep.subr.mxu0 0.0
    %v5802 = vand.u32 %v4196, 4294901760
    %5803 = vmatpush1.msra.mxu0 %v5802
    %5804 = vmatprep.subr.mxu0 0.0
    %v5805 = vand.u32 %v4195, 4294901760
    %5806 = vmatpush1.msra.mxu0 %v5805
    %5807 = vmatprep.subr.mxu0 0.0
    %v5808 = vand.u32 %v4194, 4294901760
    %5809 = vmatpush1.msra.mxu0 %v5808
    %5810 = vmatprep.subr.mxu0 0.0
    %5811 = vmatpush2.msra.mxu0 0.0
    %5812 = vmatprep.subr.mxu0 0.0
    %5813 = vmatpush2.msra.mxu0 0.0
    %5814 = vmatprep.subr.mxu0 0.0
    %5815 = vmatpush2.msra.mxu0 0.0
    %5816 = vmatprep.subr.mxu0 0.0
    %5817 = vmatpush2.msra.mxu0 0.0
    %5818 = vmatprep.subr.mxu0 0.0
    %5819 = vmatpush2.msra.mxu0 0.0
    %5820 = vmatprep.subr.mxu0 0.0
    %5821 = vmatpush2.msra.mxu0 0.0
    %5822 = vmatprep.subr.mxu0 0.0
    %5823 = vmatpush2.msra.mxu0 0.0
    %5824 = vmatprep.subr.mxu0 0.0
    %5825 = vmatpush2.msra.mxu0 0.0
    %5826 = vmatprep.subr.mxu0 0.0
    %5827 = vmatpush2.msra.mxu0 0.0
    %5828 = vmatprep.subr.mxu0 0.0
    %5829 = vmatpush2.msra.mxu0 0.0
    %5830 = vmatprep.subr.mxu0 0.0
    %5831 = vmatpush2.msra.mxu0 0.0
    %5832 = vmatprep.subr.mxu0 0.0
    %5833 = vmatpush2.msra.mxu0 0.0
    %5834 = vmatprep.subr.mxu0 0.0
    %5835 = vmatpush2.msra.mxu0 0.0
    %5836 = vmatprep.subr.mxu0 0.0
    %5837 = vmatpush2.msra.mxu0 0.0
    %5838 = vmatprep.subr.mxu0 0.0
    %5839 = vmatpush2.msra.mxu0 0.0
    %5840 = vmatprep.subr.mxu0 0.0
    %5841 = vmatpush2.msra.mxu0 0.0
    %5842 = vmatprep.mubr.f32.mxu0 0.0
    %v5843 = vand.u32 %v5772, 4294901760
    %v5844 = vsub.f32 %v5772, %v5843
    %v5845 = vand.u32 %v5844, 4294901760
    %v5846 = vsub.f32 %v5844, %v5845
    %v5847 = vand.u32 %v5846, 4294901760
    %5848 = vmatmul.mubr.f32.gmra.mxu0 %v5847
    %v5849 = vpop.f32.mrf.mxu0
    %v5850 = vadd.f32 0.0, %v5849
    %v5851 = vpop.f32.mrf.mxu0
    %5852 = vdwg.mxu0
    %5853 = vmatprep.subr.mxu0 0.0
    %5854 = vmatpush1.msra.mxu0 0.0
    %5855 = vmatprep.subr.mxu0 0.0
    %5856 = vmatpush1.msra.mxu0 0.0
    %5857 = vmatprep.subr.mxu0 0.0
    %5858 = vmatpush1.msra.mxu0 0.0
    %5859 = vmatprep.subr.mxu0 0.0
    %5860 = vmatpush1.msra.mxu0 0.0
    %5861 = vmatprep.subr.mxu0 0.0
    %5862 = vmatpush1.msra.mxu0 0.0
    %5863 = vmatprep.subr.mxu0 0.0
    %5864 = vmatpush1.msra.mxu0 0.0
    %5865 = vmatprep.subr.mxu0 0.0
    %5866 = vmatpush1.msra.mxu0 0.0
    %5867 = vmatprep.subr.mxu0 0.0
    %5868 = vmatpush1.msra.mxu0 0.0
    %5869 = vmatprep.subr.mxu0 0.0
    %5870 = vmatpush1.msra.mxu0 0.0
    %5871 = vmatprep.subr.mxu0 0.0
    %5872 = vmatpush1.msra.mxu0 0.0
    %5873 = vmatprep.subr.mxu0 0.0
    %5874 = vmatpush1.msra.mxu0 0.0
    %5875 = vmatprep.subr.mxu0 0.0
    %5876 = vmatpush1.msra.mxu0 0.0
    %5877 = vmatprep.subr.mxu0 0.0
    %v5878 = vand.u32 %v4197, 4294901760
    %v5879 = vsub.f32 %v4197, %v5878
    %v5880 = vand.u32 %v5879, 4294901760
    %v5881 = vsub.f32 %v5879, %v5880
    %v5882 = vand.u32 %v5881, 4294901760
    %5883 = vmatpush1.msra.mxu0 %v5882
    %5884 = vmatprep.subr.mxu0 0.0
    %v5885 = vand.u32 %v4196, 4294901760
    %v5886 = vsub.f32 %v4196, %v5885
    %v5887 = vand.u32 %v5886, 4294901760
    %v5888 = vsub.f32 %v5886, %v5887
    %v5889 = vand.u32 %v5888, 4294901760
    %5890 = vmatpush1.msra.mxu0 %v5889
    %5891 = vmatprep.subr.mxu0 0.0
    %v5892 = vand.u32 %v4195, 4294901760
    %v5893 = vsub.f32 %v4195, %v5892
    %v5894 = vand.u32 %v5893, 4294901760
    %v5895 = vsub.f32 %v5893, %v5894
    %v5896 = vand.u32 %v5895, 4294901760
    %5897 = vmatpush1.msra.mxu0 %v5896
    %5898 = vmatprep.subr.mxu0 0.0
    %v5899 = vand.u32 %v4194, 4294901760
    %v5900 = vsub.f32 %v4194, %v5899
    %v5901 = vand.u32 %v5900, 4294901760
    %v5902 = vsub.f32 %v5900, %v5901
    %v5903 = vand.u32 %v5902, 4294901760
    %5904 = vmatpush1.msra.mxu0 %v5903
    %5905 = vmatprep.subr.mxu0 0.0
    %5906 = vmatpush2.msra.mxu0 0.0
    %5907 = vmatprep.subr.mxu0 0.0
    %5908 = vmatpush2.msra.mxu0 0.0
    %5909 = vmatprep.subr.mxu0 0.0
    %5910 = vmatpush2.msra.mxu0 0.0
    %5911 = vmatprep.subr.mxu0 0.0
    %5912 = vmatpush2.msra.mxu0 0.0
    %5913 = vmatprep.subr.mxu0 0.0
    %5914 = vmatpush2.msra.mxu0 0.0
    %5915 = vmatprep.subr.mxu0 0.0
    %5916 = vmatpush2.msra.mxu0 0.0
    %5917 = vmatprep.subr.mxu0 0.0
    %5918 = vmatpush2.msra.mxu0 0.0
    %5919 = vmatprep.subr.mxu0 0.0
    %5920 = vmatpush2.msra.mxu0 0.0
    %5921 = vmatprep.subr.mxu0 0.0
    %5922 = vmatpush2.msra.mxu0 0.0
    %5923 = vmatprep.subr.mxu0 0.0
    %5924 = vmatpush2.msra.mxu0 0.0
    %5925 = vmatprep.subr.mxu0 0.0
    %5926 = vmatpush2.msra.mxu0 0.0
    %5927 = vmatprep.subr.mxu0 0.0
    %5928 = vmatpush2.msra.mxu0 0.0
    %5929 = vmatprep.subr.mxu0 0.0
    %5930 = vmatpush2.msra.mxu0 0.0
    %5931 = vmatprep.subr.mxu0 0.0
    %5932 = vmatpush2.msra.mxu0 0.0
    %5933 = vmatprep.subr.mxu0 0.0
    %5934 = vmatpush2.msra.mxu0 0.0
    %5935 = vmatprep.subr.mxu0 0.0
    %5936 = vmatpush2.msra.mxu0 0.0
    %5937 = vmatprep.mubr.f32.mxu0 0.0
    %v5938 = vand.u32 %v5772, 4294901760
    %5939 = vmatmul.mubr.f32.gmra.mxu0 %v5938
    %v5940 = vpop.f32.mrf.mxu0
    %v5941 = vadd.f32 %v5850, %v5940
    %v5942 = vpop.f32.mrf.mxu0
    %5943 = vdwg.mxu0
    %5944 = vmatprep.subr.mxu0 0.0
    %5945 = vmatpush1.msra.mxu0 0.0
    %5946 = vmatprep.subr.mxu0 0.0
    %5947 = vmatpush1.msra.mxu0 0.0
    %5948 = vmatprep.subr.mxu0 0.0
    %5949 = vmatpush1.msra.mxu0 0.0
    %5950 = vmatprep.subr.mxu0 0.0
    %5951 = vmatpush1.msra.mxu0 0.0
    %5952 = vmatprep.subr.mxu0 0.0
    %5953 = vmatpush1.msra.mxu0 0.0
    %5954 = vmatprep.subr.mxu0 0.0
    %5955 = vmatpush1.msra.mxu0 0.0
    %5956 = vmatprep.subr.mxu0 0.0
    %5957 = vmatpush1.msra.mxu0 0.0
    %5958 = vmatprep.subr.mxu0 0.0
    %5959 = vmatpush1.msra.mxu0 0.0
    %5960 = vmatprep.subr.mxu0 0.0
    %5961 = vmatpush1.msra.mxu0 0.0
    %5962 = vmatprep.subr.mxu0 0.0
    %5963 = vmatpush1.msra.mxu0 0.0
    %5964 = vmatprep.subr.mxu0 0.0
    %5965 = vmatpush1.msra.mxu0 0.0
    %5966 = vmatprep.subr.mxu0 0.0
    %5967 = vmatpush1.msra.mxu0 0.0
    %5968 = vmatprep.subr.mxu0 0.0
    %v5969 = vand.u32 %v4197, 4294901760
    %v5970 = vsub.f32 %v4197, %v5969
    %5971 = vmatpush1.msra.mxu0 %v5970
    %5972 = vmatprep.subr.mxu0 0.0
    %v5973 = vand.u32 %v4196, 4294901760
    %v5974 = vsub.f32 %v4196, %v5973
    %5975 = vmatpush1.msra.mxu0 %v5974
    %5976 = vmatprep.subr.mxu0 0.0
    %v5977 = vand.u32 %v4195, 4294901760
    %v5978 = vsub.f32 %v4195, %v5977
    %5979 = vmatpush1.msra.mxu0 %v5978
    %5980 = vmatprep.subr.mxu0 0.0
    %v5981 = vand.u32 %v4194, 4294901760
    %v5982 = vsub.f32 %v4194, %v5981
    %5983 = vmatpush1.msra.mxu0 %v5982
    %5984 = vmatprep.subr.mxu0 0.0
    %5985 = vmatpush2.msra.mxu0 0.0
    %5986 = vmatprep.subr.mxu0 0.0
    %5987 = vmatpush2.msra.mxu0 0.0
    %5988 = vmatprep.subr.mxu0 0.0
    %5989 = vmatpush2.msra.mxu0 0.0
    %5990 = vmatprep.subr.mxu0 0.0
    %5991 = vmatpush2.msra.mxu0 0.0
    %5992 = vmatprep.subr.mxu0 0.0
    %5993 = vmatpush2.msra.mxu0 0.0
    %5994 = vmatprep.subr.mxu0 0.0
    %5995 = vmatpush2.msra.mxu0 0.0
    %5996 = vmatprep.subr.mxu0 0.0
    %5997 = vmatpush2.msra.mxu0 0.0
    %5998 = vmatprep.subr.mxu0 0.0
    %5999 = vmatpush2.msra.mxu0 0.0
    %6000 = vmatprep.subr.mxu0 0.0
    %6001 = vmatpush2.msra.mxu0 0.0
    %6002 = vmatprep.subr.mxu0 0.0
    %6003 = vmatpush2.msra.mxu0 0.0
    %6004 = vmatprep.subr.mxu0 0.0
    %6005 = vmatpush2.msra.mxu0 0.0
    %6006 = vmatprep.subr.mxu0 0.0
    %6007 = vmatpush2.msra.mxu0 0.0
    %6008 = vmatprep.subr.mxu0 0.0
    %6009 = vmatpush2.msra.mxu0 0.0
    %6010 = vmatprep.subr.mxu0 0.0
    %6011 = vmatpush2.msra.mxu0 0.0
    %6012 = vmatprep.subr.mxu0 0.0
    %6013 = vmatpush2.msra.mxu0 0.0
    %6014 = vmatprep.subr.mxu0 0.0
    %6015 = vmatpush2.msra.mxu0 0.0
    %6016 = vmatprep.mubr.f32.mxu0 0.0
    %v6017 = vand.u32 %v5772, 4294901760
    %v6018 = vsub.f32 %v5772, %v6017
    %6019 = vmatmul.mubr.f32.gmra.mxu0 %v6018
    %v6020 = vpop.f32.mrf.mxu0
    %v6021 = vadd.f32 %v5941, %v6020
    %v6022 = vpop.f32.mrf.mxu0
    %6023 = vdwg.mxu0
    %6024 = vmatprep.subr.mxu0 0.0
    %6025 = vmatpush1.msra.mxu0 0.0
    %6026 = vmatprep.subr.mxu0 0.0
    %6027 = vmatpush1.msra.mxu0 0.0
    %6028 = vmatprep.subr.mxu0 0.0
    %6029 = vmatpush1.msra.mxu0 0.0
    %6030 = vmatprep.subr.mxu0 0.0
    %6031 = vmatpush1.msra.mxu0 0.0
    %6032 = vmatprep.subr.mxu0 0.0
    %6033 = vmatpush1.msra.mxu0 0.0
    %6034 = vmatprep.subr.mxu0 0.0
    %6035 = vmatpush1.msra.mxu0 0.0
    %6036 = vmatprep.subr.mxu0 0.0
    %6037 = vmatpush1.msra.mxu0 0.0
    %6038 = vmatprep.subr.mxu0 0.0
    %6039 = vmatpush1.msra.mxu0 0.0
    %6040 = vmatprep.subr.mxu0 0.0
    %6041 = vmatpush1.msra.mxu0 0.0
    %6042 = vmatprep.subr.mxu0 0.0
    %6043 = vmatpush1.msra.mxu0 0.0
    %6044 = vmatprep.subr.mxu0 0.0
    %6045 = vmatpush1.msra.mxu0 0.0
    %6046 = vmatprep.subr.mxu0 0.0
    %6047 = vmatpush1.msra.mxu0 0.0
    %6048 = vmatprep.subr.mxu0 0.0
    %v6049 = vand.u32 %v4197, 4294901760
    %6050 = vmatpush1.msra.mxu0 %v6049
    %6051 = vmatprep.subr.mxu0 0.0
    %v6052 = vand.u32 %v4196, 4294901760
    %6053 = vmatpush1.msra.mxu0 %v6052
    %6054 = vmatprep.subr.mxu0 0.0
    %v6055 = vand.u32 %v4195, 4294901760
    %6056 = vmatpush1.msra.mxu0 %v6055
    %6057 = vmatprep.subr.mxu0 0.0
    %v6058 = vand.u32 %v4194, 4294901760
    %6059 = vmatpush1.msra.mxu0 %v6058
    %6060 = vmatprep.subr.mxu0 0.0
    %6061 = vmatpush2.msra.mxu0 0.0
    %6062 = vmatprep.subr.mxu0 0.0
    %6063 = vmatpush2.msra.mxu0 0.0
    %6064 = vmatprep.subr.mxu0 0.0
    %6065 = vmatpush2.msra.mxu0 0.0
    %6066 = vmatprep.subr.mxu0 0.0
    %6067 = vmatpush2.msra.mxu0 0.0
    %6068 = vmatprep.subr.mxu0 0.0
    %6069 = vmatpush2.msra.mxu0 0.0
    %6070 = vmatprep.subr.mxu0 0.0
    %6071 = vmatpush2.msra.mxu0 0.0
    %6072 = vmatprep.subr.mxu0 0.0
    %6073 = vmatpush2.msra.mxu0 0.0
    %6074 = vmatprep.subr.mxu0 0.0
    %6075 = vmatpush2.msra.mxu0 0.0
    %6076 = vmatprep.subr.mxu0 0.0
    %6077 = vmatpush2.msra.mxu0 0.0
    %6078 = vmatprep.subr.mxu0 0.0
    %6079 = vmatpush2.msra.mxu0 0.0
    %6080 = vmatprep.subr.mxu0 0.0
    %6081 = vmatpush2.msra.mxu0 0.0
    %6082 = vmatprep.subr.mxu0 0.0
    %6083 = vmatpush2.msra.mxu0 0.0
    %6084 = vmatprep.subr.mxu0 0.0
    %6085 = vmatpush2.msra.mxu0 0.0
    %6086 = vmatprep.subr.mxu0 0.0
    %6087 = vmatpush2.msra.mxu0 0.0
    %6088 = vmatprep.subr.mxu0 0.0
    %6089 = vmatpush2.msra.mxu0 0.0
    %6090 = vmatprep.subr.mxu0 0.0
    %6091 = vmatpush2.msra.mxu0 0.0
    %6092 = vmatprep.mubr.f32.mxu0 0.0
    %v6093 = vand.u32 %v5772, 4294901760
    %v6094 = vsub.f32 %v5772, %v6093
    %v6095 = vand.u32 %v6094, 4294901760
    %6096 = vmatmul.mubr.f32.gmra.mxu0 %v6095
    %v6097 = vpop.f32.mrf.mxu0
    %v6098 = vadd.f32 %v6021, %v6097
    %v6099 = vpop.f32.mrf.mxu0
    %6100 = vdwg.mxu0
    %6101 = vmatprep.subr.mxu0 0.0
    %6102 = vmatpush1.msra.mxu0 0.0
    %6103 = vmatprep.subr.mxu0 0.0
    %6104 = vmatpush1.msra.mxu0 0.0
    %6105 = vmatprep.subr.mxu0 0.0
    %6106 = vmatpush1.msra.mxu0 0.0
    %6107 = vmatprep.subr.mxu0 0.0
    %6108 = vmatpush1.msra.mxu0 0.0
    %6109 = vmatprep.subr.mxu0 0.0
    %6110 = vmatpush1.msra.mxu0 0.0
    %6111 = vmatprep.subr.mxu0 0.0
    %6112 = vmatpush1.msra.mxu0 0.0
    %6113 = vmatprep.subr.mxu0 0.0
    %6114 = vmatpush1.msra.mxu0 0.0
    %6115 = vmatprep.subr.mxu0 0.0
    %6116 = vmatpush1.msra.mxu0 0.0
    %6117 = vmatprep.subr.mxu0 0.0
    %6118 = vmatpush1.msra.mxu0 0.0
    %6119 = vmatprep.subr.mxu0 0.0
    %6120 = vmatpush1.msra.mxu0 0.0
    %6121 = vmatprep.subr.mxu0 0.0
    %6122 = vmatpush1.msra.mxu0 0.0
    %6123 = vmatprep.subr.mxu0 0.0
    %6124 = vmatpush1.msra.mxu0 0.0
    %6125 = vmatprep.subr.mxu0 0.0
    %v6126 = vand.u32 %v4197, 4294901760
    %v6127 = vsub.f32 %v4197, %v6126
    %v6128 = vand.u32 %v6127, 4294901760
    %6129 = vmatpush1.msra.mxu0 %v6128
    %6130 = vmatprep.subr.mxu0 0.0
    %v6131 = vand.u32 %v4196, 4294901760
    %v6132 = vsub.f32 %v4196, %v6131
    %v6133 = vand.u32 %v6132, 4294901760
    %6134 = vmatpush1.msra.mxu0 %v6133
    %6135 = vmatprep.subr.mxu0 0.0
    %v6136 = vand.u32 %v4195, 4294901760
    %v6137 = vsub.f32 %v4195, %v6136
    %v6138 = vand.u32 %v6137, 4294901760
    %6139 = vmatpush1.msra.mxu0 %v6138
    %6140 = vmatprep.subr.mxu0 0.0
    %v6141 = vand.u32 %v4194, 4294901760
    %v6142 = vsub.f32 %v4194, %v6141
    %v6143 = vand.u32 %v6142, 4294901760
    %6144 = vmatpush1.msra.mxu0 %v6143
    %6145 = vmatprep.subr.mxu0 0.0
    %6146 = vmatpush2.msra.mxu0 0.0
    %6147 = vmatprep.subr.mxu0 0.0
    %6148 = vmatpush2.msra.mxu0 0.0
    %6149 = vmatprep.subr.mxu0 0.0
    %6150 = vmatpush2.msra.mxu0 0.0
    %6151 = vmatprep.subr.mxu0 0.0
    %6152 = vmatpush2.msra.mxu0 0.0
    %6153 = vmatprep.subr.mxu0 0.0
    %6154 = vmatpush2.msra.mxu0 0.0
    %6155 = vmatprep.subr.mxu0 0.0
    %6156 = vmatpush2.msra.mxu0 0.0
    %6157 = vmatprep.subr.mxu0 0.0
    %6158 = vmatpush2.msra.mxu0 0.0
    %6159 = vmatprep.subr.mxu0 0.0
    %6160 = vmatpush2.msra.mxu0 0.0
    %6161 = vmatprep.subr.mxu0 0.0
    %6162 = vmatpush2.msra.mxu0 0.0
    %6163 = vmatprep.subr.mxu0 0.0
    %6164 = vmatpush2.msra.mxu0 0.0
    %6165 = vmatprep.subr.mxu0 0.0
    %6166 = vmatpush2.msra.mxu0 0.0
    %6167 = vmatprep.subr.mxu0 0.0
    %6168 = vmatpush2.msra.mxu0 0.0
    %6169 = vmatprep.subr.mxu0 0.0
    %6170 = vmatpush2.msra.mxu0 0.0
    %6171 = vmatprep.subr.mxu0 0.0
    %6172 = vmatpush2.msra.mxu0 0.0
    %6173 = vmatprep.subr.mxu0 0.0
    %6174 = vmatpush2.msra.mxu0 0.0
    %6175 = vmatprep.subr.mxu0 0.0
    %6176 = vmatpush2.msra.mxu0 0.0
    %6177 = vmatprep.mubr.f32.mxu0 0.0
    %v6178 = vand.u32 %v5772, 4294901760
    %6179 = vmatmul.mubr.f32.gmra.mxu0 %v6178
    %v6180 = vpop.f32.mrf.mxu0
    %v6181 = vadd.f32 %v6098, %v6180
    %v6182 = vpop.f32.mrf.mxu0
    %6183 = vdwg.mxu0
    %6184 = vmatprep.subr.mxu0 0.0
    %6185 = vmatpush1.msra.mxu0 0.0
    %6186 = vmatprep.subr.mxu0 0.0
    %6187 = vmatpush1.msra.mxu0 0.0
    %6188 = vmatprep.subr.mxu0 0.0
    %6189 = vmatpush1.msra.mxu0 0.0
    %6190 = vmatprep.subr.mxu0 0.0
    %6191 = vmatpush1.msra.mxu0 0.0
    %6192 = vmatprep.subr.mxu0 0.0
    %6193 = vmatpush1.msra.mxu0 0.0
    %6194 = vmatprep.subr.mxu0 0.0
    %6195 = vmatpush1.msra.mxu0 0.0
    %6196 = vmatprep.subr.mxu0 0.0
    %6197 = vmatpush1.msra.mxu0 0.0
    %6198 = vmatprep.subr.mxu0 0.0
    %6199 = vmatpush1.msra.mxu0 0.0
    %6200 = vmatprep.subr.mxu0 0.0
    %6201 = vmatpush1.msra.mxu0 0.0
    %6202 = vmatprep.subr.mxu0 0.0
    %6203 = vmatpush1.msra.mxu0 0.0
    %6204 = vmatprep.subr.mxu0 0.0
    %6205 = vmatpush1.msra.mxu0 0.0
    %6206 = vmatprep.subr.mxu0 0.0
    %6207 = vmatpush1.msra.mxu0 0.0
    %6208 = vmatprep.subr.mxu0 0.0
    %v6209 = vand.u32 %v4197, 4294901760
    %6210 = vmatpush1.msra.mxu0 %v6209
    %6211 = vmatprep.subr.mxu0 0.0
    %v6212 = vand.u32 %v4196, 4294901760
    %6213 = vmatpush1.msra.mxu0 %v6212
    %6214 = vmatprep.subr.mxu0 0.0
    %v6215 = vand.u32 %v4195, 4294901760
    %6216 = vmatpush1.msra.mxu0 %v6215
    %6217 = vmatprep.subr.mxu0 0.0
    %v6218 = vand.u32 %v4194, 4294901760
    %6219 = vmatpush1.msra.mxu0 %v6218
    %6220 = vmatprep.subr.mxu0 0.0
    %6221 = vmatpush2.msra.mxu0 0.0
    %6222 = vmatprep.subr.mxu0 0.0
    %6223 = vmatpush2.msra.mxu0 0.0
    %6224 = vmatprep.subr.mxu0 0.0
    %6225 = vmatpush2.msra.mxu0 0.0
    %6226 = vmatprep.subr.mxu0 0.0
    %6227 = vmatpush2.msra.mxu0 0.0
    %6228 = vmatprep.subr.mxu0 0.0
    %6229 = vmatpush2.msra.mxu0 0.0
    %6230 = vmatprep.subr.mxu0 0.0
    %6231 = vmatpush2.msra.mxu0 0.0
    %6232 = vmatprep.subr.mxu0 0.0
    %6233 = vmatpush2.msra.mxu0 0.0
    %6234 = vmatprep.subr.mxu0 0.0
    %6235 = vmatpush2.msra.mxu0 0.0
    %6236 = vmatprep.subr.mxu0 0.0
    %6237 = vmatpush2.msra.mxu0 0.0
    %6238 = vmatprep.subr.mxu0 0.0
    %6239 = vmatpush2.msra.mxu0 0.0
    %6240 = vmatprep.subr.mxu0 0.0
    %6241 = vmatpush2.msra.mxu0 0.0
    %6242 = vmatprep.subr.mxu0 0.0
    %6243 = vmatpush2.msra.mxu0 0.0
    %6244 = vmatprep.subr.mxu0 0.0
    %6245 = vmatpush2.msra.mxu0 0.0
    %6246 = vmatprep.subr.mxu0 0.0
    %6247 = vmatpush2.msra.mxu0 0.0
    %6248 = vmatprep.subr.mxu0 0.0
    %6249 = vmatpush2.msra.mxu0 0.0
    %6250 = vmatprep.subr.mxu0 0.0
    %6251 = vmatpush2.msra.mxu0 0.0
    %6252 = vmatprep.mubr.f32.mxu0 0.0
    %v6253 = vand.u32 %v5772, 4294901760
    %6254 = vmatmul.mubr.f32.gmra.mxu0 %v6253
    %v6255 = vpop.f32.mrf.mxu0
    %v6256 = vadd.f32 %v6181, %v6255
    %v6257 = vpop.f32.mrf.mxu0
    %6258 = vdwg.mxu0
    %v6259 = vadd.f32 %v5768, %v6256
    %v6260 = vtanh.pop %v6259
    %v6261 = vxor.u32 %v6259, 2147483648
    %v6262 = vmul.f32 %v6261, 1.442695
    %v6263 = vpow.pop %v6262
    %v6264 = vadd.f32 %v6263, 1.0
    %v6265 = vrcp.pop %v6264
    %v6266 = vmul.f32 1.0, %v6265
    %v6267 = vsel %vm4202, %v6260, %v6266
    %v6268 = vmul.f32 %v6267, %v5757
    %6270 = vrot.lane.b32.xlu0 %v6267, 64
    %v6271 = vpop.permute.xlu0 %6270
    %v6273 = vmul.f32 %v6267, %v6271
    %6275 = vrot.lane.b32.xlu0 %v6273, 32
    %v6276 = vpop.permute.xlu0 %6275
    %v6278 = vadd.f32 %v6268, %v6276
    %v6279 = vtanh.pop %v6278
    %6281 = vrot.lane.b32.xlu0 %v6279, 64
    %v6282 = vpop.permute.xlu0 %6281
    %v6284 = vmul.f32 %v6267, %v6282
    %v6285 = vrot.slane %v4184, 4
    %v6287 = vrot.slane %v4191, 3
    %v6289 = vsel %vm4206, %v6285, %v6287
    %6291 = vrot.lane.b32.xlu0 %v6284, 32
    %v6292 = vpop.permute.xlu0 %6291
    %v6293 = vsel %vm4208, %v6292, 0
    %6295 = vmatprep.subr.mxu0 0.0
    %6296 = vmatpush1.msra.mxu0 0.0
    %6297 = vmatprep.subr.mxu0 0.0
    %6298 = vmatpush1.msra.mxu0 0.0
    %6299 = vmatprep.subr.mxu0 0.0
    %6300 = vmatpush1.msra.mxu0 0.0
    %6301 = vmatprep.subr.mxu0 0.0
    %6302 = vmatpush1.msra.mxu0 0.0
    %6303 = vmatprep.subr.mxu0 0.0
    %6304 = vmatpush1.msra.mxu0 0.0
    %6305 = vmatprep.subr.mxu0 0.0
    %6306 = vmatpush1.msra.mxu0 0.0
    %6307 = vmatprep.subr.mxu0 0.0
    %6308 = vmatpush1.msra.mxu0 0.0
    %6309 = vmatprep.subr.mxu0 0.0
    %6310 = vmatpush1.msra.mxu0 0.0
    %6311 = vmatprep.subr.mxu0 0.0
    %6312 = vmatpush1.msra.mxu0 0.0
    %6313 = vmatprep.subr.mxu0 0.0
    %6314 = vmatpush1.msra.mxu0 0.0
    %6315 = vmatprep.subr.mxu0 0.0
    %6316 = vmatpush1.msra.mxu0 0.0
    %6317 = vmatprep.subr.mxu0 0.0
    %6318 = vmatpush1.msra.mxu0 0.0
    %6319 = vmatprep.subr.mxu0 0.0
    %v6320 = vand.u32 %v4197, 4294901760
    %6321 = vmatpush1.msra.mxu0 %v6320
    %6322 = vmatprep.subr.mxu0 0.0
    %v6323 = vand.u32 %v4196, 4294901760
    %6324 = vmatpush1.msra.mxu0 %v6323
    %6325 = vmatprep.subr.mxu0 0.0
    %v6326 = vand.u32 %v4195, 4294901760
    %6327 = vmatpush1.msra.mxu0 %v6326
    %6328 = vmatprep.subr.mxu0 0.0
    %v6329 = vand.u32 %v4194, 4294901760
    %6330 = vmatpush1.msra.mxu0 %v6329
    %6331 = vmatprep.subr.mxu0 0.0
    %6332 = vmatpush2.msra.mxu0 0.0
    %6333 = vmatprep.subr.mxu0 0.0
    %6334 = vmatpush2.msra.mxu0 0.0
    %6335 = vmatprep.subr.mxu0 0.0
    %6336 = vmatpush2.msra.mxu0 0.0
    %6337 = vmatprep.subr.mxu0 0.0
    %6338 = vmatpush2.msra.mxu0 0.0
    %6339 = vmatprep.subr.mxu0 0.0
    %6340 = vmatpush2.msra.mxu0 0.0
    %6341 = vmatprep.subr.mxu0 0.0
    %6342 = vmatpush2.msra.mxu0 0.0
    %6343 = vmatprep.subr.mxu0 0.0
    %6344 = vmatpush2.msra.mxu0 0.0
    %6345 = vmatprep.subr.mxu0 0.0
    %6346 = vmatpush2.msra.mxu0 0.0
    %6347 = vmatprep.subr.mxu0 0.0
    %6348 = vmatpush2.msra.mxu0 0.0
    %6349 = vmatprep.subr.mxu0 0.0
    %6350 = vmatpush2.msra.mxu0 0.0
    %6351 = vmatprep.subr.mxu0 0.0
    %6352 = vmatpush2.msra.mxu0 0.0
    %6353 = vmatprep.subr.mxu0 0.0
    %6354 = vmatpush2.msra.mxu0 0.0
    %6355 = vmatprep.subr.mxu0 0.0
    %6356 = vmatpush2.msra.mxu0 0.0
    %6357 = vmatprep.subr.mxu0 0.0
    %6358 = vmatpush2.msra.mxu0 0.0
    %6359 = vmatprep.subr.mxu0 0.0
    %6360 = vmatpush2.msra.mxu0 0.0
    %6361 = vmatprep.subr.mxu0 0.0
    %6362 = vmatpush2.msra.mxu0 0.0
    %6363 = vmatprep.mubr.f32.mxu0 0.0
    %v6364 = vand.u32 %v6293, 4294901760
    %v6365 = vsub.f32 %v6293, %v6364
    %v6366 = vand.u32 %v6365, 4294901760
    %v6367 = vsub.f32 %v6365, %v6366
    %v6368 = vand.u32 %v6367, 4294901760
    %6369 = vmatmul.mubr.f32.gmra.mxu0 %v6368
    %v6370 = vpop.f32.mrf.mxu0
    %v6371 = vadd.f32 0.0, %v6370
    %v6372 = vpop.f32.mrf.mxu0
    %6373 = vdwg.mxu0
    %6374 = vmatprep.subr.mxu0 0.0
    %6375 = vmatpush1.msra.mxu0 0.0
    %6376 = vmatprep.subr.mxu0 0.0
    %6377 = vmatpush1.msra.mxu0 0.0
    %6378 = vmatprep.subr.mxu0 0.0
    %6379 = vmatpush1.msra.mxu0 0.0
    %6380 = vmatprep.subr.mxu0 0.0
    %6381 = vmatpush1.msra.mxu0 0.0
    %6382 = vmatprep.subr.mxu0 0.0
    %6383 = vmatpush1.msra.mxu0 0.0
    %6384 = vmatprep.subr.mxu0 0.0
    %6385 = vmatpush1.msra.mxu0 0.0
    %6386 = vmatprep.subr.mxu0 0.0
    %6387 = vmatpush1.msra.mxu0 0.0
    %6388 = vmatprep.subr.mxu0 0.0
    %6389 = vmatpush1.msra.mxu0 0.0
    %6390 = vmatprep.subr.mxu0 0.0
    %6391 = vmatpush1.msra.mxu0 0.0
    %6392 = vmatprep.subr.mxu0 0.0
    %6393 = vmatpush1.msra.mxu0 0.0
    %6394 = vmatprep.subr.mxu0 0.0
    %6395 = vmatpush1.msra.mxu0 0.0
    %6396 = vmatprep.subr.mxu0 0.0
    %6397 = vmatpush1.msra.mxu0 0.0
    %6398 = vmatprep.subr.mxu0 0.0
    %v6399 = vand.u32 %v4197, 4294901760
    %v6400 = vsub.f32 %v4197, %v6399
    %v6401 = vand.u32 %v6400, 4294901760
    %v6402 = vsub.f32 %v6400, %v6401
    %v6403 = vand.u32 %v6402, 4294901760
    %6404 = vmatpush1.msra.mxu0 %v6403
    %6405 = vmatprep.subr.mxu0 0.0
    %v6406 = vand.u32 %v4196, 4294901760
    %v6407 = vsub.f32 %v4196, %v6406
    %v6408 = vand.u32 %v6407, 4294901760
    %v6409 = vsub.f32 %v6407, %v6408
    %v6410 = vand.u32 %v6409, 4294901760
    %6411 = vmatpush1.msra.mxu0 %v6410
    %6412 = vmatprep.subr.mxu0 0.0
    %v6413 = vand.u32 %v4195, 4294901760
    %v6414 = vsub.f32 %v4195, %v6413
    %v6415 = vand.u32 %v6414, 4294901760
    %v6416 = vsub.f32 %v6414, %v6415
    %v6417 = vand.u32 %v6416, 4294901760
    %6418 = vmatpush1.msra.mxu0 %v6417
    %6419 = vmatprep.subr.mxu0 0.0
    %v6420 = vand.u32 %v4194, 4294901760
    %v6421 = vsub.f32 %v4194, %v6420
    %v6422 = vand.u32 %v6421, 4294901760
    %v6423 = vsub.f32 %v6421, %v6422
    %v6424 = vand.u32 %v6423, 4294901760
    %6425 = vmatpush1.msra.mxu0 %v6424
    %6426 = vmatprep.subr.mxu0 0.0
    %6427 = vmatpush2.msra.mxu0 0.0
    %6428 = vmatprep.subr.mxu0 0.0
    %6429 = vmatpush2.msra.mxu0 0.0
    %6430 = vmatprep.subr.mxu0 0.0
    %6431 = vmatpush2.msra.mxu0 0.0
    %6432 = vmatprep.subr.mxu0 0.0
    %6433 = vmatpush2.msra.mxu0 0.0
    %6434 = vmatprep.subr.mxu0 0.0
    %6435 = vmatpush2.msra.mxu0 0.0
    %6436 = vmatprep.subr.mxu0 0.0
    %6437 = vmatpush2.msra.mxu0 0.0
    %6438 = vmatprep.subr.mxu0 0.0
    %6439 = vmatpush2.msra.mxu0 0.0
    %6440 = vmatprep.subr.mxu0 0.0
    %6441 = vmatpush2.msra.mxu0 0.0
    %6442 = vmatprep.subr.mxu0 0.0
    %6443 = vmatpush2.msra.mxu0 0.0
    %6444 = vmatprep.subr.mxu0 0.0
    %6445 = vmatpush2.msra.mxu0 0.0
    %6446 = vmatprep.subr.mxu0 0.0
    %6447 = vmatpush2.msra.mxu0 0.0
    %6448 = vmatprep.subr.mxu0 0.0
    %6449 = vmatpush2.msra.mxu0 0.0
    %6450 = vmatprep.subr.mxu0 0.0
    %6451 = vmatpush2.msra.mxu0 0.0
    %6452 = vmatprep.subr.mxu0 0.0
    %6453 = vmatpush2.msra.mxu0 0.0
    %6454 = vmatprep.subr.mxu0 0.0
    %6455 = vmatpush2.msra.mxu0 0.0
    %6456 = vmatprep.subr.mxu0 0.0
    %6457 = vmatpush2.msra.mxu0 0.0
    %6458 = vmatprep.mubr.f32.mxu0 0.0
    %v6459 = vand.u32 %v6293, 4294901760
    %6460 = vmatmul.mubr.f32.gmra.mxu0 %v6459
    %v6461 = vpop.f32.mrf.mxu0
    %v6462 = vadd.f32 %v6371, %v6461
    %v6463 = vpop.f32.mrf.mxu0
    %6464 = vdwg.mxu0
    %6465 = vmatprep.subr.mxu0 0.0
    %6466 = vmatpush1.msra.mxu0 0.0
    %6467 = vmatprep.subr.mxu0 0.0
    %6468 = vmatpush1.msra.mxu0 0.0
    %6469 = vmatprep.subr.mxu0 0.0
    %6470 = vmatpush1.msra.mxu0 0.0
    %6471 = vmatprep.subr.mxu0 0.0
    %6472 = vmatpush1.msra.mxu0 0.0
    %6473 = vmatprep.subr.mxu0 0.0
    %6474 = vmatpush1.msra.mxu0 0.0
    %6475 = vmatprep.subr.mxu0 0.0
    %6476 = vmatpush1.msra.mxu0 0.0
    %6477 = vmatprep.subr.mxu0 0.0
    %6478 = vmatpush1.msra.mxu0 0.0
    %6479 = vmatprep.subr.mxu0 0.0
    %6480 = vmatpush1.msra.mxu0 0.0
    %6481 = vmatprep.subr.mxu0 0.0
    %6482 = vmatpush1.msra.mxu0 0.0
    %6483 = vmatprep.subr.mxu0 0.0
    %6484 = vmatpush1.msra.mxu0 0.0
    %6485 = vmatprep.subr.mxu0 0.0
    %6486 = vmatpush1.msra.mxu0 0.0
    %6487 = vmatprep.subr.mxu0 0.0
    %6488 = vmatpush1.msra.mxu0 0.0
    %6489 = vmatprep.subr.mxu0 0.0
    %v6490 = vand.u32 %v4197, 4294901760
    %v6491 = vsub.f32 %v4197, %v6490
    %6492 = vmatpush1.msra.mxu0 %v6491
    %6493 = vmatprep.subr.mxu0 0.0
    %v6494 = vand.u32 %v4196, 4294901760
    %v6495 = vsub.f32 %v4196, %v6494
    %6496 = vmatpush1.msra.mxu0 %v6495
    %6497 = vmatprep.subr.mxu0 0.0
    %v6498 = vand.u32 %v4195, 4294901760
    %v6499 = vsub.f32 %v4195, %v6498
    %6500 = vmatpush1.msra.mxu0 %v6499
    %6501 = vmatprep.subr.mxu0 0.0
    %v6502 = vand.u32 %v4194, 4294901760
    %v6503 = vsub.f32 %v4194, %v6502
    %6504 = vmatpush1.msra.mxu0 %v6503
    %6505 = vmatprep.subr.mxu0 0.0
    %6506 = vmatpush2.msra.mxu0 0.0
    %6507 = vmatprep.subr.mxu0 0.0
    %6508 = vmatpush2.msra.mxu0 0.0
    %6509 = vmatprep.subr.mxu0 0.0
    %6510 = vmatpush2.msra.mxu0 0.0
    %6511 = vmatprep.subr.mxu0 0.0
    %6512 = vmatpush2.msra.mxu0 0.0
    %6513 = vmatprep.subr.mxu0 0.0
    %6514 = vmatpush2.msra.mxu0 0.0
    %6515 = vmatprep.subr.mxu0 0.0
    %6516 = vmatpush2.msra.mxu0 0.0
    %6517 = vmatprep.subr.mxu0 0.0
    %6518 = vmatpush2.msra.mxu0 0.0
    %6519 = vmatprep.subr.mxu0 0.0
    %6520 = vmatpush2.msra.mxu0 0.0
    %6521 = vmatprep.subr.mxu0 0.0
    %6522 = vmatpush2.msra.mxu0 0.0
    %6523 = vmatprep.subr.mxu0 0.0
    %6524 = vmatpush2.msra.mxu0 0.0
    %6525 = vmatprep.subr.mxu0 0.0
    %6526 = vmatpush2.msra.mxu0 0.0
    %6527 = vmatprep.subr.mxu0 0.0
    %6528 = vmatpush2.msra.mxu0 0.0
    %6529 = vmatprep.subr.mxu0 0.0
    %6530 = vmatpush2.msra.mxu0 0.0
    %6531 = vmatprep.subr.mxu0 0.0
    %6532 = vmatpush2.msra.mxu0 0.0
    %6533 = vmatprep.subr.mxu0 0.0
    %6534 = vmatpush2.msra.mxu0 0.0
    %6535 = vmatprep.subr.mxu0 0.0
    %6536 = vmatpush2.msra.mxu0 0.0
    %6537 = vmatprep.mubr.f32.mxu0 0.0
    %v6538 = vand.u32 %v6293, 4294901760
    %v6539 = vsub.f32 %v6293, %v6538
    %6540 = vmatmul.mubr.f32.gmra.mxu0 %v6539
    %v6541 = vpop.f32.mrf.mxu0
    %v6542 = vadd.f32 %v6462, %v6541
    %v6543 = vpop.f32.mrf.mxu0
    %6544 = vdwg.mxu0
    %6545 = vmatprep.subr.mxu0 0.0
    %6546 = vmatpush1.msra.mxu0 0.0
    %6547 = vmatprep.subr.mxu0 0.0
    %6548 = vmatpush1.msra.mxu0 0.0
    %6549 = vmatprep.subr.mxu0 0.0
    %6550 = vmatpush1.msra.mxu0 0.0
    %6551 = vmatprep.subr.mxu0 0.0
    %6552 = vmatpush1.msra.mxu0 0.0
    %6553 = vmatprep.subr.mxu0 0.0
    %6554 = vmatpush1.msra.mxu0 0.0
    %6555 = vmatprep.subr.mxu0 0.0
    %6556 = vmatpush1.msra.mxu0 0.0
    %6557 = vmatprep.subr.mxu0 0.0
    %6558 = vmatpush1.msra.mxu0 0.0
    %6559 = vmatprep.subr.mxu0 0.0
    %6560 = vmatpush1.msra.mxu0 0.0
    %6561 = vmatprep.subr.mxu0 0.0
    %6562 = vmatpush1.msra.mxu0 0.0
    %6563 = vmatprep.subr.mxu0 0.0
    %6564 = vmatpush1.msra.mxu0 0.0
    %6565 = vmatprep.subr.mxu0 0.0
    %6566 = vmatpush1.msra.mxu0 0.0
    %6567 = vmatprep.subr.mxu0 0.0
    %6568 = vmatpush1.msra.mxu0 0.0
    %6569 = vmatprep.subr.mxu0 0.0
    %v6570 = vand.u32 %v4197, 4294901760
    %6571 = vmatpush1.msra.mxu0 %v6570
    %6572 = vmatprep.subr.mxu0 0.0
    %v6573 = vand.u32 %v4196, 4294901760
    %6574 = vmatpush1.msra.mxu0 %v6573
    %6575 = vmatprep.subr.mxu0 0.0
    %v6576 = vand.u32 %v4195, 4294901760
    %6577 = vmatpush1.msra.mxu0 %v6576
    %6578 = vmatprep.subr.mxu0 0.0
    %v6579 = vand.u32 %v4194, 4294901760
    %6580 = vmatpush1.msra.mxu0 %v6579
    %6581 = vmatprep.subr.mxu0 0.0
    %6582 = vmatpush2.msra.mxu0 0.0
    %6583 = vmatprep.subr.mxu0 0.0
    %6584 = vmatpush2.msra.mxu0 0.0
    %6585 = vmatprep.subr.mxu0 0.0
    %6586 = vmatpush2.msra.mxu0 0.0
    %6587 = vmatprep.subr.mxu0 0.0
    %6588 = vmatpush2.msra.mxu0 0.0
    %6589 = vmatprep.subr.mxu0 0.0
    %6590 = vmatpush2.msra.mxu0 0.0
    %6591 = vmatprep.subr.mxu0 0.0
    %6592 = vmatpush2.msra.mxu0 0.0
    %6593 = vmatprep.subr.mxu0 0.0
    %6594 = vmatpush2.msra.mxu0 0.0
    %6595 = vmatprep.subr.mxu0 0.0
    %6596 = vmatpush2.msra.mxu0 0.0
    %6597 = vmatprep.subr.mxu0 0.0
    %6598 = vmatpush2.msra.mxu0 0.0
    %6599 = vmatprep.subr.mxu0 0.0
    %6600 = vmatpush2.msra.mxu0 0.0
    %6601 = vmatprep.subr.mxu0 0.0
    %6602 = vmatpush2.msra.mxu0 0.0
    %6603 = vmatprep.subr.mxu0 0.0
    %6604 = vmatpush2.msra.mxu0 0.0
    %6605 = vmatprep.subr.mxu0 0.0
    %6606 = vmatpush2.msra.mxu0 0.0
    %6607 = vmatprep.subr.mxu0 0.0
    %6608 = vmatpush2.msra.mxu0 0.0
    %6609 = vmatprep.subr.mxu0 0.0
    %6610 = vmatpush2.msra.mxu0 0.0
    %6611 = vmatprep.subr.mxu0 0.0
    %6612 = vmatpush2.msra.mxu0 0.0
    %6613 = vmatprep.mubr.f32.mxu0 0.0
    %v6614 = vand.u32 %v6293, 4294901760
    %v6615 = vsub.f32 %v6293, %v6614
    %v6616 = vand.u32 %v6615, 4294901760
    %6617 = vmatmul.mubr.f32.gmra.mxu0 %v6616
    %v6618 = vpop.f32.mrf.mxu0
    %v6619 = vadd.f32 %v6542, %v6618
    %v6620 = vpop.f32.mrf.mxu0
    %6621 = vdwg.mxu0
    %6622 = vmatprep.subr.mxu0 0.0
    %6623 = vmatpush1.msra.mxu0 0.0
    %6624 = vmatprep.subr.mxu0 0.0
    %6625 = vmatpush1.msra.mxu0 0.0
    %6626 = vmatprep.subr.mxu0 0.0
    %6627 = vmatpush1.msra.mxu0 0.0
    %6628 = vmatprep.subr.mxu0 0.0
    %6629 = vmatpush1.msra.mxu0 0.0
    %6630 = vmatprep.subr.mxu0 0.0
    %6631 = vmatpush1.msra.mxu0 0.0
    %6632 = vmatprep.subr.mxu0 0.0
    %6633 = vmatpush1.msra.mxu0 0.0
    %6634 = vmatprep.subr.mxu0 0.0
    %6635 = vmatpush1.msra.mxu0 0.0
    %6636 = vmatprep.subr.mxu0 0.0
    %6637 = vmatpush1.msra.mxu0 0.0
    %6638 = vmatprep.subr.mxu0 0.0
    %6639 = vmatpush1.msra.mxu0 0.0
    %6640 = vmatprep.subr.mxu0 0.0
    %6641 = vmatpush1.msra.mxu0 0.0
    %6642 = vmatprep.subr.mxu0 0.0
    %6643 = vmatpush1.msra.mxu0 0.0
    %6644 = vmatprep.subr.mxu0 0.0
    %6645 = vmatpush1.msra.mxu0 0.0
    %6646 = vmatprep.subr.mxu0 0.0
    %v6647 = vand.u32 %v4197, 4294901760
    %v6648 = vsub.f32 %v4197, %v6647
    %v6649 = vand.u32 %v6648, 4294901760
    %6650 = vmatpush1.msra.mxu0 %v6649
    %6651 = vmatprep.subr.mxu0 0.0
    %v6652 = vand.u32 %v4196, 4294901760
    %v6653 = vsub.f32 %v4196, %v6652
    %v6654 = vand.u32 %v6653, 4294901760
    %6655 = vmatpush1.msra.mxu0 %v6654
    %6656 = vmatprep.subr.mxu0 0.0
    %v6657 = vand.u32 %v4195, 4294901760
    %v6658 = vsub.f32 %v4195, %v6657
    %v6659 = vand.u32 %v6658, 4294901760
    %6660 = vmatpush1.msra.mxu0 %v6659
    %6661 = vmatprep.subr.mxu0 0.0
    %v6662 = vand.u32 %v4194, 4294901760
    %v6663 = vsub.f32 %v4194, %v6662
    %v6664 = vand.u32 %v6663, 4294901760
    %6665 = vmatpush1.msra.mxu0 %v6664
    %6666 = vmatprep.subr.mxu0 0.0
    %6667 = vmatpush2.msra.mxu0 0.0
    %6668 = vmatprep.subr.mxu0 0.0
    %6669 = vmatpush2.msra.mxu0 0.0
    %6670 = vmatprep.subr.mxu0 0.0
    %6671 = vmatpush2.msra.mxu0 0.0
    %6672 = vmatprep.subr.mxu0 0.0
    %6673 = vmatpush2.msra.mxu0 0.0
    %6674 = vmatprep.subr.mxu0 0.0
    %6675 = vmatpush2.msra.mxu0 0.0
    %6676 = vmatprep.subr.mxu0 0.0
    %6677 = vmatpush2.msra.mxu0 0.0
    %6678 = vmatprep.subr.mxu0 0.0
    %6679 = vmatpush2.msra.mxu0 0.0
    %6680 = vmatprep.subr.mxu0 0.0
    %6681 = vmatpush2.msra.mxu0 0.0
    %6682 = vmatprep.subr.mxu0 0.0
    %6683 = vmatpush2.msra.mxu0 0.0
    %6684 = vmatprep.subr.mxu0 0.0
    %6685 = vmatpush2.msra.mxu0 0.0
    %6686 = vmatprep.subr.mxu0 0.0
    %6687 = vmatpush2.msra.mxu0 0.0
    %6688 = vmatprep.subr.mxu0 0.0
    %6689 = vmatpush2.msra.mxu0 0.0
    %6690 = vmatprep.subr.mxu0 0.0
    %6691 = vmatpush2.msra.mxu0 0.0
    %6692 = vmatprep.subr.mxu0 0.0
    %6693 = vmatpush2.msra.mxu0 0.0
    %6694 = vmatprep.subr.mxu0 0.0
    %6695 = vmatpush2.msra.mxu0 0.0
    %6696 = vmatprep.subr.mxu0 0.0
    %6697 = vmatpush2.msra.mxu0 0.0
    %6698 = vmatprep.mubr.f32.mxu0 0.0
    %v6699 = vand.u32 %v6293, 4294901760
    %6700 = vmatmul.mubr.f32.gmra.mxu0 %v6699
    %v6701 = vpop.f32.mrf.mxu0
    %v6702 = vadd.f32 %v6619, %v6701
    %v6703 = vpop.f32.mrf.mxu0
    %6704 = vdwg.mxu0
    %6705 = vmatprep.subr.mxu0 0.0
    %6706 = vmatpush1.msra.mxu0 0.0
    %6707 = vmatprep.subr.mxu0 0.0
    %6708 = vmatpush1.msra.mxu0 0.0
    %6709 = vmatprep.subr.mxu0 0.0
    %6710 = vmatpush1.msra.mxu0 0.0
    %6711 = vmatprep.subr.mxu0 0.0
    %6712 = vmatpush1.msra.mxu0 0.0
    %6713 = vmatprep.subr.mxu0 0.0
    %6714 = vmatpush1.msra.mxu0 0.0
    %6715 = vmatprep.subr.mxu0 0.0
    %6716 = vmatpush1.msra.mxu0 0.0
    %6717 = vmatprep.subr.mxu0 0.0
    %6718 = vmatpush1.msra.mxu0 0.0
    %6719 = vmatprep.subr.mxu0 0.0
    %6720 = vmatpush1.msra.mxu0 0.0
    %6721 = vmatprep.subr.mxu0 0.0
    %6722 = vmatpush1.msra.mxu0 0.0
    %6723 = vmatprep.subr.mxu0 0.0
    %6724 = vmatpush1.msra.mxu0 0.0
    %6725 = vmatprep.subr.mxu0 0.0
    %6726 = vmatpush1.msra.mxu0 0.0
    %6727 = vmatprep.subr.mxu0 0.0
    %6728 = vmatpush1.msra.mxu0 0.0
    %6729 = vmatprep.subr.mxu0 0.0
    %v6730 = vand.u32 %v4197, 4294901760
    %6731 = vmatpush1.msra.mxu0 %v6730
    %6732 = vmatprep.subr.mxu0 0.0
    %v6733 = vand.u32 %v4196, 4294901760
    %6734 = vmatpush1.msra.mxu0 %v6733
    %6735 = vmatprep.subr.mxu0 0.0
    %v6736 = vand.u32 %v4195, 4294901760
    %6737 = vmatpush1.msra.mxu0 %v6736
    %6738 = vmatprep.subr.mxu0 0.0
    %v6739 = vand.u32 %v4194, 4294901760
    %6740 = vmatpush1.msra.mxu0 %v6739
    %6741 = vmatprep.subr.mxu0 0.0
    %6742 = vmatpush2.msra.mxu0 0.0
    %6743 = vmatprep.subr.mxu0 0.0
    %6744 = vmatpush2.msra.mxu0 0.0
    %6745 = vmatprep.subr.mxu0 0.0
    %6746 = vmatpush2.msra.mxu0 0.0
    %6747 = vmatprep.subr.mxu0 0.0
    %6748 = vmatpush2.msra.mxu0 0.0
    %6749 = vmatprep.subr.mxu0 0.0
    %6750 = vmatpush2.msra.mxu0 0.0
    %6751 = vmatprep.subr.mxu0 0.0
    %6752 = vmatpush2.msra.mxu0 0.0
    %6753 = vmatprep.subr.mxu0 0.0
    %6754 = vmatpush2.msra.mxu0 0.0
    %6755 = vmatprep.subr.mxu0 0.0
    %6756 = vmatpush2.msra.mxu0 0.0
    %6757 = vmatprep.subr.mxu0 0.0
    %6758 = vmatpush2.msra.mxu0 0.0
    %6759 = vmatprep.subr.mxu0 0.0
    %6760 = vmatpush2.msra.mxu0 0.0
    %6761 = vmatprep.subr.mxu0 0.0
    %6762 = vmatpush2.msra.mxu0 0.0
    %6763 = vmatprep.subr.mxu0 0.0
    %6764 = vmatpush2.msra.mxu0 0.0
    %6765 = vmatprep.subr.mxu0 0.0
    %6766 = vmatpush2.msra.mxu0 0.0
    %6767 = vmatprep.subr.mxu0 0.0
    %6768 = vmatpush2.msra.mxu0 0.0
    %6769 = vmatprep.subr.mxu0 0.0
    %6770 = vmatpush2.msra.mxu0 0.0
    %6771 = vmatprep.subr.mxu0 0.0
    %6772 = vmatpush2.msra.mxu0 0.0
    %6773 = vmatprep.mubr.f32.mxu0 0.0
    %v6774 = vand.u32 %v6293, 4294901760
    %6775 = vmatmul.mubr.f32.gmra.mxu0 %v6774
    %v6776 = vpop.f32.mrf.mxu0
    %v6777 = vadd.f32 %v6702, %v6776
    %v6778 = vpop.f32.mrf.mxu0
    %6779 = vdwg.mxu0
    %v6780 = vadd.f32 %v6289, %v6777
    %v6781 = vtanh.pop %v6780
    %v6782 = vxor.u32 %v6780, 2147483648
    %v6783 = vmul.f32 %v6782, 1.442695
    %v6784 = vpow.pop %v6783
    %v6785 = vadd.f32 %v6784, 1.0
    %v6786 = vrcp.pop %v6785
    %v6787 = vmul.f32 1.0, %v6786
    %v6788 = vsel %vm4202, %v6781, %v6787
    %v6789 = vmul.f32 %v6788, %v6278
    %6791 = vrot.lane.b32.xlu0 %v6788, 64
    %v6792 = vpop.permute.xlu0 %6791
    %v6794 = vmul.f32 %v6788, %v6792
    %6796 = vrot.lane.b32.xlu0 %v6794, 32
    %v6797 = vpop.permute.xlu0 %6796
    %v6799 = vadd.f32 %v6789, %v6797
    %v6800 = vtanh.pop %v6799
    %6802 = vrot.lane.b32.xlu0 %v6800, 64
    %v6803 = vpop.permute.xlu0 %6802
    %v6805 = vmul.f32 %v6788, %v6803
    %v6806 = vrot.slane %v4184, 5
    %v6808 = vrot.slane %v4191, 4
    %v6810 = vsel %vm4206, %v6806, %v6808
    %6812 = vrot.lane.b32.xlu0 %v6805, 32
    %v6813 = vpop.permute.xlu0 %6812
    %v6814 = vsel %vm4208, %v6813, 0
    %6816 = vmatprep.subr.mxu0 0.0
    %6817 = vmatpush1.msra.mxu0 0.0
    %6818 = vmatprep.subr.mxu0 0.0
    %6819 = vmatpush1.msra.mxu0 0.0
    %6820 = vmatprep.subr.mxu0 0.0
    %6821 = vmatpush1.msra.mxu0 0.0
    %6822 = vmatprep.subr.mxu0 0.0
    %6823 = vmatpush1.msra.mxu0 0.0
    %6824 = vmatprep.subr.mxu0 0.0
    %6825 = vmatpush1.msra.mxu0 0.0
    %6826 = vmatprep.subr.mxu0 0.0
    %6827 = vmatpush1.msra.mxu0 0.0
    %6828 = vmatprep.subr.mxu0 0.0
    %6829 = vmatpush1.msra.mxu0 0.0
    %6830 = vmatprep.subr.mxu0 0.0
    %6831 = vmatpush1.msra.mxu0 0.0
    %6832 = vmatprep.subr.mxu0 0.0
    %6833 = vmatpush1.msra.mxu0 0.0
    %6834 = vmatprep.subr.mxu0 0.0
    %6835 = vmatpush1.msra.mxu0 0.0
    %6836 = vmatprep.subr.mxu0 0.0
    %6837 = vmatpush1.msra.mxu0 0.0
    %6838 = vmatprep.subr.mxu0 0.0
    %6839 = vmatpush1.msra.mxu0 0.0
    %6840 = vmatprep.subr.mxu0 0.0
    %v6841 = vand.u32 %v4197, 4294901760
    %6842 = vmatpush1.msra.mxu0 %v6841
    %6843 = vmatprep.subr.mxu0 0.0
    %v6844 = vand.u32 %v4196, 4294901760
    %6845 = vmatpush1.msra.mxu0 %v6844
    %6846 = vmatprep.subr.mxu0 0.0
    %v6847 = vand.u32 %v4195, 4294901760
    %6848 = vmatpush1.msra.mxu0 %v6847
    %6849 = vmatprep.subr.mxu0 0.0
    %v6850 = vand.u32 %v4194, 4294901760
    %6851 = vmatpush1.msra.mxu0 %v6850
    %6852 = vmatprep.subr.mxu0 0.0
    %6853 = vmatpush2.msra.mxu0 0.0
    %6854 = vmatprep.subr.mxu0 0.0
    %6855 = vmatpush2.msra.mxu0 0.0
    %6856 = vmatprep.subr.mxu0 0.0
    %6857 = vmatpush2.msra.mxu0 0.0
    %6858 = vmatprep.subr.mxu0 0.0
    %6859 = vmatpush2.msra.mxu0 0.0
    %6860 = vmatprep.subr.mxu0 0.0
    %6861 = vmatpush2.msra.mxu0 0.0
    %6862 = vmatprep.subr.mxu0 0.0
    %6863 = vmatpush2.msra.mxu0 0.0
    %6864 = vmatprep.subr.mxu0 0.0
    %6865 = vmatpush2.msra.mxu0 0.0
    %6866 = vmatprep.subr.mxu0 0.0
    %6867 = vmatpush2.msra.mxu0 0.0
    %6868 = vmatprep.subr.mxu0 0.0
    %6869 = vmatpush2.msra.mxu0 0.0
    %6870 = vmatprep.subr.mxu0 0.0
    %6871 = vmatpush2.msra.mxu0 0.0
    %6872 = vmatprep.subr.mxu0 0.0
    %6873 = vmatpush2.msra.mxu0 0.0
    %6874 = vmatprep.subr.mxu0 0.0
    %6875 = vmatpush2.msra.mxu0 0.0
    %6876 = vmatprep.subr.mxu0 0.0
    %6877 = vmatpush2.msra.mxu0 0.0
    %6878 = vmatprep.subr.mxu0 0.0
    %6879 = vmatpush2.msra.mxu0 0.0
    %6880 = vmatprep.subr.mxu0 0.0
    %6881 = vmatpush2.msra.mxu0 0.0
    %6882 = vmatprep.subr.mxu0 0.0
    %6883 = vmatpush2.msra.mxu0 0.0
    %6884 = vmatprep.mubr.f32.mxu0 0.0
    %v6885 = vand.u32 %v6814, 4294901760
    %v6886 = vsub.f32 %v6814, %v6885
    %v6887 = vand.u32 %v6886, 4294901760
    %v6888 = vsub.f32 %v6886, %v6887
    %v6889 = vand.u32 %v6888, 4294901760
    %6890 = vmatmul.mubr.f32.gmra.mxu0 %v6889
    %v6891 = vpop.f32.mrf.mxu0
    %v6892 = vadd.f32 0.0, %v6891
    %v6893 = vpop.f32.mrf.mxu0
    %6894 = vdwg.mxu0
    %6895 = vmatprep.subr.mxu0 0.0
    %6896 = vmatpush1.msra.mxu0 0.0
    %6897 = vmatprep.subr.mxu0 0.0
    %6898 = vmatpush1.msra.mxu0 0.0
    %6899 = vmatprep.subr.mxu0 0.0
    %6900 = vmatpush1.msra.mxu0 0.0
    %6901 = vmatprep.subr.mxu0 0.0
    %6902 = vmatpush1.msra.mxu0 0.0
    %6903 = vmatprep.subr.mxu0 0.0
    %6904 = vmatpush1.msra.mxu0 0.0
    %6905 = vmatprep.subr.mxu0 0.0
    %6906 = vmatpush1.msra.mxu0 0.0
    %6907 = vmatprep.subr.mxu0 0.0
    %6908 = vmatpush1.msra.mxu0 0.0
    %6909 = vmatprep.subr.mxu0 0.0
    %6910 = vmatpush1.msra.mxu0 0.0
    %6911 = vmatprep.subr.mxu0 0.0
    %6912 = vmatpush1.msra.mxu0 0.0
    %6913 = vmatprep.subr.mxu0 0.0
    %6914 = vmatpush1.msra.mxu0 0.0
    %6915 = vmatprep.subr.mxu0 0.0
    %6916 = vmatpush1.msra.mxu0 0.0
    %6917 = vmatprep.subr.mxu0 0.0
    %6918 = vmatpush1.msra.mxu0 0.0
    %6919 = vmatprep.subr.mxu0 0.0
    %v6920 = vand.u32 %v4197, 4294901760
    %v6921 = vsub.f32 %v4197, %v6920
    %v6922 = vand.u32 %v6921, 4294901760
    %v6923 = vsub.f32 %v6921, %v6922
    %v6924 = vand.u32 %v6923, 4294901760
    %6925 = vmatpush1.msra.mxu0 %v6924
    %6926 = vmatprep.subr.mxu0 0.0
    %v6927 = vand.u32 %v4196, 4294901760
    %v6928 = vsub.f32 %v4196, %v6927
    %v6929 = vand.u32 %v6928, 4294901760
    %v6930 = vsub.f32 %v6928, %v6929
    %v6931 = vand.u32 %v6930, 4294901760
    %6932 = vmatpush1.msra.mxu0 %v6931
    %6933 = vmatprep.subr.mxu0 0.0
    %v6934 = vand.u32 %v4195, 4294901760
    %v6935 = vsub.f32 %v4195, %v6934
    %v6936 = vand.u32 %v6935, 4294901760
    %v6937 = vsub.f32 %v6935, %v6936
    %v6938 = vand.u32 %v6937, 4294901760
    %6939 = vmatpush1.msra.mxu0 %v6938
    %6940 = vmatprep.subr.mxu0 0.0
    %v6941 = vand.u32 %v4194, 4294901760
    %v6942 = vsub.f32 %v4194, %v6941
    %v6943 = vand.u32 %v6942, 4294901760
    %v6944 = vsub.f32 %v6942, %v6943
    %v6945 = vand.u32 %v6944, 4294901760
    %6946 = vmatpush1.msra.mxu0 %v6945
    %6947 = vmatprep.subr.mxu0 0.0
    %6948 = vmatpush2.msra.mxu0 0.0
    %6949 = vmatprep.subr.mxu0 0.0
    %6950 = vmatpush2.msra.mxu0 0.0
    %6951 = vmatprep.subr.mxu0 0.0
    %6952 = vmatpush2.msra.mxu0 0.0
    %6953 = vmatprep.subr.mxu0 0.0
    %6954 = vmatpush2.msra.mxu0 0.0
    %6955 = vmatprep.subr.mxu0 0.0
    %6956 = vmatpush2.msra.mxu0 0.0
    %6957 = vmatprep.subr.mxu0 0.0
    %6958 = vmatpush2.msra.mxu0 0.0
    %6959 = vmatprep.subr.mxu0 0.0
    %6960 = vmatpush2.msra.mxu0 0.0
    %6961 = vmatprep.subr.mxu0 0.0
    %6962 = vmatpush2.msra.mxu0 0.0
    %6963 = vmatprep.subr.mxu0 0.0
    %6964 = vmatpush2.msra.mxu0 0.0
    %6965 = vmatprep.subr.mxu0 0.0
    %6966 = vmatpush2.msra.mxu0 0.0
    %6967 = vmatprep.subr.mxu0 0.0
    %6968 = vmatpush2.msra.mxu0 0.0
    %6969 = vmatprep.subr.mxu0 0.0
    %6970 = vmatpush2.msra.mxu0 0.0
    %6971 = vmatprep.subr.mxu0 0.0
    %6972 = vmatpush2.msra.mxu0 0.0
    %6973 = vmatprep.subr.mxu0 0.0
    %6974 = vmatpush2.msra.mxu0 0.0
    %6975 = vmatprep.subr.mxu0 0.0
    %6976 = vmatpush2.msra.mxu0 0.0
    %6977 = vmatprep.subr.mxu0 0.0
    %6978 = vmatpush2.msra.mxu0 0.0
    %6979 = vmatprep.mubr.f32.mxu0 0.0
    %v6980 = vand.u32 %v6814, 4294901760
    %6981 = vmatmul.mubr.f32.gmra.mxu0 %v6980
    %v6982 = vpop.f32.mrf.mxu0
    %v6983 = vadd.f32 %v6892, %v6982
    %v6984 = vpop.f32.mrf.mxu0
    %6985 = vdwg.mxu0
    %6986 = vmatprep.subr.mxu0 0.0
    %6987 = vmatpush1.msra.mxu0 0.0
    %6988 = vmatprep.subr.mxu0 0.0
    %6989 = vmatpush1.msra.mxu0 0.0
    %6990 = vmatprep.subr.mxu0 0.0
    %6991 = vmatpush1.msra.mxu0 0.0
    %6992 = vmatprep.subr.mxu0 0.0
    %6993 = vmatpush1.msra.mxu0 0.0
    %6994 = vmatprep.subr.mxu0 0.0
    %6995 = vmatpush1.msra.mxu0 0.0
    %6996 = vmatprep.subr.mxu0 0.0
    %6997 = vmatpush1.msra.mxu0 0.0
    %6998 = vmatprep.subr.mxu0 0.0
    %6999 = vmatpush1.msra.mxu0 0.0
    %7000 = vmatprep.subr.mxu0 0.0
    %7001 = vmatpush1.msra.mxu0 0.0
    %7002 = vmatprep.subr.mxu0 0.0
    %7003 = vmatpush1.msra.mxu0 0.0
    %7004 = vmatprep.subr.mxu0 0.0
    %7005 = vmatpush1.msra.mxu0 0.0
    %7006 = vmatprep.subr.mxu0 0.0
    %7007 = vmatpush1.msra.mxu0 0.0
    %7008 = vmatprep.subr.mxu0 0.0
    %7009 = vmatpush1.msra.mxu0 0.0
    %7010 = vmatprep.subr.mxu0 0.0
    %v7011 = vand.u32 %v4197, 4294901760
    %v7012 = vsub.f32 %v4197, %v7011
    %7013 = vmatpush1.msra.mxu0 %v7012
    %7014 = vmatprep.subr.mxu0 0.0
    %v7015 = vand.u32 %v4196, 4294901760
    %v7016 = vsub.f32 %v4196, %v7015
    %7017 = vmatpush1.msra.mxu0 %v7016
    %7018 = vmatprep.subr.mxu0 0.0
    %v7019 = vand.u32 %v4195, 4294901760
    %v7020 = vsub.f32 %v4195, %v7019
    %7021 = vmatpush1.msra.mxu0 %v7020
    %7022 = vmatprep.subr.mxu0 0.0
    %v7023 = vand.u32 %v4194, 4294901760
    %v7024 = vsub.f32 %v4194, %v7023
    %7025 = vmatpush1.msra.mxu0 %v7024
    %7026 = vmatprep.subr.mxu0 0.0
    %7027 = vmatpush2.msra.mxu0 0.0
    %7028 = vmatprep.subr.mxu0 0.0
    %7029 = vmatpush2.msra.mxu0 0.0
    %7030 = vmatprep.subr.mxu0 0.0
    %7031 = vmatpush2.msra.mxu0 0.0
    %7032 = vmatprep.subr.mxu0 0.0
    %7033 = vmatpush2.msra.mxu0 0.0
    %7034 = vmatprep.subr.mxu0 0.0
    %7035 = vmatpush2.msra.mxu0 0.0
    %7036 = vmatprep.subr.mxu0 0.0
    %7037 = vmatpush2.msra.mxu0 0.0
    %7038 = vmatprep.subr.mxu0 0.0
    %7039 = vmatpush2.msra.mxu0 0.0
    %7040 = vmatprep.subr.mxu0 0.0
    %7041 = vmatpush2.msra.mxu0 0.0
    %7042 = vmatprep.subr.mxu0 0.0
    %7043 = vmatpush2.msra.mxu0 0.0
    %7044 = vmatprep.subr.mxu0 0.0
    %7045 = vmatpush2.msra.mxu0 0.0
    %7046 = vmatprep.subr.mxu0 0.0
    %7047 = vmatpush2.msra.mxu0 0.0
    %7048 = vmatprep.subr.mxu0 0.0
    %7049 = vmatpush2.msra.mxu0 0.0
    %7050 = vmatprep.subr.mxu0 0.0
    %7051 = vmatpush2.msra.mxu0 0.0
    %7052 = vmatprep.subr.mxu0 0.0
    %7053 = vmatpush2.msra.mxu0 0.0
    %7054 = vmatprep.subr.mxu0 0.0
    %7055 = vmatpush2.msra.mxu0 0.0
    %7056 = vmatprep.subr.mxu0 0.0
    %7057 = vmatpush2.msra.mxu0 0.0
    %7058 = vmatprep.mubr.f32.mxu0 0.0
    %v7059 = vand.u32 %v6814, 4294901760
    %v7060 = vsub.f32 %v6814, %v7059
    %7061 = vmatmul.mubr.f32.gmra.mxu0 %v7060
    %v7062 = vpop.f32.mrf.mxu0
    %v7063 = vadd.f32 %v6983, %v7062
    %v7064 = vpop.f32.mrf.mxu0
    %7065 = vdwg.mxu0
    %7066 = vmatprep.subr.mxu0 0.0
    %7067 = vmatpush1.msra.mxu0 0.0
    %7068 = vmatprep.subr.mxu0 0.0
    %7069 = vmatpush1.msra.mxu0 0.0
    %7070 = vmatprep.subr.mxu0 0.0
    %7071 = vmatpush1.msra.mxu0 0.0
    %7072 = vmatprep.subr.mxu0 0.0
    %7073 = vmatpush1.msra.mxu0 0.0
    %7074 = vmatprep.subr.mxu0 0.0
    %7075 = vmatpush1.msra.mxu0 0.0
    %7076 = vmatprep.subr.mxu0 0.0
    %7077 = vmatpush1.msra.mxu0 0.0
    %7078 = vmatprep.subr.mxu0 0.0
    %7079 = vmatpush1.msra.mxu0 0.0
    %7080 = vmatprep.subr.mxu0 0.0
    %7081 = vmatpush1.msra.mxu0 0.0
    %7082 = vmatprep.subr.mxu0 0.0
    %7083 = vmatpush1.msra.mxu0 0.0
    %7084 = vmatprep.subr.mxu0 0.0
    %7085 = vmatpush1.msra.mxu0 0.0
    %7086 = vmatprep.subr.mxu0 0.0
    %7087 = vmatpush1.msra.mxu0 0.0
    %7088 = vmatprep.subr.mxu0 0.0
    %7089 = vmatpush1.msra.mxu0 0.0
    %7090 = vmatprep.subr.mxu0 0.0
    %v7091 = vand.u32 %v4197, 4294901760
    %7092 = vmatpush1.msra.mxu0 %v7091
    %7093 = vmatprep.subr.mxu0 0.0
    %v7094 = vand.u32 %v4196, 4294901760
    %7095 = vmatpush1.msra.mxu0 %v7094
    %7096 = vmatprep.subr.mxu0 0.0
    %v7097 = vand.u32 %v4195, 4294901760
    %7098 = vmatpush1.msra.mxu0 %v7097
    %7099 = vmatprep.subr.mxu0 0.0
    %v7100 = vand.u32 %v4194, 4294901760
    %7101 = vmatpush1.msra.mxu0 %v7100
    %7102 = vmatprep.subr.mxu0 0.0
    %7103 = vmatpush2.msra.mxu0 0.0
    %7104 = vmatprep.subr.mxu0 0.0
    %7105 = vmatpush2.msra.mxu0 0.0
    %7106 = vmatprep.subr.mxu0 0.0
    %7107 = vmatpush2.msra.mxu0 0.0
    %7108 = vmatprep.subr.mxu0 0.0
    %7109 = vmatpush2.msra.mxu0 0.0
    %7110 = vmatprep.subr.mxu0 0.0
    %7111 = vmatpush2.msra.mxu0 0.0
    %7112 = vmatprep.subr.mxu0 0.0
    %7113 = vmatpush2.msra.mxu0 0.0
    %7114 = vmatprep.subr.mxu0 0.0
    %7115 = vmatpush2.msra.mxu0 0.0
    %7116 = vmatprep.subr.mxu0 0.0
    %7117 = vmatpush2.msra.mxu0 0.0
    %7118 = vmatprep.subr.mxu0 0.0
    %7119 = vmatpush2.msra.mxu0 0.0
    %7120 = vmatprep.subr.mxu0 0.0
    %7121 = vmatpush2.msra.mxu0 0.0
    %7122 = vmatprep.subr.mxu0 0.0
    %7123 = vmatpush2.msra.mxu0 0.0
    %7124 = vmatprep.subr.mxu0 0.0
    %7125 = vmatpush2.msra.mxu0 0.0
    %7126 = vmatprep.subr.mxu0 0.0
    %7127 = vmatpush2.msra.mxu0 0.0
    %7128 = vmatprep.subr.mxu0 0.0
    %7129 = vmatpush2.msra.mxu0 0.0
    %7130 = vmatprep.subr.mxu0 0.0
    %7131 = vmatpush2.msra.mxu0 0.0
    %7132 = vmatprep.subr.mxu0 0.0
    %7133 = vmatpush2.msra.mxu0 0.0
    %7134 = vmatprep.mubr.f32.mxu0 0.0
    %v7135 = vand.u32 %v6814, 4294901760
    %v7136 = vsub.f32 %v6814, %v7135
    %v7137 = vand.u32 %v7136, 4294901760
    %7138 = vmatmul.mubr.f32.gmra.mxu0 %v7137
    %v7139 = vpop.f32.mrf.mxu0
    %v7140 = vadd.f32 %v7063, %v7139
    %v7141 = vpop.f32.mrf.mxu0
    %7142 = vdwg.mxu0
    %7143 = vmatprep.subr.mxu0 0.0
    %7144 = vmatpush1.msra.mxu0 0.0
    %7145 = vmatprep.subr.mxu0 0.0
    %7146 = vmatpush1.msra.mxu0 0.0
    %7147 = vmatprep.subr.mxu0 0.0
    %7148 = vmatpush1.msra.mxu0 0.0
    %7149 = vmatprep.subr.mxu0 0.0
    %7150 = vmatpush1.msra.mxu0 0.0
    %7151 = vmatprep.subr.mxu0 0.0
    %7152 = vmatpush1.msra.mxu0 0.0
    %7153 = vmatprep.subr.mxu0 0.0
    %7154 = vmatpush1.msra.mxu0 0.0
    %7155 = vmatprep.subr.mxu0 0.0
    %7156 = vmatpush1.msra.mxu0 0.0
    %7157 = vmatprep.subr.mxu0 0.0
    %7158 = vmatpush1.msra.mxu0 0.0
    %7159 = vmatprep.subr.mxu0 0.0
    %7160 = vmatpush1.msra.mxu0 0.0
    %7161 = vmatprep.subr.mxu0 0.0
    %7162 = vmatpush1.msra.mxu0 0.0
    %7163 = vmatprep.subr.mxu0 0.0
    %7164 = vmatpush1.msra.mxu0 0.0
    %7165 = vmatprep.subr.mxu0 0.0
    %7166 = vmatpush1.msra.mxu0 0.0
    %7167 = vmatprep.subr.mxu0 0.0
    %v7168 = vand.u32 %v4197, 4294901760
    %v7169 = vsub.f32 %v4197, %v7168
    %v7170 = vand.u32 %v7169, 4294901760
    %7171 = vmatpush1.msra.mxu0 %v7170
    %7172 = vmatprep.subr.mxu0 0.0
    %v7173 = vand.u32 %v4196, 4294901760
    %v7174 = vsub.f32 %v4196, %v7173
    %v7175 = vand.u32 %v7174, 4294901760
    %7176 = vmatpush1.msra.mxu0 %v7175
    %7177 = vmatprep.subr.mxu0 0.0
    %v7178 = vand.u32 %v4195, 4294901760
    %v7179 = vsub.f32 %v4195, %v7178
    %v7180 = vand.u32 %v7179, 4294901760
    %7181 = vmatpush1.msra.mxu0 %v7180
    %7182 = vmatprep.subr.mxu0 0.0
    %v7183 = vand.u32 %v4194, 4294901760
    %v7184 = vsub.f32 %v4194, %v7183
    %v7185 = vand.u32 %v7184, 4294901760
    %7186 = vmatpush1.msra.mxu0 %v7185
    %7187 = vmatprep.subr.mxu0 0.0
    %7188 = vmatpush2.msra.mxu0 0.0
    %7189 = vmatprep.subr.mxu0 0.0
    %7190 = vmatpush2.msra.mxu0 0.0
    %7191 = vmatprep.subr.mxu0 0.0
    %7192 = vmatpush2.msra.mxu0 0.0
    %7193 = vmatprep.subr.mxu0 0.0
    %7194 = vmatpush2.msra.mxu0 0.0
    %7195 = vmatprep.subr.mxu0 0.0
    %7196 = vmatpush2.msra.mxu0 0.0
    %7197 = vmatprep.subr.mxu0 0.0
    %7198 = vmatpush2.msra.mxu0 0.0
    %7199 = vmatprep.subr.mxu0 0.0
    %7200 = vmatpush2.msra.mxu0 0.0
    %7201 = vmatprep.subr.mxu0 0.0
    %7202 = vmatpush2.msra.mxu0 0.0
    %7203 = vmatprep.subr.mxu0 0.0
    %7204 = vmatpush2.msra.mxu0 0.0
    %7205 = vmatprep.subr.mxu0 0.0
    %7206 = vmatpush2.msra.mxu0 0.0
    %7207 = vmatprep.subr.mxu0 0.0
    %7208 = vmatpush2.msra.mxu0 0.0
    %7209 = vmatprep.subr.mxu0 0.0
    %7210 = vmatpush2.msra.mxu0 0.0
    %7211 = vmatprep.subr.mxu0 0.0
    %7212 = vmatpush2.msra.mxu0 0.0
    %7213 = vmatprep.subr.mxu0 0.0
    %7214 = vmatpush2.msra.mxu0 0.0
    %7215 = vmatprep.subr.mxu0 0.0
    %7216 = vmatpush2.msra.mxu0 0.0
    %7217 = vmatprep.subr.mxu0 0.0
    %7218 = vmatpush2.msra.mxu0 0.0
    %7219 = vmatprep.mubr.f32.mxu0 0.0
    %v7220 = vand.u32 %v6814, 4294901760
    %7221 = vmatmul.mubr.f32.gmra.mxu0 %v7220
    %v7222 = vpop.f32.mrf.mxu0
    %v7223 = vadd.f32 %v7140, %v7222
    %v7224 = vpop.f32.mrf.mxu0
    %7225 = vdwg.mxu0
    %7226 = vmatprep.subr.mxu0 0.0
    %7227 = vmatpush1.msra.mxu0 0.0
    %7228 = vmatprep.subr.mxu0 0.0
    %7229 = vmatpush1.msra.mxu0 0.0
    %7230 = vmatprep.subr.mxu0 0.0
    %7231 = vmatpush1.msra.mxu0 0.0
    %7232 = vmatprep.subr.mxu0 0.0
    %7233 = vmatpush1.msra.mxu0 0.0
    %7234 = vmatprep.subr.mxu0 0.0
    %7235 = vmatpush1.msra.mxu0 0.0
    %7236 = vmatprep.subr.mxu0 0.0
    %7237 = vmatpush1.msra.mxu0 0.0
    %7238 = vmatprep.subr.mxu0 0.0
    %7239 = vmatpush1.msra.mxu0 0.0
    %7240 = vmatprep.subr.mxu0 0.0
    %7241 = vmatpush1.msra.mxu0 0.0
    %7242 = vmatprep.subr.mxu0 0.0
    %7243 = vmatpush1.msra.mxu0 0.0
    %7244 = vmatprep.subr.mxu0 0.0
    %7245 = vmatpush1.msra.mxu0 0.0
    %7246 = vmatprep.subr.mxu0 0.0
    %7247 = vmatpush1.msra.mxu0 0.0
    %7248 = vmatprep.subr.mxu0 0.0
    %7249 = vmatpush1.msra.mxu0 0.0
    %7250 = vmatprep.subr.mxu0 0.0
    %v7251 = vand.u32 %v4197, 4294901760
    %7252 = vmatpush1.msra.mxu0 %v7251
    %7253 = vmatprep.subr.mxu0 0.0
    %v7254 = vand.u32 %v4196, 4294901760
    %7255 = vmatpush1.msra.mxu0 %v7254
    %7256 = vmatprep.subr.mxu0 0.0
    %v7257 = vand.u32 %v4195, 4294901760
    %7258 = vmatpush1.msra.mxu0 %v7257
    %7259 = vmatprep.subr.mxu0 0.0
    %v7260 = vand.u32 %v4194, 4294901760
    %7261 = vmatpush1.msra.mxu0 %v7260
    %7262 = vmatprep.subr.mxu0 0.0
    %7263 = vmatpush2.msra.mxu0 0.0
    %7264 = vmatprep.subr.mxu0 0.0
    %7265 = vmatpush2.msra.mxu0 0.0
    %7266 = vmatprep.subr.mxu0 0.0
    %7267 = vmatpush2.msra.mxu0 0.0
    %7268 = vmatprep.subr.mxu0 0.0
    %7269 = vmatpush2.msra.mxu0 0.0
    %7270 = vmatprep.subr.mxu0 0.0
    %7271 = vmatpush2.msra.mxu0 0.0
    %7272 = vmatprep.subr.mxu0 0.0
    %7273 = vmatpush2.msra.mxu0 0.0
    %7274 = vmatprep.subr.mxu0 0.0
    %7275 = vmatpush2.msra.mxu0 0.0
    %7276 = vmatprep.subr.mxu0 0.0
    %7277 = vmatpush2.msra.mxu0 0.0
    %7278 = vmatprep.subr.mxu0 0.0
    %7279 = vmatpush2.msra.mxu0 0.0
    %7280 = vmatprep.subr.mxu0 0.0
    %7281 = vmatpush2.msra.mxu0 0.0
    %7282 = vmatprep.subr.mxu0 0.0
    %7283 = vmatpush2.msra.mxu0 0.0
    %7284 = vmatprep.subr.mxu0 0.0
    %7285 = vmatpush2.msra.mxu0 0.0
    %7286 = vmatprep.subr.mxu0 0.0
    %7287 = vmatpush2.msra.mxu0 0.0
    %7288 = vmatprep.subr.mxu0 0.0
    %7289 = vmatpush2.msra.mxu0 0.0
    %7290 = vmatprep.subr.mxu0 0.0
    %7291 = vmatpush2.msra.mxu0 0.0
    %7292 = vmatprep.subr.mxu0 0.0
    %7293 = vmatpush2.msra.mxu0 0.0
    %7294 = vmatprep.mubr.f32.mxu0 0.0
    %v7295 = vand.u32 %v6814, 4294901760
    %7296 = vmatmul.mubr.f32.gmra.mxu0 %v7295
    %v7297 = vpop.f32.mrf.mxu0
    %v7298 = vadd.f32 %v7223, %v7297
    %v7299 = vpop.f32.mrf.mxu0
    %7300 = vdwg.mxu0
    %v7301 = vadd.f32 %v6810, %v7298
    %v7302 = vtanh.pop %v7301
    %v7303 = vxor.u32 %v7301, 2147483648
    %v7304 = vmul.f32 %v7303, 1.442695
    %v7305 = vpow.pop %v7304
    %v7306 = vadd.f32 %v7305, 1.0
    %v7307 = vrcp.pop %v7306
    %v7308 = vmul.f32 1.0, %v7307
    %v7309 = vsel %vm4202, %v7302, %v7308
    %v7310 = vmul.f32 %v7309, %v6799
    %7312 = vrot.lane.b32.xlu0 %v7309, 64
    %v7313 = vpop.permute.xlu0 %7312
    %v7315 = vmul.f32 %v7309, %v7313
    %7317 = vrot.lane.b32.xlu0 %v7315, 32
    %v7318 = vpop.permute.xlu0 %7317
    %v7320 = vadd.f32 %v7310, %v7318
    %v7321 = vtanh.pop %v7320
    %7323 = vrot.lane.b32.xlu0 %v7321, 64
    %v7324 = vpop.permute.xlu0 %7323
    %v7326 = vmul.f32 %v7309, %v7324
    %v7327 = vrot.slane %v4184, 6
    %v7329 = vrot.slane %v4191, 5
    %v7331 = vsel %vm4206, %v7327, %v7329
    %7333 = vrot.lane.b32.xlu0 %v7326, 32
    %v7334 = vpop.permute.xlu0 %7333
    %v7335 = vsel %vm4208, %v7334, 0
    %7337 = vmatprep.subr.mxu0 0.0
    %7338 = vmatpush1.msra.mxu0 0.0
    %7339 = vmatprep.subr.mxu0 0.0
    %7340 = vmatpush1.msra.mxu0 0.0
    %7341 = vmatprep.subr.mxu0 0.0
    %7342 = vmatpush1.msra.mxu0 0.0
    %7343 = vmatprep.subr.mxu0 0.0
    %7344 = vmatpush1.msra.mxu0 0.0
    %7345 = vmatprep.subr.mxu0 0.0
    %7346 = vmatpush1.msra.mxu0 0.0
    %7347 = vmatprep.subr.mxu0 0.0
    %7348 = vmatpush1.msra.mxu0 0.0
    %7349 = vmatprep.subr.mxu0 0.0
    %7350 = vmatpush1.msra.mxu0 0.0
    %7351 = vmatprep.subr.mxu0 0.0
    %7352 = vmatpush1.msra.mxu0 0.0
    %7353 = vmatprep.subr.mxu0 0.0
    %7354 = vmatpush1.msra.mxu0 0.0
    %7355 = vmatprep.subr.mxu0 0.0
    %7356 = vmatpush1.msra.mxu0 0.0
    %7357 = vmatprep.subr.mxu0 0.0
    %7358 = vmatpush1.msra.mxu0 0.0
    %7359 = vmatprep.subr.mxu0 0.0
    %7360 = vmatpush1.msra.mxu0 0.0
    %7361 = vmatprep.subr.mxu0 0.0
    %v7362 = vand.u32 %v4197, 4294901760
    %7363 = vmatpush1.msra.mxu0 %v7362
    %7364 = vmatprep.subr.mxu0 0.0
    %v7365 = vand.u32 %v4196, 4294901760
    %7366 = vmatpush1.msra.mxu0 %v7365
    %7367 = vmatprep.subr.mxu0 0.0
    %v7368 = vand.u32 %v4195, 4294901760
    %7369 = vmatpush1.msra.mxu0 %v7368
    %7370 = vmatprep.subr.mxu0 0.0
    %v7371 = vand.u32 %v4194, 4294901760
    %7372 = vmatpush1.msra.mxu0 %v7371
    %7373 = vmatprep.subr.mxu0 0.0
    %7374 = vmatpush2.msra.mxu0 0.0
    %7375 = vmatprep.subr.mxu0 0.0
    %7376 = vmatpush2.msra.mxu0 0.0
    %7377 = vmatprep.subr.mxu0 0.0
    %7378 = vmatpush2.msra.mxu0 0.0
    %7379 = vmatprep.subr.mxu0 0.0
    %7380 = vmatpush2.msra.mxu0 0.0
    %7381 = vmatprep.subr.mxu0 0.0
    %7382 = vmatpush2.msra.mxu0 0.0
    %7383 = vmatprep.subr.mxu0 0.0
    %7384 = vmatpush2.msra.mxu0 0.0
    %7385 = vmatprep.subr.mxu0 0.0
    %7386 = vmatpush2.msra.mxu0 0.0
    %7387 = vmatprep.subr.mxu0 0.0
    %7388 = vmatpush2.msra.mxu0 0.0
    %7389 = vmatprep.subr.mxu0 0.0
    %7390 = vmatpush2.msra.mxu0 0.0
    %7391 = vmatprep.subr.mxu0 0.0
    %7392 = vmatpush2.msra.mxu0 0.0
    %7393 = vmatprep.subr.mxu0 0.0
    %7394 = vmatpush2.msra.mxu0 0.0
    %7395 = vmatprep.subr.mxu0 0.0
    %7396 = vmatpush2.msra.mxu0 0.0
    %7397 = vmatprep.subr.mxu0 0.0
    %7398 = vmatpush2.msra.mxu0 0.0
    %7399 = vmatprep.subr.mxu0 0.0
    %7400 = vmatpush2.msra.mxu0 0.0
    %7401 = vmatprep.subr.mxu0 0.0
    %7402 = vmatpush2.msra.mxu0 0.0
    %7403 = vmatprep.subr.mxu0 0.0
    %7404 = vmatpush2.msra.mxu0 0.0
    %7405 = vmatprep.mubr.f32.mxu0 0.0
    %v7406 = vand.u32 %v7335, 4294901760
    %v7407 = vsub.f32 %v7335, %v7406
    %v7408 = vand.u32 %v7407, 4294901760
    %v7409 = vsub.f32 %v7407, %v7408
    %v7410 = vand.u32 %v7409, 4294901760
    %7411 = vmatmul.mubr.f32.gmra.mxu0 %v7410
    %v7412 = vpop.f32.mrf.mxu0
    %v7413 = vadd.f32 0.0, %v7412
    %v7414 = vpop.f32.mrf.mxu0
    %7415 = vdwg.mxu0
    %7416 = vmatprep.subr.mxu0 0.0
    %7417 = vmatpush1.msra.mxu0 0.0
    %7418 = vmatprep.subr.mxu0 0.0
    %7419 = vmatpush1.msra.mxu0 0.0
    %7420 = vmatprep.subr.mxu0 0.0
    %7421 = vmatpush1.msra.mxu0 0.0
    %7422 = vmatprep.subr.mxu0 0.0
    %7423 = vmatpush1.msra.mxu0 0.0
    %7424 = vmatprep.subr.mxu0 0.0
    %7425 = vmatpush1.msra.mxu0 0.0
    %7426 = vmatprep.subr.mxu0 0.0
    %7427 = vmatpush1.msra.mxu0 0.0
    %7428 = vmatprep.subr.mxu0 0.0
    %7429 = vmatpush1.msra.mxu0 0.0
    %7430 = vmatprep.subr.mxu0 0.0
    %7431 = vmatpush1.msra.mxu0 0.0
    %7432 = vmatprep.subr.mxu0 0.0
    %7433 = vmatpush1.msra.mxu0 0.0
    %7434 = vmatprep.subr.mxu0 0.0
    %7435 = vmatpush1.msra.mxu0 0.0
    %7436 = vmatprep.subr.mxu0 0.0
    %7437 = vmatpush1.msra.mxu0 0.0
    %7438 = vmatprep.subr.mxu0 0.0
    %7439 = vmatpush1.msra.mxu0 0.0
    %7440 = vmatprep.subr.mxu0 0.0
    %v7441 = vand.u32 %v4197, 4294901760
    %v7442 = vsub.f32 %v4197, %v7441
    %v7443 = vand.u32 %v7442, 4294901760
    %v7444 = vsub.f32 %v7442, %v7443
    %v7445 = vand.u32 %v7444, 4294901760
    %7446 = vmatpush1.msra.mxu0 %v7445
    %7447 = vmatprep.subr.mxu0 0.0
    %v7448 = vand.u32 %v4196, 4294901760
    %v7449 = vsub.f32 %v4196, %v7448
    %v7450 = vand.u32 %v7449, 4294901760
    %v7451 = vsub.f32 %v7449, %v7450
    %v7452 = vand.u32 %v7451, 4294901760
    %7453 = vmatpush1.msra.mxu0 %v7452
    %7454 = vmatprep.subr.mxu0 0.0
    %v7455 = vand.u32 %v4195, 4294901760
    %v7456 = vsub.f32 %v4195, %v7455
    %v7457 = vand.u32 %v7456, 4294901760
    %v7458 = vsub.f32 %v7456, %v7457
    %v7459 = vand.u32 %v7458, 4294901760
    %7460 = vmatpush1.msra.mxu0 %v7459
    %7461 = vmatprep.subr.mxu0 0.0
    %v7462 = vand.u32 %v4194, 4294901760
    %v7463 = vsub.f32 %v4194, %v7462
    %v7464 = vand.u32 %v7463, 4294901760
    %v7465 = vsub.f32 %v7463, %v7464
    %v7466 = vand.u32 %v7465, 4294901760
    %7467 = vmatpush1.msra.mxu0 %v7466
    %7468 = vmatprep.subr.mxu0 0.0
    %7469 = vmatpush2.msra.mxu0 0.0
    %7470 = vmatprep.subr.mxu0 0.0
    %7471 = vmatpush2.msra.mxu0 0.0
    %7472 = vmatprep.subr.mxu0 0.0
    %7473 = vmatpush2.msra.mxu0 0.0
    %7474 = vmatprep.subr.mxu0 0.0
    %7475 = vmatpush2.msra.mxu0 0.0
    %7476 = vmatprep.subr.mxu0 0.0
    %7477 = vmatpush2.msra.mxu0 0.0
    %7478 = vmatprep.subr.mxu0 0.0
    %7479 = vmatpush2.msra.mxu0 0.0
    %7480 = vmatprep.subr.mxu0 0.0
    %7481 = vmatpush2.msra.mxu0 0.0
    %7482 = vmatprep.subr.mxu0 0.0
    %7483 = vmatpush2.msra.mxu0 0.0
    %7484 = vmatprep.subr.mxu0 0.0
    %7485 = vmatpush2.msra.mxu0 0.0
    %7486 = vmatprep.subr.mxu0 0.0
    %7487 = vmatpush2.msra.mxu0 0.0
    %7488 = vmatprep.subr.mxu0 0.0
    %7489 = vmatpush2.msra.mxu0 0.0
    %7490 = vmatprep.subr.mxu0 0.0
    %7491 = vmatpush2.msra.mxu0 0.0
    %7492 = vmatprep.subr.mxu0 0.0
    %7493 = vmatpush2.msra.mxu0 0.0
    %7494 = vmatprep.subr.mxu0 0.0
    %7495 = vmatpush2.msra.mxu0 0.0
    %7496 = vmatprep.subr.mxu0 0.0
    %7497 = vmatpush2.msra.mxu0 0.0
    %7498 = vmatprep.subr.mxu0 0.0
    %7499 = vmatpush2.msra.mxu0 0.0
    %7500 = vmatprep.mubr.f32.mxu0 0.0
    %v7501 = vand.u32 %v7335, 4294901760
    %7502 = vmatmul.mubr.f32.gmra.mxu0 %v7501
    %v7503 = vpop.f32.mrf.mxu0
    %v7504 = vadd.f32 %v7413, %v7503
    %v7505 = vpop.f32.mrf.mxu0
    %7506 = vdwg.mxu0
    %7507 = vmatprep.subr.mxu0 0.0
    %7508 = vmatpush1.msra.mxu0 0.0
    %7509 = vmatprep.subr.mxu0 0.0
    %7510 = vmatpush1.msra.mxu0 0.0
    %7511 = vmatprep.subr.mxu0 0.0
    %7512 = vmatpush1.msra.mxu0 0.0
    %7513 = vmatprep.subr.mxu0 0.0
    %7514 = vmatpush1.msra.mxu0 0.0
    %7515 = vmatprep.subr.mxu0 0.0
    %7516 = vmatpush1.msra.mxu0 0.0
    %7517 = vmatprep.subr.mxu0 0.0
    %7518 = vmatpush1.msra.mxu0 0.0
    %7519 = vmatprep.subr.mxu0 0.0
    %7520 = vmatpush1.msra.mxu0 0.0
    %7521 = vmatprep.subr.mxu0 0.0
    %7522 = vmatpush1.msra.mxu0 0.0
    %7523 = vmatprep.subr.mxu0 0.0
    %7524 = vmatpush1.msra.mxu0 0.0
    %7525 = vmatprep.subr.mxu0 0.0
    %7526 = vmatpush1.msra.mxu0 0.0
    %7527 = vmatprep.subr.mxu0 0.0
    %7528 = vmatpush1.msra.mxu0 0.0
    %7529 = vmatprep.subr.mxu0 0.0
    %7530 = vmatpush1.msra.mxu0 0.0
    %7531 = vmatprep.subr.mxu0 0.0
    %v7532 = vand.u32 %v4197, 4294901760
    %v7533 = vsub.f32 %v4197, %v7532
    %7534 = vmatpush1.msra.mxu0 %v7533
    %7535 = vmatprep.subr.mxu0 0.0
    %v7536 = vand.u32 %v4196, 4294901760
    %v7537 = vsub.f32 %v4196, %v7536
    %7538 = vmatpush1.msra.mxu0 %v7537
    %7539 = vmatprep.subr.mxu0 0.0
    %v7540 = vand.u32 %v4195, 4294901760
    %v7541 = vsub.f32 %v4195, %v7540
    %7542 = vmatpush1.msra.mxu0 %v7541
    %7543 = vmatprep.subr.mxu0 0.0
    %v7544 = vand.u32 %v4194, 4294901760
    %v7545 = vsub.f32 %v4194, %v7544
    %7546 = vmatpush1.msra.mxu0 %v7545
    %7547 = vmatprep.subr.mxu0 0.0
    %7548 = vmatpush2.msra.mxu0 0.0
    %7549 = vmatprep.subr.mxu0 0.0
    %7550 = vmatpush2.msra.mxu0 0.0
    %7551 = vmatprep.subr.mxu0 0.0
    %7552 = vmatpush2.msra.mxu0 0.0
    %7553 = vmatprep.subr.mxu0 0.0
    %7554 = vmatpush2.msra.mxu0 0.0
    %7555 = vmatprep.subr.mxu0 0.0
    %7556 = vmatpush2.msra.mxu0 0.0
    %7557 = vmatprep.subr.mxu0 0.0
    %7558 = vmatpush2.msra.mxu0 0.0
    %7559 = vmatprep.subr.mxu0 0.0
    %7560 = vmatpush2.msra.mxu0 0.0
    %7561 = vmatprep.subr.mxu0 0.0
    %7562 = vmatpush2.msra.mxu0 0.0
    %7563 = vmatprep.subr.mxu0 0.0
    %7564 = vmatpush2.msra.mxu0 0.0
    %7565 = vmatprep.subr.mxu0 0.0
    %7566 = vmatpush2.msra.mxu0 0.0
    %7567 = vmatprep.subr.mxu0 0.0
    %7568 = vmatpush2.msra.mxu0 0.0
    %7569 = vmatprep.subr.mxu0 0.0
    %7570 = vmatpush2.msra.mxu0 0.0
    %7571 = vmatprep.subr.mxu0 0.0
    %7572 = vmatpush2.msra.mxu0 0.0
    %7573 = vmatprep.subr.mxu0 0.0
    %7574 = vmatpush2.msra.mxu0 0.0
    %7575 = vmatprep.subr.mxu0 0.0
    %7576 = vmatpush2.msra.mxu0 0.0
    %7577 = vmatprep.subr.mxu0 0.0
    %7578 = vmatpush2.msra.mxu0 0.0
    %7579 = vmatprep.mubr.f32.mxu0 0.0
    %v7580 = vand.u32 %v7335, 4294901760
    %v7581 = vsub.f32 %v7335, %v7580
    %7582 = vmatmul.mubr.f32.gmra.mxu0 %v7581
    %v7583 = vpop.f32.mrf.mxu0
    %v7584 = vadd.f32 %v7504, %v7583
    %v7585 = vpop.f32.mrf.mxu0
    %7586 = vdwg.mxu0
    %7587 = vmatprep.subr.mxu0 0.0
    %7588 = vmatpush1.msra.mxu0 0.0
    %7589 = vmatprep.subr.mxu0 0.0
    %7590 = vmatpush1.msra.mxu0 0.0
    %7591 = vmatprep.subr.mxu0 0.0
    %7592 = vmatpush1.msra.mxu0 0.0
    %7593 = vmatprep.subr.mxu0 0.0
    %7594 = vmatpush1.msra.mxu0 0.0
    %7595 = vmatprep.subr.mxu0 0.0
    %7596 = vmatpush1.msra.mxu0 0.0
    %7597 = vmatprep.subr.mxu0 0.0
    %7598 = vmatpush1.msra.mxu0 0.0
    %7599 = vmatprep.subr.mxu0 0.0
    %7600 = vmatpush1.msra.mxu0 0.0
    %7601 = vmatprep.subr.mxu0 0.0
    %7602 = vmatpush1.msra.mxu0 0.0
    %7603 = vmatprep.subr.mxu0 0.0
    %7604 = vmatpush1.msra.mxu0 0.0
    %7605 = vmatprep.subr.mxu0 0.0
    %7606 = vmatpush1.msra.mxu0 0.0
    %7607 = vmatprep.subr.mxu0 0.0
    %7608 = vmatpush1.msra.mxu0 0.0
    %7609 = vmatprep.subr.mxu0 0.0
    %7610 = vmatpush1.msra.mxu0 0.0
    %7611 = vmatprep.subr.mxu0 0.0
    %v7612 = vand.u32 %v4197, 4294901760
    %7613 = vmatpush1.msra.mxu0 %v7612
    %7614 = vmatprep.subr.mxu0 0.0
    %v7615 = vand.u32 %v4196, 4294901760
    %7616 = vmatpush1.msra.mxu0 %v7615
    %7617 = vmatprep.subr.mxu0 0.0
    %v7618 = vand.u32 %v4195, 4294901760
    %7619 = vmatpush1.msra.mxu0 %v7618
    %7620 = vmatprep.subr.mxu0 0.0
    %v7621 = vand.u32 %v4194, 4294901760
    %7622 = vmatpush1.msra.mxu0 %v7621
    %7623 = vmatprep.subr.mxu0 0.0
    %7624 = vmatpush2.msra.mxu0 0.0
    %7625 = vmatprep.subr.mxu0 0.0
    %7626 = vmatpush2.msra.mxu0 0.0
    %7627 = vmatprep.subr.mxu0 0.0
    %7628 = vmatpush2.msra.mxu0 0.0
    %7629 = vmatprep.subr.mxu0 0.0
    %7630 = vmatpush2.msra.mxu0 0.0
    %7631 = vmatprep.subr.mxu0 0.0
    %7632 = vmatpush2.msra.mxu0 0.0
    %7633 = vmatprep.subr.mxu0 0.0
    %7634 = vmatpush2.msra.mxu0 0.0
    %7635 = vmatprep.subr.mxu0 0.0
    %7636 = vmatpush2.msra.mxu0 0.0
    %7637 = vmatprep.subr.mxu0 0.0
    %7638 = vmatpush2.msra.mxu0 0.0
    %7639 = vmatprep.subr.mxu0 0.0
    %7640 = vmatpush2.msra.mxu0 0.0
    %7641 = vmatprep.subr.mxu0 0.0
    %7642 = vmatpush2.msra.mxu0 0.0
    %7643 = vmatprep.subr.mxu0 0.0
    %7644 = vmatpush2.msra.mxu0 0.0
    %7645 = vmatprep.subr.mxu0 0.0
    %7646 = vmatpush2.msra.mxu0 0.0
    %7647 = vmatprep.subr.mxu0 0.0
    %7648 = vmatpush2.msra.mxu0 0.0
    %7649 = vmatprep.subr.mxu0 0.0
    %7650 = vmatpush2.msra.mxu0 0.0
    %7651 = vmatprep.subr.mxu0 0.0
    %7652 = vmatpush2.msra.mxu0 0.0
    %7653 = vmatprep.subr.mxu0 0.0
    %7654 = vmatpush2.msra.mxu0 0.0
    %7655 = vmatprep.mubr.f32.mxu0 0.0
    %v7656 = vand.u32 %v7335, 4294901760
    %v7657 = vsub.f32 %v7335, %v7656
    %v7658 = vand.u32 %v7657, 4294901760
    %7659 = vmatmul.mubr.f32.gmra.mxu0 %v7658
    %v7660 = vpop.f32.mrf.mxu0
    %v7661 = vadd.f32 %v7584, %v7660
    %v7662 = vpop.f32.mrf.mxu0
    %7663 = vdwg.mxu0
    %7664 = vmatprep.subr.mxu0 0.0
    %7665 = vmatpush1.msra.mxu0 0.0
    %7666 = vmatprep.subr.mxu0 0.0
    %7667 = vmatpush1.msra.mxu0 0.0
    %7668 = vmatprep.subr.mxu0 0.0
    %7669 = vmatpush1.msra.mxu0 0.0
    %7670 = vmatprep.subr.mxu0 0.0
    %7671 = vmatpush1.msra.mxu0 0.0
    %7672 = vmatprep.subr.mxu0 0.0
    %7673 = vmatpush1.msra.mxu0 0.0
    %7674 = vmatprep.subr.mxu0 0.0
    %7675 = vmatpush1.msra.mxu0 0.0
    %7676 = vmatprep.subr.mxu0 0.0
    %7677 = vmatpush1.msra.mxu0 0.0
    %7678 = vmatprep.subr.mxu0 0.0
    %7679 = vmatpush1.msra.mxu0 0.0
    %7680 = vmatprep.subr.mxu0 0.0
    %7681 = vmatpush1.msra.mxu0 0.0
    %7682 = vmatprep.subr.mxu0 0.0
    %7683 = vmatpush1.msra.mxu0 0.0
    %7684 = vmatprep.subr.mxu0 0.0
    %7685 = vmatpush1.msra.mxu0 0.0
    %7686 = vmatprep.subr.mxu0 0.0
    %7687 = vmatpush1.msra.mxu0 0.0
    %7688 = vmatprep.subr.mxu0 0.0
    %v7689 = vand.u32 %v4197, 4294901760
    %v7690 = vsub.f32 %v4197, %v7689
    %v7691 = vand.u32 %v7690, 4294901760
    %7692 = vmatpush1.msra.mxu0 %v7691
    %7693 = vmatprep.subr.mxu0 0.0
    %v7694 = vand.u32 %v4196, 4294901760
    %v7695 = vsub.f32 %v4196, %v7694
    %v7696 = vand.u32 %v7695, 4294901760
    %7697 = vmatpush1.msra.mxu0 %v7696
    %7698 = vmatprep.subr.mxu0 0.0
    %v7699 = vand.u32 %v4195, 4294901760
    %v7700 = vsub.f32 %v4195, %v7699
    %v7701 = vand.u32 %v7700, 4294901760
    %7702 = vmatpush1.msra.mxu0 %v7701
    %7703 = vmatprep.subr.mxu0 0.0
    %v7704 = vand.u32 %v4194, 4294901760
    %v7705 = vsub.f32 %v4194, %v7704
    %v7706 = vand.u32 %v7705, 4294901760
    %7707 = vmatpush1.msra.mxu0 %v7706
    %7708 = vmatprep.subr.mxu0 0.0
    %7709 = vmatpush2.msra.mxu0 0.0
    %7710 = vmatprep.subr.mxu0 0.0
    %7711 = vmatpush2.msra.mxu0 0.0
    %7712 = vmatprep.subr.mxu0 0.0
    %7713 = vmatpush2.msra.mxu0 0.0
    %7714 = vmatprep.subr.mxu0 0.0
    %7715 = vmatpush2.msra.mxu0 0.0
    %7716 = vmatprep.subr.mxu0 0.0
    %7717 = vmatpush2.msra.mxu0 0.0
    %7718 = vmatprep.subr.mxu0 0.0
    %7719 = vmatpush2.msra.mxu0 0.0
    %7720 = vmatprep.subr.mxu0 0.0
    %7721 = vmatpush2.msra.mxu0 0.0
    %7722 = vmatprep.subr.mxu0 0.0
    %7723 = vmatpush2.msra.mxu0 0.0
    %7724 = vmatprep.subr.mxu0 0.0
    %7725 = vmatpush2.msra.mxu0 0.0
    %7726 = vmatprep.subr.mxu0 0.0
    %7727 = vmatpush2.msra.mxu0 0.0
    %7728 = vmatprep.subr.mxu0 0.0
    %7729 = vmatpush2.msra.mxu0 0.0
    %7730 = vmatprep.subr.mxu0 0.0
    %7731 = vmatpush2.msra.mxu0 0.0
    %7732 = vmatprep.subr.mxu0 0.0
    %7733 = vmatpush2.msra.mxu0 0.0
    %7734 = vmatprep.subr.mxu0 0.0
    %7735 = vmatpush2.msra.mxu0 0.0
    %7736 = vmatprep.subr.mxu0 0.0
    %7737 = vmatpush2.msra.mxu0 0.0
    %7738 = vmatprep.subr.mxu0 0.0
    %7739 = vmatpush2.msra.mxu0 0.0
    %7740 = vmatprep.mubr.f32.mxu0 0.0
    %v7741 = vand.u32 %v7335, 4294901760
    %7742 = vmatmul.mubr.f32.gmra.mxu0 %v7741
    %v7743 = vpop.f32.mrf.mxu0
    %v7744 = vadd.f32 %v7661, %v7743
    %v7745 = vpop.f32.mrf.mxu0
    %7746 = vdwg.mxu0
    %7747 = vmatprep.subr.mxu0 0.0
    %7748 = vmatpush1.msra.mxu0 0.0
    %7749 = vmatprep.subr.mxu0 0.0
    %7750 = vmatpush1.msra.mxu0 0.0
    %7751 = vmatprep.subr.mxu0 0.0
    %7752 = vmatpush1.msra.mxu0 0.0
    %7753 = vmatprep.subr.mxu0 0.0
    %7754 = vmatpush1.msra.mxu0 0.0
    %7755 = vmatprep.subr.mxu0 0.0
    %7756 = vmatpush1.msra.mxu0 0.0
    %7757 = vmatprep.subr.mxu0 0.0
    %7758 = vmatpush1.msra.mxu0 0.0
    %7759 = vmatprep.subr.mxu0 0.0
    %7760 = vmatpush1.msra.mxu0 0.0
    %7761 = vmatprep.subr.mxu0 0.0
    %7762 = vmatpush1.msra.mxu0 0.0
    %7763 = vmatprep.subr.mxu0 0.0
    %7764 = vmatpush1.msra.mxu0 0.0
    %7765 = vmatprep.subr.mxu0 0.0
    %7766 = vmatpush1.msra.mxu0 0.0
    %7767 = vmatprep.subr.mxu0 0.0
    %7768 = vmatpush1.msra.mxu0 0.0
    %7769 = vmatprep.subr.mxu0 0.0
    %7770 = vmatpush1.msra.mxu0 0.0
    %7771 = vmatprep.subr.mxu0 0.0
    %v7772 = vand.u32 %v4197, 4294901760
    %7773 = vmatpush1.msra.mxu0 %v7772
    %7774 = vmatprep.subr.mxu0 0.0
    %v7775 = vand.u32 %v4196, 4294901760
    %7776 = vmatpush1.msra.mxu0 %v7775
    %7777 = vmatprep.subr.mxu0 0.0
    %v7778 = vand.u32 %v4195, 4294901760
    %7779 = vmatpush1.msra.mxu0 %v7778
    %7780 = vmatprep.subr.mxu0 0.0
    %v7781 = vand.u32 %v4194, 4294901760
    %7782 = vmatpush1.msra.mxu0 %v7781
    %7783 = vmatprep.subr.mxu0 0.0
    %7784 = vmatpush2.msra.mxu0 0.0
    %7785 = vmatprep.subr.mxu0 0.0
    %7786 = vmatpush2.msra.mxu0 0.0
    %7787 = vmatprep.subr.mxu0 0.0
    %7788 = vmatpush2.msra.mxu0 0.0
    %7789 = vmatprep.subr.mxu0 0.0
    %7790 = vmatpush2.msra.mxu0 0.0
    %7791 = vmatprep.subr.mxu0 0.0
    %7792 = vmatpush2.msra.mxu0 0.0
    %7793 = vmatprep.subr.mxu0 0.0
    %7794 = vmatpush2.msra.mxu0 0.0
    %7795 = vmatprep.subr.mxu0 0.0
    %7796 = vmatpush2.msra.mxu0 0.0
    %7797 = vmatprep.subr.mxu0 0.0
    %7798 = vmatpush2.msra.mxu0 0.0
    %7799 = vmatprep.subr.mxu0 0.0
    %7800 = vmatpush2.msra.mxu0 0.0
    %7801 = vmatprep.subr.mxu0 0.0
    %7802 = vmatpush2.msra.mxu0 0.0
    %7803 = vmatprep.subr.mxu0 0.0
    %7804 = vmatpush2.msra.mxu0 0.0
    %7805 = vmatprep.subr.mxu0 0.0
    %7806 = vmatpush2.msra.mxu0 0.0
    %7807 = vmatprep.subr.mxu0 0.0
    %7808 = vmatpush2.msra.mxu0 0.0
    %7809 = vmatprep.subr.mxu0 0.0
    %7810 = vmatpush2.msra.mxu0 0.0
    %7811 = vmatprep.subr.mxu0 0.0
    %7812 = vmatpush2.msra.mxu0 0.0
    %7813 = vmatprep.subr.mxu0 0.0
    %7814 = vmatpush2.msra.mxu0 0.0
    %7815 = vmatprep.mubr.f32.mxu0 0.0
    %v7816 = vand.u32 %v7335, 4294901760
    %7817 = vmatmul.mubr.f32.gmra.mxu0 %v7816
    %v7818 = vpop.f32.mrf.mxu0
    %v7819 = vadd.f32 %v7744, %v7818
    %v7820 = vpop.f32.mrf.mxu0
    %7821 = vdwg.mxu0
    %v7822 = vadd.f32 %v7331, %v7819
    %v7823 = vtanh.pop %v7822
    %v7824 = vxor.u32 %v7822, 2147483648
    %v7825 = vmul.f32 %v7824, 1.442695
    %v7826 = vpow.pop %v7825
    %v7827 = vadd.f32 %v7826, 1.0
    %v7828 = vrcp.pop %v7827
    %v7829 = vmul.f32 1.0, %v7828
    %v7830 = vsel %vm4202, %v7823, %v7829
    %v7831 = vmul.f32 %v7830, %v7320
    %7833 = vrot.lane.b32.xlu0 %v7830, 64
    %v7834 = vpop.permute.xlu0 %7833
    %v7836 = vmul.f32 %v7830, %v7834
    %7838 = vrot.lane.b32.xlu0 %v7836, 32
    %v7839 = vpop.permute.xlu0 %7838
    %v7841 = vadd.f32 %v7831, %v7839
    %v7842 = vtanh.pop %v7841
    %7844 = vrot.lane.b32.xlu0 %v7842, 64
    %v7845 = vpop.permute.xlu0 %7844
    %v7847 = vmul.f32 %v7830, %v7845
    %v7848 = vrot.slane %v4184, 7
    %v7850 = vrot.slane %v4191, 6
    %v7852 = vsel %vm4206, %v7848, %v7850
    %7854 = vrot.lane.b32.xlu0 %v7847, 32
    %v7855 = vpop.permute.xlu0 %7854
    %v7856 = vsel %vm4208, %v7855, 0
    %7858 = vmatprep.subr.mxu0 0.0
    %7859 = vmatpush1.msra.mxu0 0.0
    %7860 = vmatprep.subr.mxu0 0.0
    %7861 = vmatpush1.msra.mxu0 0.0
    %7862 = vmatprep.subr.mxu0 0.0
    %7863 = vmatpush1.msra.mxu0 0.0
    %7864 = vmatprep.subr.mxu0 0.0
    %7865 = vmatpush1.msra.mxu0 0.0
    %7866 = vmatprep.subr.mxu0 0.0
    %7867 = vmatpush1.msra.mxu0 0.0
    %7868 = vmatprep.subr.mxu0 0.0
    %7869 = vmatpush1.msra.mxu0 0.0
    %7870 = vmatprep.subr.mxu0 0.0
    %7871 = vmatpush1.msra.mxu0 0.0
    %7872 = vmatprep.subr.mxu0 0.0
    %7873 = vmatpush1.msra.mxu0 0.0
    %7874 = vmatprep.subr.mxu0 0.0
    %7875 = vmatpush1.msra.mxu0 0.0
    %7876 = vmatprep.subr.mxu0 0.0
    %7877 = vmatpush1.msra.mxu0 0.0
    %7878 = vmatprep.subr.mxu0 0.0
    %7879 = vmatpush1.msra.mxu0 0.0
    %7880 = vmatprep.subr.mxu0 0.0
    %7881 = vmatpush1.msra.mxu0 0.0
    %7882 = vmatprep.subr.mxu0 0.0
    %v7883 = vand.u32 %v4197, 4294901760
    %7884 = vmatpush1.msra.mxu0 %v7883
    %7885 = vmatprep.subr.mxu0 0.0
    %v7886 = vand.u32 %v4196, 4294901760
    %7887 = vmatpush1.msra.mxu0 %v7886
    %7888 = vmatprep.subr.mxu0 0.0
    %v7889 = vand.u32 %v4195, 4294901760
    %7890 = vmatpush1.msra.mxu0 %v7889
    %7891 = vmatprep.subr.mxu0 0.0
    %v7892 = vand.u32 %v4194, 4294901760
    %7893 = vmatpush1.msra.mxu0 %v7892
    %7894 = vmatprep.subr.mxu0 0.0
    %7895 = vmatpush2.msra.mxu0 0.0
    %7896 = vmatprep.subr.mxu0 0.0
    %7897 = vmatpush2.msra.mxu0 0.0
    %7898 = vmatprep.subr.mxu0 0.0
    %7899 = vmatpush2.msra.mxu0 0.0
    %7900 = vmatprep.subr.mxu0 0.0
    %7901 = vmatpush2.msra.mxu0 0.0
    %7902 = vmatprep.subr.mxu0 0.0
    %7903 = vmatpush2.msra.mxu0 0.0
    %7904 = vmatprep.subr.mxu0 0.0
    %7905 = vmatpush2.msra.mxu0 0.0
    %7906 = vmatprep.subr.mxu0 0.0
    %7907 = vmatpush2.msra.mxu0 0.0
    %7908 = vmatprep.subr.mxu0 0.0
    %7909 = vmatpush2.msra.mxu0 0.0
    %7910 = vmatprep.subr.mxu0 0.0
    %7911 = vmatpush2.msra.mxu0 0.0
    %7912 = vmatprep.subr.mxu0 0.0
    %7913 = vmatpush2.msra.mxu0 0.0
    %7914 = vmatprep.subr.mxu0 0.0
    %7915 = vmatpush2.msra.mxu0 0.0
    %7916 = vmatprep.subr.mxu0 0.0
    %7917 = vmatpush2.msra.mxu0 0.0
    %7918 = vmatprep.subr.mxu0 0.0
    %7919 = vmatpush2.msra.mxu0 0.0
    %7920 = vmatprep.subr.mxu0 0.0
    %7921 = vmatpush2.msra.mxu0 0.0
    %7922 = vmatprep.subr.mxu0 0.0
    %7923 = vmatpush2.msra.mxu0 0.0
    %7924 = vmatprep.subr.mxu0 0.0
    %7925 = vmatpush2.msra.mxu0 0.0
    %7926 = vmatprep.mubr.f32.mxu0 0.0
    %v7927 = vand.u32 %v7856, 4294901760
    %v7928 = vsub.f32 %v7856, %v7927
    %v7929 = vand.u32 %v7928, 4294901760
    %v7930 = vsub.f32 %v7928, %v7929
    %v7931 = vand.u32 %v7930, 4294901760
    %7932 = vmatmul.mubr.f32.gmra.mxu0 %v7931
    %v7933 = vpop.f32.mrf.mxu0
    %v7934 = vadd.f32 0.0, %v7933
    %v7935 = vpop.f32.mrf.mxu0
    %7936 = vdwg.mxu0
    %7937 = vmatprep.subr.mxu0 0.0
    %7938 = vmatpush1.msra.mxu0 0.0
    %7939 = vmatprep.subr.mxu0 0.0
    %7940 = vmatpush1.msra.mxu0 0.0
    %7941 = vmatprep.subr.mxu0 0.0
    %7942 = vmatpush1.msra.mxu0 0.0
    %7943 = vmatprep.subr.mxu0 0.0
    %7944 = vmatpush1.msra.mxu0 0.0
    %7945 = vmatprep.subr.mxu0 0.0
    %7946 = vmatpush1.msra.mxu0 0.0
    %7947 = vmatprep.subr.mxu0 0.0
    %7948 = vmatpush1.msra.mxu0 0.0
    %7949 = vmatprep.subr.mxu0 0.0
    %7950 = vmatpush1.msra.mxu0 0.0
    %7951 = vmatprep.subr.mxu0 0.0
    %7952 = vmatpush1.msra.mxu0 0.0
    %7953 = vmatprep.subr.mxu0 0.0
    %7954 = vmatpush1.msra.mxu0 0.0
    %7955 = vmatprep.subr.mxu0 0.0
    %7956 = vmatpush1.msra.mxu0 0.0
    %7957 = vmatprep.subr.mxu0 0.0
    %7958 = vmatpush1.msra.mxu0 0.0
    %7959 = vmatprep.subr.mxu0 0.0
    %7960 = vmatpush1.msra.mxu0 0.0
    %7961 = vmatprep.subr.mxu0 0.0
    %v7962 = vand.u32 %v4197, 4294901760
    %v7963 = vsub.f32 %v4197, %v7962
    %v7964 = vand.u32 %v7963, 4294901760
    %v7965 = vsub.f32 %v7963, %v7964
    %v7966 = vand.u32 %v7965, 4294901760
    %7967 = vmatpush1.msra.mxu0 %v7966
    %7968 = vmatprep.subr.mxu0 0.0
    %v7969 = vand.u32 %v4196, 4294901760
    %v7970 = vsub.f32 %v4196, %v7969
    %v7971 = vand.u32 %v7970, 4294901760
    %v7972 = vsub.f32 %v7970, %v7971
    %v7973 = vand.u32 %v7972, 4294901760
    %7974 = vmatpush1.msra.mxu0 %v7973
    %7975 = vmatprep.subr.mxu0 0.0
    %v7976 = vand.u32 %v4195, 4294901760
    %v7977 = vsub.f32 %v4195, %v7976
    %v7978 = vand.u32 %v7977, 4294901760
    %v7979 = vsub.f32 %v7977, %v7978
    %v7980 = vand.u32 %v7979, 4294901760
    %7981 = vmatpush1.msra.mxu0 %v7980
    %7982 = vmatprep.subr.mxu0 0.0
    %v7983 = vand.u32 %v4194, 4294901760
    %v7984 = vsub.f32 %v4194, %v7983
    %v7985 = vand.u32 %v7984, 4294901760
    %v7986 = vsub.f32 %v7984, %v7985
    %v7987 = vand.u32 %v7986, 4294901760
    %7988 = vmatpush1.msra.mxu0 %v7987
    %7989 = vmatprep.subr.mxu0 0.0
    %7990 = vmatpush2.msra.mxu0 0.0
    %7991 = vmatprep.subr.mxu0 0.0
    %7992 = vmatpush2.msra.mxu0 0.0
    %7993 = vmatprep.subr.mxu0 0.0
    %7994 = vmatpush2.msra.mxu0 0.0
    %7995 = vmatprep.subr.mxu0 0.0
    %7996 = vmatpush2.msra.mxu0 0.0
    %7997 = vmatprep.subr.mxu0 0.0
    %7998 = vmatpush2.msra.mxu0 0.0
    %7999 = vmatprep.subr.mxu0 0.0
    %8000 = vmatpush2.msra.mxu0 0.0
    %8001 = vmatprep.subr.mxu0 0.0
    %8002 = vmatpush2.msra.mxu0 0.0
    %8003 = vmatprep.subr.mxu0 0.0
    %8004 = vmatpush2.msra.mxu0 0.0
    %8005 = vmatprep.subr.mxu0 0.0
    %8006 = vmatpush2.msra.mxu0 0.0
    %8007 = vmatprep.subr.mxu0 0.0
    %8008 = vmatpush2.msra.mxu0 0.0
    %8009 = vmatprep.subr.mxu0 0.0
    %8010 = vmatpush2.msra.mxu0 0.0
    %8011 = vmatprep.subr.mxu0 0.0
    %8012 = vmatpush2.msra.mxu0 0.0
    %8013 = vmatprep.subr.mxu0 0.0
    %8014 = vmatpush2.msra.mxu0 0.0
    %8015 = vmatprep.subr.mxu0 0.0
    %8016 = vmatpush2.msra.mxu0 0.0
    %8017 = vmatprep.subr.mxu0 0.0
    %8018 = vmatpush2.msra.mxu0 0.0
    %8019 = vmatprep.subr.mxu0 0.0
    %8020 = vmatpush2.msra.mxu0 0.0
    %8021 = vmatprep.mubr.f32.mxu0 0.0
    %v8022 = vand.u32 %v7856, 4294901760
    %8023 = vmatmul.mubr.f32.gmra.mxu0 %v8022
    %v8024 = vpop.f32.mrf.mxu0
    %v8025 = vadd.f32 %v7934, %v8024
    %v8026 = vpop.f32.mrf.mxu0
    %8027 = vdwg.mxu0
    %8028 = vmatprep.subr.mxu0 0.0
    %8029 = vmatpush1.msra.mxu0 0.0
    %8030 = vmatprep.subr.mxu0 0.0
    %8031 = vmatpush1.msra.mxu0 0.0
    %8032 = vmatprep.subr.mxu0 0.0
    %8033 = vmatpush1.msra.mxu0 0.0
    %8034 = vmatprep.subr.mxu0 0.0
    %8035 = vmatpush1.msra.mxu0 0.0
    %8036 = vmatprep.subr.mxu0 0.0
    %8037 = vmatpush1.msra.mxu0 0.0
    %8038 = vmatprep.subr.mxu0 0.0
    %8039 = vmatpush1.msra.mxu0 0.0
    %8040 = vmatprep.subr.mxu0 0.0
    %8041 = vmatpush1.msra.mxu0 0.0
    %8042 = vmatprep.subr.mxu0 0.0
    %8043 = vmatpush1.msra.mxu0 0.0
    %8044 = vmatprep.subr.mxu0 0.0
    %8045 = vmatpush1.msra.mxu0 0.0
    %8046 = vmatprep.subr.mxu0 0.0
    %8047 = vmatpush1.msra.mxu0 0.0
    %8048 = vmatprep.subr.mxu0 0.0
    %8049 = vmatpush1.msra.mxu0 0.0
    %8050 = vmatprep.subr.mxu0 0.0
    %8051 = vmatpush1.msra.mxu0 0.0
    %8052 = vmatprep.subr.mxu0 0.0
    %v8053 = vand.u32 %v4197, 4294901760
    %v8054 = vsub.f32 %v4197, %v8053
    %8055 = vmatpush1.msra.mxu0 %v8054
    %8056 = vmatprep.subr.mxu0 0.0
    %v8057 = vand.u32 %v4196, 4294901760
    %v8058 = vsub.f32 %v4196, %v8057
    %8059 = vmatpush1.msra.mxu0 %v8058
    %8060 = vmatprep.subr.mxu0 0.0
    %v8061 = vand.u32 %v4195, 4294901760
    %v8062 = vsub.f32 %v4195, %v8061
    %8063 = vmatpush1.msra.mxu0 %v8062
    %8064 = vmatprep.subr.mxu0 0.0
    %v8065 = vand.u32 %v4194, 4294901760
    %v8066 = vsub.f32 %v4194, %v8065
    %8067 = vmatpush1.msra.mxu0 %v8066
    %8068 = vmatprep.subr.mxu0 0.0
    %8069 = vmatpush2.msra.mxu0 0.0
    %8070 = vmatprep.subr.mxu0 0.0
    %8071 = vmatpush2.msra.mxu0 0.0
    %8072 = vmatprep.subr.mxu0 0.0
    %8073 = vmatpush2.msra.mxu0 0.0
    %8074 = vmatprep.subr.mxu0 0.0
    %8075 = vmatpush2.msra.mxu0 0.0
    %8076 = vmatprep.subr.mxu0 0.0
    %8077 = vmatpush2.msra.mxu0 0.0
    %8078 = vmatprep.subr.mxu0 0.0
    %8079 = vmatpush2.msra.mxu0 0.0
    %8080 = vmatprep.subr.mxu0 0.0
    %8081 = vmatpush2.msra.mxu0 0.0
    %8082 = vmatprep.subr.mxu0 0.0
    %8083 = vmatpush2.msra.mxu0 0.0
    %8084 = vmatprep.subr.mxu0 0.0
    %8085 = vmatpush2.msra.mxu0 0.0
    %8086 = vmatprep.subr.mxu0 0.0
    %8087 = vmatpush2.msra.mxu0 0.0
    %8088 = vmatprep.subr.mxu0 0.0
    %8089 = vmatpush2.msra.mxu0 0.0
    %8090 = vmatprep.subr.mxu0 0.0
    %8091 = vmatpush2.msra.mxu0 0.0
    %8092 = vmatprep.subr.mxu0 0.0
    %8093 = vmatpush2.msra.mxu0 0.0
    %8094 = vmatprep.subr.mxu0 0.0
    %8095 = vmatpush2.msra.mxu0 0.0
    %8096 = vmatprep.subr.mxu0 0.0
    %8097 = vmatpush2.msra.mxu0 0.0
    %8098 = vmatprep.subr.mxu0 0.0
    %8099 = vmatpush2.msra.mxu0 0.0
    %8100 = vmatprep.mubr.f32.mxu0 0.0
    %v8101 = vand.u32 %v7856, 4294901760
    %v8102 = vsub.f32 %v7856, %v8101
    %8103 = vmatmul.mubr.f32.gmra.mxu0 %v8102
    %v8104 = vpop.f32.mrf.mxu0
    %v8105 = vadd.f32 %v8025, %v8104
    %v8106 = vpop.f32.mrf.mxu0
    %8107 = vdwg.mxu0
    %8108 = vmatprep.subr.mxu0 0.0
    %8109 = vmatpush1.msra.mxu0 0.0
    %8110 = vmatprep.subr.mxu0 0.0
    %8111 = vmatpush1.msra.mxu0 0.0
    %8112 = vmatprep.subr.mxu0 0.0
    %8113 = vmatpush1.msra.mxu0 0.0
    %8114 = vmatprep.subr.mxu0 0.0
    %8115 = vmatpush1.msra.mxu0 0.0
    %8116 = vmatprep.subr.mxu0 0.0
    %8117 = vmatpush1.msra.mxu0 0.0
    %8118 = vmatprep.subr.mxu0 0.0
    %8119 = vmatpush1.msra.mxu0 0.0
    %8120 = vmatprep.subr.mxu0 0.0
    %8121 = vmatpush1.msra.mxu0 0.0
    %8122 = vmatprep.subr.mxu0 0.0
    %8123 = vmatpush1.msra.mxu0 0.0
    %8124 = vmatprep.subr.mxu0 0.0
    %8125 = vmatpush1.msra.mxu0 0.0
    %8126 = vmatprep.subr.mxu0 0.0
    %8127 = vmatpush1.msra.mxu0 0.0
    %8128 = vmatprep.subr.mxu0 0.0
    %8129 = vmatpush1.msra.mxu0 0.0
    %8130 = vmatprep.subr.mxu0 0.0
    %8131 = vmatpush1.msra.mxu0 0.0
    %8132 = vmatprep.subr.mxu0 0.0
    %v8133 = vand.u32 %v4197, 4294901760
    %8134 = vmatpush1.msra.mxu0 %v8133
    %8135 = vmatprep.subr.mxu0 0.0
    %v8136 = vand.u32 %v4196, 4294901760
    %8137 = vmatpush1.msra.mxu0 %v8136
    %8138 = vmatprep.subr.mxu0 0.0
    %v8139 = vand.u32 %v4195, 4294901760
    %8140 = vmatpush1.msra.mxu0 %v8139
    %8141 = vmatprep.subr.mxu0 0.0
    %v8142 = vand.u32 %v4194, 4294901760
    %8143 = vmatpush1.msra.mxu0 %v8142
    %8144 = vmatprep.subr.mxu0 0.0
    %8145 = vmatpush2.msra.mxu0 0.0
    %8146 = vmatprep.subr.mxu0 0.0
    %8147 = vmatpush2.msra.mxu0 0.0
    %8148 = vmatprep.subr.mxu0 0.0
    %8149 = vmatpush2.msra.mxu0 0.0
    %8150 = vmatprep.subr.mxu0 0.0
    %8151 = vmatpush2.msra.mxu0 0.0
    %8152 = vmatprep.subr.mxu0 0.0
    %8153 = vmatpush2.msra.mxu0 0.0
    %8154 = vmatprep.subr.mxu0 0.0
    %8155 = vmatpush2.msra.mxu0 0.0
    %8156 = vmatprep.subr.mxu0 0.0
    %8157 = vmatpush2.msra.mxu0 0.0
    %8158 = vmatprep.subr.mxu0 0.0
    %8159 = vmatpush2.msra.mxu0 0.0
    %8160 = vmatprep.subr.mxu0 0.0
    %8161 = vmatpush2.msra.mxu0 0.0
    %8162 = vmatprep.subr.mxu0 0.0
    %8163 = vmatpush2.msra.mxu0 0.0
    %8164 = vmatprep.subr.mxu0 0.0
    %8165 = vmatpush2.msra.mxu0 0.0
    %8166 = vmatprep.subr.mxu0 0.0
    %8167 = vmatpush2.msra.mxu0 0.0
    %8168 = vmatprep.subr.mxu0 0.0
    %8169 = vmatpush2.msra.mxu0 0.0
    %8170 = vmatprep.subr.mxu0 0.0
    %8171 = vmatpush2.msra.mxu0 0.0
    %8172 = vmatprep.subr.mxu0 0.0
    %8173 = vmatpush2.msra.mxu0 0.0
    %8174 = vmatprep.subr.mxu0 0.0
    %8175 = vmatpush2.msra.mxu0 0.0
    %8176 = vmatprep.mubr.f32.mxu0 0.0
    %v8177 = vand.u32 %v7856, 4294901760
    %v8178 = vsub.f32 %v7856, %v8177
    %v8179 = vand.u32 %v8178, 4294901760
    %8180 = vmatmul.mubr.f32.gmra.mxu0 %v8179
    %v8181 = vpop.f32.mrf.mxu0
    %v8182 = vadd.f32 %v8105, %v8181
    %v8183 = vpop.f32.mrf.mxu0
    %8184 = vdwg.mxu0
    %8185 = vmatprep.subr.mxu0 0.0
    %8186 = vmatpush1.msra.mxu0 0.0
    %8187 = vmatprep.subr.mxu0 0.0
    %8188 = vmatpush1.msra.mxu0 0.0
    %8189 = vmatprep.subr.mxu0 0.0
    %8190 = vmatpush1.msra.mxu0 0.0
    %8191 = vmatprep.subr.mxu0 0.0
    %8192 = vmatpush1.msra.mxu0 0.0
    %8193 = vmatprep.subr.mxu0 0.0
    %8194 = vmatpush1.msra.mxu0 0.0
    %8195 = vmatprep.subr.mxu0 0.0
    %8196 = vmatpush1.msra.mxu0 0.0
    %8197 = vmatprep.subr.mxu0 0.0
    %8198 = vmatpush1.msra.mxu0 0.0
    %8199 = vmatprep.subr.mxu0 0.0
    %8200 = vmatpush1.msra.mxu0 0.0
    %8201 = vmatprep.subr.mxu0 0.0
    %8202 = vmatpush1.msra.mxu0 0.0
    %8203 = vmatprep.subr.mxu0 0.0
    %8204 = vmatpush1.msra.mxu0 0.0
    %8205 = vmatprep.subr.mxu0 0.0
    %8206 = vmatpush1.msra.mxu0 0.0
    %8207 = vmatprep.subr.mxu0 0.0
    %8208 = vmatpush1.msra.mxu0 0.0
    %8209 = vmatprep.subr.mxu0 0.0
    %v8210 = vand.u32 %v4197, 4294901760
    %v8211 = vsub.f32 %v4197, %v8210
    %v8212 = vand.u32 %v8211, 4294901760
    %8213 = vmatpush1.msra.mxu0 %v8212
    %8214 = vmatprep.subr.mxu0 0.0
    %v8215 = vand.u32 %v4196, 4294901760
    %v8216 = vsub.f32 %v4196, %v8215
    %v8217 = vand.u32 %v8216, 4294901760
    %8218 = vmatpush1.msra.mxu0 %v8217
    %8219 = vmatprep.subr.mxu0 0.0
    %v8220 = vand.u32 %v4195, 4294901760
    %v8221 = vsub.f32 %v4195, %v8220
    %v8222 = vand.u32 %v8221, 4294901760
    %8223 = vmatpush1.msra.mxu0 %v8222
    %8224 = vmatprep.subr.mxu0 0.0
    %v8225 = vand.u32 %v4194, 4294901760
    %v8226 = vsub.f32 %v4194, %v8225
    %v8227 = vand.u32 %v8226, 4294901760
    %8228 = vmatpush1.msra.mxu0 %v8227
    %8229 = vmatprep.subr.mxu0 0.0
    %8230 = vmatpush2.msra.mxu0 0.0
    %8231 = vmatprep.subr.mxu0 0.0
    %8232 = vmatpush2.msra.mxu0 0.0
    %8233 = vmatprep.subr.mxu0 0.0
    %8234 = vmatpush2.msra.mxu0 0.0
    %8235 = vmatprep.subr.mxu0 0.0
    %8236 = vmatpush2.msra.mxu0 0.0
    %8237 = vmatprep.subr.mxu0 0.0
    %8238 = vmatpush2.msra.mxu0 0.0
    %8239 = vmatprep.subr.mxu0 0.0
    %8240 = vmatpush2.msra.mxu0 0.0
    %8241 = vmatprep.subr.mxu0 0.0
    %8242 = vmatpush2.msra.mxu0 0.0
    %8243 = vmatprep.subr.mxu0 0.0
    %8244 = vmatpush2.msra.mxu0 0.0
    %8245 = vmatprep.subr.mxu0 0.0
    %8246 = vmatpush2.msra.mxu0 0.0
    %8247 = vmatprep.subr.mxu0 0.0
    %8248 = vmatpush2.msra.mxu0 0.0
    %8249 = vmatprep.subr.mxu0 0.0
    %8250 = vmatpush2.msra.mxu0 0.0
    %8251 = vmatprep.subr.mxu0 0.0
    %8252 = vmatpush2.msra.mxu0 0.0
    %8253 = vmatprep.subr.mxu0 0.0
    %8254 = vmatpush2.msra.mxu0 0.0
    %8255 = vmatprep.subr.mxu0 0.0
    %8256 = vmatpush2.msra.mxu0 0.0
    %8257 = vmatprep.subr.mxu0 0.0
    %8258 = vmatpush2.msra.mxu0 0.0
    %8259 = vmatprep.subr.mxu0 0.0
    %8260 = vmatpush2.msra.mxu0 0.0
    %8261 = vmatprep.mubr.f32.mxu0 0.0
    %v8262 = vand.u32 %v7856, 4294901760
    %8263 = vmatmul.mubr.f32.gmra.mxu0 %v8262
    %v8264 = vpop.f32.mrf.mxu0
    %v8265 = vadd.f32 %v8182, %v8264
    %v8266 = vpop.f32.mrf.mxu0
    %8267 = vdwg.mxu0
    %8268 = vmatprep.subr.mxu0 0.0
    %8269 = vmatpush1.msra.mxu0 0.0
    %8270 = vmatprep.subr.mxu0 0.0
    %8271 = vmatpush1.msra.mxu0 0.0
    %8272 = vmatprep.subr.mxu0 0.0
    %8273 = vmatpush1.msra.mxu0 0.0
    %8274 = vmatprep.subr.mxu0 0.0
    %8275 = vmatpush1.msra.mxu0 0.0
    %8276 = vmatprep.subr.mxu0 0.0
    %8277 = vmatpush1.msra.mxu0 0.0
    %8278 = vmatprep.subr.mxu0 0.0
    %8279 = vmatpush1.msra.mxu0 0.0
    %8280 = vmatprep.subr.mxu0 0.0
    %8281 = vmatpush1.msra.mxu0 0.0
    %8282 = vmatprep.subr.mxu0 0.0
    %8283 = vmatpush1.msra.mxu0 0.0
    %8284 = vmatprep.subr.mxu0 0.0
    %8285 = vmatpush1.msra.mxu0 0.0
    %8286 = vmatprep.subr.mxu0 0.0
    %8287 = vmatpush1.msra.mxu0 0.0
    %8288 = vmatprep.subr.mxu0 0.0
    %8289 = vmatpush1.msra.mxu0 0.0
    %8290 = vmatprep.subr.mxu0 0.0
    %8291 = vmatpush1.msra.mxu0 0.0
    %8292 = vmatprep.subr.mxu0 0.0
    %v8293 = vand.u32 %v4197, 4294901760
    %8294 = vmatpush1.msra.mxu0 %v8293
    %8295 = vmatprep.subr.mxu0 0.0
    %v8296 = vand.u32 %v4196, 4294901760
    %8297 = vmatpush1.msra.mxu0 %v8296
    %8298 = vmatprep.subr.mxu0 0.0
    %v8299 = vand.u32 %v4195, 4294901760
    %8300 = vmatpush1.msra.mxu0 %v8299
    %8301 = vmatprep.subr.mxu0 0.0
    %v8302 = vand.u32 %v4194, 4294901760
    %8303 = vmatpush1.msra.mxu0 %v8302
    %8304 = vmatprep.subr.mxu0 0.0
    %8305 = vmatpush2.msra.mxu0 0.0
    %8306 = vmatprep.subr.mxu0 0.0
    %8307 = vmatpush2.msra.mxu0 0.0
    %8308 = vmatprep.subr.mxu0 0.0
    %8309 = vmatpush2.msra.mxu0 0.0
    %8310 = vmatprep.subr.mxu0 0.0
    %8311 = vmatpush2.msra.mxu0 0.0
    %8312 = vmatprep.subr.mxu0 0.0
    %8313 = vmatpush2.msra.mxu0 0.0
    %8314 = vmatprep.subr.mxu0 0.0
    %8315 = vmatpush2.msra.mxu0 0.0
    %8316 = vmatprep.subr.mxu0 0.0
    %8317 = vmatpush2.msra.mxu0 0.0
    %8318 = vmatprep.subr.mxu0 0.0
    %8319 = vmatpush2.msra.mxu0 0.0
    %8320 = vmatprep.subr.mxu0 0.0
    %8321 = vmatpush2.msra.mxu0 0.0
    %8322 = vmatprep.subr.mxu0 0.0
    %8323 = vmatpush2.msra.mxu0 0.0
    %8324 = vmatprep.subr.mxu0 0.0
    %8325 = vmatpush2.msra.mxu0 0.0
    %8326 = vmatprep.subr.mxu0 0.0
    %8327 = vmatpush2.msra.mxu0 0.0
    %8328 = vmatprep.subr.mxu0 0.0
    %8329 = vmatpush2.msra.mxu0 0.0
    %8330 = vmatprep.subr.mxu0 0.0
    %8331 = vmatpush2.msra.mxu0 0.0
    %8332 = vmatprep.subr.mxu0 0.0
    %8333 = vmatpush2.msra.mxu0 0.0
    %8334 = vmatprep.subr.mxu0 0.0
    %8335 = vmatpush2.msra.mxu0 0.0
    %8336 = vmatprep.mubr.f32.mxu0 0.0
    %v8337 = vand.u32 %v7856, 4294901760
    %8338 = vmatmul.mubr.f32.gmra.mxu0 %v8337
    %v8339 = vpop.f32.mrf.mxu0
    %v8340 = vadd.f32 %v8265, %v8339
    %v8341 = vpop.f32.mrf.mxu0
    %8342 = vdwg.mxu0
    %v8343 = vadd.f32 %v7852, %v8340
    %v8344 = vtanh.pop %v8343
    %v8345 = vxor.u32 %v8343, 2147483648
    %v8346 = vmul.f32 %v8345, 1.442695
    %v8347 = vpow.pop %v8346
    %v8348 = vadd.f32 %v8347, 1.0
    %v8349 = vrcp.pop %v8348
    %v8350 = vmul.f32 1.0, %v8349
    %v8351 = vsel %vm4202, %v8344, %v8350
    %v8352 = vmul.f32 %v8351, %v7841
    %8354 = vrot.lane.b32.xlu0 %v8351, 64
    %v8355 = vpop.permute.xlu0 %8354
    %v8357 = vmul.f32 %v8351, %v8355
    %8359 = vrot.lane.b32.xlu0 %v8357, 32
    %v8360 = vpop.permute.xlu0 %8359
    %v8362 = vadd.f32 %v8352, %v8360
    %v8363 = vtanh.pop %v8362
    %8365 = vrot.lane.b32.xlu0 %v8363, 64
    %v8366 = vpop.permute.xlu0 %8365
    %v8368 = vmul.f32 %v8351, %v8366
    %v8369 = vld [vmem:[%s6] sm:$0xff]
    %v8370 = vld [vmem:[%s6 + $0x8] sm:$0xff]
    %v8371 = vld [vmem:[%s6 + $0x10] sm:$0xff]
    %v8372 = vld [vmem:[%s6 + $0x18] sm:$0xff]
    %v8373 = vld [vmem:[%s7] sm:$0x1]
    %v8375 = vlaneseq
    %v8376 = vshrl.u32 %v8375, 7
    %v8377 = vsub.s32 0, %v8376
    %v8378 = vrot.slane %v8373, %v8377
    %8381 = vrot.lane.b32.xlu0 %v8368, 32
    %v8382 = vpop.permute.xlu0 %8381
    %v8383 = vsel %vm4208, %v8382, 0
    %8385 = vmatprep.subr.mxu0 0.0
    %8386 = vmatpush1.msra.mxu0 0.0
    %8387 = vmatprep.subr.mxu0 0.0
    %8388 = vmatpush1.msra.mxu0 0.0
    %8389 = vmatprep.subr.mxu0 0.0
    %8390 = vmatpush1.msra.mxu0 0.0
    %8391 = vmatprep.subr.mxu0 0.0
    %8392 = vmatpush1.msra.mxu0 0.0
    %8393 = vmatprep.subr.mxu0 0.0
    %8394 = vmatpush1.msra.mxu0 0.0
    %8395 = vmatprep.subr.mxu0 0.0
    %8396 = vmatpush1.msra.mxu0 0.0
    %8397 = vmatprep.subr.mxu0 0.0
    %8398 = vmatpush1.msra.mxu0 0.0
    %8399 = vmatprep.subr.mxu0 0.0
    %8400 = vmatpush1.msra.mxu0 0.0
    %8401 = vmatprep.subr.mxu0 0.0
    %8402 = vmatpush1.msra.mxu0 0.0
    %8403 = vmatprep.subr.mxu0 0.0
    %8404 = vmatpush1.msra.mxu0 0.0
    %8405 = vmatprep.subr.mxu0 0.0
    %8406 = vmatpush1.msra.mxu0 0.0
    %8407 = vmatprep.subr.mxu0 0.0
    %8408 = vmatpush1.msra.mxu0 0.0
    %8409 = vmatprep.subr.mxu0 0.0
    %v8410 = vand.u32 %v8372, 4294901760
    %8411 = vmatpush1.msra.mxu0 %v8410
    %8412 = vmatprep.subr.mxu0 0.0
    %v8413 = vand.u32 %v8371, 4294901760
    %8414 = vmatpush1.msra.mxu0 %v8413
    %8415 = vmatprep.subr.mxu0 0.0
    %v8416 = vand.u32 %v8370, 4294901760
    %8417 = vmatpush1.msra.mxu0 %v8416
    %8418 = vmatprep.subr.mxu0 0.0
    %v8419 = vand.u32 %v8369, 4294901760
    %8420 = vmatpush1.msra.mxu0 %v8419
    %8421 = vmatprep.subr.mxu0 0.0
    %8422 = vmatpush2.msra.mxu0 0.0
    %8423 = vmatprep.subr.mxu0 0.0
    %8424 = vmatpush2.msra.mxu0 0.0
    %8425 = vmatprep.subr.mxu0 0.0
    %8426 = vmatpush2.msra.mxu0 0.0
    %8427 = vmatprep.subr.mxu0 0.0
    %8428 = vmatpush2.msra.mxu0 0.0
    %8429 = vmatprep.subr.mxu0 0.0
    %8430 = vmatpush2.msra.mxu0 0.0
    %8431 = vmatprep.subr.mxu0 0.0
    %8432 = vmatpush2.msra.mxu0 0.0
    %8433 = vmatprep.subr.mxu0 0.0
    %8434 = vmatpush2.msra.mxu0 0.0
    %8435 = vmatprep.subr.mxu0 0.0
    %8436 = vmatpush2.msra.mxu0 0.0
    %8437 = vmatprep.subr.mxu0 0.0
    %8438 = vmatpush2.msra.mxu0 0.0
    %8439 = vmatprep.subr.mxu0 0.0
    %8440 = vmatpush2.msra.mxu0 0.0
    %8441 = vmatprep.subr.mxu0 0.0
    %8442 = vmatpush2.msra.mxu0 0.0
    %8443 = vmatprep.subr.mxu0 0.0
    %8444 = vmatpush2.msra.mxu0 0.0
    %8445 = vmatprep.subr.mxu0 0.0
    %8446 = vmatpush2.msra.mxu0 0.0
    %8447 = vmatprep.subr.mxu0 0.0
    %8448 = vmatpush2.msra.mxu0 0.0
    %8449 = vmatprep.subr.mxu0 0.0
    %8450 = vmatpush2.msra.mxu0 0.0
    %8451 = vmatprep.subr.mxu0 0.0
    %8452 = vmatpush2.msra.mxu0 0.0
    %8453 = vmatprep.mubr.f32.mxu0 0.0
    %v8454 = vand.u32 %v8383, 4294901760
    %v8455 = vsub.f32 %v8383, %v8454
    %v8456 = vand.u32 %v8455, 4294901760
    %v8457 = vsub.f32 %v8455, %v8456
    %v8458 = vand.u32 %v8457, 4294901760
    %8459 = vmatmul.mubr.f32.gmra.mxu0 %v8458
    %v8460 = vpop.f32.mrf.mxu0
    %v8461 = vadd.f32 %v8378, %v8460
    %v8462 = vpop.f32.mrf.mxu0
    %8463 = vdwg.mxu0
    %8464 = vmatprep.subr.mxu0 0.0
    %8465 = vmatpush1.msra.mxu0 0.0
    %8466 = vmatprep.subr.mxu0 0.0
    %8467 = vmatpush1.msra.mxu0 0.0
    %8468 = vmatprep.subr.mxu0 0.0
    %8469 = vmatpush1.msra.mxu0 0.0
    %8470 = vmatprep.subr.mxu0 0.0
    %8471 = vmatpush1.msra.mxu0 0.0
    %8472 = vmatprep.subr.mxu0 0.0
    %8473 = vmatpush1.msra.mxu0 0.0
    %8474 = vmatprep.subr.mxu0 0.0
    %8475 = vmatpush1.msra.mxu0 0.0
    %8476 = vmatprep.subr.mxu0 0.0
    %8477 = vmatpush1.msra.mxu0 0.0
    %8478 = vmatprep.subr.mxu0 0.0
    %8479 = vmatpush1.msra.mxu0 0.0
    %8480 = vmatprep.subr.mxu0 0.0
    %8481 = vmatpush1.msra.mxu0 0.0
    %8482 = vmatprep.subr.mxu0 0.0
    %8483 = vmatpush1.msra.mxu0 0.0
    %8484 = vmatprep.subr.mxu0 0.0
    %8485 = vmatpush1.msra.mxu0 0.0
    %8486 = vmatprep.subr.mxu0 0.0
    %8487 = vmatpush1.msra.mxu0 0.0
    %8488 = vmatprep.subr.mxu0 0.0
    %v8489 = vand.u32 %v8372, 4294901760
    %v8490 = vsub.f32 %v8372, %v8489
    %v8491 = vand.u32 %v8490, 4294901760
    %v8492 = vsub.f32 %v8490, %v8491
    %v8493 = vand.u32 %v8492, 4294901760
    %8494 = vmatpush1.msra.mxu0 %v8493
    %8495 = vmatprep.subr.mxu0 0.0
    %v8496 = vand.u32 %v8371, 4294901760
    %v8497 = vsub.f32 %v8371, %v8496
    %v8498 = vand.u32 %v8497, 4294901760
    %v8499 = vsub.f32 %v8497, %v8498
    %v8500 = vand.u32 %v8499, 4294901760
    %8501 = vmatpush1.msra.mxu0 %v8500
    %8502 = vmatprep.subr.mxu0 0.0
    %v8503 = vand.u32 %v8370, 4294901760
    %v8504 = vsub.f32 %v8370, %v8503
    %v8505 = vand.u32 %v8504, 4294901760
    %v8506 = vsub.f32 %v8504, %v8505
    %v8507 = vand.u32 %v8506, 4294901760
    %8508 = vmatpush1.msra.mxu0 %v8507
    %8509 = vmatprep.subr.mxu0 0.0
    %v8510 = vand.u32 %v8369, 4294901760
    %v8511 = vsub.f32 %v8369, %v8510
    %v8512 = vand.u32 %v8511, 4294901760
    %v8513 = vsub.f32 %v8511, %v8512
    %v8514 = vand.u32 %v8513, 4294901760
    %8515 = vmatpush1.msra.mxu0 %v8514
    %8516 = vmatprep.subr.mxu0 0.0
    %8517 = vmatpush2.msra.mxu0 0.0
    %8518 = vmatprep.subr.mxu0 0.0
    %8519 = vmatpush2.msra.mxu0 0.0
    %8520 = vmatprep.subr.mxu0 0.0
    %8521 = vmatpush2.msra.mxu0 0.0
    %8522 = vmatprep.subr.mxu0 0.0
    %8523 = vmatpush2.msra.mxu0 0.0
    %8524 = vmatprep.subr.mxu0 0.0
    %8525 = vmatpush2.msra.mxu0 0.0
    %8526 = vmatprep.subr.mxu0 0.0
    %8527 = vmatpush2.msra.mxu0 0.0
    %8528 = vmatprep.subr.mxu0 0.0
    %8529 = vmatpush2.msra.mxu0 0.0
    %8530 = vmatprep.subr.mxu0 0.0
    %8531 = vmatpush2.msra.mxu0 0.0
    %8532 = vmatprep.subr.mxu0 0.0
    %8533 = vmatpush2.msra.mxu0 0.0
    %8534 = vmatprep.subr.mxu0 0.0
    %8535 = vmatpush2.msra.mxu0 0.0
    %8536 = vmatprep.subr.mxu0 0.0
    %8537 = vmatpush2.msra.mxu0 0.0
    %8538 = vmatprep.subr.mxu0 0.0
    %8539 = vmatpush2.msra.mxu0 0.0
    %8540 = vmatprep.subr.mxu0 0.0
    %8541 = vmatpush2.msra.mxu0 0.0
    %8542 = vmatprep.subr.mxu0 0.0
    %8543 = vmatpush2.msra.mxu0 0.0
    %8544 = vmatprep.subr.mxu0 0.0
    %8545 = vmatpush2.msra.mxu0 0.0
    %8546 = vmatprep.subr.mxu0 0.0
    %8547 = vmatpush2.msra.mxu0 0.0
    %8548 = vmatprep.mubr.f32.mxu0 0.0
    %v8549 = vand.u32 %v8383, 4294901760
    %8550 = vmatmul.mubr.f32.gmra.mxu0 %v8549
    %v8551 = vpop.f32.mrf.mxu0
    %v8552 = vadd.f32 %v8461, %v8551
    %v8553 = vpop.f32.mrf.mxu0
    %8554 = vdwg.mxu0
    %8555 = vmatprep.subr.mxu0 0.0
    %8556 = vmatpush1.msra.mxu0 0.0
    %8557 = vmatprep.subr.mxu0 0.0
    %8558 = vmatpush1.msra.mxu0 0.0
    %8559 = vmatprep.subr.mxu0 0.0
    %8560 = vmatpush1.msra.mxu0 0.0
    %8561 = vmatprep.subr.mxu0 0.0
    %8562 = vmatpush1.msra.mxu0 0.0
    %8563 = vmatprep.subr.mxu0 0.0
    %8564 = vmatpush1.msra.mxu0 0.0
    %8565 = vmatprep.subr.mxu0 0.0
    %8566 = vmatpush1.msra.mxu0 0.0
    %8567 = vmatprep.subr.mxu0 0.0
    %8568 = vmatpush1.msra.mxu0 0.0
    %8569 = vmatprep.subr.mxu0 0.0
    %8570 = vmatpush1.msra.mxu0 0.0
    %8571 = vmatprep.subr.mxu0 0.0
    %8572 = vmatpush1.msra.mxu0 0.0
    %8573 = vmatprep.subr.mxu0 0.0
    %8574 = vmatpush1.msra.mxu0 0.0
    %8575 = vmatprep.subr.mxu0 0.0
    %8576 = vmatpush1.msra.mxu0 0.0
    %8577 = vmatprep.subr.mxu0 0.0
    %8578 = vmatpush1.msra.mxu0 0.0
    %8579 = vmatprep.subr.mxu0 0.0
    %v8580 = vand.u32 %v8372, 4294901760
    %v8581 = vsub.f32 %v8372, %v8580
    %8582 = vmatpush1.msra.mxu0 %v8581
    %8583 = vmatprep.subr.mxu0 0.0
    %v8584 = vand.u32 %v8371, 4294901760
    %v8585 = vsub.f32 %v8371, %v8584
    %8586 = vmatpush1.msra.mxu0 %v8585
    %8587 = vmatprep.subr.mxu0 0.0
    %v8588 = vand.u32 %v8370, 4294901760
    %v8589 = vsub.f32 %v8370, %v8588
    %8590 = vmatpush1.msra.mxu0 %v8589
    %8591 = vmatprep.subr.mxu0 0.0
    %v8592 = vand.u32 %v8369, 4294901760
    %v8593 = vsub.f32 %v8369, %v8592
    %8594 = vmatpush1.msra.mxu0 %v8593
    %8595 = vmatprep.subr.mxu0 0.0
    %8596 = vmatpush2.msra.mxu0 0.0
    %8597 = vmatprep.subr.mxu0 0.0
    %8598 = vmatpush2.msra.mxu0 0.0
    %8599 = vmatprep.subr.mxu0 0.0
    %8600 = vmatpush2.msra.mxu0 0.0
    %8601 = vmatprep.subr.mxu0 0.0
    %8602 = vmatpush2.msra.mxu0 0.0
    %8603 = vmatprep.subr.mxu0 0.0
    %8604 = vmatpush2.msra.mxu0 0.0
    %8605 = vmatprep.subr.mxu0 0.0
    %8606 = vmatpush2.msra.mxu0 0.0
    %8607 = vmatprep.subr.mxu0 0.0
    %8608 = vmatpush2.msra.mxu0 0.0
    %8609 = vmatprep.subr.mxu0 0.0
    %8610 = vmatpush2.msra.mxu0 0.0
    %8611 = vmatprep.subr.mxu0 0.0
    %8612 = vmatpush2.msra.mxu0 0.0
    %8613 = vmatprep.subr.mxu0 0.0
    %8614 = vmatpush2.msra.mxu0 0.0
    %8615 = vmatprep.subr.mxu0 0.0
    %8616 = vmatpush2.msra.mxu0 0.0
    %8617 = vmatprep.subr.mxu0 0.0
    %8618 = vmatpush2.msra.mxu0 0.0
    %8619 = vmatprep.subr.mxu0 0.0
    %8620 = vmatpush2.msra.mxu0 0.0
    %8621 = vmatprep.subr.mxu0 0.0
    %8622 = vmatpush2.msra.mxu0 0.0
    %8623 = vmatprep.subr.mxu0 0.0
    %8624 = vmatpush2.msra.mxu0 0.0
    %8625 = vmatprep.subr.mxu0 0.0
    %8626 = vmatpush2.msra.mxu0 0.0
    %8627 = vmatprep.mubr.f32.mxu0 0.0
    %v8628 = vand.u32 %v8383, 4294901760
    %v8629 = vsub.f32 %v8383, %v8628
    %8630 = vmatmul.mubr.f32.gmra.mxu0 %v8629
    %v8631 = vpop.f32.mrf.mxu0
    %v8632 = vadd.f32 %v8552, %v8631
    %v8633 = vpop.f32.mrf.mxu0
    %8634 = vdwg.mxu0
    %8635 = vmatprep.subr.mxu0 0.0
    %8636 = vmatpush1.msra.mxu0 0.0
    %8637 = vmatprep.subr.mxu0 0.0
    %8638 = vmatpush1.msra.mxu0 0.0
    %8639 = vmatprep.subr.mxu0 0.0
    %8640 = vmatpush1.msra.mxu0 0.0
    %8641 = vmatprep.subr.mxu0 0.0
    %8642 = vmatpush1.msra.mxu0 0.0
    %8643 = vmatprep.subr.mxu0 0.0
    %8644 = vmatpush1.msra.mxu0 0.0
    %8645 = vmatprep.subr.mxu0 0.0
    %8646 = vmatpush1.msra.mxu0 0.0
    %8647 = vmatprep.subr.mxu0 0.0
    %8648 = vmatpush1.msra.mxu0 0.0
    %8649 = vmatprep.subr.mxu0 0.0
    %8650 = vmatpush1.msra.mxu0 0.0
    %8651 = vmatprep.subr.mxu0 0.0
    %8652 = vmatpush1.msra.mxu0 0.0
    %8653 = vmatprep.subr.mxu0 0.0
    %8654 = vmatpush1.msra.mxu0 0.0
    %8655 = vmatprep.subr.mxu0 0.0
    %8656 = vmatpush1.msra.mxu0 0.0
    %8657 = vmatprep.subr.mxu0 0.0
    %8658 = vmatpush1.msra.mxu0 0.0
    %8659 = vmatprep.subr.mxu0 0.0
    %v8660 = vand.u32 %v8372, 4294901760
    %8661 = vmatpush1.msra.mxu0 %v8660
    %8662 = vmatprep.subr.mxu0 0.0
    %v8663 = vand.u32 %v8371, 4294901760
    %8664 = vmatpush1.msra.mxu0 %v8663
    %8665 = vmatprep.subr.mxu0 0.0
    %v8666 = vand.u32 %v8370, 4294901760
    %8667 = vmatpush1.msra.mxu0 %v8666
    %8668 = vmatprep.subr.mxu0 0.0
    %v8669 = vand.u32 %v8369, 4294901760
    %8670 = vmatpush1.msra.mxu0 %v8669
    %8671 = vmatprep.subr.mxu0 0.0
    %8672 = vmatpush2.msra.mxu0 0.0
    %8673 = vmatprep.subr.mxu0 0.0
    %8674 = vmatpush2.msra.mxu0 0.0
    %8675 = vmatprep.subr.mxu0 0.0
    %8676 = vmatpush2.msra.mxu0 0.0
    %8677 = vmatprep.subr.mxu0 0.0
    %8678 = vmatpush2.msra.mxu0 0.0
    %8679 = vmatprep.subr.mxu0 0.0
    %8680 = vmatpush2.msra.mxu0 0.0
    %8681 = vmatprep.subr.mxu0 0.0
    %8682 = vmatpush2.msra.mxu0 0.0
    %8683 = vmatprep.subr.mxu0 0.0
    %8684 = vmatpush2.msra.mxu0 0.0
    %8685 = vmatprep.subr.mxu0 0.0
    %8686 = vmatpush2.msra.mxu0 0.0
    %8687 = vmatprep.subr.mxu0 0.0
    %8688 = vmatpush2.msra.mxu0 0.0
    %8689 = vmatprep.subr.mxu0 0.0
    %8690 = vmatpush2.msra.mxu0 0.0
    %8691 = vmatprep.subr.mxu0 0.0
    %8692 = vmatpush2.msra.mxu0 0.0
    %8693 = vmatprep.subr.mxu0 0.0
    %8694 = vmatpush2.msra.mxu0 0.0
    %8695 = vmatprep.subr.mxu0 0.0
    %8696 = vmatpush2.msra.mxu0 0.0
    %8697 = vmatprep.subr.mxu0 0.0
    %8698 = vmatpush2.msra.mxu0 0.0
    %8699 = vmatprep.subr.mxu0 0.0
    %8700 = vmatpush2.msra.mxu0 0.0
    %8701 = vmatprep.subr.mxu0 0.0
    %8702 = vmatpush2.msra.mxu0 0.0
    %8703 = vmatprep.mubr.f32.mxu0 0.0
    %v8704 = vand.u32 %v8383, 4294901760
    %v8705 = vsub.f32 %v8383, %v8704
    %v8706 = vand.u32 %v8705, 4294901760
    %8707 = vmatmul.mubr.f32.gmra.mxu0 %v8706
    %v8708 = vpop.f32.mrf.mxu0
    %v8709 = vadd.f32 %v8632, %v8708
    %v8710 = vpop.f32.mrf.mxu0
    %8711 = vdwg.mxu0
    %8712 = vmatprep.subr.mxu0 0.0
    %8713 = vmatpush1.msra.mxu0 0.0
    %8714 = vmatprep.subr.mxu0 0.0
    %8715 = vmatpush1.msra.mxu0 0.0
    %8716 = vmatprep.subr.mxu0 0.0
    %8717 = vmatpush1.msra.mxu0 0.0
    %8718 = vmatprep.subr.mxu0 0.0
    %8719 = vmatpush1.msra.mxu0 0.0
    %8720 = vmatprep.subr.mxu0 0.0
    %8721 = vmatpush1.msra.mxu0 0.0
    %8722 = vmatprep.subr.mxu0 0.0
    %8723 = vmatpush1.msra.mxu0 0.0
    %8724 = vmatprep.subr.mxu0 0.0
    %8725 = vmatpush1.msra.mxu0 0.0
    %8726 = vmatprep.subr.mxu0 0.0
    %8727 = vmatpush1.msra.mxu0 0.0
    %8728 = vmatprep.subr.mxu0 0.0
    %8729 = vmatpush1.msra.mxu0 0.0
    %8730 = vmatprep.subr.mxu0 0.0
    %8731 = vmatpush1.msra.mxu0 0.0
    %8732 = vmatprep.subr.mxu0 0.0
    %8733 = vmatpush1.msra.mxu0 0.0
    %8734 = vmatprep.subr.mxu0 0.0
    %8735 = vmatpush1.msra.mxu0 0.0
    %8736 = vmatprep.subr.mxu0 0.0
    %v8737 = vand.u32 %v8372, 4294901760
    %v8738 = vsub.f32 %v8372, %v8737
    %v8739 = vand.u32 %v8738, 4294901760
    %8740 = vmatpush1.msra.mxu0 %v8739
    %8741 = vmatprep.subr.mxu0 0.0
    %v8742 = vand.u32 %v8371, 4294901760
    %v8743 = vsub.f32 %v8371, %v8742
    %v8744 = vand.u32 %v8743, 4294901760
    %8745 = vmatpush1.msra.mxu0 %v8744
    %8746 = vmatprep.subr.mxu0 0.0
    %v8747 = vand.u32 %v8370, 4294901760
    %v8748 = vsub.f32 %v8370, %v8747
    %v8749 = vand.u32 %v8748, 4294901760
    %8750 = vmatpush1.msra.mxu0 %v8749
    %8751 = vmatprep.subr.mxu0 0.0
    %v8752 = vand.u32 %v8369, 4294901760
    %v8753 = vsub.f32 %v8369, %v8752
    %v8754 = vand.u32 %v8753, 4294901760
    %8755 = vmatpush1.msra.mxu0 %v8754
    %8756 = vmatprep.subr.mxu0 0.0
    %8757 = vmatpush2.msra.mxu0 0.0
    %8758 = vmatprep.subr.mxu0 0.0
    %8759 = vmatpush2.msra.mxu0 0.0
    %8760 = vmatprep.subr.mxu0 0.0
    %8761 = vmatpush2.msra.mxu0 0.0
    %8762 = vmatprep.subr.mxu0 0.0
    %8763 = vmatpush2.msra.mxu0 0.0
    %8764 = vmatprep.subr.mxu0 0.0
    %8765 = vmatpush2.msra.mxu0 0.0
    %8766 = vmatprep.subr.mxu0 0.0
    %8767 = vmatpush2.msra.mxu0 0.0
    %8768 = vmatprep.subr.mxu0 0.0
    %8769 = vmatpush2.msra.mxu0 0.0
    %8770 = vmatprep.subr.mxu0 0.0
    %8771 = vmatpush2.msra.mxu0 0.0
    %8772 = vmatprep.subr.mxu0 0.0
    %8773 = vmatpush2.msra.mxu0 0.0
    %8774 = vmatprep.subr.mxu0 0.0
    %8775 = vmatpush2.msra.mxu0 0.0
    %8776 = vmatprep.subr.mxu0 0.0
    %8777 = vmatpush2.msra.mxu0 0.0
    %8778 = vmatprep.subr.mxu0 0.0
    %8779 = vmatpush2.msra.mxu0 0.0
    %8780 = vmatprep.subr.mxu0 0.0
    %8781 = vmatpush2.msra.mxu0 0.0
    %8782 = vmatprep.subr.mxu0 0.0
    %8783 = vmatpush2.msra.mxu0 0.0
    %8784 = vmatprep.subr.mxu0 0.0
    %8785 = vmatpush2.msra.mxu0 0.0
    %8786 = vmatprep.subr.mxu0 0.0
    %8787 = vmatpush2.msra.mxu0 0.0
    %8788 = vmatprep.mubr.f32.mxu0 0.0
    %v8789 = vand.u32 %v8383, 4294901760
    %8790 = vmatmul.mubr.f32.gmra.mxu0 %v8789
    %v8791 = vpop.f32.mrf.mxu0
    %v8792 = vadd.f32 %v8709, %v8791
    %v8793 = vpop.f32.mrf.mxu0
    %8794 = vdwg.mxu0
    %8795 = vmatprep.subr.mxu0 0.0
    %8796 = vmatpush1.msra.mxu0 0.0
    %8797 = vmatprep.subr.mxu0 0.0
    %8798 = vmatpush1.msra.mxu0 0.0
    %8799 = vmatprep.subr.mxu0 0.0
    %8800 = vmatpush1.msra.mxu0 0.0
    %8801 = vmatprep.subr.mxu0 0.0
    %8802 = vmatpush1.msra.mxu0 0.0
    %8803 = vmatprep.subr.mxu0 0.0
    %8804 = vmatpush1.msra.mxu0 0.0
    %8805 = vmatprep.subr.mxu0 0.0
    %8806 = vmatpush1.msra.mxu0 0.0
    %8807 = vmatprep.subr.mxu0 0.0
    %8808 = vmatpush1.msra.mxu0 0.0
    %8809 = vmatprep.subr.mxu0 0.0
    %8810 = vmatpush1.msra.mxu0 0.0
    %8811 = vmatprep.subr.mxu0 0.0
    %8812 = vmatpush1.msra.mxu0 0.0
    %8813 = vmatprep.subr.mxu0 0.0
    %8814 = vmatpush1.msra.mxu0 0.0
    %8815 = vmatprep.subr.mxu0 0.0
    %8816 = vmatpush1.msra.mxu0 0.0
    %8817 = vmatprep.subr.mxu0 0.0
    %8818 = vmatpush1.msra.mxu0 0.0
    %8819 = vmatprep.subr.mxu0 0.0
    %v8820 = vand.u32 %v8372, 4294901760
    %8821 = vmatpush1.msra.mxu0 %v8820
    %8822 = vmatprep.subr.mxu0 0.0
    %v8823 = vand.u32 %v8371, 4294901760
    %8824 = vmatpush1.msra.mxu0 %v8823
    %8825 = vmatprep.subr.mxu0 0.0
    %v8826 = vand.u32 %v8370, 4294901760
    %8827 = vmatpush1.msra.mxu0 %v8826
    %8828 = vmatprep.subr.mxu0 0.0
    %v8829 = vand.u32 %v8369, 4294901760
    %8830 = vmatpush1.msra.mxu0 %v8829
    %8831 = vmatprep.subr.mxu0 0.0
    %8832 = vmatpush2.msra.mxu0 0.0
    %8833 = vmatprep.subr.mxu0 0.0
    %8834 = vmatpush2.msra.mxu0 0.0
    %8835 = vmatprep.subr.mxu0 0.0
    %8836 = vmatpush2.msra.mxu0 0.0
    %8837 = vmatprep.subr.mxu0 0.0
    %8838 = vmatpush2.msra.mxu0 0.0
    %8839 = vmatprep.subr.mxu0 0.0
    %8840 = vmatpush2.msra.mxu0 0.0
    %8841 = vmatprep.subr.mxu0 0.0
    %8842 = vmatpush2.msra.mxu0 0.0
    %8843 = vmatprep.subr.mxu0 0.0
    %8844 = vmatpush2.msra.mxu0 0.0
    %8845 = vmatprep.subr.mxu0 0.0
    %8846 = vmatpush2.msra.mxu0 0.0
    %8847 = vmatprep.subr.mxu0 0.0
    %8848 = vmatpush2.msra.mxu0 0.0
    %8849 = vmatprep.subr.mxu0 0.0
    %8850 = vmatpush2.msra.mxu0 0.0
    %8851 = vmatprep.subr.mxu0 0.0
    %8852 = vmatpush2.msra.mxu0 0.0
    %8853 = vmatprep.subr.mxu0 0.0
    %8854 = vmatpush2.msra.mxu0 0.0
    %8855 = vmatprep.subr.mxu0 0.0
    %8856 = vmatpush2.msra.mxu0 0.0
    %8857 = vmatprep.subr.mxu0 0.0
    %8858 = vmatpush2.msra.mxu0 0.0
    %8859 = vmatprep.subr.mxu0 0.0
    %8860 = vmatpush2.msra.mxu0 0.0
    %8861 = vmatprep.subr.mxu0 0.0
    %8862 = vmatpush2.msra.mxu0 0.0
    %8863 = vmatprep.mubr.f32.mxu0 0.0
    %v8864 = vand.u32 %v8383, 4294901760
    %8865 = vmatmul.mubr.f32.gmra.mxu0 %v8864
    %v8866 = vpop.f32.mrf.mxu0
    %v8867 = vadd.f32 %v8792, %v8866
    %v8868 = vpop.f32.mrf.mxu0
    %8869 = vdwg.mxu0
    %v8870 = vtanh.pop %v8867
    %v8871 = vld [vmem:[#allocation7] sm:$0xff]
    %v8872 = vld [vmem:[#allocation7 + $0x8] sm:$0xff]
    %v8873 = vld [vmem:[%s9] sm:$0x1]
    %v8875 = vlaneseq
    %v8876 = vshrl.u32 %v8875, 7
    %v8877 = vsub.s32 0, %v8876
    %v8878 = vrot.slane %v8873, %v8877
    %vm8880 = vcmask 130048
    %v8882 = vsel %vm8880, %v8870, 0
    %8884 = vmatprep.subr.mxu0 0.0
    %8885 = vmatpush1.msra.mxu0 0.0
    %8886 = vmatprep.subr.mxu0 0.0
    %8887 = vmatpush1.msra.mxu0 0.0
    %8888 = vmatprep.subr.mxu0 0.0
    %8889 = vmatpush1.msra.mxu0 0.0
    %8890 = vmatprep.subr.mxu0 0.0
    %8891 = vmatpush1.msra.mxu0 0.0
    %8892 = vmatprep.subr.mxu0 0.0
    %8893 = vmatpush1.msra.mxu0 0.0
    %8894 = vmatprep.subr.mxu0 0.0
    %8895 = vmatpush1.msra.mxu0 0.0
    %8896 = vmatprep.subr.mxu0 0.0
    %8897 = vmatpush1.msra.mxu0 0.0
    %8898 = vmatprep.subr.mxu0 0.0
    %8899 = vmatpush1.msra.mxu0 0.0
    %8900 = vmatprep.subr.mxu0 0.0
    %8901 = vmatpush1.msra.mxu0 0.0
    %8902 = vmatprep.subr.mxu0 0.0
    %8903 = vmatpush1.msra.mxu0 0.0
    %8904 = vmatprep.subr.mxu0 0.0
    %8905 = vmatpush1.msra.mxu0 0.0
    %8906 = vmatprep.subr.mxu0 0.0
    %8907 = vmatpush1.msra.mxu0 0.0
    %8908 = vmatprep.subr.mxu0 0.0
    %8909 = vmatpush1.msra.mxu0 0.0
    %8910 = vmatprep.subr.mxu0 0.0
    %8911 = vmatpush1.msra.mxu0 0.0
    %8912 = vmatprep.subr.mxu0 0.0
    %v8913 = vand.u32 %v8872, 4294901760
    %8914 = vmatpush1.msra.mxu0 %v8913
    %8915 = vmatprep.subr.mxu0 0.0
    %v8916 = vand.u32 %v8871, 4294901760
    %8917 = vmatpush1.msra.mxu0 %v8916
    %8918 = vmatprep.subr.mxu0 0.0
    %8919 = vmatpush2.msra.mxu0 0.0
    %8920 = vmatprep.subr.mxu0 0.0
    %8921 = vmatpush2.msra.mxu0 0.0
    %8922 = vmatprep.subr.mxu0 0.0
    %8923 = vmatpush2.msra.mxu0 0.0
    %8924 = vmatprep.subr.mxu0 0.0
    %8925 = vmatpush2.msra.mxu0 0.0
    %8926 = vmatprep.subr.mxu0 0.0
    %8927 = vmatpush2.msra.mxu0 0.0
    %8928 = vmatprep.subr.mxu0 0.0
    %8929 = vmatpush2.msra.mxu0 0.0
    %8930 = vmatprep.subr.mxu0 0.0
    %8931 = vmatpush2.msra.mxu0 0.0
    %8932 = vmatprep.subr.mxu0 0.0
    %8933 = vmatpush2.msra.mxu0 0.0
    %8934 = vmatprep.subr.mxu0 0.0
    %8935 = vmatpush2.msra.mxu0 0.0
    %8936 = vmatprep.subr.mxu0 0.0
    %8937 = vmatpush2.msra.mxu0 0.0
    %8938 = vmatprep.subr.mxu0 0.0
    %8939 = vmatpush2.msra.mxu0 0.0
    %8940 = vmatprep.subr.mxu0 0.0
    %8941 = vmatpush2.msra.mxu0 0.0
    %8942 = vmatprep.subr.mxu0 0.0
    %8943 = vmatpush2.msra.mxu0 0.0
    %8944 = vmatprep.subr.mxu0 0.0
    %8945 = vmatpush2.msra.mxu0 0.0
    %8946 = vmatprep.subr.mxu0 0.0
    %8947 = vmatpush2.msra.mxu0 0.0
    %8948 = vmatprep.subr.mxu0 0.0
    %8949 = vmatpush2.msra.mxu0 0.0
    %8950 = vmatprep.mubr.f32.mxu0 0.0
    %v8951 = vand.u32 %v8882, 4294901760
    %v8952 = vsub.f32 %v8882, %v8951
    %v8953 = vand.u32 %v8952, 4294901760
    %v8954 = vsub.f32 %v8952, %v8953
    %v8955 = vand.u32 %v8954, 4294901760
    %8956 = vmatmul.mubr.f32.gmra.mxu0 %v8955
    %v8957 = vpop.f32.mrf.mxu0
    %v8958 = vadd.f32 %v8878, %v8957
    %v8959 = vpop.f32.mrf.mxu0
    %8960 = vdwg.mxu0
    %8961 = vmatprep.subr.mxu0 0.0
    %8962 = vmatpush1.msra.mxu0 0.0
    %8963 = vmatprep.subr.mxu0 0.0
    %8964 = vmatpush1.msra.mxu0 0.0
    %8965 = vmatprep.subr.mxu0 0.0
    %8966 = vmatpush1.msra.mxu0 0.0
    %8967 = vmatprep.subr.mxu0 0.0
    %8968 = vmatpush1.msra.mxu0 0.0
    %8969 = vmatprep.subr.mxu0 0.0
    %8970 = vmatpush1.msra.mxu0 0.0
    %8971 = vmatprep.subr.mxu0 0.0
    %8972 = vmatpush1.msra.mxu0 0.0
    %8973 = vmatprep.subr.mxu0 0.0
    %8974 = vmatpush1.msra.mxu0 0.0
    %8975 = vmatprep.subr.mxu0 0.0
    %8976 = vmatpush1.msra.mxu0 0.0
    %8977 = vmatprep.subr.mxu0 0.0
    %8978 = vmatpush1.msra.mxu0 0.0
    %8979 = vmatprep.subr.mxu0 0.0
    %8980 = vmatpush1.msra.mxu0 0.0
    %8981 = vmatprep.subr.mxu0 0.0
    %8982 = vmatpush1.msra.mxu0 0.0
    %8983 = vmatprep.subr.mxu0 0.0
    %8984 = vmatpush1.msra.mxu0 0.0
    %8985 = vmatprep.subr.mxu0 0.0
    %8986 = vmatpush1.msra.mxu0 0.0
    %8987 = vmatprep.subr.mxu0 0.0
    %8988 = vmatpush1.msra.mxu0 0.0
    %8989 = vmatprep.subr.mxu0 0.0
    %v8990 = vand.u32 %v8872, 4294901760
    %v8991 = vsub.f32 %v8872, %v8990
    %v8992 = vand.u32 %v8991, 4294901760
    %v8993 = vsub.f32 %v8991, %v8992
    %v8994 = vand.u32 %v8993, 4294901760
    %8995 = vmatpush1.msra.mxu0 %v8994
    %8996 = vmatprep.subr.mxu0 0.0
    %v8997 = vand.u32 %v8871, 4294901760
    %v8998 = vsub.f32 %v8871, %v8997
    %v8999 = vand.u32 %v8998, 4294901760
    %v9000 = vsub.f32 %v8998, %v8999
    %v9001 = vand.u32 %v9000, 4294901760
    %9002 = vmatpush1.msra.mxu0 %v9001
    %9003 = vmatprep.subr.mxu0 0.0
    %9004 = vmatpush2.msra.mxu0 0.0
    %9005 = vmatprep.subr.mxu0 0.0
    %9006 = vmatpush2.msra.mxu0 0.0
    %9007 = vmatprep.subr.mxu0 0.0
    %9008 = vmatpush2.msra.mxu0 0.0
    %9009 = vmatprep.subr.mxu0 0.0
    %9010 = vmatpush2.msra.mxu0 0.0
    %9011 = vmatprep.subr.mxu0 0.0
    %9012 = vmatpush2.msra.mxu0 0.0
    %9013 = vmatprep.subr.mxu0 0.0
    %9014 = vmatpush2.msra.mxu0 0.0
    %9015 = vmatprep.subr.mxu0 0.0
    %9016 = vmatpush2.msra.mxu0 0.0
    %9017 = vmatprep.subr.mxu0 0.0
    %9018 = vmatpush2.msra.mxu0 0.0
    %9019 = vmatprep.subr.mxu0 0.0
    %9020 = vmatpush2.msra.mxu0 0.0
    %9021 = vmatprep.subr.mxu0 0.0
    %9022 = vmatpush2.msra.mxu0 0.0
    %9023 = vmatprep.subr.mxu0 0.0
    %9024 = vmatpush2.msra.mxu0 0.0
    %9025 = vmatprep.subr.mxu0 0.0
    %9026 = vmatpush2.msra.mxu0 0.0
    %9027 = vmatprep.subr.mxu0 0.0
    %9028 = vmatpush2.msra.mxu0 0.0
    %9029 = vmatprep.subr.mxu0 0.0
    %9030 = vmatpush2.msra.mxu0 0.0
    %9031 = vmatprep.subr.mxu0 0.0
    %9032 = vmatpush2.msra.mxu0 0.0
    %9033 = vmatprep.subr.mxu0 0.0
    %9034 = vmatpush2.msra.mxu0 0.0
    %9035 = vmatprep.mubr.f32.mxu0 0.0
    %v9036 = vand.u32 %v8882, 4294901760
    %9037 = vmatmul.mubr.f32.gmra.mxu0 %v9036
    %v9038 = vpop.f32.mrf.mxu0
    %v9039 = vadd.f32 %v8958, %v9038
    %v9040 = vpop.f32.mrf.mxu0
    %9041 = vdwg.mxu0
    %9042 = vmatprep.subr.mxu0 0.0
    %9043 = vmatpush1.msra.mxu0 0.0
    %9044 = vmatprep.subr.mxu0 0.0
    %9045 = vmatpush1.msra.mxu0 0.0
    %9046 = vmatprep.subr.mxu0 0.0
    %9047 = vmatpush1.msra.mxu0 0.0
    %9048 = vmatprep.subr.mxu0 0.0
    %9049 = vmatpush1.msra.mxu0 0.0
    %9050 = vmatprep.subr.mxu0 0.0
    %9051 = vmatpush1.msra.mxu0 0.0
    %9052 = vmatprep.subr.mxu0 0.0
    %9053 = vmatpush1.msra.mxu0 0.0
    %9054 = vmatprep.subr.mxu0 0.0
    %9055 = vmatpush1.msra.mxu0 0.0
    %9056 = vmatprep.subr.mxu0 0.0
    %9057 = vmatpush1.msra.mxu0 0.0
    %9058 = vmatprep.subr.mxu0 0.0
    %9059 = vmatpush1.msra.mxu0 0.0
    %9060 = vmatprep.subr.mxu0 0.0
    %9061 = vmatpush1.msra.mxu0 0.0
    %9062 = vmatprep.subr.mxu0 0.0
    %9063 = vmatpush1.msra.mxu0 0.0
    %9064 = vmatprep.subr.mxu0 0.0
    %9065 = vmatpush1.msra.mxu0 0.0
    %9066 = vmatprep.subr.mxu0 0.0
    %9067 = vmatpush1.msra.mxu0 0.0
    %9068 = vmatprep.subr.mxu0 0.0
    %9069 = vmatpush1.msra.mxu0 0.0
    %9070 = vmatprep.subr.mxu0 0.0
    %v9071 = vand.u32 %v8872, 4294901760
    %v9072 = vsub.f32 %v8872, %v9071
    %9073 = vmatpush1.msra.mxu0 %v9072
    %9074 = vmatprep.subr.mxu0 0.0
    %v9075 = vand.u32 %v8871, 4294901760
    %v9076 = vsub.f32 %v8871, %v9075
    %9077 = vmatpush1.msra.mxu0 %v9076
    %9078 = vmatprep.subr.mxu0 0.0
    %9079 = vmatpush2.msra.mxu0 0.0
    %9080 = vmatprep.subr.mxu0 0.0
    %9081 = vmatpush2.msra.mxu0 0.0
    %9082 = vmatprep.subr.mxu0 0.0
    %9083 = vmatpush2.msra.mxu0 0.0
    %9084 = vmatprep.subr.mxu0 0.0
    %9085 = vmatpush2.msra.mxu0 0.0
    %9086 = vmatprep.subr.mxu0 0.0
    %9087 = vmatpush2.msra.mxu0 0.0
    %9088 = vmatprep.subr.mxu0 0.0
    %9089 = vmatpush2.msra.mxu0 0.0
    %9090 = vmatprep.subr.mxu0 0.0
    %9091 = vmatpush2.msra.mxu0 0.0
    %9092 = vmatprep.subr.mxu0 0.0
    %9093 = vmatpush2.msra.mxu0 0.0
    %9094 = vmatprep.subr.mxu0 0.0
    %9095 = vmatpush2.msra.mxu0 0.0
    %9096 = vmatprep.subr.mxu0 0.0
    %9097 = vmatpush2.msra.mxu0 0.0
    %9098 = vmatprep.subr.mxu0 0.0
    %9099 = vmatpush2.msra.mxu0 0.0
    %9100 = vmatprep.subr.mxu0 0.0
    %9101 = vmatpush2.msra.mxu0 0.0
    %9102 = vmatprep.subr.mxu0 0.0
    %9103 = vmatpush2.msra.mxu0 0.0
    %9104 = vmatprep.subr.mxu0 0.0
    %9105 = vmatpush2.msra.mxu0 0.0
    %9106 = vmatprep.subr.mxu0 0.0
    %9107 = vmatpush2.msra.mxu0 0.0
    %9108 = vmatprep.subr.mxu0 0.0
    %9109 = vmatpush2.msra.mxu0 0.0
    %9110 = vmatprep.mubr.f32.mxu0 0.0
    %v9111 = vand.u32 %v8882, 4294901760
    %v9112 = vsub.f32 %v8882, %v9111
    %9113 = vmatmul.mubr.f32.gmra.mxu0 %v9112
    %v9114 = vpop.f32.mrf.mxu0
    %v9115 = vadd.f32 %v9039, %v9114
    %v9116 = vpop.f32.mrf.mxu0
    %9117 = vdwg.mxu0
    %9118 = vmatprep.subr.mxu0 0.0
    %9119 = vmatpush1.msra.mxu0 0.0
    %9120 = vmatprep.subr.mxu0 0.0
    %9121 = vmatpush1.msra.mxu0 0.0
    %9122 = vmatprep.subr.mxu0 0.0
    %9123 = vmatpush1.msra.mxu0 0.0
    %9124 = vmatprep.subr.mxu0 0.0
    %9125 = vmatpush1.msra.mxu0 0.0
    %9126 = vmatprep.subr.mxu0 0.0
    %9127 = vmatpush1.msra.mxu0 0.0
    %9128 = vmatprep.subr.mxu0 0.0
    %9129 = vmatpush1.msra.mxu0 0.0
    %9130 = vmatprep.subr.mxu0 0.0
    %9131 = vmatpush1.msra.mxu0 0.0
    %9132 = vmatprep.subr.mxu0 0.0
    %9133 = vmatpush1.msra.mxu0 0.0
    %9134 = vmatprep.subr.mxu0 0.0
    %9135 = vmatpush1.msra.mxu0 0.0
    %9136 = vmatprep.subr.mxu0 0.0
    %9137 = vmatpush1.msra.mxu0 0.0
    %9138 = vmatprep.subr.mxu0 0.0
    %9139 = vmatpush1.msra.mxu0 0.0
    %9140 = vmatprep.subr.mxu0 0.0
    %9141 = vmatpush1.msra.mxu0 0.0
    %9142 = vmatprep.subr.mxu0 0.0
    %9143 = vmatpush1.msra.mxu0 0.0
    %9144 = vmatprep.subr.mxu0 0.0
    %9145 = vmatpush1.msra.mxu0 0.0
    %9146 = vmatprep.subr.mxu0 0.0
    %v9147 = vand.u32 %v8872, 4294901760
    %9148 = vmatpush1.msra.mxu0 %v9147
    %9149 = vmatprep.subr.mxu0 0.0
    %v9150 = vand.u32 %v8871, 4294901760
    %9151 = vmatpush1.msra.mxu0 %v9150
    %9152 = vmatprep.subr.mxu0 0.0
    %9153 = vmatpush2.msra.mxu0 0.0
    %9154 = vmatprep.subr.mxu0 0.0
    %9155 = vmatpush2.msra.mxu0 0.0
    %9156 = vmatprep.subr.mxu0 0.0
    %9157 = vmatpush2.msra.mxu0 0.0
    %9158 = vmatprep.subr.mxu0 0.0
    %9159 = vmatpush2.msra.mxu0 0.0
    %9160 = vmatprep.subr.mxu0 0.0
    %9161 = vmatpush2.msra.mxu0 0.0
    %9162 = vmatprep.subr.mxu0 0.0
    %9163 = vmatpush2.msra.mxu0 0.0
    %9164 = vmatprep.subr.mxu0 0.0
    %9165 = vmatpush2.msra.mxu0 0.0
    %9166 = vmatprep.subr.mxu0 0.0
    %9167 = vmatpush2.msra.mxu0 0.0
    %9168 = vmatprep.subr.mxu0 0.0
    %9169 = vmatpush2.msra.mxu0 0.0
    %9170 = vmatprep.subr.mxu0 0.0
    %9171 = vmatpush2.msra.mxu0 0.0
    %9172 = vmatprep.subr.mxu0 0.0
    %9173 = vmatpush2.msra.mxu0 0.0
    %9174 = vmatprep.subr.mxu0 0.0
    %9175 = vmatpush2.msra.mxu0 0.0
    %9176 = vmatprep.subr.mxu0 0.0
    %9177 = vmatpush2.msra.mxu0 0.0
    %9178 = vmatprep.subr.mxu0 0.0
    %9179 = vmatpush2.msra.mxu0 0.0
    %9180 = vmatprep.subr.mxu0 0.0
    %9181 = vmatpush2.msra.mxu0 0.0
    %9182 = vmatprep.subr.mxu0 0.0
    %9183 = vmatpush2.msra.mxu0 0.0
    %9184 = vmatprep.mubr.f32.mxu0 0.0
    %v9185 = vand.u32 %v8882, 4294901760
    %v9186 = vsub.f32 %v8882, %v9185
    %v9187 = vand.u32 %v9186, 4294901760
    %9188 = vmatmul.mubr.f32.gmra.mxu0 %v9187
    %v9189 = vpop.f32.mrf.mxu0
    %v9190 = vadd.f32 %v9115, %v9189
    %v9191 = vpop.f32.mrf.mxu0
    %9192 = vdwg.mxu0
    %9193 = vmatprep.subr.mxu0 0.0
    %9194 = vmatpush1.msra.mxu0 0.0
    %9195 = vmatprep.subr.mxu0 0.0
    %9196 = vmatpush1.msra.mxu0 0.0
    %9197 = vmatprep.subr.mxu0 0.0
    %9198 = vmatpush1.msra.mxu0 0.0
    %9199 = vmatprep.subr.mxu0 0.0
    %9200 = vmatpush1.msra.mxu0 0.0
    %9201 = vmatprep.subr.mxu0 0.0
    %9202 = vmatpush1.msra.mxu0 0.0
    %9203 = vmatprep.subr.mxu0 0.0
    %9204 = vmatpush1.msra.mxu0 0.0
    %9205 = vmatprep.subr.mxu0 0.0
    %9206 = vmatpush1.msra.mxu0 0.0
    %9207 = vmatprep.subr.mxu0 0.0
    %9208 = vmatpush1.msra.mxu0 0.0
    %9209 = vmatprep.subr.mxu0 0.0
    %9210 = vmatpush1.msra.mxu0 0.0
    %9211 = vmatprep.subr.mxu0 0.0
    %9212 = vmatpush1.msra.mxu0 0.0
    %9213 = vmatprep.subr.mxu0 0.0
    %9214 = vmatpush1.msra.mxu0 0.0
    %9215 = vmatprep.subr.mxu0 0.0
    %9216 = vmatpush1.msra.mxu0 0.0
    %9217 = vmatprep.subr.mxu0 0.0
    %9218 = vmatpush1.msra.mxu0 0.0
    %9219 = vmatprep.subr.mxu0 0.0
    %9220 = vmatpush1.msra.mxu0 0.0
    %9221 = vmatprep.subr.mxu0 0.0
    %v9222 = vand.u32 %v8872, 4294901760
    %v9223 = vsub.f32 %v8872, %v9222
    %v9224 = vand.u32 %v9223, 4294901760
    %9225 = vmatpush1.msra.mxu0 %v9224
    %9226 = vmatprep.subr.mxu0 0.0
    %v9227 = vand.u32 %v8871, 4294901760
    %v9228 = vsub.f32 %v8871, %v9227
    %v9229 = vand.u32 %v9228, 4294901760
    %9230 = vmatpush1.msra.mxu0 %v9229
    %9231 = vmatprep.subr.mxu0 0.0
    %9232 = vmatpush2.msra.mxu0 0.0
    %9233 = vmatprep.subr.mxu0 0.0
    %9234 = vmatpush2.msra.mxu0 0.0
    %9235 = vmatprep.subr.mxu0 0.0
    %9236 = vmatpush2.msra.mxu0 0.0
    %9237 = vmatprep.subr.mxu0 0.0
    %9238 = vmatpush2.msra.mxu0 0.0
    %9239 = vmatprep.subr.mxu0 0.0
    %9240 = vmatpush2.msra.mxu0 0.0
    %9241 = vmatprep.subr.mxu0 0.0
    %9242 = vmatpush2.msra.mxu0 0.0
    %9243 = vmatprep.subr.mxu0 0.0
    %9244 = vmatpush2.msra.mxu0 0.0
    %9245 = vmatprep.subr.mxu0 0.0
    %9246 = vmatpush2.msra.mxu0 0.0
    %9247 = vmatprep.subr.mxu0 0.0
    %9248 = vmatpush2.msra.mxu0 0.0
    %9249 = vmatprep.subr.mxu0 0.0
    %9250 = vmatpush2.msra.mxu0 0.0
    %9251 = vmatprep.subr.mxu0 0.0
    %9252 = vmatpush2.msra.mxu0 0.0
    %9253 = vmatprep.subr.mxu0 0.0
    %9254 = vmatpush2.msra.mxu0 0.0
    %9255 = vmatprep.subr.mxu0 0.0
    %9256 = vmatpush2.msra.mxu0 0.0
    %9257 = vmatprep.subr.mxu0 0.0
    %9258 = vmatpush2.msra.mxu0 0.0
    %9259 = vmatprep.subr.mxu0 0.0
    %9260 = vmatpush2.msra.mxu0 0.0
    %9261 = vmatprep.subr.mxu0 0.0
    %9262 = vmatpush2.msra.mxu0 0.0
    %9263 = vmatprep.mubr.f32.mxu0 0.0
    %v9264 = vand.u32 %v8882, 4294901760
    %9265 = vmatmul.mubr.f32.gmra.mxu0 %v9264
    %v9266 = vpop.f32.mrf.mxu0
    %v9267 = vadd.f32 %v9190, %v9266
    %v9268 = vpop.f32.mrf.mxu0
    %9269 = vdwg.mxu0
    %9270 = vmatprep.subr.mxu0 0.0
    %9271 = vmatpush1.msra.mxu0 0.0
    %9272 = vmatprep.subr.mxu0 0.0
    %9273 = vmatpush1.msra.mxu0 0.0
    %9274 = vmatprep.subr.mxu0 0.0
    %9275 = vmatpush1.msra.mxu0 0.0
    %9276 = vmatprep.subr.mxu0 0.0
    %9277 = vmatpush1.msra.mxu0 0.0
    %9278 = vmatprep.subr.mxu0 0.0
    %9279 = vmatpush1.msra.mxu0 0.0
    %9280 = vmatprep.subr.mxu0 0.0
    %9281 = vmatpush1.msra.mxu0 0.0
    %9282 = vmatprep.subr.mxu0 0.0
    %9283 = vmatpush1.msra.mxu0 0.0
    %9284 = vmatprep.subr.mxu0 0.0
    %9285 = vmatpush1.msra.mxu0 0.0
    %9286 = vmatprep.subr.mxu0 0.0
    %9287 = vmatpush1.msra.mxu0 0.0
    %9288 = vmatprep.subr.mxu0 0.0
    %9289 = vmatpush1.msra.mxu0 0.0
    %9290 = vmatprep.subr.mxu0 0.0
    %9291 = vmatpush1.msra.mxu0 0.0
    %9292 = vmatprep.subr.mxu0 0.0
    %9293 = vmatpush1.msra.mxu0 0.0
    %9294 = vmatprep.subr.mxu0 0.0
    %9295 = vmatpush1.msra.mxu0 0.0
    %9296 = vmatprep.subr.mxu0 0.0
    %9297 = vmatpush1.msra.mxu0 0.0
    %9298 = vmatprep.subr.mxu0 0.0
    %v9299 = vand.u32 %v8872, 4294901760
    %9300 = vmatpush1.msra.mxu0 %v9299
    %9301 = vmatprep.subr.mxu0 0.0
    %v9302 = vand.u32 %v8871, 4294901760
    %9303 = vmatpush1.msra.mxu0 %v9302
    %9304 = vmatprep.subr.mxu0 0.0
    %9305 = vmatpush2.msra.mxu0 0.0
    %9306 = vmatprep.subr.mxu0 0.0
    %9307 = vmatpush2.msra.mxu0 0.0
    %9308 = vmatprep.subr.mxu0 0.0
    %9309 = vmatpush2.msra.mxu0 0.0
    %9310 = vmatprep.subr.mxu0 0.0
    %9311 = vmatpush2.msra.mxu0 0.0
    %9312 = vmatprep.subr.mxu0 0.0
    %9313 = vmatpush2.msra.mxu0 0.0
    %9314 = vmatprep.subr.mxu0 0.0
    %9315 = vmatpush2.msra.mxu0 0.0
    %9316 = vmatprep.subr.mxu0 0.0
    %9317 = vmatpush2.msra.mxu0 0.0
    %9318 = vmatprep.subr.mxu0 0.0
    %9319 = vmatpush2.msra.mxu0 0.0
    %9320 = vmatprep.subr.mxu0 0.0
    %9321 = vmatpush2.msra.mxu0 0.0
    %9322 = vmatprep.subr.mxu0 0.0
    %9323 = vmatpush2.msra.mxu0 0.0
    %9324 = vmatprep.subr.mxu0 0.0
    %9325 = vmatpush2.msra.mxu0 0.0
    %9326 = vmatprep.subr.mxu0 0.0
    %9327 = vmatpush2.msra.mxu0 0.0
    %9328 = vmatprep.subr.mxu0 0.0
    %9329 = vmatpush2.msra.mxu0 0.0
    %9330 = vmatprep.subr.mxu0 0.0
    %9331 = vmatpush2.msra.mxu0 0.0
    %9332 = vmatprep.subr.mxu0 0.0
    %9333 = vmatpush2.msra.mxu0 0.0
    %9334 = vmatprep.subr.mxu0 0.0
    %9335 = vmatpush2.msra.mxu0 0.0
    %9336 = vmatprep.mubr.f32.mxu0 0.0
    %v9337 = vand.u32 %v8882, 4294901760
    %9338 = vmatmul.mubr.f32.gmra.mxu0 %v9337
    %v9339 = vpop.f32.mrf.mxu0
    %v9340 = vadd.f32 %v9267, %v9339
    %v9341 = vpop.f32.mrf.mxu0
    %9342 = vdwg.mxu0
    %v9343 = vtanh.pop %v9340
    %v9344 = vld [vmem:[#allocation8] sm:$0xff]
    %v9345 = vld [vmem:[#allocation8 + $0x8] sm:$0xff]
    %v9346 = vld [vmem:[%s11] sm:$0x1]
    %v9348 = vlaneseq
    %v9349 = vshrl.u32 %v9348, 7
    %v9350 = vsub.s32 0, %v9349
    %v9351 = vrot.slane %v9346, %v9350
    %v9354 = vsel %vm8880, %v9343, 0
    %9356 = vmatprep.subr.mxu0 0.0
    %9357 = vmatpush1.msra.mxu0 0.0
    %9358 = vmatprep.subr.mxu0 0.0
    %9359 = vmatpush1.msra.mxu0 0.0
    %9360 = vmatprep.subr.mxu0 0.0
    %9361 = vmatpush1.msra.mxu0 0.0
    %9362 = vmatprep.subr.mxu0 0.0
    %9363 = vmatpush1.msra.mxu0 0.0
    %9364 = vmatprep.subr.mxu0 0.0
    %9365 = vmatpush1.msra.mxu0 0.0
    %9366 = vmatprep.subr.mxu0 0.0
    %9367 = vmatpush1.msra.mxu0 0.0
    %9368 = vmatprep.subr.mxu0 0.0
    %9369 = vmatpush1.msra.mxu0 0.0
    %9370 = vmatprep.subr.mxu0 0.0
    %9371 = vmatpush1.msra.mxu0 0.0
    %9372 = vmatprep.subr.mxu0 0.0
    %9373 = vmatpush1.msra.mxu0 0.0
    %9374 = vmatprep.subr.mxu0 0.0
    %9375 = vmatpush1.msra.mxu0 0.0
    %9376 = vmatprep.subr.mxu0 0.0
    %9377 = vmatpush1.msra.mxu0 0.0
    %9378 = vmatprep.subr.mxu0 0.0
    %9379 = vmatpush1.msra.mxu0 0.0
    %9380 = vmatprep.subr.mxu0 0.0
    %9381 = vmatpush1.msra.mxu0 0.0
    %9382 = vmatprep.subr.mxu0 0.0
    %9383 = vmatpush1.msra.mxu0 0.0
    %9384 = vmatprep.subr.mxu0 0.0
    %v9385 = vand.u32 %v9345, 4294901760
    %9386 = vmatpush1.msra.mxu0 %v9385
    %9387 = vmatprep.subr.mxu0 0.0
    %v9388 = vand.u32 %v9344, 4294901760
    %9389 = vmatpush1.msra.mxu0 %v9388
    %9390 = vmatprep.subr.mxu0 0.0
    %9391 = vmatpush2.msra.mxu0 0.0
    %9392 = vmatprep.subr.mxu0 0.0
    %9393 = vmatpush2.msra.mxu0 0.0
    %9394 = vmatprep.subr.mxu0 0.0
    %9395 = vmatpush2.msra.mxu0 0.0
    %9396 = vmatprep.subr.mxu0 0.0
    %9397 = vmatpush2.msra.mxu0 0.0
    %9398 = vmatprep.subr.mxu0 0.0
    %9399 = vmatpush2.msra.mxu0 0.0
    %9400 = vmatprep.subr.mxu0 0.0
    %9401 = vmatpush2.msra.mxu0 0.0
    %9402 = vmatprep.subr.mxu0 0.0
    %9403 = vmatpush2.msra.mxu0 0.0
    %9404 = vmatprep.subr.mxu0 0.0
    %9405 = vmatpush2.msra.mxu0 0.0
    %9406 = vmatprep.subr.mxu0 0.0
    %9407 = vmatpush2.msra.mxu0 0.0
    %9408 = vmatprep.subr.mxu0 0.0
    %9409 = vmatpush2.msra.mxu0 0.0
    %9410 = vmatprep.subr.mxu0 0.0
    %9411 = vmatpush2.msra.mxu0 0.0
    %9412 = vmatprep.subr.mxu0 0.0
    %9413 = vmatpush2.msra.mxu0 0.0
    %9414 = vmatprep.subr.mxu0 0.0
    %9415 = vmatpush2.msra.mxu0 0.0
    %9416 = vmatprep.subr.mxu0 0.0
    %9417 = vmatpush2.msra.mxu0 0.0
    %9418 = vmatprep.subr.mxu0 0.0
    %9419 = vmatpush2.msra.mxu0 0.0
    %9420 = vmatprep.subr.mxu0 0.0
    %9421 = vmatpush2.msra.mxu0 0.0
    %9422 = vmatprep.mubr.f32.mxu0 0.0
    %v9423 = vand.u32 %v9354, 4294901760
    %v9424 = vsub.f32 %v9354, %v9423
    %v9425 = vand.u32 %v9424, 4294901760
    %v9426 = vsub.f32 %v9424, %v9425
    %v9427 = vand.u32 %v9426, 4294901760
    %9428 = vmatmul.mubr.f32.gmra.mxu0 %v9427
    %v9429 = vpop.f32.mrf.mxu0
    %v9430 = vadd.f32 %v9351, %v9429
    %v9431 = vpop.f32.mrf.mxu0
    %9432 = vdwg.mxu0
    %9433 = vmatprep.subr.mxu0 0.0
    %9434 = vmatpush1.msra.mxu0 0.0
    %9435 = vmatprep.subr.mxu0 0.0
    %9436 = vmatpush1.msra.mxu0 0.0
    %9437 = vmatprep.subr.mxu0 0.0
    %9438 = vmatpush1.msra.mxu0 0.0
    %9439 = vmatprep.subr.mxu0 0.0
    %9440 = vmatpush1.msra.mxu0 0.0
    %9441 = vmatprep.subr.mxu0 0.0
    %9442 = vmatpush1.msra.mxu0 0.0
    %9443 = vmatprep.subr.mxu0 0.0
    %9444 = vmatpush1.msra.mxu0 0.0
    %9445 = vmatprep.subr.mxu0 0.0
    %9446 = vmatpush1.msra.mxu0 0.0
    %9447 = vmatprep.subr.mxu0 0.0
    %9448 = vmatpush1.msra.mxu0 0.0
    %9449 = vmatprep.subr.mxu0 0.0
    %9450 = vmatpush1.msra.mxu0 0.0
    %9451 = vmatprep.subr.mxu0 0.0
    %9452 = vmatpush1.msra.mxu0 0.0
    %9453 = vmatprep.subr.mxu0 0.0
    %9454 = vmatpush1.msra.mxu0 0.0
    %9455 = vmatprep.subr.mxu0 0.0
    %9456 = vmatpush1.msra.mxu0 0.0
    %9457 = vmatprep.subr.mxu0 0.0
    %9458 = vmatpush1.msra.mxu0 0.0
    %9459 = vmatprep.subr.mxu0 0.0
    %9460 = vmatpush1.msra.mxu0 0.0
    %9461 = vmatprep.subr.mxu0 0.0
    %v9462 = vand.u32 %v9345, 4294901760
    %v9463 = vsub.f32 %v9345, %v9462
    %v9464 = vand.u32 %v9463, 4294901760
    %v9465 = vsub.f32 %v9463, %v9464
    %v9466 = vand.u32 %v9465, 4294901760
    %9467 = vmatpush1.msra.mxu0 %v9466
    %9468 = vmatprep.subr.mxu0 0.0
    %v9469 = vand.u32 %v9344, 4294901760
    %v9470 = vsub.f32 %v9344, %v9469
    %v9471 = vand.u32 %v9470, 4294901760
    %v9472 = vsub.f32 %v9470, %v9471
    %v9473 = vand.u32 %v9472, 4294901760
    %9474 = vmatpush1.msra.mxu0 %v9473
    %9475 = vmatprep.subr.mxu0 0.0
    %9476 = vmatpush2.msra.mxu0 0.0
    %9477 = vmatprep.subr.mxu0 0.0
    %9478 = vmatpush2.msra.mxu0 0.0
    %9479 = vmatprep.subr.mxu0 0.0
    %9480 = vmatpush2.msra.mxu0 0.0
    %9481 = vmatprep.subr.mxu0 0.0
    %9482 = vmatpush2.msra.mxu0 0.0
    %9483 = vmatprep.subr.mxu0 0.0
    %9484 = vmatpush2.msra.mxu0 0.0
    %9485 = vmatprep.subr.mxu0 0.0
    %9486 = vmatpush2.msra.mxu0 0.0
    %9487 = vmatprep.subr.mxu0 0.0
    %9488 = vmatpush2.msra.mxu0 0.0
    %9489 = vmatprep.subr.mxu0 0.0
    %9490 = vmatpush2.msra.mxu0 0.0
    %9491 = vmatprep.subr.mxu0 0.0
    %9492 = vmatpush2.msra.mxu0 0.0
    %9493 = vmatprep.subr.mxu0 0.0
    %9494 = vmatpush2.msra.mxu0 0.0
    %9495 = vmatprep.subr.mxu0 0.0
    %9496 = vmatpush2.msra.mxu0 0.0
    %9497 = vmatprep.subr.mxu0 0.0
    %9498 = vmatpush2.msra.mxu0 0.0
    %9499 = vmatprep.subr.mxu0 0.0
    %9500 = vmatpush2.msra.mxu0 0.0
    %9501 = vmatprep.subr.mxu0 0.0
    %9502 = vmatpush2.msra.mxu0 0.0
    %9503 = vmatprep.subr.mxu0 0.0
    %9504 = vmatpush2.msra.mxu0 0.0
    %9505 = vmatprep.subr.mxu0 0.0
    %9506 = vmatpush2.msra.mxu0 0.0
    %9507 = vmatprep.mubr.f32.mxu0 0.0
    %v9508 = vand.u32 %v9354, 4294901760
    %9509 = vmatmul.mubr.f32.gmra.mxu0 %v9508
    %v9510 = vpop.f32.mrf.mxu0
    %v9511 = vadd.f32 %v9430, %v9510
    %v9512 = vpop.f32.mrf.mxu0
    %9513 = vdwg.mxu0
    %9514 = vmatprep.subr.mxu0 0.0
    %9515 = vmatpush1.msra.mxu0 0.0
    %9516 = vmatprep.subr.mxu0 0.0
    %9517 = vmatpush1.msra.mxu0 0.0
    %9518 = vmatprep.subr.mxu0 0.0
    %9519 = vmatpush1.msra.mxu0 0.0
    %9520 = vmatprep.subr.mxu0 0.0
    %9521 = vmatpush1.msra.mxu0 0.0
    %9522 = vmatprep.subr.mxu0 0.0
    %9523 = vmatpush1.msra.mxu0 0.0
    %9524 = vmatprep.subr.mxu0 0.0
    %9525 = vmatpush1.msra.mxu0 0.0
    %9526 = vmatprep.subr.mxu0 0.0
    %9527 = vmatpush1.msra.mxu0 0.0
    %9528 = vmatprep.subr.mxu0 0.0
    %9529 = vmatpush1.msra.mxu0 0.0
    %9530 = vmatprep.subr.mxu0 0.0
    %9531 = vmatpush1.msra.mxu0 0.0
    %9532 = vmatprep.subr.mxu0 0.0
    %9533 = vmatpush1.msra.mxu0 0.0
    %9534 = vmatprep.subr.mxu0 0.0
    %9535 = vmatpush1.msra.mxu0 0.0
    %9536 = vmatprep.subr.mxu0 0.0
    %9537 = vmatpush1.msra.mxu0 0.0
    %9538 = vmatprep.subr.mxu0 0.0
    %9539 = vmatpush1.msra.mxu0 0.0
    %9540 = vmatprep.subr.mxu0 0.0
    %9541 = vmatpush1.msra.mxu0 0.0
    %9542 = vmatprep.subr.mxu0 0.0
    %v9543 = vand.u32 %v9345, 4294901760
    %v9544 = vsub.f32 %v9345, %v9543
    %9545 = vmatpush1.msra.mxu0 %v9544
    %9546 = vmatprep.subr.mxu0 0.0
    %v9547 = vand.u32 %v9344, 4294901760
    %v9548 = vsub.f32 %v9344, %v9547
    %9549 = vmatpush1.msra.mxu0 %v9548
    %9550 = vmatprep.subr.mxu0 0.0
    %9551 = vmatpush2.msra.mxu0 0.0
    %9552 = vmatprep.subr.mxu0 0.0
    %9553 = vmatpush2.msra.mxu0 0.0
    %9554 = vmatprep.subr.mxu0 0.0
    %9555 = vmatpush2.msra.mxu0 0.0
    %9556 = vmatprep.subr.mxu0 0.0
    %9557 = vmatpush2.msra.mxu0 0.0
    %9558 = vmatprep.subr.mxu0 0.0
    %9559 = vmatpush2.msra.mxu0 0.0
    %9560 = vmatprep.subr.mxu0 0.0
    %9561 = vmatpush2.msra.mxu0 0.0
    %9562 = vmatprep.subr.mxu0 0.0
    %9563 = vmatpush2.msra.mxu0 0.0
    %9564 = vmatprep.subr.mxu0 0.0
    %9565 = vmatpush2.msra.mxu0 0.0
    %9566 = vmatprep.subr.mxu0 0.0
    %9567 = vmatpush2.msra.mxu0 0.0
    %9568 = vmatprep.subr.mxu0 0.0
    %9569 = vmatpush2.msra.mxu0 0.0
    %9570 = vmatprep.subr.mxu0 0.0
    %9571 = vmatpush2.msra.mxu0 0.0
    %9572 = vmatprep.subr.mxu0 0.0
    %9573 = vmatpush2.msra.mxu0 0.0
    %9574 = vmatprep.subr.mxu0 0.0
    %9575 = vmatpush2.msra.mxu0 0.0
    %9576 = vmatprep.subr.mxu0 0.0
    %9577 = vmatpush2.msra.mxu0 0.0
    %9578 = vmatprep.subr.mxu0 0.0
    %9579 = vmatpush2.msra.mxu0 0.0
    %9580 = vmatprep.subr.mxu0 0.0
    %9581 = vmatpush2.msra.mxu0 0.0
    %9582 = vmatprep.mubr.f32.mxu0 0.0
    %v9583 = vand.u32 %v9354, 4294901760
    %v9584 = vsub.f32 %v9354, %v9583
    %9585 = vmatmul.mubr.f32.gmra.mxu0 %v9584
    %v9586 = vpop.f32.mrf.mxu0
    %v9587 = vadd.f32 %v9511, %v9586
    %v9588 = vpop.f32.mrf.mxu0
    %9589 = vdwg.mxu0
    %9590 = vmatprep.subr.mxu0 0.0
    %9591 = vmatpush1.msra.mxu0 0.0
    %9592 = vmatprep.subr.mxu0 0.0
    %9593 = vmatpush1.msra.mxu0 0.0
    %9594 = vmatprep.subr.mxu0 0.0
    %9595 = vmatpush1.msra.mxu0 0.0
    %9596 = vmatprep.subr.mxu0 0.0
    %9597 = vmatpush1.msra.mxu0 0.0
    %9598 = vmatprep.subr.mxu0 0.0
    %9599 = vmatpush1.msra.mxu0 0.0
    %9600 = vmatprep.subr.mxu0 0.0
    %9601 = vmatpush1.msra.mxu0 0.0
    %9602 = vmatprep.subr.mxu0 0.0
    %9603 = vmatpush1.msra.mxu0 0.0
    %9604 = vmatprep.subr.mxu0 0.0
    %9605 = vmatpush1.msra.mxu0 0.0
    %9606 = vmatprep.subr.mxu0 0.0
    %9607 = vmatpush1.msra.mxu0 0.0
    %9608 = vmatprep.subr.mxu0 0.0
    %9609 = vmatpush1.msra.mxu0 0.0
    %9610 = vmatprep.subr.mxu0 0.0
    %9611 = vmatpush1.msra.mxu0 0.0
    %9612 = vmatprep.subr.mxu0 0.0
    %9613 = vmatpush1.msra.mxu0 0.0
    %9614 = vmatprep.subr.mxu0 0.0
    %9615 = vmatpush1.msra.mxu0 0.0
    %9616 = vmatprep.subr.mxu0 0.0
    %9617 = vmatpush1.msra.mxu0 0.0
    %9618 = vmatprep.subr.mxu0 0.0
    %v9619 = vand.u32 %v9345, 4294901760
    %9620 = vmatpush1.msra.mxu0 %v9619
    %9621 = vmatprep.subr.mxu0 0.0
    %v9622 = vand.u32 %v9344, 4294901760
    %9623 = vmatpush1.msra.mxu0 %v9622
    %9624 = vmatprep.subr.mxu0 0.0
    %9625 = vmatpush2.msra.mxu0 0.0
    %9626 = vmatprep.subr.mxu0 0.0
    %9627 = vmatpush2.msra.mxu0 0.0
    %9628 = vmatprep.subr.mxu0 0.0
    %9629 = vmatpush2.msra.mxu0 0.0
    %9630 = vmatprep.subr.mxu0 0.0
    %9631 = vmatpush2.msra.mxu0 0.0
    %9632 = vmatprep.subr.mxu0 0.0
    %9633 = vmatpush2.msra.mxu0 0.0
    %9634 = vmatprep.subr.mxu0 0.0
    %9635 = vmatpush2.msra.mxu0 0.0
    %9636 = vmatprep.subr.mxu0 0.0
    %9637 = vmatpush2.msra.mxu0 0.0
    %9638 = vmatprep.subr.mxu0 0.0
    %9639 = vmatpush2.msra.mxu0 0.0
    %9640 = vmatprep.subr.mxu0 0.0
    %9641 = vmatpush2.msra.mxu0 0.0
    %9642 = vmatprep.subr.mxu0 0.0
    %9643 = vmatpush2.msra.mxu0 0.0
    %9644 = vmatprep.subr.mxu0 0.0
    %9645 = vmatpush2.msra.mxu0 0.0
    %9646 = vmatprep.subr.mxu0 0.0
    %9647 = vmatpush2.msra.mxu0 0.0
    %9648 = vmatprep.subr.mxu0 0.0
    %9649 = vmatpush2.msra.mxu0 0.0
    %9650 = vmatprep.subr.mxu0 0.0
    %9651 = vmatpush2.msra.mxu0 0.0
    %9652 = vmatprep.subr.mxu0 0.0
    %9653 = vmatpush2.msra.mxu0 0.0
    %9654 = vmatprep.subr.mxu0 0.0
    %9655 = vmatpush2.msra.mxu0 0.0
    %9656 = vmatprep.mubr.f32.mxu0 0.0
    %v9657 = vand.u32 %v9354, 4294901760
    %v9658 = vsub.f32 %v9354, %v9657
    %v9659 = vand.u32 %v9658, 4294901760
    %9660 = vmatmul.mubr.f32.gmra.mxu0 %v9659
    %v9661 = vpop.f32.mrf.mxu0
    %v9662 = vadd.f32 %v9587, %v9661
    %v9663 = vpop.f32.mrf.mxu0
    %9664 = vdwg.mxu0
    %9665 = vmatprep.subr.mxu0 0.0
    %9666 = vmatpush1.msra.mxu0 0.0
    %9667 = vmatprep.subr.mxu0 0.0
    %9668 = vmatpush1.msra.mxu0 0.0
    %9669 = vmatprep.subr.mxu0 0.0
    %9670 = vmatpush1.msra.mxu0 0.0
    %9671 = vmatprep.subr.mxu0 0.0
    %9672 = vmatpush1.msra.mxu0 0.0
    %9673 = vmatprep.subr.mxu0 0.0
    %9674 = vmatpush1.msra.mxu0 0.0
    %9675 = vmatprep.subr.mxu0 0.0
    %9676 = vmatpush1.msra.mxu0 0.0
    %9677 = vmatprep.subr.mxu0 0.0
    %9678 = vmatpush1.msra.mxu0 0.0
    %9679 = vmatprep.subr.mxu0 0.0
    %9680 = vmatpush1.msra.mxu0 0.0
    %9681 = vmatprep.subr.mxu0 0.0
    %9682 = vmatpush1.msra.mxu0 0.0
    %9683 = vmatprep.subr.mxu0 0.0
    %9684 = vmatpush1.msra.mxu0 0.0
    %9685 = vmatprep.subr.mxu0 0.0
    %9686 = vmatpush1.msra.mxu0 0.0
    %9687 = vmatprep.subr.mxu0 0.0
    %9688 = vmatpush1.msra.mxu0 0.0
    %9689 = vmatprep.subr.mxu0 0.0
    %9690 = vmatpush1.msra.mxu0 0.0
    %9691 = vmatprep.subr.mxu0 0.0
    %9692 = vmatpush1.msra.mxu0 0.0
    %9693 = vmatprep.subr.mxu0 0.0
    %v9694 = vand.u32 %v9345, 4294901760
    %v9695 = vsub.f32 %v9345, %v9694
    %v9696 = vand.u32 %v9695, 4294901760
    %9697 = vmatpush1.msra.mxu0 %v9696
    %9698 = vmatprep.subr.mxu0 0.0
    %v9699 = vand.u32 %v9344, 4294901760
    %v9700 = vsub.f32 %v9344, %v9699
    %v9701 = vand.u32 %v9700, 4294901760
    %9702 = vmatpush1.msra.mxu0 %v9701
    %9703 = vmatprep.subr.mxu0 0.0
    %9704 = vmatpush2.msra.mxu0 0.0
    %9705 = vmatprep.subr.mxu0 0.0
    %9706 = vmatpush2.msra.mxu0 0.0
    %9707 = vmatprep.subr.mxu0 0.0
    %9708 = vmatpush2.msra.mxu0 0.0
    %9709 = vmatprep.subr.mxu0 0.0
    %9710 = vmatpush2.msra.mxu0 0.0
    %9711 = vmatprep.subr.mxu0 0.0
    %9712 = vmatpush2.msra.mxu0 0.0
    %9713 = vmatprep.subr.mxu0 0.0
    %9714 = vmatpush2.msra.mxu0 0.0
    %9715 = vmatprep.subr.mxu0 0.0
    %9716 = vmatpush2.msra.mxu0 0.0
    %9717 = vmatprep.subr.mxu0 0.0
    %9718 = vmatpush2.msra.mxu0 0.0
    %9719 = vmatprep.subr.mxu0 0.0
    %9720 = vmatpush2.msra.mxu0 0.0
    %9721 = vmatprep.subr.mxu0 0.0
    %9722 = vmatpush2.msra.mxu0 0.0
    %9723 = vmatprep.subr.mxu0 0.0
    %9724 = vmatpush2.msra.mxu0 0.0
    %9725 = vmatprep.subr.mxu0 0.0
    %9726 = vmatpush2.msra.mxu0 0.0
    %9727 = vmatprep.subr.mxu0 0.0
    %9728 = vmatpush2.msra.mxu0 0.0
    %9729 = vmatprep.subr.mxu0 0.0
    %9730 = vmatpush2.msra.mxu0 0.0
    %9731 = vmatprep.subr.mxu0 0.0
    %9732 = vmatpush2.msra.mxu0 0.0
    %9733 = vmatprep.subr.mxu0 0.0
    %9734 = vmatpush2.msra.mxu0 0.0
    %9735 = vmatprep.mubr.f32.mxu0 0.0
    %v9736 = vand.u32 %v9354, 4294901760
    %9737 = vmatmul.mubr.f32.gmra.mxu0 %v9736
    %v9738 = vpop.f32.mrf.mxu0
    %v9739 = vadd.f32 %v9662, %v9738
    %v9740 = vpop.f32.mrf.mxu0
    %9741 = vdwg.mxu0
    %9742 = vmatprep.subr.mxu0 0.0
    %9743 = vmatpush1.msra.mxu0 0.0
    %9744 = vmatprep.subr.mxu0 0.0
    %9745 = vmatpush1.msra.mxu0 0.0
    %9746 = vmatprep.subr.mxu0 0.0
    %9747 = vmatpush1.msra.mxu0 0.0
    %9748 = vmatprep.subr.mxu0 0.0
    %9749 = vmatpush1.msra.mxu0 0.0
    %9750 = vmatprep.subr.mxu0 0.0
    %9751 = vmatpush1.msra.mxu0 0.0
    %9752 = vmatprep.subr.mxu0 0.0
    %9753 = vmatpush1.msra.mxu0 0.0
    %9754 = vmatprep.subr.mxu0 0.0
    %9755 = vmatpush1.msra.mxu0 0.0
    %9756 = vmatprep.subr.mxu0 0.0
    %9757 = vmatpush1.msra.mxu0 0.0
    %9758 = vmatprep.subr.mxu0 0.0
    %9759 = vmatpush1.msra.mxu0 0.0
    %9760 = vmatprep.subr.mxu0 0.0
    %9761 = vmatpush1.msra.mxu0 0.0
    %9762 = vmatprep.subr.mxu0 0.0
    %9763 = vmatpush1.msra.mxu0 0.0
    %9764 = vmatprep.subr.mxu0 0.0
    %9765 = vmatpush1.msra.mxu0 0.0
    %9766 = vmatprep.subr.mxu0 0.0
    %9767 = vmatpush1.msra.mxu0 0.0
    %9768 = vmatprep.subr.mxu0 0.0
    %9769 = vmatpush1.msra.mxu0 0.0
    %9770 = vmatprep.subr.mxu0 0.0
    %v9771 = vand.u32 %v9345, 4294901760
    %9772 = vmatpush1.msra.mxu0 %v9771
    %9773 = vmatprep.subr.mxu0 0.0
    %v9774 = vand.u32 %v9344, 4294901760
    %9775 = vmatpush1.msra.mxu0 %v9774
    %9776 = vmatprep.subr.mxu0 0.0
    %9777 = vmatpush2.msra.mxu0 0.0
    %9778 = vmatprep.subr.mxu0 0.0
    %9779 = vmatpush2.msra.mxu0 0.0
    %9780 = vmatprep.subr.mxu0 0.0
    %9781 = vmatpush2.msra.mxu0 0.0
    %9782 = vmatprep.subr.mxu0 0.0
    %9783 = vmatpush2.msra.mxu0 0.0
    %9784 = vmatprep.subr.mxu0 0.0
    %9785 = vmatpush2.msra.mxu0 0.0
    %9786 = vmatprep.subr.mxu0 0.0
    %9787 = vmatpush2.msra.mxu0 0.0
    %9788 = vmatprep.subr.mxu0 0.0
    %9789 = vmatpush2.msra.mxu0 0.0
    %9790 = vmatprep.subr.mxu0 0.0
    %9791 = vmatpush2.msra.mxu0 0.0
    %9792 = vmatprep.subr.mxu0 0.0
    %9793 = vmatpush2.msra.mxu0 0.0
    %9794 = vmatprep.subr.mxu0 0.0
    %9795 = vmatpush2.msra.mxu0 0.0
    %9796 = vmatprep.subr.mxu0 0.0
    %9797 = vmatpush2.msra.mxu0 0.0
    %9798 = vmatprep.subr.mxu0 0.0
    %9799 = vmatpush2.msra.mxu0 0.0
    %9800 = vmatprep.subr.mxu0 0.0
    %9801 = vmatpush2.msra.mxu0 0.0
    %9802 = vmatprep.subr.mxu0 0.0
    %9803 = vmatpush2.msra.mxu0 0.0
    %9804 = vmatprep.subr.mxu0 0.0
    %9805 = vmatpush2.msra.mxu0 0.0
    %9806 = vmatprep.subr.mxu0 0.0
    %9807 = vmatpush2.msra.mxu0 0.0
    %9808 = vmatprep.mubr.f32.mxu0 0.0
    %v9809 = vand.u32 %v9354, 4294901760
    %9810 = vmatmul.mubr.f32.gmra.mxu0 %v9809
    %v9811 = vpop.f32.mrf.mxu0
    %v9812 = vadd.f32 %v9739, %v9811
    %v9813 = vpop.f32.mrf.mxu0
    %9814 = vdwg.mxu0
    %9815 = vst [vmem:[#allocation10] sm:$0x3] %v9812
    // Predicated region
    $region66: #{tpu_custom_call.1} parent=1 // pred_check
      _
    $region67: #{tpu_custom_call.1} parent=1 // pred_check_branch
      %9817 = sbr.rel (0) target = $region69
    $region68: #{tpu_custom_call.1} parent=1 // pred_region
      %s9819 = ssub.s32 32, 32
      %9820 = vsyncadd [#allocation4], %s9819
      %s9822 = sshll.u32 [#allocation10], 4
      %s9823 = int_to_ptr.vmem [resolvable:$true] %s9822
      %9825 = dma.vmem_to_hbm [thread:$0]  %s9823, 32, %s12, [#allocation4]
    $region69: #{tpu_custom_call.1} parent=1 // pred_fallthru
      _
    // Predicated region
    $region70: #{tpu_custom_call.1} parent=1 // pred_check
      _
    $region71: #{tpu_custom_call.1} parent=1 // pred_check_branch
      %9827 = sbr.rel (0) target = $region73
    $region72: #{tpu_custom_call.1} parent=1 // pred_region
      %9828 = dma.done [#allocation4], 32
    $region73: #{tpu_custom_call.1} parent=1 // pred_fallthru
      _
    %9829 = vsyncpa [#allocation3], 1
    %9830 = vsyncpa [#allocation6], 1
    %9831 = vsyncpa [#allocation9], 1
    %9832 = vsyncpa [#allocation4], 1

</llo_original>
